<compile_context>
chip_gen: v5e
topology: v5e:2x2
jax: 0.10.0
libtpu: 0.0.40
codegen_flags: <defaults>
</compile_context>

<pallas_src>
import functools

import jax
import jax.numpy as jnp
from jax.experimental import pallas as pl
from jax.experimental.pallas import tpu as pltpu

_LPAD = 8  # left halo width in the dwconv scratch (multiple of 8 -> aligned stores)


def _hswish(y):
    return y * jnp.clip(y + 3.0, 0.0, 6.0) * (1.0 / 6.0)


# ---------------------------------------------------------------------------
# Fused per-sample kernel: stem -> expand -> dw3x3 -> SE -> project -> neck -> head
# ---------------------------------------------------------------------------
def _msnet_fused_kernel(xs_ref, stem_w_ref, stem_b_ref,
                        exp_w_ref, exp_b_ref,
                        dw_w_ref, dw_b_ref,
                        se_w1_ref, se_b1_ref, se_w2_ref, se_b2_ref,
                        proj_w_ref, proj_b_ref,
                        neck_w_ref, neck_b_ref,
                        head_wt_ref, head_bt_ref,
                        o_ref, dwpad_ref, *, Ho, Wo, Cin):
    f32, bf16 = jnp.float32, jnp.bfloat16
    P = Ho * Wo
    Cstem = stem_w_ref.shape[1]      # 16
    Cexp = exp_w_ref.shape[1]        # 64

    # ---- stem: 3x3 / stride-2 conv as 9*Cin shifted VPU MACs --------------
    # xs is the padded input, pixel-unshuffled so every stride-2 tap is a
    # plain (unstrided) slice: channel = (row_phase*2 + col_phase)*Cin + ci.
    xs = xs_ref[...]                                   # (Ho+1, Wo+1, 4*Cin) f32
    acc0 = jnp.zeros((Ho, Wo, Cstem), f32)
    for dh in range(3):
        rp, ro = dh % 2, dh // 2
        for dw in range(3):
            cp, co = dw % 2, dw // 2
            ch0 = (rp * 2 + cp) * Cin
            k0 = (dh * 3 + dw) * Cin
            for ci in range(Cin):
                tap = xs[ro:ro + Ho, co:co + Wo, ch0 + ci:ch0 + ci + 1]   # (Ho,Wo,1)
                acc0 = acc0 + tap * stem_w_ref[k0 + ci:k0 + ci + 1, :]    # -> (Ho,Wo,Cstem)
    y1 = _hswish(acc0 + stem_b_ref[...])               # (Ho, Wo, 16)

    # ---- expand 1x1 (MXU, bf16 operands, f32 accumulation) -----------------
    y1f = y1.reshape(P, Cstem)
    t = jnp.dot(y1f.astype(bf16), exp_w_ref[...], preferred_element_type=f32)
    t = _hswish(t + exp_b_ref[...])                    # (P, Cexp)

    # ---- depthwise 3x3, stride 1, 'same' pad -------------------------------
    # Halo kept in VMEM scratch (no HBM pad op); interior store is sublane
    # aligned (column offset _LPAD=8).  The W (sublane) shift is hoisted:
    # 3 shifted slabs, reused across the 3 dh taps.
    dwpad_ref[...] = jnp.zeros(dwpad_ref.shape, dwpad_ref.dtype)
    dwpad_ref[1:Ho + 1, _LPAD:_LPAD + Wo, :] = t.reshape(Ho, Wo, Cexp)
    acc1 = jnp.zeros((Ho, Wo, Cexp), f32)
    for dw in range(3):
        slab = dwpad_ref[:, _LPAD - 1 + dw:_LPAD - 1 + dw + Wo, :]  # (Ho+2, Wo, Cexp)
        for dh in range(3):
            k = dh * 3 + dw
            acc1 = acc1 + slab[dh:dh + Ho] * dw_w_ref[k:k + 1, :]
    t2 = _hswish(acc1 + dw_b_ref[...])                 # (Ho, Wo, Cexp)

    # ---- squeeze-excite (fused: pool + FC/ReLU + FC/hsigmoid + rescale) ----
    pooled = jnp.mean(t2, axis=(0, 1))[None, :]        # (1, Cexp)
    h = jnp.dot(pooled, se_w1_ref[...], preferred_element_type=f32) + se_b1_ref[...]
    h = jnp.maximum(h, 0.0)
    s = jnp.dot(h, se_w2_ref[...], preferred_element_type=f32) + se_b2_ref[...]
    s = jnp.clip(s + 3.0, 0.0, 6.0) * (1.0 / 6.0)      # hard-sigmoid
    t3 = (t2 * s).reshape(P, Cexp)                     # (P, Cexp)

    # ---- project 1x1 (linear) ----------------------------------------------
    t4 = jnp.dot(t3.astype(bf16), proj_w_ref[...], preferred_element_type=f32)
    t4 = t4 + proj_b_ref[...]                          # (P, Cproj)

    # ---- neck 1x1 + hswish --------------------------------------------------
    y2 = jnp.dot(t4.astype(bf16), neck_w_ref[...], preferred_element_type=f32)
    y2 = _hswish(y2 + neck_b_ref[...])                 # (P, Cneck)

    # ---- head 1x1, emitted transposed -> lane-dense (J, P) HBM store -------
    heat_t = jnp.einsum('jc,pc->jp', head_wt_ref[...], y2.astype(bf16),
                        preferred_element_type=f32)    # (J, P)
    o_ref[...] = (heat_t + head_bt_ref[...]).astype(o_ref.dtype)


# ---------------------------------------------------------------------------
# Parameters (deterministic init; BN folded to identity)
# ---------------------------------------------------------------------------
def init_params(key, neck_channels=32, num_joints=8):
    ks = jax.random.split(key, 8)

    def w(k, shape, scale=0.1):
        return jax.random.normal(k, shape, jnp.float32) * scale

    z = lambda n: jnp.zeros((1, n), jnp.float32)
    p = {}
    # stem: conv3x3 stride 2, 3 -> 16, hswish.  Layout (9*Cin, Cout), row index
    # = (dh*3 + dw)*Cin + ci  (matches the kernel's tap ordering).
    p["stem_w"], p["stem_b"] = w(ks[0], (9 * 3, 16)), z(16)
    # inverted-residual block: expand 16->64, dw3x3, SE(64->16->64), project 64->32
    p["exp_w"], p["exp_b"] = w(ks[1], (16, 64)), z(64)
    p["dw_w"], p["dw_b"] = w(ks[2], (9, 64)), z(64)
    p["se_w1"], p["se_b1"] = w(ks[3], (64, 16)), z(16)
    p["se_w2"], p["se_b2"] = w(ks[4], (16, 64)), z(64)
    p["proj_w"], p["proj_b"] = w(ks[5], (64, 32)), z(32)
    # neck: 1x1 conv 32 -> neck_channels, hswish (MobileNetV3 output_channels)
    p["neck_w"], p["neck_b"] = w(ks[6], (32, neck_channels)), z(neck_channels)
    # SimpleHead: final 1x1 conv -> num_joints heatmaps
    p["head_w"], p["head_b"] = w(ks[7], (neck_channels, num_joints)), z(num_joints)
    return p


# ---------------------------------------------------------------------------
# MSNet.forward(x, target, target_weight) -> heatmaps (NCHW)
# ---------------------------------------------------------------------------
def msnet_forward(params, x, target, target_weight):
    # target / target_weight are accepted (matching MSNet.forward's signature)
    # but unused: forward only returns heatmaps.
    del target, target_weight
    x = x.astype(jnp.float32)                          # torch.Tensor.float(x)
    Nb, Cin, H, W = x.shape
    assert H % 2 == 0 and W % 2 == 0
    Ho, Wo = H // 2, W // 2
    assert Ho % 8 == 0 and Wo % 8 == 0, "backbone resolution must be (8,128)-friendly"
    P = Ho * Wo
    J = params["head_w"].shape[1]
    Cexp = params["exp_w"].shape[1]

    # NCHW -> NHWC, zero-pad for the 3x3/stride-2 stem, then pixel-unshuffle
    # the padded image so every stride-2 tap inside the kernel is a plain
    # (unstrided) slice.  Same total size as the padded input: no 9x im2col
    # replication is ever materialized in HBM.
    xh = jnp.transpose(x, (0, 2, 3, 1))
    xp = jnp.pad(xh, ((0, 0), (1, 1), (1, 1), (0, 0)))
    Hp, Wp = Ho + 1, Wo + 1
    xs = xp.reshape(Nb, Hp, 2, Wp, 2, Cin)
    xs = xs.transpose(0, 1, 3, 2, 4, 5).reshape(Nb, Hp, Wp, 4 * Cin)

    bf16 = jnp.bfloat16
    args = (
        xs,
        params["stem_w"], params["stem_b"],
        params["exp_w"].astype(bf16), params["exp_b"],
        params["dw_w"], params["dw_b"],
        params["se_w1"], params["se_b1"], params["se_w2"], params["se_b2"],
        params["proj_w"].astype(bf16), params["proj_b"],
        params["neck_w"].astype(bf16), params["neck_b"],
        params["head_w"].T.astype(bf16),               # (J, Cneck) for transposed head
        params["head_b"].T,                            # (J, 1)
    )

    def _full(a):
        nd = a.ndim
        return pl.BlockSpec(a.shape, lambda n: (0,) * nd)

    in_specs = [pl.BlockSpec((pl.Squeezed(), Hp, Wp, 4 * Cin),
                             lambda n: (n, 0, 0, 0))]
    in_specs += [_full(a) for a in args[1:]]

    heat_t = pl.pallas_call(
        functools.partial(_msnet_fused_kernel, Ho=Ho, Wo=Wo, Cin=Cin),
        out_shape=jax.ShapeDtypeStruct((Nb, J, P), jnp.float32),
        grid=(Nb,),
        in_specs=in_specs,
        out_specs=pl.BlockSpec((pl.Squeezed(), J, P), lambda n: (n, 0, 0)),
        scratch_shapes=[pltpu.VMEM((Ho + 2, _LPAD + Wo + 1, Cexp), jnp.float32)],
        compiler_params=pltpu.CompilerParams(dimension_semantics=("parallel",)),
    )(*args)

    # (Nb, J, Ho*Wo) -> NCHW heatmaps.  Pure reshape: the kernel already
    # emitted the joints-major, row-major-spatial layout.
    # TODO(synk): SimpleHead's exact deconv/upsampling stack is not given in
    # the prompt; only the final 1x1 heatmap conv (at backbone resolution) is
    # implemented here.
    return heat_t.reshape(Nb, J, Ho, Wo)


if __name__ == "__main__":
    key = jax.random.PRNGKey(0)
    k_x, k_t, k_p = jax.random.split(key, 3)

    N, C, H, W = 2, 3, 32, 32
    num_joints, neck_channels = 8, 32

    x = jax.random.normal(k_x, (N, C, H, W), jnp.float32)
    target = jax.random.normal(k_t, (N, num_joints, H // 2, W // 2), jnp.float32)
    target_weight = jnp.ones((N, num_joints, 1), jnp.float32)

    params = init_params(k_p, neck_channels=neck_channels, num_joints=num_joints)

    fwd = jax.jit(msnet_forward)
    out = fwd(params, x, target, target_weight)
    out = jax.block_until_ready(out)
    assert out.shape == (N, num_joints, H // 2, W // 2), out.shape
    assert bool(jnp.all(jnp.isfinite(out)))
    print("KERNEL_OK")
</pallas_src>

<mosaic_0001>
module attributes {stable_mosaic.version = 11 : i64} {
  func.func @_msnet_fused_kernel(%arg0: i32, %arg1: memref<1x17x17x12xf32, #tpu.memory_space<vmem>>, %arg2: memref<27x16xf32, #tpu.memory_space<vmem>>, %arg3: memref<1x16xf32, #tpu.memory_space<vmem>>, %arg4: memref<16x64xbf16, #tpu.memory_space<vmem>>, %arg5: memref<1x64xf32, #tpu.memory_space<vmem>>, %arg6: memref<9x64xf32, #tpu.memory_space<vmem>>, %arg7: memref<1x64xf32, #tpu.memory_space<vmem>>, %arg8: memref<64x16xf32, #tpu.memory_space<vmem>>, %arg9: memref<1x16xf32, #tpu.memory_space<vmem>>, %arg10: memref<16x64xf32, #tpu.memory_space<vmem>>, %arg11: memref<1x64xf32, #tpu.memory_space<vmem>>, %arg12: memref<64x32xbf16, #tpu.memory_space<vmem>>, %arg13: memref<1x32xf32, #tpu.memory_space<vmem>>, %arg14: memref<32x32xbf16, #tpu.memory_space<vmem>>, %arg15: memref<1x32xf32, #tpu.memory_space<vmem>>, %arg16: memref<8x32xbf16, #tpu.memory_space<vmem>>, %arg17: memref<8x1xf32, #tpu.memory_space<vmem>>, %arg18: memref<1x8x256xf32, #tpu.memory_space<vmem>>, %arg19: memref<18x25x64xf32, #tpu.memory_space<vmem>>) attributes {dimension_semantics = [#tpu.dimension_semantics<parallel>], iteration_bounds = array<i64: 2>, scalar_prefetch = 0 : i64, scratch_operands = 1 : i64, tpu.core_type = #tpu.core_type<tc>, window_params = [{transform_indices = @transform_0, window_bounds = array<i64: 1, 17, 17, 12>}, {pipeline_mode = #tpu.pipeline_mode<synchronous>, transform_indices = @transform_1, window_bounds = array<i64: 27, 16>}, {pipeline_mode = #tpu.pipeline_mode<synchronous>, transform_indices = @transform_2, window_bounds = array<i64: 1, 16>}, {pipeline_mode = #tpu.pipeline_mode<synchronous>, transform_indices = @transform_3, window_bounds = array<i64: 16, 64>}, {pipeline_mode = #tpu.pipeline_mode<synchronous>, transform_indices = @transform_4, window_bounds = array<i64: 1, 64>}, {pipeline_mode = #tpu.pipeline_mode<synchronous>, transform_indices = @transform_5, window_bounds = array<i64: 9, 64>}, {pipeline_mode = #tpu.pipeline_mode<synchronous>, transform_indices = @transform_6, window_bounds = array<i64: 1, 64>}, {pipeline_mode = #tpu.pipeline_mode<synchronous>, transform_indices = @transform_7, window_bounds = array<i64: 64, 16>}, {pipeline_mode = #tpu.pipeline_mode<synchronous>, transform_indices = @transform_8, window_bounds = array<i64: 1, 16>}, {pipeline_mode = #tpu.pipeline_mode<synchronous>, transform_indices = @transform_9, window_bounds = array<i64: 16, 64>}, {pipeline_mode = #tpu.pipeline_mode<synchronous>, transform_indices = @transform_10, window_bounds = array<i64: 1, 64>}, {pipeline_mode = #tpu.pipeline_mode<synchronous>, transform_indices = @transform_11, window_bounds = array<i64: 64, 32>}, {pipeline_mode = #tpu.pipeline_mode<synchronous>, transform_indices = @transform_12, window_bounds = array<i64: 1, 32>}, {pipeline_mode = #tpu.pipeline_mode<synchronous>, transform_indices = @transform_13, window_bounds = array<i64: 32, 32>}, {pipeline_mode = #tpu.pipeline_mode<synchronous>, transform_indices = @transform_14, window_bounds = array<i64: 1, 32>}, {pipeline_mode = #tpu.pipeline_mode<synchronous>, transform_indices = @transform_15, window_bounds = array<i64: 8, 32>}, {pipeline_mode = #tpu.pipeline_mode<synchronous>, transform_indices = @transform_16, window_bounds = array<i64: 8, 1>}, {transform_indices = @transform_17, window_bounds = array<i64: 1, 8, 256>}]} {
    %c0 = arith.constant 0 : index
    %c0_0 = arith.constant 0 : index
    %c0_1 = arith.constant 0 : index
    %c0_2 = arith.constant 0 : index
    %0 = vector.load %arg1[%c0, %c0_0, %c0_1, %c0_2] : memref<1x17x17x12xf32, #tpu.memory_space<vmem>>, vector<1x17x17x12xf32>
    %1 = vector.shape_cast %0 : vector<1x17x17x12xf32> to vector<17x17x12xf32>
    %cst = arith.constant 0.000000e+00 : f32
    %2 = vector.broadcast %cst : f32 to vector<16x16x16xf32>
    %3 = vector.extract_strided_slice %1 {offsets = [0, 0, 0], sizes = [16, 16, 1], strides = [1, 1, 1]} : vector<17x17x12xf32> to vector<16x16x1xf32>
    %c0_3 = arith.constant 0 : index
    %c0_4 = arith.constant 0 : index
    %4 = vector.load %arg2[%c0_3, %c0_4] : memref<27x16xf32, #tpu.memory_space<vmem>>, vector<1x16xf32>
    %5 = vector.shape_cast %4 : vector<1x16xf32> to vector<1x1x16xf32>
    %6 = vector.broadcast %3 : vector<16x16x1xf32> to vector<16x16x16xf32>
    %7 = vector.broadcast %5 : vector<1x1x16xf32> to vector<16x16x16xf32>
    %8 = arith.mulf %6, %7 : vector<16x16x16xf32>
    %9 = arith.addf %2, %8 : vector<16x16x16xf32>
    %10 = vector.extract_strided_slice %1 {offsets = [0, 0, 1], sizes = [16, 16, 1], strides = [1, 1, 1]} : vector<17x17x12xf32> to vector<16x16x1xf32>
    %c1 = arith.constant 1 : index
    %c0_5 = arith.constant 0 : index
    %11 = vector.load %arg2[%c1, %c0_5] : memref<27x16xf32, #tpu.memory_space<vmem>>, vector<1x16xf32>
    %12 = vector.shape_cast %11 : vector<1x16xf32> to vector<1x1x16xf32>
    %13 = vector.broadcast %10 : vector<16x16x1xf32> to vector<16x16x16xf32>
    %14 = vector.broadcast %12 : vector<1x1x16xf32> to vector<16x16x16xf32>
    %15 = arith.mulf %13, %14 : vector<16x16x16xf32>
    %16 = arith.addf %9, %15 : vector<16x16x16xf32>
    %17 = vector.extract_strided_slice %1 {offsets = [0, 0, 2], sizes = [16, 16, 1], strides = [1, 1, 1]} : vector<17x17x12xf32> to vector<16x16x1xf32>
    %c2 = arith.constant 2 : index
    %c0_6 = arith.constant 0 : index
    %18 = vector.load %arg2[%c2, %c0_6] : memref<27x16xf32, #tpu.memory_space<vmem>>, vector<1x16xf32>
    %19 = vector.shape_cast %18 : vector<1x16xf32> to vector<1x1x16xf32>
    %20 = vector.broadcast %17 : vector<16x16x1xf32> to vector<16x16x16xf32>
    %21 = vector.broadcast %19 : vector<1x1x16xf32> to vector<16x16x16xf32>
    %22 = arith.mulf %20, %21 : vector<16x16x16xf32>
    %23 = arith.addf %16, %22 : vector<16x16x16xf32>
    %24 = vector.extract_strided_slice %1 {offsets = [0, 0, 3], sizes = [16, 16, 1], strides = [1, 1, 1]} : vector<17x17x12xf32> to vector<16x16x1xf32>
    %c3 = arith.constant 3 : index
    %c0_7 = arith.constant 0 : index
    %25 = vector.load %arg2[%c3, %c0_7] : memref<27x16xf32, #tpu.memory_space<vmem>>, vector<1x16xf32>
    %26 = vector.shape_cast %25 : vector<1x16xf32> to vector<1x1x16xf32>
    %27 = vector.broadcast %24 : vector<16x16x1xf32> to vector<16x16x16xf32>
    %28 = vector.broadcast %26 : vector<1x1x16xf32> to vector<16x16x16xf32>
    %29 = arith.mulf %27, %28 : vector<16x16x16xf32>
    %30 = arith.addf %23, %29 : vector<16x16x16xf32>
    %31 = vector.extract_strided_slice %1 {offsets = [0, 0, 4], sizes = [16, 16, 1], strides = [1, 1, 1]} : vector<17x17x12xf32> to vector<16x16x1xf32>
    %c4 = arith.constant 4 : index
    %c0_8 = arith.constant 0 : index
    %32 = vector.load %arg2[%c4, %c0_8] : memref<27x16xf32, #tpu.memory_space<vmem>>, vector<1x16xf32>
    %33 = vector.shape_cast %32 : vector<1x16xf32> to vector<1x1x16xf32>
    %34 = vector.broadcast %31 : vector<16x16x1xf32> to vector<16x16x16xf32>
    %35 = vector.broadcast %33 : vector<1x1x16xf32> to vector<16x16x16xf32>
    %36 = arith.mulf %34, %35 : vector<16x16x16xf32>
    %37 = arith.addf %30, %36 : vector<16x16x16xf32>
    %38 = vector.extract_strided_slice %1 {offsets = [0, 0, 5], sizes = [16, 16, 1], strides = [1, 1, 1]} : vector<17x17x12xf32> to vector<16x16x1xf32>
    %c5 = arith.constant 5 : index
    %c0_9 = arith.constant 0 : index
    %39 = vector.load %arg2[%c5, %c0_9] : memref<27x16xf32, #tpu.memory_space<vmem>>, vector<1x16xf32>
    %40 = vector.shape_cast %39 : vector<1x16xf32> to vector<1x1x16xf32>
    %41 = vector.broadcast %38 : vector<16x16x1xf32> to vector<16x16x16xf32>
    %42 = vector.broadcast %40 : vector<1x1x16xf32> to vector<16x16x16xf32>
    %43 = arith.mulf %41, %42 : vector<16x16x16xf32>
    %44 = arith.addf %37, %43 : vector<16x16x16xf32>
    %45 = vector.extract_strided_slice %1 {offsets = [0, 1, 0], sizes = [16, 16, 1], strides = [1, 1, 1]} : vector<17x17x12xf32> to vector<16x16x1xf32>
    %c6 = arith.constant 6 : index
    %c0_10 = arith.constant 0 : index
    %46 = vector.load %arg2[%c6, %c0_10] : memref<27x16xf32, #tpu.memory_space<vmem>>, vector<1x16xf32>
    %47 = vector.shape_cast %46 : vector<1x16xf32> to vector<1x1x16xf32>
    %48 = vector.broadcast %45 : vector<16x16x1xf32> to vector<16x16x16xf32>
    %49 = vector.broadcast %47 : vector<1x1x16xf32> to vector<16x16x16xf32>
    %50 = arith.mulf %48, %49 : vector<16x16x16xf32>
    %51 = arith.addf %44, %50 : vector<16x16x16xf32>
    %52 = vector.extract_strided_slice %1 {offsets = [0, 1, 1], sizes = [16, 16, 1], strides = [1, 1, 1]} : vector<17x17x12xf32> to vector<16x16x1xf32>
    %c7 = arith.constant 7 : index
    %c0_11 = arith.constant 0 : index
    %53 = vector.load %arg2[%c7, %c0_11] : memref<27x16xf32, #tpu.memory_space<vmem>>, vector<1x16xf32>
    %54 = vector.shape_cast %53 : vector<1x16xf32> to vector<1x1x16xf32>
    %55 = vector.broadcast %52 : vector<16x16x1xf32> to vector<16x16x16xf32>
    %56 = vector.broadcast %54 : vector<1x1x16xf32> to vector<16x16x16xf32>
    %57 = arith.mulf %55, %56 : vector<16x16x16xf32>
    %58 = arith.addf %51, %57 : vector<16x16x16xf32>
    %59 = vector.extract_strided_slice %1 {offsets = [0, 1, 2], sizes = [16, 16, 1], strides = [1, 1, 1]} : vector<17x17x12xf32> to vector<16x16x1xf32>
    %c8 = arith.constant 8 : index
    %c0_12 = arith.constant 0 : index
    %60 = vector.load %arg2[%c8, %c0_12] : memref<27x16xf32, #tpu.memory_space<vmem>>, vector<1x16xf32>
    %61 = vector.shape_cast %60 : vector<1x16xf32> to vector<1x1x16xf32>
    %62 = vector.broadcast %59 : vector<16x16x1xf32> to vector<16x16x16xf32>
    %63 = vector.broadcast %61 : vector<1x1x16xf32> to vector<16x16x16xf32>
    %64 = arith.mulf %62, %63 : vector<16x16x16xf32>
    %65 = arith.addf %58, %64 : vector<16x16x16xf32>
    %66 = vector.extract_strided_slice %1 {offsets = [0, 0, 6], sizes = [16, 16, 1], strides = [1, 1, 1]} : vector<17x17x12xf32> to vector<16x16x1xf32>
    %c9 = arith.constant 9 : index
    %c0_13 = arith.constant 0 : index
    %67 = vector.load %arg2[%c9, %c0_13] : memref<27x16xf32, #tpu.memory_space<vmem>>, vector<1x16xf32>
    %68 = vector.shape_cast %67 : vector<1x16xf32> to vector<1x1x16xf32>
    %69 = vector.broadcast %66 : vector<16x16x1xf32> to vector<16x16x16xf32>
    %70 = vector.broadcast %68 : vector<1x1x16xf32> to vector<16x16x16xf32>
    %71 = arith.mulf %69, %70 : vector<16x16x16xf32>
    %72 = arith.addf %65, %71 : vector<16x16x16xf32>
    %73 = vector.extract_strided_slice %1 {offsets = [0, 0, 7], sizes = [16, 16, 1], strides = [1, 1, 1]} : vector<17x17x12xf32> to vector<16x16x1xf32>
    %c10 = arith.constant 10 : index
    %c0_14 = arith.constant 0 : index
    %74 = vector.load %arg2[%c10, %c0_14] : memref<27x16xf32, #tpu.memory_space<vmem>>, vector<1x16xf32>
    %75 = vector.shape_cast %74 : vector<1x16xf32> to vector<1x1x16xf32>
    %76 = vector.broadcast %73 : vector<16x16x1xf32> to vector<16x16x16xf32>
    %77 = vector.broadcast %75 : vector<1x1x16xf32> to vector<16x16x16xf32>
    %78 = arith.mulf %76, %77 : vector<16x16x16xf32>
    %79 = arith.addf %72, %78 : vector<16x16x16xf32>
    %80 = vector.extract_strided_slice %1 {offsets = [0, 0, 8], sizes = [16, 16, 1], strides = [1, 1, 1]} : vector<17x17x12xf32> to vector<16x16x1xf32>
    %c11 = arith.constant 11 : index
    %c0_15 = arith.constant 0 : index
    %81 = vector.load %arg2[%c11, %c0_15] : memref<27x16xf32, #tpu.memory_space<vmem>>, vector<1x16xf32>
    %82 = vector.shape_cast %81 : vector<1x16xf32> to vector<1x1x16xf32>
    %83 = vector.broadcast %80 : vector<16x16x1xf32> to vector<16x16x16xf32>
    %84 = vector.broadcast %82 : vector<1x1x16xf32> to vector<16x16x16xf32>
    %85 = arith.mulf %83, %84 : vector<16x16x16xf32>
    %86 = arith.addf %79, %85 : vector<16x16x16xf32>
    %87 = vector.extract_strided_slice %1 {offsets = [0, 0, 9], sizes = [16, 16, 1], strides = [1, 1, 1]} : vector<17x17x12xf32> to vector<16x16x1xf32>
    %c12 = arith.constant 12 : index
    %c0_16 = arith.constant 0 : index
    %88 = vector.load %arg2[%c12, %c0_16] : memref<27x16xf32, #tpu.memory_space<vmem>>, vector<1x16xf32>
    %89 = vector.shape_cast %88 : vector<1x16xf32> to vector<1x1x16xf32>
    %90 = vector.broadcast %87 : vector<16x16x1xf32> to vector<16x16x16xf32>
    %91 = vector.broadcast %89 : vector<1x1x16xf32> to vector<16x16x16xf32>
    %92 = arith.mulf %90, %91 : vector<16x16x16xf32>
    %93 = arith.addf %86, %92 : vector<16x16x16xf32>
    %94 = vector.extract_strided_slice %1 {offsets = [0, 0, 10], sizes = [16, 16, 1], strides = [1, 1, 1]} : vector<17x17x12xf32> to vector<16x16x1xf32>
    %c13 = arith.constant 13 : index
    %c0_17 = arith.constant 0 : index
    %95 = vector.load %arg2[%c13, %c0_17] : memref<27x16xf32, #tpu.memory_space<vmem>>, vector<1x16xf32>
    %96 = vector.shape_cast %95 : vector<1x16xf32> to vector<1x1x16xf32>
    %97 = vector.broadcast %94 : vector<16x16x1xf32> to vector<16x16x16xf32>
    %98 = vector.broadcast %96 : vector<1x1x16xf32> to vector<16x16x16xf32>
    %99 = arith.mulf %97, %98 : vector<16x16x16xf32>
    %100 = arith.addf %93, %99 : vector<16x16x16xf32>
    %101 = vector.extract_strided_slice %1 {offsets = [0, 0, 11], sizes = [16, 16, 1], strides = [1, 1, 1]} : vector<17x17x12xf32> to vector<16x16x1xf32>
    %c14 = arith.constant 14 : index
    %c0_18 = arith.constant 0 : index
    %102 = vector.load %arg2[%c14, %c0_18] : memref<27x16xf32, #tpu.memory_space<vmem>>, vector<1x16xf32>
    %103 = vector.shape_cast %102 : vector<1x16xf32> to vector<1x1x16xf32>
    %104 = vector.broadcast %101 : vector<16x16x1xf32> to vector<16x16x16xf32>
    %105 = vector.broadcast %103 : vector<1x1x16xf32> to vector<16x16x16xf32>
    %106 = arith.mulf %104, %105 : vector<16x16x16xf32>
    %107 = arith.addf %100, %106 : vector<16x16x16xf32>
    %108 = vector.extract_strided_slice %1 {offsets = [0, 1, 6], sizes = [16, 16, 1], strides = [1, 1, 1]} : vector<17x17x12xf32> to vector<16x16x1xf32>
    %c15 = arith.constant 15 : index
    %c0_19 = arith.constant 0 : index
    %109 = vector.load %arg2[%c15, %c0_19] : memref<27x16xf32, #tpu.memory_space<vmem>>, vector<1x16xf32>
    %110 = vector.shape_cast %109 : vector<1x16xf32> to vector<1x1x16xf32>
    %111 = vector.broadcast %108 : vector<16x16x1xf32> to vector<16x16x16xf32>
    %112 = vector.broadcast %110 : vector<1x1x16xf32> to vector<16x16x16xf32>
    %113 = arith.mulf %111, %112 : vector<16x16x16xf32>
    %114 = arith.addf %107, %113 : vector<16x16x16xf32>
    %115 = vector.extract_strided_slice %1 {offsets = [0, 1, 7], sizes = [16, 16, 1], strides = [1, 1, 1]} : vector<17x17x12xf32> to vector<16x16x1xf32>
    %c16 = arith.constant 16 : index
    %c0_20 = arith.constant 0 : index
    %116 = vector.load %arg2[%c16, %c0_20] : memref<27x16xf32, #tpu.memory_space<vmem>>, vector<1x16xf32>
    %117 = vector.shape_cast %116 : vector<1x16xf32> to vector<1x1x16xf32>
    %118 = vector.broadcast %115 : vector<16x16x1xf32> to vector<16x16x16xf32>
    %119 = vector.broadcast %117 : vector<1x1x16xf32> to vector<16x16x16xf32>
    %120 = arith.mulf %118, %119 : vector<16x16x16xf32>
    %121 = arith.addf %114, %120 : vector<16x16x16xf32>
    %122 = vector.extract_strided_slice %1 {offsets = [0, 1, 8], sizes = [16, 16, 1], strides = [1, 1, 1]} : vector<17x17x12xf32> to vector<16x16x1xf32>
    %c17 = arith.constant 17 : index
    %c0_21 = arith.constant 0 : index
    %123 = vector.load %arg2[%c17, %c0_21] : memref<27x16xf32, #tpu.memory_space<vmem>>, vector<1x16xf32>
    %124 = vector.shape_cast %123 : vector<1x16xf32> to vector<1x1x16xf32>
    %125 = vector.broadcast %122 : vector<16x16x1xf32> to vector<16x16x16xf32>
    %126 = vector.broadcast %124 : vector<1x1x16xf32> to vector<16x16x16xf32>
    %127 = arith.mulf %125, %126 : vector<16x16x16xf32>
    %128 = arith.addf %121, %127 : vector<16x16x16xf32>
    %129 = vector.extract_strided_slice %1 {offsets = [1, 0, 0], sizes = [16, 16, 1], strides = [1, 1, 1]} : vector<17x17x12xf32> to vector<16x16x1xf32>
    %c18 = arith.constant 18 : index
    %c0_22 = arith.constant 0 : index
    %130 = vector.load %arg2[%c18, %c0_22] : memref<27x16xf32, #tpu.memory_space<vmem>>, vector<1x16xf32>
    %131 = vector.shape_cast %130 : vector<1x16xf32> to vector<1x1x16xf32>
    %132 = vector.broadcast %129 : vector<16x16x1xf32> to vector<16x16x16xf32>
    %133 = vector.broadcast %131 : vector<1x1x16xf32> to vector<16x16x16xf32>
    %134 = arith.mulf %132, %133 : vector<16x16x16xf32>
    %135 = arith.addf %128, %134 : vector<16x16x16xf32>
    %136 = vector.extract_strided_slice %1 {offsets = [1, 0, 1], sizes = [16, 16, 1], strides = [1, 1, 1]} : vector<17x17x12xf32> to vector<16x16x1xf32>
    %c19 = arith.constant 19 : index
    %c0_23 = arith.constant 0 : index
    %137 = vector.load %arg2[%c19, %c0_23] : memref<27x16xf32, #tpu.memory_space<vmem>>, vector<1x16xf32>
    %138 = vector.shape_cast %137 : vector<1x16xf32> to vector<1x1x16xf32>
    %139 = vector.broadcast %136 : vector<16x16x1xf32> to vector<16x16x16xf32>
    %140 = vector.broadcast %138 : vector<1x1x16xf32> to vector<16x16x16xf32>
    %141 = arith.mulf %139, %140 : vector<16x16x16xf32>
    %142 = arith.addf %135, %141 : vector<16x16x16xf32>
    %143 = vector.extract_strided_slice %1 {offsets = [1, 0, 2], sizes = [16, 16, 1], strides = [1, 1, 1]} : vector<17x17x12xf32> to vector<16x16x1xf32>
    %c20 = arith.constant 20 : index
    %c0_24 = arith.constant 0 : index
    %144 = vector.load %arg2[%c20, %c0_24] : memref<27x16xf32, #tpu.memory_space<vmem>>, vector<1x16xf32>
    %145 = vector.shape_cast %144 : vector<1x16xf32> to vector<1x1x16xf32>
    %146 = vector.broadcast %143 : vector<16x16x1xf32> to vector<16x16x16xf32>
    %147 = vector.broadcast %145 : vector<1x1x16xf32> to vector<16x16x16xf32>
    %148 = arith.mulf %146, %147 : vector<16x16x16xf32>
    %149 = arith.addf %142, %148 : vector<16x16x16xf32>
    %150 = vector.extract_strided_slice %1 {offsets = [1, 0, 3], sizes = [16, 16, 1], strides = [1, 1, 1]} : vector<17x17x12xf32> to vector<16x16x1xf32>
    %c21 = arith.constant 21 : index
    %c0_25 = arith.constant 0 : index
    %151 = vector.load %arg2[%c21, %c0_25] : memref<27x16xf32, #tpu.memory_space<vmem>>, vector<1x16xf32>
    %152 = vector.shape_cast %151 : vector<1x16xf32> to vector<1x1x16xf32>
    %153 = vector.broadcast %150 : vector<16x16x1xf32> to vector<16x16x16xf32>
    %154 = vector.broadcast %152 : vector<1x1x16xf32> to vector<16x16x16xf32>
    %155 = arith.mulf %153, %154 : vector<16x16x16xf32>
    %156 = arith.addf %149, %155 : vector<16x16x16xf32>
    %157 = vector.extract_strided_slice %1 {offsets = [1, 0, 4], sizes = [16, 16, 1], strides = [1, 1, 1]} : vector<17x17x12xf32> to vector<16x16x1xf32>
    %c22 = arith.constant 22 : index
    %c0_26 = arith.constant 0 : index
    %158 = vector.load %arg2[%c22, %c0_26] : memref<27x16xf32, #tpu.memory_space<vmem>>, vector<1x16xf32>
    %159 = vector.shape_cast %158 : vector<1x16xf32> to vector<1x1x16xf32>
    %160 = vector.broadcast %157 : vector<16x16x1xf32> to vector<16x16x16xf32>
    %161 = vector.broadcast %159 : vector<1x1x16xf32> to vector<16x16x16xf32>
    %162 = arith.mulf %160, %161 : vector<16x16x16xf32>
    %163 = arith.addf %156, %162 : vector<16x16x16xf32>
    %164 = vector.extract_strided_slice %1 {offsets = [1, 0, 5], sizes = [16, 16, 1], strides = [1, 1, 1]} : vector<17x17x12xf32> to vector<16x16x1xf32>
    %c23 = arith.constant 23 : index
    %c0_27 = arith.constant 0 : index
    %165 = vector.load %arg2[%c23, %c0_27] : memref<27x16xf32, #tpu.memory_space<vmem>>, vector<1x16xf32>
    %166 = vector.shape_cast %165 : vector<1x16xf32> to vector<1x1x16xf32>
    %167 = vector.broadcast %164 : vector<16x16x1xf32> to vector<16x16x16xf32>
    %168 = vector.broadcast %166 : vector<1x1x16xf32> to vector<16x16x16xf32>
    %169 = arith.mulf %167, %168 : vector<16x16x16xf32>
    %170 = arith.addf %163, %169 : vector<16x16x16xf32>
    %171 = vector.extract_strided_slice %1 {offsets = [1, 1, 0], sizes = [16, 16, 1], strides = [1, 1, 1]} : vector<17x17x12xf32> to vector<16x16x1xf32>
    %c24 = arith.constant 24 : index
    %c0_28 = arith.constant 0 : index
    %172 = vector.load %arg2[%c24, %c0_28] : memref<27x16xf32, #tpu.memory_space<vmem>>, vector<1x16xf32>
    %173 = vector.shape_cast %172 : vector<1x16xf32> to vector<1x1x16xf32>
    %174 = vector.broadcast %171 : vector<16x16x1xf32> to vector<16x16x16xf32>
    %175 = vector.broadcast %173 : vector<1x1x16xf32> to vector<16x16x16xf32>
    %176 = arith.mulf %174, %175 : vector<16x16x16xf32>
    %177 = arith.addf %170, %176 : vector<16x16x16xf32>
    %178 = vector.extract_strided_slice %1 {offsets = [1, 1, 1], sizes = [16, 16, 1], strides = [1, 1, 1]} : vector<17x17x12xf32> to vector<16x16x1xf32>
    %c25 = arith.constant 25 : index
    %c0_29 = arith.constant 0 : index
    %179 = vector.load %arg2[%c25, %c0_29] : memref<27x16xf32, #tpu.memory_space<vmem>>, vector<1x16xf32>
    %180 = vector.shape_cast %179 : vector<1x16xf32> to vector<1x1x16xf32>
    %181 = vector.broadcast %178 : vector<16x16x1xf32> to vector<16x16x16xf32>
    %182 = vector.broadcast %180 : vector<1x1x16xf32> to vector<16x16x16xf32>
    %183 = arith.mulf %181, %182 : vector<16x16x16xf32>
    %184 = arith.addf %177, %183 : vector<16x16x16xf32>
    %185 = vector.extract_strided_slice %1 {offsets = [1, 1, 2], sizes = [16, 16, 1], strides = [1, 1, 1]} : vector<17x17x12xf32> to vector<16x16x1xf32>
    %c26 = arith.constant 26 : index
    %c0_30 = arith.constant 0 : index
    %186 = vector.load %arg2[%c26, %c0_30] : memref<27x16xf32, #tpu.memory_space<vmem>>, vector<1x16xf32>
    %187 = vector.shape_cast %186 : vector<1x16xf32> to vector<1x1x16xf32>
    %188 = vector.broadcast %185 : vector<16x16x1xf32> to vector<16x16x16xf32>
    %189 = vector.broadcast %187 : vector<1x1x16xf32> to vector<16x16x16xf32>
    %190 = arith.mulf %188, %189 : vector<16x16x16xf32>
    %191 = arith.addf %184, %190 : vector<16x16x16xf32>
    %c0_31 = arith.constant 0 : index
    %c0_32 = arith.constant 0 : index
    %192 = vector.load %arg3[%c0_31, %c0_32] : memref<1x16xf32, #tpu.memory_space<vmem>>, vector<1x16xf32>
    %193 = vector.shape_cast %192 : vector<1x16xf32> to vector<1x1x16xf32>
    %194 = vector.broadcast %193 : vector<1x1x16xf32> to vector<16x16x16xf32>
    %195 = arith.addf %191, %194 : vector<16x16x16xf32>
    %cst_33 = arith.constant 3.000000e+00 : f32
    %196 = vector.broadcast %cst_33 : f32 to vector<16x16x16xf32>
    %197 = arith.addf %195, %196 : vector<16x16x16xf32>
    %cst_34 = arith.constant 0.000000e+00 : f32
    %cst_35 = arith.constant 6.000000e+00 : f32
    %198 = vector.broadcast %cst_34 : f32 to vector<16x16x16xf32>
    %199 = arith.maximumf %198, %197 : vector<16x16x16xf32>
    %200 = vector.broadcast %cst_35 : f32 to vector<16x16x16xf32>
    %201 = arith.minimumf %200, %199 : vector<16x16x16xf32>
    %202 = arith.mulf %195, %201 : vector<16x16x16xf32>
    %cst_36 = arith.constant 0.166666672 : f32
    %203 = vector.broadcast %cst_36 : f32 to vector<16x16x16xf32>
    %204 = arith.mulf %202, %203 : vector<16x16x16xf32>
    %205 = vector.shape_cast %204 : vector<16x16x16xf32> to vector<256x16xf32>
    %206 = arith.truncf %205 : vector<256x16xf32> to vector<256x16xbf16>
    %c0_37 = arith.constant 0 : index
    %c0_38 = arith.constant 0 : index
    %207 = vector.load %arg4[%c0_37, %c0_38] : memref<16x64xbf16, #tpu.memory_space<vmem>>, vector<16x64xbf16>
    %cst_39 = arith.constant dense<0.000000e+00> : vector<256x64xf32>
    %208 = tpu.matmul %206, %207, %cst_39 {dimension_numbers = #tpu.dot_dimension_numbers<[1], [0], [0], [1], [0, 0, 1, 1], [], []>} : vector<256x16xbf16>, vector<16x64xbf16>, vector<256x64xf32> -> vector<256x64xf32>
    %c0_40 = arith.constant 0 : index
    %c0_41 = arith.constant 0 : index
    %209 = vector.load %arg5[%c0_40, %c0_41] : memref<1x64xf32, #tpu.memory_space<vmem>>, vector<1x64xf32>
    %210 = vector.broadcast %209 : vector<1x64xf32> to vector<256x64xf32>
    %211 = arith.addf %208, %210 : vector<256x64xf32>
    %cst_42 = arith.constant 3.000000e+00 : f32
    %212 = vector.broadcast %cst_42 : f32 to vector<256x64xf32>
    %213 = arith.addf %211, %212 : vector<256x64xf32>
    %cst_43 = arith.constant 0.000000e+00 : f32
    %cst_44 = arith.constant 6.000000e+00 : f32
    %214 = vector.broadcast %cst_43 : f32 to vector<256x64xf32>
    %215 = arith.maximumf %214, %213 : vector<256x64xf32>
    %216 = vector.broadcast %cst_44 : f32 to vector<256x64xf32>
    %217 = arith.minimumf %216, %215 : vector<256x64xf32>
    %218 = arith.mulf %211, %217 : vector<256x64xf32>
    %cst_45 = arith.constant 0.166666672 : f32
    %219 = vector.broadcast %cst_45 : f32 to vector<256x64xf32>
    %220 = arith.mulf %218, %219 : vector<256x64xf32>
    %cst_46 = arith.constant 0.000000e+00 : f32
    %221 = vector.broadcast %cst_46 : f32 to vector<18x25x64xf32>
    %c0_47 = arith.constant 0 : index
    %c0_48 = arith.constant 0 : index
    %c0_49 = arith.constant 0 : index
    %222 = vector.load %arg19[%c0_47, %c0_48, %c0_49] : memref<18x25x64xf32, #tpu.memory_space<vmem>>, vector<18x25x64xf32>
    tpu.vector_store %arg19[%c0_47, %c0_48, %c0_49], %221 {strides = array<i32>} : memref<18x25x64xf32, #tpu.memory_space<vmem>>, vector<18x25x64xf32>,
    %223 = vector.shape_cast %220 : vector<256x64xf32> to vector<16x16x64xf32>
    %c1_50 = arith.constant 1 : index
    %c8_51 = arith.constant 8 : index
    %c0_52 = arith.constant 0 : index
    %224 = vector.load %arg19[%c1_50, %c8_51, %c0_52] : memref<18x25x64xf32, #tpu.memory_space<vmem>>, vector<16x16x64xf32>
    tpu.vector_store %arg19[%c1_50, %c8_51, %c0_52], %223 {strides = array<i32>} : memref<18x25x64xf32, #tpu.memory_space<vmem>>, vector<16x16x64xf32>,
    %cst_53 = arith.constant 0.000000e+00 : f32
    %225 = vector.broadcast %cst_53 : f32 to vector<16x16x64xf32>
    %c0_54 = arith.constant 0 : index
    %c7_55 = arith.constant 7 : index
    %c0_56 = arith.constant 0 : index
    %226 = vector.load %arg19[%c0_54, %c7_55, %c0_56] : memref<18x25x64xf32, #tpu.memory_space<vmem>>, vector<18x16x64xf32>
    %227 = vector.extract_strided_slice %226 {offsets = [0, 0, 0], sizes = [16, 16, 64], strides = [1, 1, 1]} : vector<18x16x64xf32> to vector<16x16x64xf32>
    %c0_57 = arith.constant 0 : index
    %c0_58 = arith.constant 0 : index
    %228 = vector.load %arg6[%c0_57, %c0_58] : memref<9x64xf32, #tpu.memory_space<vmem>>, vector<1x64xf32>
    %229 = vector.shape_cast %228 : vector<1x64xf32> to vector<1x1x64xf32>
    %230 = vector.broadcast %229 : vector<1x1x64xf32> to vector<16x16x64xf32>
    %231 = arith.mulf %227, %230 : vector<16x16x64xf32>
    %232 = arith.addf %225, %231 : vector<16x16x64xf32>
    %233 = vector.extract_strided_slice %226 {offsets = [1, 0, 0], sizes = [16, 16, 64], strides = [1, 1, 1]} : vector<18x16x64xf32> to vector<16x16x64xf32>
    %c3_59 = arith.constant 3 : index
    %c0_60 = arith.constant 0 : index
    %234 = vector.load %arg6[%c3_59, %c0_60] : memref<9x64xf32, #tpu.memory_space<vmem>>, vector<1x64xf32>
    %235 = vector.shape_cast %234 : vector<1x64xf32> to vector<1x1x64xf32>
    %236 = vector.broadcast %235 : vector<1x1x64xf32> to vector<16x16x64xf32>
    %237 = arith.mulf %233, %236 : vector<16x16x64xf32>
    %238 = arith.addf %232, %237 : vector<16x16x64xf32>
    %239 = vector.extract_strided_slice %226 {offsets = [2, 0, 0], sizes = [16, 16, 64], strides = [1, 1, 1]} : vector<18x16x64xf32> to vector<16x16x64xf32>
    %c6_61 = arith.constant 6 : index
    %c0_62 = arith.constant 0 : index
    %240 = vector.load %arg6[%c6_61, %c0_62] : memref<9x64xf32, #tpu.memory_space<vmem>>, vector<1x64xf32>
    %241 = vector.shape_cast %240 : vector<1x64xf32> to vector<1x1x64xf32>
    %242 = vector.broadcast %241 : vector<1x1x64xf32> to vector<16x16x64xf32>
    %243 = arith.mulf %239, %242 : vector<16x16x64xf32>
    %244 = arith.addf %238, %243 : vector<16x16x64xf32>
    %c0_63 = arith.constant 0 : index
    %c8_64 = arith.constant 8 : index
    %c0_65 = arith.constant 0 : index
    %245 = vector.load %arg19[%c0_63, %c8_64, %c0_65] : memref<18x25x64xf32, #tpu.memory_space<vmem>>, vector<18x16x64xf32>
    %246 = vector.extract_strided_slice %245 {offsets = [0, 0, 0], sizes = [16, 16, 64], strides = [1, 1, 1]} : vector<18x16x64xf32> to vector<16x16x64xf32>
    %c1_66 = arith.constant 1 : index
    %c0_67 = arith.constant 0 : index
    %247 = vector.load %arg6[%c1_66, %c0_67] : memref<9x64xf32, #tpu.memory_space<vmem>>, vector<1x64xf32>
    %248 = vector.shape_cast %247 : vector<1x64xf32> to vector<1x1x64xf32>
    %249 = vector.broadcast %248 : vector<1x1x64xf32> to vector<16x16x64xf32>
    %250 = arith.mulf %246, %249 : vector<16x16x64xf32>
    %251 = arith.addf %244, %250 : vector<16x16x64xf32>
    %252 = vector.extract_strided_slice %245 {offsets = [1, 0, 0], sizes = [16, 16, 64], strides = [1, 1, 1]} : vector<18x16x64xf32> to vector<16x16x64xf32>
    %c4_68 = arith.constant 4 : index
    %c0_69 = arith.constant 0 : index
    %253 = vector.load %arg6[%c4_68, %c0_69] : memref<9x64xf32, #tpu.memory_space<vmem>>, vector<1x64xf32>
    %254 = vector.shape_cast %253 : vector<1x64xf32> to vector<1x1x64xf32>
    %255 = vector.broadcast %254 : vector<1x1x64xf32> to vector<16x16x64xf32>
    %256 = arith.mulf %252, %255 : vector<16x16x64xf32>
    %257 = arith.addf %251, %256 : vector<16x16x64xf32>
    %258 = vector.extract_strided_slice %245 {offsets = [2, 0, 0], sizes = [16, 16, 64], strides = [1, 1, 1]} : vector<18x16x64xf32> to vector<16x16x64xf32>
    %c7_70 = arith.constant 7 : index
    %c0_71 = arith.constant 0 : index
    %259 = vector.load %arg6[%c7_70, %c0_71] : memref<9x64xf32, #tpu.memory_space<vmem>>, vector<1x64xf32>
    %260 = vector.shape_cast %259 : vector<1x64xf32> to vector<1x1x64xf32>
    %261 = vector.broadcast %260 : vector<1x1x64xf32> to vector<16x16x64xf32>
    %262 = arith.mulf %258, %261 : vector<16x16x64xf32>
    %263 = arith.addf %257, %262 : vector<16x16x64xf32>
    %c0_72 = arith.constant 0 : index
    %c9_73 = arith.constant 9 : index
    %c0_74 = arith.constant 0 : index
    %264 = vector.load %arg19[%c0_72, %c9_73, %c0_74] : memref<18x25x64xf32, #tpu.memory_space<vmem>>, vector<18x16x64xf32>
    %265 = vector.extract_strided_slice %264 {offsets = [0, 0, 0], sizes = [16, 16, 64], strides = [1, 1, 1]} : vector<18x16x64xf32> to vector<16x16x64xf32>
    %c2_75 = arith.constant 2 : index
    %c0_76 = arith.constant 0 : index
    %266 = vector.load %arg6[%c2_75, %c0_76] : memref<9x64xf32, #tpu.memory_space<vmem>>, vector<1x64xf32>
    %267 = vector.shape_cast %266 : vector<1x64xf32> to vector<1x1x64xf32>
    %268 = vector.broadcast %267 : vector<1x1x64xf32> to vector<16x16x64xf32>
    %269 = arith.mulf %265, %268 : vector<16x16x64xf32>
    %270 = arith.addf %263, %269 : vector<16x16x64xf32>
    %271 = vector.extract_strided_slice %264 {offsets = [1, 0, 0], sizes = [16, 16, 64], strides = [1, 1, 1]} : vector<18x16x64xf32> to vector<16x16x64xf32>
    %c5_77 = arith.constant 5 : index
    %c0_78 = arith.constant 0 : index
    %272 = vector.load %arg6[%c5_77, %c0_78] : memref<9x64xf32, #tpu.memory_space<vmem>>, vector<1x64xf32>
    %273 = vector.shape_cast %272 : vector<1x64xf32> to vector<1x1x64xf32>
    %274 = vector.broadcast %273 : vector<1x1x64xf32> to vector<16x16x64xf32>
    %275 = arith.mulf %271, %274 : vector<16x16x64xf32>
    %276 = arith.addf %270, %275 : vector<16x16x64xf32>
    %277 = vector.extract_strided_slice %264 {offsets = [2, 0, 0], sizes = [16, 16, 64], strides = [1, 1, 1]} : vector<18x16x64xf32> to vector<16x16x64xf32>
    %c8_79 = arith.constant 8 : index
    %c0_80 = arith.constant 0 : index
    %278 = vector.load %arg6[%c8_79, %c0_80] : memref<9x64xf32, #tpu.memory_space<vmem>>, vector<1x64xf32>
    %279 = vector.shape_cast %278 : vector<1x64xf32> to vector<1x1x64xf32>
    %280 = vector.broadcast %279 : vector<1x1x64xf32> to vector<16x16x64xf32>
    %281 = arith.mulf %277, %280 : vector<16x16x64xf32>
    %282 = arith.addf %276, %281 : vector<16x16x64xf32>
    %c0_81 = arith.constant 0 : index
    %c0_82 = arith.constant 0 : index
    %283 = vector.load %arg7[%c0_81, %c0_82] : memref<1x64xf32, #tpu.memory_space<vmem>>, vector<1x64xf32>
    %284 = vector.shape_cast %283 : vector<1x64xf32> to vector<1x1x64xf32>
    %285 = vector.broadcast %284 : vector<1x1x64xf32> to vector<16x16x64xf32>
    %286 = arith.addf %282, %285 : vector<16x16x64xf32>
    %cst_83 = arith.constant 3.000000e+00 : f32
    %287 = vector.broadcast %cst_83 : f32 to vector<16x16x64xf32>
    %288 = arith.addf %286, %287 : vector<16x16x64xf32>
    %cst_84 = arith.constant 0.000000e+00 : f32
    %cst_85 = arith.constant 6.000000e+00 : f32
    %289 = vector.broadcast %cst_84 : f32 to vector<16x16x64xf32>
    %290 = arith.maximumf %289, %288 : vector<16x16x64xf32>
    %291 = vector.broadcast %cst_85 : f32 to vector<16x16x64xf32>
    %292 = arith.minimumf %291, %290 : vector<16x16x64xf32>
    %293 = arith.mulf %286, %292 : vector<16x16x64xf32>
    %cst_86 = arith.constant 0.166666672 : f32
    %294 = vector.broadcast %cst_86 : f32 to vector<16x16x64xf32>
    %295 = arith.mulf %293, %294 : vector<16x16x64xf32>
    %cst_87 = arith.constant dense<0.000000e+00> : vector<64xf32>
    %296 = vector.multi_reduction <add>, %295, %cst_87 [0, 1] : vector<16x16x64xf32> to vector<64xf32>
    %cst_88 = arith.constant 2.560000e+02 : f32
    %297 = vector.broadcast %cst_88 : f32 to vector<64xf32>
    %298 = arith.divf %296, %297 : vector<64xf32>
    %299 = vector.shape_cast %298 : vector<64xf32> to vector<1x64xf32>
    %c0_89 = arith.constant 0 : index
    %c0_90 = arith.constant 0 : index
    %300 = vector.load %arg8[%c0_89, %c0_90] : memref<64x16xf32, #tpu.memory_space<vmem>>, vector<64x16xf32>
    %cst_91 = arith.constant dense<0.000000e+00> : vector<1x16xf32>
    %301 = tpu.matmul %299, %300, %cst_91 {dimension_numbers = #tpu.dot_dimension_numbers<[1], [0], [0], [1], [0, 0, 1, 1], [], []>} : vector<1x64xf32>, vector<64x16xf32>, vector<1x16xf32> -> vector<1x16xf32>
    %c0_92 = arith.constant 0 : index
    %c0_93 = arith.constant 0 : index
    %302 = vector.load %arg9[%c0_92, %c0_93] : memref<1x16xf32, #tpu.memory_space<vmem>>, vector<1x16xf32>
    %303 = arith.addf %301, %302 : vector<1x16xf32>
    %cst_94 = arith.constant 0.000000e+00 : f32
    %304 = vector.broadcast %cst_94 : f32 to vector<1x16xf32>
    %305 = arith.maximumf %303, %304 : vector<1x16xf32>
    %c0_95 = arith.constant 0 : index
    %c0_96 = arith.constant 0 : index
    %306 = vector.load %arg10[%c0_95, %c0_96] : memref<16x64xf32, #tpu.memory_space<vmem>>, vector<16x64xf32>
    %cst_97 = arith.constant dense<0.000000e+00> : vector<1x64xf32>
    %307 = tpu.matmul %305, %306, %cst_97 {dimension_numbers = #tpu.dot_dimension_numbers<[1], [0], [0], [1], [0, 0, 1, 1], [], []>} : vector<1x16xf32>, vector<16x64xf32>, vector<1x64xf32> -> vector<1x64xf32>
    %c0_98 = arith.constant 0 : index
    %c0_99 = arith.constant 0 : index
    %308 = vector.load %arg11[%c0_98, %c0_99] : memref<1x64xf32, #tpu.memory_space<vmem>>, vector<1x64xf32>
    %309 = arith.addf %307, %308 : vector<1x64xf32>
    %cst_100 = arith.constant 3.000000e+00 : f32
    %310 = vector.broadcast %cst_100 : f32 to vector<1x64xf32>
    %311 = arith.addf %309, %310 : vector<1x64xf32>
    %cst_101 = arith.constant 0.000000e+00 : f32
    %cst_102 = arith.constant 6.000000e+00 : f32
    %312 = vector.broadcast %cst_101 : f32 to vector<1x64xf32>
    %313 = arith.maximumf %312, %311 : vector<1x64xf32>
    %314 = vector.broadcast %cst_102 : f32 to vector<1x64xf32>
    %315 = arith.minimumf %314, %313 : vector<1x64xf32>
    %cst_103 = arith.constant 0.166666672 : f32
    %316 = vector.broadcast %cst_103 : f32 to vector<1x64xf32>
    %317 = arith.mulf %315, %316 : vector<1x64xf32>
    %318 = vector.shape_cast %317 : vector<1x64xf32> to vector<1x1x64xf32>
    %319 = vector.broadcast %318 : vector<1x1x64xf32> to vector<16x16x64xf32>
    %320 = arith.mulf %295, %319 : vector<16x16x64xf32>
    %321 = vector.shape_cast %320 : vector<16x16x64xf32> to vector<256x64xf32>
    %322 = arith.truncf %321 : vector<256x64xf32> to vector<256x64xbf16>
    %c0_104 = arith.constant 0 : index
    %c0_105 = arith.constant 0 : index
    %323 = vector.load %arg12[%c0_104, %c0_105] : memref<64x32xbf16, #tpu.memory_space<vmem>>, vector<64x32xbf16>
    %cst_106 = arith.constant dense<0.000000e+00> : vector<256x32xf32>
    %324 = tpu.matmul %322, %323, %cst_106 {dimension_numbers = #tpu.dot_dimension_numbers<[1], [0], [0], [1], [0, 0, 1, 1], [], []>} : vector<256x64xbf16>, vector<64x32xbf16>, vector<256x32xf32> -> vector<256x32xf32>
    %c0_107 = arith.constant 0 : index
    %c0_108 = arith.constant 0 : index
    %325 = vector.load %arg13[%c0_107, %c0_108] : memref<1x32xf32, #tpu.memory_space<vmem>>, vector<1x32xf32>
    %326 = vector.broadcast %325 : vector<1x32xf32> to vector<256x32xf32>
    %327 = arith.addf %324, %326 : vector<256x32xf32>
    %328 = arith.truncf %327 : vector<256x32xf32> to vector<256x32xbf16>
    %c0_109 = arith.constant 0 : index
    %c0_110 = arith.constant 0 : index
    %329 = vector.load %arg14[%c0_109, %c0_110] : memref<32x32xbf16, #tpu.memory_space<vmem>>, vector<32x32xbf16>
    %cst_111 = arith.constant dense<0.000000e+00> : vector<256x32xf32>
    %330 = tpu.matmul %328, %329, %cst_111 {dimension_numbers = #tpu.dot_dimension_numbers<[1], [0], [0], [1], [0, 0, 1, 1], [], []>} : vector<256x32xbf16>, vector<32x32xbf16>, vector<256x32xf32> -> vector<256x32xf32>
    %c0_112 = arith.constant 0 : index
    %c0_113 = arith.constant 0 : index
    %331 = vector.load %arg15[%c0_112, %c0_113] : memref<1x32xf32, #tpu.memory_space<vmem>>, vector<1x32xf32>
    %332 = vector.broadcast %331 : vector<1x32xf32> to vector<256x32xf32>
    %333 = arith.addf %330, %332 : vector<256x32xf32>
    %cst_114 = arith.constant 3.000000e+00 : f32
    %334 = vector.broadcast %cst_114 : f32 to vector<256x32xf32>
    %335 = arith.addf %333, %334 : vector<256x32xf32>
    %cst_115 = arith.constant 0.000000e+00 : f32
    %cst_116 = arith.constant 6.000000e+00 : f32
    %336 = vector.broadcast %cst_115 : f32 to vector<256x32xf32>
    %337 = arith.maximumf %336, %335 : vector<256x32xf32>
    %338 = vector.broadcast %cst_116 : f32 to vector<256x32xf32>
    %339 = arith.minimumf %338, %337 : vector<256x32xf32>
    %340 = arith.mulf %333, %339 : vector<256x32xf32>
    %cst_117 = arith.constant 0.166666672 : f32
    %341 = vector.broadcast %cst_117 : f32 to vector<256x32xf32>
    %342 = arith.mulf %340, %341 : vector<256x32xf32>
    %c0_118 = arith.constant 0 : index
    %c0_119 = arith.constant 0 : index
    %343 = vector.load %arg16[%c0_118, %c0_119] : memref<8x32xbf16, #tpu.memory_space<vmem>>, vector<8x32xbf16>
    %344 = arith.truncf %342 : vector<256x32xf32> to vector<256x32xbf16>
    "tpu.trace_start"() <{level = 10 : i32, message = "jc,pc->jp"}> : () -> ()
    %cst_120 = arith.constant dense<0.000000e+00> : vector<8x256xf32>
    %345 = tpu.matmul %343, %344, %cst_120 {dimension_numbers = #tpu.dot_dimension_numbers<[1], [1], [0], [0], [0, 0, 1, 0], [], []>} : vector<8x32xbf16>, vector<256x32xbf16>, vector<8x256xf32> -> vector<8x256xf32>
    "tpu.trace_stop"() : () -> ()
    %c0_121 = arith.constant 0 : index
    %c0_122 = arith.constant 0 : index
    %346 = vector.load %arg17[%c0_121, %c0_122] : memref<8x1xf32, #tpu.memory_space<vmem>>, vector<8x1xf32>
    %347 = vector.broadcast %346 : vector<8x1xf32> to vector<8x256xf32>
    %348 = arith.addf %345, %347 : vector<8x256xf32>
    %c0_123 = arith.constant 0 : index
    %c0_124 = arith.constant 0 : index
    %c0_125 = arith.constant 0 : index
    %349 = vector.load %arg18[%c0_123, %c0_124, %c0_125] : memref<1x8x256xf32, #tpu.memory_space<vmem>>, vector<1x8x256xf32>
    %350 = vector.shape_cast %349 : vector<1x8x256xf32> to vector<8x256xf32>
    %351 = vector.shape_cast %348 : vector<8x256xf32> to vector<1x8x256xf32>
    tpu.vector_store %arg18[%c0_123, %c0_124, %c0_125], %351 {strides = array<i32>} : memref<1x8x256xf32, #tpu.memory_space<vmem>>, vector<1x8x256xf32>,
    return
  }
  func.func @transform_0(%arg0: i32) -> (i32, i32, i32, i32) {
    %c0_i32 = arith.constant 0 : i32
    %c0_i32_0 = arith.constant 0 : i32
    %c0_i32_1 = arith.constant 0 : i32
    %c0_i32_2 = arith.constant 0 : i32
    return %arg0, %c0_i32, %c0_i32_0, %c0_i32_1 : i32, i32, i32, i32
  }
  func.func @transform_1(%arg0: i32) -> (i32, i32) {
    %c0_i32 = arith.constant 0 : i32
    %c0_i32_0 = arith.constant 0 : i32
    %c0_i32_1 = arith.constant 0 : i32
    return %c0_i32, %c0_i32_0 : i32, i32
  }
  func.func @transform_2(%arg0: i32) -> (i32, i32) {
    %c0_i32 = arith.constant 0 : i32
    %c0_i32_0 = arith.constant 0 : i32
    %c0_i32_1 = arith.constant 0 : i32
    return %c0_i32, %c0_i32_0 : i32, i32
  }
  func.func @transform_3(%arg0: i32) -> (i32, i32) {
    %c0_i32 = arith.constant 0 : i32
    %c0_i32_0 = arith.constant 0 : i32
    %c0_i32_1 = arith.constant 0 : i32
    return %c0_i32, %c0_i32_0 : i32, i32
  }
  func.func @transform_4(%arg0: i32) -> (i32, i32) {
    %c0_i32 = arith.constant 0 : i32
    %c0_i32_0 = arith.constant 0 : i32
    %c0_i32_1 = arith.constant 0 : i32
    return %c0_i32, %c0_i32_0 : i32, i32
  }
  func.func @transform_5(%arg0: i32) -> (i32, i32) {
    %c0_i32 = arith.constant 0 : i32
    %c0_i32_0 = arith.constant 0 : i32
    %c0_i32_1 = arith.constant 0 : i32
    return %c0_i32, %c0_i32_0 : i32, i32
  }
  func.func @transform_6(%arg0: i32) -> (i32, i32) {
    %c0_i32 = arith.constant 0 : i32
    %c0_i32_0 = arith.constant 0 : i32
    %c0_i32_1 = arith.constant 0 : i32
    return %c0_i32, %c0_i32_0 : i32, i32
  }
  func.func @transform_7(%arg0: i32) -> (i32, i32) {
    %c0_i32 = arith.constant 0 : i32
    %c0_i32_0 = arith.constant 0 : i32
    %c0_i32_1 = arith.constant 0 : i32
    return %c0_i32, %c0_i32_0 : i32, i32
  }
  func.func @transform_8(%arg0: i32) -> (i32, i32) {
    %c0_i32 = arith.constant 0 : i32
    %c0_i32_0 = arith.constant 0 : i32
    %c0_i32_1 = arith.constant 0 : i32
    return %c0_i32, %c0_i32_0 : i32, i32
  }
  func.func @transform_9(%arg0: i32) -> (i32, i32) {
    %c0_i32 = arith.constant 0 : i32
    %c0_i32_0 = arith.constant 0 : i32
    %c0_i32_1 = arith.constant 0 : i32
    return %c0_i32, %c0_i32_0 : i32, i32
  }
  func.func @transform_10(%arg0: i32) -> (i32, i32) {
    %c0_i32 = arith.constant 0 : i32
    %c0_i32_0 = arith.constant 0 : i32
    %c0_i32_1 = arith.constant 0 : i32
    return %c0_i32, %c0_i32_0 : i32, i32
  }
  func.func @transform_11(%arg0: i32) -> (i32, i32) {
    %c0_i32 = arith.constant 0 : i32
    %c0_i32_0 = arith.constant 0 : i32
    %c0_i32_1 = arith.constant 0 : i32
    return %c0_i32, %c0_i32_0 : i32, i32
  }
  func.func @transform_12(%arg0: i32) -> (i32, i32) {
    %c0_i32 = arith.constant 0 : i32
    %c0_i32_0 = arith.constant 0 : i32
    %c0_i32_1 = arith.constant 0 : i32
    return %c0_i32, %c0_i32_0 : i32, i32
  }
  func.func @transform_13(%arg0: i32) -> (i32, i32) {
    %c0_i32 = arith.constant 0 : i32
    %c0_i32_0 = arith.constant 0 : i32
    %c0_i32_1 = arith.constant 0 : i32
    return %c0_i32, %c0_i32_0 : i32, i32
  }
  func.func @transform_14(%arg0: i32) -> (i32, i32) {
    %c0_i32 = arith.constant 0 : i32
    %c0_i32_0 = arith.constant 0 : i32
    %c0_i32_1 = arith.constant 0 : i32
    return %c0_i32, %c0_i32_0 : i32, i32
  }
  func.func @transform_15(%arg0: i32) -> (i32, i32) {
    %c0_i32 = arith.constant 0 : i32
    %c0_i32_0 = arith.constant 0 : i32
    %c0_i32_1 = arith.constant 0 : i32
    return %c0_i32, %c0_i32_0 : i32, i32
  }
  func.func @transform_16(%arg0: i32) -> (i32, i32) {
    %c0_i32 = arith.constant 0 : i32
    %c0_i32_0 = arith.constant 0 : i32
    %c0_i32_1 = arith.constant 0 : i32
    return %c0_i32, %c0_i32_0 : i32, i32
  }
  func.func @transform_17(%arg0: i32) -> (i32, i32, i32) {
    %c0_i32 = arith.constant 0 : i32
    %c0_i32_0 = arith.constant 0 : i32
    %c0_i32_1 = arith.constant 0 : i32
    return %arg0, %c0_i32, %c0_i32_0 : i32, i32, i32
  }
}

</mosaic_0001>

<llo_original>
// kernel: msnet_forward.1
$region0: #{msnet_forward.1}
  #allocation0 [shape = 'u32[]', space=smem, size = 0x4, offset = 0x4, fixed_abs, tag = 'smem constant byte address 0x4 - core index']
  #allocation1 [shape = 'u32[72,128]{1,0:T(1,128)}', space=vmem, size = 0x9000, scoped, tag = 'internal scratch']
  #allocation2 [shape = 'f32[18,25,64]{2,1,0:T(8,128)}', space=vmem, size = 0x48000, scoped, tag = 'scratch operand']
  %s0 = inlined_call_operand.vmem [shape: f32[2,17,17,12], index: 0, kind: input, shape index: {}]
  %s1 = inlined_call_operand.vmem [shape: f32[27,16], index: 1, kind: input, shape index: {}]
  %s2 = inlined_call_operand.vmem [shape: f32[1,16], index: 2, kind: input, shape index: {}]
  %s3 = inlined_call_operand.vmem [shape: bf16[16,64], index: 3, kind: input, shape index: {}]
  %s4 = inlined_call_operand.vmem [shape: f32[1,64], index: 4, kind: input, shape index: {}]
  %s5 = inlined_call_operand.vmem [shape: f32[9,64], index: 5, kind: input, shape index: {}]
  %s6 = inlined_call_operand.vmem [shape: f32[1,64], index: 6, kind: input, shape index: {}]
  %s7 = inlined_call_operand.vmem [shape: f32[64,16], index: 7, kind: input, shape index: {}]
  %s8 = inlined_call_operand.vmem [shape: f32[1,16], index: 8, kind: input, shape index: {}]
  %s9 = inlined_call_operand.vmem [shape: f32[16,64], index: 9, kind: input, shape index: {}]
  %s10 = inlined_call_operand.vmem [shape: f32[1,64], index: 10, kind: input, shape index: {}]
  %s11 = inlined_call_operand.vmem [shape: bf16[64,32], index: 11, kind: input, shape index: {}]
  %s12 = inlined_call_operand.vmem [shape: f32[1,32], index: 12, kind: input, shape index: {}]
  %s13 = inlined_call_operand.vmem [shape: bf16[32,32], index: 13, kind: input, shape index: {}]
  %s14 = inlined_call_operand.vmem [shape: f32[1,32], index: 14, kind: input, shape index: {}]
  %s15 = inlined_call_operand.vmem [shape: bf16[8,32], index: 15, kind: input, shape index: {}]
  %s16 = inlined_call_operand.vmem [shape: f32[8,1], index: 16, kind: input, shape index: {}]
  %s17 = inlined_call_operand.vmem [shape: f32[2,8,256], index: 17, kind: output, shape index: {}]
  %s18 = sld [smem:[#allocation0]]
  $region101: #{msnet_forward.1} parent=0
    _
  %s20 = ssub.s32 1, %s18
  %s21 = scalar_select 0, %s20, %s18
  loop: start=0, step=1, limit=4
  $region2: #{msnet_forward.1} parent=0 // loop_pre_header
    _
  $region3: #{msnet_forward.1} parent=0 // loop_header
    %s23 = sphi 0, %s27
    %p24 = scmp.ge.s32.totalorder %s23, 4
    %s33 = sphi 0, %s35
    %s36 = sphi 0, %s33
    %s37 = sphi 0, %s36
    %s53 = sphi 0, %s37
    %s57 = sphi 0, %s57
    %s59 = sphi 0, %s57
    %s60 = sphi 0, %s59
    %s74 = sphi 0, %s60
    %s78 = sphi 0, %s78
    %s80 = sphi 0, %s78
    %s81 = sphi 0, %s80
    %s95 = sphi 0, %s81
    %s99 = sphi 0, %s99
    %s101 = sphi 0, %s99
    %s102 = sphi 0, %s101
    %s116 = sphi 0, %s102
    %s120 = sphi 0, %s120
    %s122 = sphi 0, %s120
    %s123 = sphi 0, %s122
    %s137 = sphi 0, %s123
    %s141 = sphi 0, %s141
    %s143 = sphi 0, %s141
    %s144 = sphi 0, %s143
    %s158 = sphi 0, %s144
    %s162 = sphi 0, %s162
    %s164 = sphi 0, %s162
    %s165 = sphi 0, %s164
    %s179 = sphi 0, %s165
    %s183 = sphi 0, %s183
    %s185 = sphi 0, %s183
    %s186 = sphi 0, %s185
    %s200 = sphi 0, %s186
    %s204 = sphi 0, %s204
    %s206 = sphi 0, %s204
    %s207 = sphi 0, %s206
    %s221 = sphi 0, %s207
    %s225 = sphi 0, %s225
    %s227 = sphi 0, %s225
    %s228 = sphi 0, %s227
    %s242 = sphi 0, %s228
    %s246 = sphi 0, %s246
    %s248 = sphi 0, %s246
    %s249 = sphi 0, %s248
    %s263 = sphi 0, %s249
    %s267 = sphi 0, %s267
    %s269 = sphi 0, %s267
    %s270 = sphi 0, %s269
    %s284 = sphi 0, %s270
    %s288 = sphi 0, %s288
    %s290 = sphi 0, %s288
    %s291 = sphi 0, %s290
    %s305 = sphi 0, %s291
    %s309 = sphi 0, %s309
    %s311 = sphi 0, %s309
    %s312 = sphi 0, %s311
    %s326 = sphi 0, %s312
    %s330 = sphi 0, %s330
    %s332 = sphi 0, %s330
    %s333 = sphi 0, %s332
    %s347 = sphi 0, %s333
    %s351 = sphi 0, %s351
    %s353 = sphi 0, %s351
    %s354 = sphi 0, %s353
    %s368 = sphi 0, %s354
    %s372 = sphi 0, %s372
    %s374 = sphi 0, %s372
    %s375 = sphi 0, %s374
    %s389 = sphi 0, %s375
    %s395 = sphi 0, %s397
    %s398 = sphi 0, %s395
    %s399 = sphi 0, %s398
    %s415 = sphi 0, %s399
  $region4: #{msnet_forward.1} parent=0 // loop_header_branch
    %26 = sbr.rel (%p24) target = $region8
  $region5: #{msnet_forward.1} parent=0 // loop_body
    %s28 = ssub.s32 %s23, 1
    %s29 = ssub.s32 %s23, 2
    %s30 = sadd.s32 %s23, 1
    %s31 = ssub.s32 %s23, %s30
    %p32 = scmp.eq.s32.totalorder %s31, 0
    %s34 = sadd.s32 %s33, 1
    %s35 = scalar_select %p32, %s33, %s34
    %p38 = pneg %p32
    %p39 = scmp.eq.s32.totalorder %s23, 1
    %p40 = por %p38, %p39
    %p41 = scmp.ne.s32.totalorder %s33, %s36
    %p42 = scmp.eq.s32.totalorder %s23, 0
    %p43 = por %p41, %p42
    %p44 = scmp.ne.s32.totalorder %s33, %s36
    %p45 = scmp.eq.s32.totalorder %s28, 1
    %p46 = por %p44, %p45
    %p47 = scmp.ne.s32.totalorder %s36, %s37
    %p48 = scmp.eq.s32.totalorder %s28, 0
    %p49 = por %p47, %p48
    %p50 = scmp.ne.s32.totalorder %s36, %s37
    %p51 = scmp.eq.s32.totalorder %s29, 1
    %p52 = por %p50, %p51
    %p54 = scmp.ne.s32.totalorder %s37, %s53
    %p55 = scmp.eq.s32.totalorder %s29, 0
    %p56 = por %p54, %p55
    %s58 = sadd.s32 %s57, 1
    %p61 = scmp.eq.s32.totalorder %s23, 1
    %p62 = scmp.ne.s32.totalorder %s57, %s59
    %p63 = scmp.eq.s32.totalorder %s23, 0
    %p64 = por %p62, %p63
    %p65 = scmp.ne.s32.totalorder %s57, %s59
    %p66 = scmp.eq.s32.totalorder %s28, 1
    %p67 = por %p65, %p66
    %p68 = scmp.ne.s32.totalorder %s59, %s60
    %p69 = scmp.eq.s32.totalorder %s28, 0
    %p70 = por %p68, %p69
    %p71 = scmp.ne.s32.totalorder %s59, %s60
    %p72 = scmp.eq.s32.totalorder %s29, 1
    %p73 = por %p71, %p72
    %p75 = scmp.ne.s32.totalorder %s60, %s74
    %p76 = scmp.eq.s32.totalorder %s29, 0
    %p77 = por %p75, %p76
    %s79 = sadd.s32 %s78, 1
    %p82 = scmp.eq.s32.totalorder %s23, 1
    %p83 = scmp.ne.s32.totalorder %s78, %s80
    %p84 = scmp.eq.s32.totalorder %s23, 0
    %p85 = por %p83, %p84
    %p86 = scmp.ne.s32.totalorder %s78, %s80
    %p87 = scmp.eq.s32.totalorder %s28, 1
    %p88 = por %p86, %p87
    %p89 = scmp.ne.s32.totalorder %s80, %s81
    %p90 = scmp.eq.s32.totalorder %s28, 0
    %p91 = por %p89, %p90
    %p92 = scmp.ne.s32.totalorder %s80, %s81
    %p93 = scmp.eq.s32.totalorder %s29, 1
    %p94 = por %p92, %p93
    %p96 = scmp.ne.s32.totalorder %s81, %s95
    %p97 = scmp.eq.s32.totalorder %s29, 0
    %p98 = por %p96, %p97
    %s100 = sadd.s32 %s99, 1
    %p103 = scmp.eq.s32.totalorder %s23, 1
    %p104 = scmp.ne.s32.totalorder %s99, %s101
    %p105 = scmp.eq.s32.totalorder %s23, 0
    %p106 = por %p104, %p105
    %p107 = scmp.ne.s32.totalorder %s99, %s101
    %p108 = scmp.eq.s32.totalorder %s28, 1
    %p109 = por %p107, %p108
    %p110 = scmp.ne.s32.totalorder %s101, %s102
    %p111 = scmp.eq.s32.totalorder %s28, 0
    %p112 = por %p110, %p111
    %p113 = scmp.ne.s32.totalorder %s101, %s102
    %p114 = scmp.eq.s32.totalorder %s29, 1
    %p115 = por %p113, %p114
    %p117 = scmp.ne.s32.totalorder %s102, %s116
    %p118 = scmp.eq.s32.totalorder %s29, 0
    %p119 = por %p117, %p118
    %s121 = sadd.s32 %s120, 1
    %p124 = scmp.eq.s32.totalorder %s23, 1
    %p125 = scmp.ne.s32.totalorder %s120, %s122
    %p126 = scmp.eq.s32.totalorder %s23, 0
    %p127 = por %p125, %p126
    %p128 = scmp.ne.s32.totalorder %s120, %s122
    %p129 = scmp.eq.s32.totalorder %s28, 1
    %p130 = por %p128, %p129
    %p131 = scmp.ne.s32.totalorder %s122, %s123
    %p132 = scmp.eq.s32.totalorder %s28, 0
    %p133 = por %p131, %p132
    %p134 = scmp.ne.s32.totalorder %s122, %s123
    %p135 = scmp.eq.s32.totalorder %s29, 1
    %p136 = por %p134, %p135
    %p138 = scmp.ne.s32.totalorder %s123, %s137
    %p139 = scmp.eq.s32.totalorder %s29, 0
    %p140 = por %p138, %p139
    %s142 = sadd.s32 %s141, 1
    %p145 = scmp.eq.s32.totalorder %s23, 1
    %p146 = scmp.ne.s32.totalorder %s141, %s143
    %p147 = scmp.eq.s32.totalorder %s23, 0
    %p148 = por %p146, %p147
    %p149 = scmp.ne.s32.totalorder %s141, %s143
    %p150 = scmp.eq.s32.totalorder %s28, 1
    %p151 = por %p149, %p150
    %p152 = scmp.ne.s32.totalorder %s143, %s144
    %p153 = scmp.eq.s32.totalorder %s28, 0
    %p154 = por %p152, %p153
    %p155 = scmp.ne.s32.totalorder %s143, %s144
    %p156 = scmp.eq.s32.totalorder %s29, 1
    %p157 = por %p155, %p156
    %p159 = scmp.ne.s32.totalorder %s144, %s158
    %p160 = scmp.eq.s32.totalorder %s29, 0
    %p161 = por %p159, %p160
    %s163 = sadd.s32 %s162, 1
    %p166 = scmp.eq.s32.totalorder %s23, 1
    %p167 = scmp.ne.s32.totalorder %s162, %s164
    %p168 = scmp.eq.s32.totalorder %s23, 0
    %p169 = por %p167, %p168
    %p170 = scmp.ne.s32.totalorder %s162, %s164
    %p171 = scmp.eq.s32.totalorder %s28, 1
    %p172 = por %p170, %p171
    %p173 = scmp.ne.s32.totalorder %s164, %s165
    %p174 = scmp.eq.s32.totalorder %s28, 0
    %p175 = por %p173, %p174
    %p176 = scmp.ne.s32.totalorder %s164, %s165
    %p177 = scmp.eq.s32.totalorder %s29, 1
    %p178 = por %p176, %p177
    %p180 = scmp.ne.s32.totalorder %s165, %s179
    %p181 = scmp.eq.s32.totalorder %s29, 0
    %p182 = por %p180, %p181
    %s184 = sadd.s32 %s183, 1
    %p187 = scmp.eq.s32.totalorder %s23, 1
    %p188 = scmp.ne.s32.totalorder %s183, %s185
    %p189 = scmp.eq.s32.totalorder %s23, 0
    %p190 = por %p188, %p189
    %p191 = scmp.ne.s32.totalorder %s183, %s185
    %p192 = scmp.eq.s32.totalorder %s28, 1
    %p193 = por %p191, %p192
    %p194 = scmp.ne.s32.totalorder %s185, %s186
    %p195 = scmp.eq.s32.totalorder %s28, 0
    %p196 = por %p194, %p195
    %p197 = scmp.ne.s32.totalorder %s185, %s186
    %p198 = scmp.eq.s32.totalorder %s29, 1
    %p199 = por %p197, %p198
    %p201 = scmp.ne.s32.totalorder %s186, %s200
    %p202 = scmp.eq.s32.totalorder %s29, 0
    %p203 = por %p201, %p202
    %s205 = sadd.s32 %s204, 1
    %p208 = scmp.eq.s32.totalorder %s23, 1
    %p209 = scmp.ne.s32.totalorder %s204, %s206
    %p210 = scmp.eq.s32.totalorder %s23, 0
    %p211 = por %p209, %p210
    %p212 = scmp.ne.s32.totalorder %s204, %s206
    %p213 = scmp.eq.s32.totalorder %s28, 1
    %p214 = por %p212, %p213
    %p215 = scmp.ne.s32.totalorder %s206, %s207
    %p216 = scmp.eq.s32.totalorder %s28, 0
    %p217 = por %p215, %p216
    %p218 = scmp.ne.s32.totalorder %s206, %s207
    %p219 = scmp.eq.s32.totalorder %s29, 1
    %p220 = por %p218, %p219
    %p222 = scmp.ne.s32.totalorder %s207, %s221
    %p223 = scmp.eq.s32.totalorder %s29, 0
    %p224 = por %p222, %p223
    %s226 = sadd.s32 %s225, 1
    %p229 = scmp.eq.s32.totalorder %s23, 1
    %p230 = scmp.ne.s32.totalorder %s225, %s227
    %p231 = scmp.eq.s32.totalorder %s23, 0
    %p232 = por %p230, %p231
    %p233 = scmp.ne.s32.totalorder %s225, %s227
    %p234 = scmp.eq.s32.totalorder %s28, 1
    %p235 = por %p233, %p234
    %p236 = scmp.ne.s32.totalorder %s227, %s228
    %p237 = scmp.eq.s32.totalorder %s28, 0
    %p238 = por %p236, %p237
    %p239 = scmp.ne.s32.totalorder %s227, %s228
    %p240 = scmp.eq.s32.totalorder %s29, 1
    %p241 = por %p239, %p240
    %p243 = scmp.ne.s32.totalorder %s228, %s242
    %p244 = scmp.eq.s32.totalorder %s29, 0
    %p245 = por %p243, %p244
    %s247 = sadd.s32 %s246, 1
    %p250 = scmp.eq.s32.totalorder %s23, 1
    %p251 = scmp.ne.s32.totalorder %s246, %s248
    %p252 = scmp.eq.s32.totalorder %s23, 0
    %p253 = por %p251, %p252
    %p254 = scmp.ne.s32.totalorder %s246, %s248
    %p255 = scmp.eq.s32.totalorder %s28, 1
    %p256 = por %p254, %p255
    %p257 = scmp.ne.s32.totalorder %s248, %s249
    %p258 = scmp.eq.s32.totalorder %s28, 0
    %p259 = por %p257, %p258
    %p260 = scmp.ne.s32.totalorder %s248, %s249
    %p261 = scmp.eq.s32.totalorder %s29, 1
    %p262 = por %p260, %p261
    %p264 = scmp.ne.s32.totalorder %s249, %s263
    %p265 = scmp.eq.s32.totalorder %s29, 0
    %p266 = por %p264, %p265
    %s268 = sadd.s32 %s267, 1
    %p271 = scmp.eq.s32.totalorder %s23, 1
    %p272 = scmp.ne.s32.totalorder %s267, %s269
    %p273 = scmp.eq.s32.totalorder %s23, 0
    %p274 = por %p272, %p273
    %p275 = scmp.ne.s32.totalorder %s267, %s269
    %p276 = scmp.eq.s32.totalorder %s28, 1
    %p277 = por %p275, %p276
    %p278 = scmp.ne.s32.totalorder %s269, %s270
    %p279 = scmp.eq.s32.totalorder %s28, 0
    %p280 = por %p278, %p279
    %p281 = scmp.ne.s32.totalorder %s269, %s270
    %p282 = scmp.eq.s32.totalorder %s29, 1
    %p283 = por %p281, %p282
    %p285 = scmp.ne.s32.totalorder %s270, %s284
    %p286 = scmp.eq.s32.totalorder %s29, 0
    %p287 = por %p285, %p286
    %s289 = sadd.s32 %s288, 1
    %p292 = scmp.eq.s32.totalorder %s23, 1
    %p293 = scmp.ne.s32.totalorder %s288, %s290
    %p294 = scmp.eq.s32.totalorder %s23, 0
    %p295 = por %p293, %p294
    %p296 = scmp.ne.s32.totalorder %s288, %s290
    %p297 = scmp.eq.s32.totalorder %s28, 1
    %p298 = por %p296, %p297
    %p299 = scmp.ne.s32.totalorder %s290, %s291
    %p300 = scmp.eq.s32.totalorder %s28, 0
    %p301 = por %p299, %p300
    %p302 = scmp.ne.s32.totalorder %s290, %s291
    %p303 = scmp.eq.s32.totalorder %s29, 1
    %p304 = por %p302, %p303
    %p306 = scmp.ne.s32.totalorder %s291, %s305
    %p307 = scmp.eq.s32.totalorder %s29, 0
    %p308 = por %p306, %p307
    %s310 = sadd.s32 %s309, 1
    %p313 = scmp.eq.s32.totalorder %s23, 1
    %p314 = scmp.ne.s32.totalorder %s309, %s311
    %p315 = scmp.eq.s32.totalorder %s23, 0
    %p316 = por %p314, %p315
    %p317 = scmp.ne.s32.totalorder %s309, %s311
    %p318 = scmp.eq.s32.totalorder %s28, 1
    %p319 = por %p317, %p318
    %p320 = scmp.ne.s32.totalorder %s311, %s312
    %p321 = scmp.eq.s32.totalorder %s28, 0
    %p322 = por %p320, %p321
    %p323 = scmp.ne.s32.totalorder %s311, %s312
    %p324 = scmp.eq.s32.totalorder %s29, 1
    %p325 = por %p323, %p324
    %p327 = scmp.ne.s32.totalorder %s312, %s326
    %p328 = scmp.eq.s32.totalorder %s29, 0
    %p329 = por %p327, %p328
    %s331 = sadd.s32 %s330, 1
    %p334 = scmp.eq.s32.totalorder %s23, 1
    %p335 = scmp.ne.s32.totalorder %s330, %s332
    %p336 = scmp.eq.s32.totalorder %s23, 0
    %p337 = por %p335, %p336
    %p338 = scmp.ne.s32.totalorder %s330, %s332
    %p339 = scmp.eq.s32.totalorder %s28, 1
    %p340 = por %p338, %p339
    %p341 = scmp.ne.s32.totalorder %s332, %s333
    %p342 = scmp.eq.s32.totalorder %s28, 0
    %p343 = por %p341, %p342
    %p344 = scmp.ne.s32.totalorder %s332, %s333
    %p345 = scmp.eq.s32.totalorder %s29, 1
    %p346 = por %p344, %p345
    %p348 = scmp.ne.s32.totalorder %s333, %s347
    %p349 = scmp.eq.s32.totalorder %s29, 0
    %p350 = por %p348, %p349
    %s352 = sadd.s32 %s351, 1
    %p355 = scmp.eq.s32.totalorder %s23, 1
    %p356 = scmp.ne.s32.totalorder %s351, %s353
    %p357 = scmp.eq.s32.totalorder %s23, 0
    %p358 = por %p356, %p357
    %p359 = scmp.ne.s32.totalorder %s351, %s353
    %p360 = scmp.eq.s32.totalorder %s28, 1
    %p361 = por %p359, %p360
    %p362 = scmp.ne.s32.totalorder %s353, %s354
    %p363 = scmp.eq.s32.totalorder %s28, 0
    %p364 = por %p362, %p363
    %p365 = scmp.ne.s32.totalorder %s353, %s354
    %p366 = scmp.eq.s32.totalorder %s29, 1
    %p367 = por %p365, %p366
    %p369 = scmp.ne.s32.totalorder %s354, %s368
    %p370 = scmp.eq.s32.totalorder %s29, 0
    %p371 = por %p369, %p370
    %s373 = sadd.s32 %s372, 1
    %p376 = scmp.eq.s32.totalorder %s23, 1
    %p377 = scmp.ne.s32.totalorder %s372, %s374
    %p378 = scmp.eq.s32.totalorder %s23, 0
    %p379 = por %p377, %p378
    %p380 = scmp.ne.s32.totalorder %s372, %s374
    %p381 = scmp.eq.s32.totalorder %s28, 1
    %p382 = por %p380, %p381
    %p383 = scmp.ne.s32.totalorder %s374, %s375
    %p384 = scmp.eq.s32.totalorder %s28, 0
    %p385 = por %p383, %p384
    %p386 = scmp.ne.s32.totalorder %s374, %s375
    %p387 = scmp.eq.s32.totalorder %s29, 1
    %p388 = por %p386, %p387
    %p390 = scmp.ne.s32.totalorder %s375, %s389
    %p391 = scmp.eq.s32.totalorder %s29, 0
    %p392 = por %p390, %p391
    %s393 = ssub.s32 %s23, %s30
    %p394 = scmp.eq.s32.totalorder %s393, 0
    %s396 = sadd.s32 %s395, 1
    %s397 = scalar_select %p394, %s395, %s396
    %p400 = pneg %p394
    %p401 = scmp.eq.s32.totalorder %s23, 1
    %p402 = por %p400, %p401
    %p403 = scmp.ne.s32.totalorder %s395, %s398
    %p404 = scmp.eq.s32.totalorder %s23, 0
    %p405 = por %p403, %p404
    %p406 = scmp.ne.s32.totalorder %s395, %s398
    %p407 = scmp.eq.s32.totalorder %s28, 1
    %p408 = por %p406, %p407
    %p409 = scmp.ne.s32.totalorder %s398, %s399
    %p410 = scmp.eq.s32.totalorder %s28, 0
    %p411 = por %p409, %p410
    %p412 = scmp.ne.s32.totalorder %s398, %s399
    %p413 = scmp.eq.s32.totalorder %s29, 1
    %p414 = por %p412, %p413
    %p416 = scmp.ne.s32.totalorder %s399, %s415
    %p417 = scmp.eq.s32.totalorder %s29, 0
    %p418 = por %p416, %p417
    %p419 = scmp.le.s32.totalorder 1, %s23
    %p420 = scmp.lt.s32.totalorder %s23, 3
    %p421 = pnand %p419, %p420
    %p422 = pneg %p421
    // Predicated region
    $region9: #{msnet_forward.1} parent=5 // pred_check
      _
    $region10: #{msnet_forward.1} parent=5 // pred_check_branch
      %424 = sbr.rel (%p421) target = $region12
    $region11: #{msnet_forward.1} parent=5 // pred_region
      %s425 = ssub.s32 %s23, 1
      // Predicated region
      $region13: #{msnet_forward.1} parent=11 // pred_check
        %p426 = pneg %p70
      $region14: #{msnet_forward.1} parent=11 // pred_check_branch
        %428 = sbr.rel (%p426) target = $region16
      $region15: #{msnet_forward.1} parent=11 // pred_region
        _
      $region16: #{msnet_forward.1} parent=11 // pred_fallthru
        _
      // Predicated region
      $region17: #{msnet_forward.1} parent=11 // pred_check
        %p429 = pneg %p91
      $region18: #{msnet_forward.1} parent=11 // pred_check_branch
        %431 = sbr.rel (%p429) target = $region20
      $region19: #{msnet_forward.1} parent=11 // pred_region
        _
      $region20: #{msnet_forward.1} parent=11 // pred_fallthru
        _
      // Predicated region
      $region21: #{msnet_forward.1} parent=11 // pred_check
        %p432 = pneg %p112
      $region22: #{msnet_forward.1} parent=11 // pred_check_branch
        %434 = sbr.rel (%p432) target = $region24
      $region23: #{msnet_forward.1} parent=11 // pred_region
        _
      $region24: #{msnet_forward.1} parent=11 // pred_fallthru
        _
      // Predicated region
      $region25: #{msnet_forward.1} parent=11 // pred_check
        %p435 = pneg %p133
      $region26: #{msnet_forward.1} parent=11 // pred_check_branch
        %437 = sbr.rel (%p435) target = $region28
      $region27: #{msnet_forward.1} parent=11 // pred_region
        _
      $region28: #{msnet_forward.1} parent=11 // pred_fallthru
        _
      // Predicated region
      $region29: #{msnet_forward.1} parent=11 // pred_check
        %p438 = pneg %p154
      $region30: #{msnet_forward.1} parent=11 // pred_check_branch
        %440 = sbr.rel (%p438) target = $region32
      $region31: #{msnet_forward.1} parent=11 // pred_region
        _
      $region32: #{msnet_forward.1} parent=11 // pred_fallthru
        _
      // Predicated region
      $region33: #{msnet_forward.1} parent=11 // pred_check
        %p441 = pneg %p175
      $region34: #{msnet_forward.1} parent=11 // pred_check_branch
        %443 = sbr.rel (%p441) target = $region36
      $region35: #{msnet_forward.1} parent=11 // pred_region
        _
      $region36: #{msnet_forward.1} parent=11 // pred_fallthru
        _
      // Predicated region
      $region37: #{msnet_forward.1} parent=11 // pred_check
        %p444 = pneg %p196
      $region38: #{msnet_forward.1} parent=11 // pred_check_branch
        %446 = sbr.rel (%p444) target = $region40
      $region39: #{msnet_forward.1} parent=11 // pred_region
        _
      $region40: #{msnet_forward.1} parent=11 // pred_fallthru
        _
      // Predicated region
      $region41: #{msnet_forward.1} parent=11 // pred_check
        %p447 = pneg %p217
      $region42: #{msnet_forward.1} parent=11 // pred_check_branch
        %449 = sbr.rel (%p447) target = $region44
      $region43: #{msnet_forward.1} parent=11 // pred_region
        _
      $region44: #{msnet_forward.1} parent=11 // pred_fallthru
        _
      // Predicated region
      $region45: #{msnet_forward.1} parent=11 // pred_check
        %p450 = pneg %p238
      $region46: #{msnet_forward.1} parent=11 // pred_check_branch
        %452 = sbr.rel (%p450) target = $region48
      $region47: #{msnet_forward.1} parent=11 // pred_region
        _
      $region48: #{msnet_forward.1} parent=11 // pred_fallthru
        _
      // Predicated region
      $region49: #{msnet_forward.1} parent=11 // pred_check
        %p453 = pneg %p259
      $region50: #{msnet_forward.1} parent=11 // pred_check_branch
        %455 = sbr.rel (%p453) target = $region52
      $region51: #{msnet_forward.1} parent=11 // pred_region
        _
      $region52: #{msnet_forward.1} parent=11 // pred_fallthru
        _
      // Predicated region
      $region53: #{msnet_forward.1} parent=11 // pred_check
        %p456 = pneg %p280
      $region54: #{msnet_forward.1} parent=11 // pred_check_branch
        %458 = sbr.rel (%p456) target = $region56
      $region55: #{msnet_forward.1} parent=11 // pred_region
        _
      $region56: #{msnet_forward.1} parent=11 // pred_fallthru
        _
      // Predicated region
      $region57: #{msnet_forward.1} parent=11 // pred_check
        %p459 = pneg %p301
      $region58: #{msnet_forward.1} parent=11 // pred_check_branch
        %461 = sbr.rel (%p459) target = $region60
      $region59: #{msnet_forward.1} parent=11 // pred_region
        _
      $region60: #{msnet_forward.1} parent=11 // pred_fallthru
        _
      // Predicated region
      $region61: #{msnet_forward.1} parent=11 // pred_check
        %p462 = pneg %p322
      $region62: #{msnet_forward.1} parent=11 // pred_check_branch
        %464 = sbr.rel (%p462) target = $region64
      $region63: #{msnet_forward.1} parent=11 // pred_region
        _
      $region64: #{msnet_forward.1} parent=11 // pred_fallthru
        _
      // Predicated region
      $region65: #{msnet_forward.1} parent=11 // pred_check
        %p465 = pneg %p343
      $region66: #{msnet_forward.1} parent=11 // pred_check_branch
        %467 = sbr.rel (%p465) target = $region68
      $region67: #{msnet_forward.1} parent=11 // pred_region
        _
      $region68: #{msnet_forward.1} parent=11 // pred_fallthru
        _
      // Predicated region
      $region69: #{msnet_forward.1} parent=11 // pred_check
        %p468 = pneg %p364
      $region70: #{msnet_forward.1} parent=11 // pred_check_branch
        %470 = sbr.rel (%p468) target = $region72
      $region71: #{msnet_forward.1} parent=11 // pred_region
        _
      $region72: #{msnet_forward.1} parent=11 // pred_fallthru
        _
      // Predicated region
      $region73: #{msnet_forward.1} parent=11 // pred_check
        %p471 = pneg %p385
      $region74: #{msnet_forward.1} parent=11 // pred_check_branch
        %473 = sbr.rel (%p471) target = $region76
      $region75: #{msnet_forward.1} parent=11 // pred_region
        _
      $region76: #{msnet_forward.1} parent=11 // pred_fallthru
        _
    $region12: #{msnet_forward.1} parent=5 // pred_fallthru
      _
    %p474 = scmp.lt.s32.totalorder %s23, 2
    // Predicated region
    $region77: #{msnet_forward.1} parent=5 // pred_check
      %p475 = pneg %p474
    $region78: #{msnet_forward.1} parent=5 // pred_check_branch
      %477 = sbr.rel (%p475) target = $region80
    $region79: #{msnet_forward.1} parent=5 // pred_region
      // Predicated region
      $region81: #{msnet_forward.1} parent=79 // pred_check
        %p478 = pneg %p43
      $region82: #{msnet_forward.1} parent=79 // pred_check_branch
        %480 = sbr.rel (%p478) target = $region84
      $region83: #{msnet_forward.1} parent=79 // pred_region
        %p481 = scmp.lt.s32.totalorder %s23, 1
        %s482 = scalar_select %p481, %s23, 1
        %s483 = smul.addr %s482, 51
        %s484 = smul.addr %s483, 8
        %s485 = scalar_lea.vmem %s0, %s484
      $region84: #{msnet_forward.1} parent=79 // pred_fallthru
        _
    $region80: #{msnet_forward.1} parent=5 // pred_fallthru
      _
    %p486 = scmp.le.s32.totalorder 1, %s23
    %p487 = scmp.lt.s32.totalorder %s23, 3
    %p488 = pnand %p486, %p487
    %p489 = pneg %p488
    // Predicated region
    $region85: #{msnet_forward.1} parent=5 // pred_check
      _
    $region86: #{msnet_forward.1} parent=5 // pred_check_branch
      %491 = sbr.rel (%p488) target = $region88
    $region87: #{msnet_forward.1} parent=5 // pred_region
      %s492 = ssub.s32 %s23, 1
      %p493 = scmp.lt.s32.totalorder %s28, 1
      %s494 = scalar_select %p493, %s28, 1
      %s495 = smul.addr %s494, 51
      %s496 = smul.addr %s495, 8
      %s497 = scalar_lea.vmem %s0, %s496
      %p498 = pneg %p49
      %p499 = pneg %p46
      %p500 = pneg %p70
      %p501 = pneg %p67
      %p502 = pneg %p91
      %p503 = pneg %p88
      %p504 = pneg %p112
      %p505 = pneg %p109
      %p506 = pneg %p133
      %p507 = pneg %p130
      %p508 = pneg %p154
      %p509 = pneg %p151
      %p510 = pneg %p175
      %p511 = pneg %p172
      %p512 = pneg %p196
      %p513 = pneg %p193
      %p514 = pneg %p217
      %p515 = pneg %p214
      %p516 = pneg %p238
      %p517 = pneg %p235
      %p518 = pneg %p259
      %p519 = pneg %p256
      %p520 = pneg %p280
      %p521 = pneg %p277
      %p522 = pneg %p301
      %p523 = pneg %p298
      %p524 = pneg %p322
      %p525 = pneg %p319
      %p526 = pneg %p343
      %p527 = pneg %p340
      %p528 = pneg %p364
      %p529 = pneg %p361
      %p530 = pneg %p385
      %p531 = pneg %p382
      %p532 = pneg %p411
      %p533 = pneg %p408
      %p534 = scmp.lt.s32.totalorder %s28, 1
      %s535 = scalar_select %p534, %s28, 1
      %s536 = smul.addr %s535, 2
      %s537 = smul.addr %s536, 8
      %s538 = scalar_lea.vmem %s17, %s537
      %p539 = scmp.lt.s32.totalorder %s28, 1
      %s540 = scalar_select %p539, %s28, 1
      %s541 = smul.addr %s540, 51
      %s542 = smul.addr %s541, 8
      %s543 = scalar_lea.vmem %s0, %s542
      %p544 = scmp.lt.s32.totalorder %s28, 1
      %s545 = scalar_select %p544, %s28, 1
      %s546 = smul.addr %s545, 2
      %s547 = smul.addr %s546, 8
      %s548 = scalar_lea.vmem %s17, %s547
      %v550 = vld [vmem:[%s543] sm:$0xff]
      %v551 = vld [vmem:[%s543 + $0x8] sm:$0xff]
      %v552 = vld [vmem:[%s543 + $0x10] sm:$0x1]
      %v553 = vld [vmem:[%s543 + $0x18] sm:$0xff]
      %v554 = vld [vmem:[%s543 + $0x20] sm:$0xff]
      %v555 = vld [vmem:[%s543 + $0x28] sm:$0x1]
      %v556 = vld [vmem:[%s543 + $0x30] sm:$0xff]
      %v557 = vld [vmem:[%s543 + $0x38] sm:$0xff]
      %v558 = vld [vmem:[%s543 + $0x40] sm:$0x1]
      %v559 = vld [vmem:[%s543 + $0x48] sm:$0xff]
      %v560 = vld [vmem:[%s543 + $0x50] sm:$0xff]
      %v561 = vld [vmem:[%s543 + $0x58] sm:$0x1]
      %v562 = vld [vmem:[%s543 + $0x60] sm:$0xff]
      %v563 = vld [vmem:[%s543 + $0x68] sm:$0xff]
      %v564 = vld [vmem:[%s543 + $0x70] sm:$0x1]
      %v565 = vld [vmem:[%s543 + $0x78] sm:$0xff]
      %v566 = vld [vmem:[%s543 + $0x80] sm:$0xff]
      %v567 = vld [vmem:[%s543 + $0x88] sm:$0x1]
      %v568 = vld [vmem:[%s543 + $0x90] sm:$0xff]
      %v569 = vld [vmem:[%s543 + $0x98] sm:$0xff]
      %v570 = vld [vmem:[%s543 + $0xa0] sm:$0x1]
      %v571 = vld [vmem:[%s543 + $0xa8] sm:$0xff]
      %v572 = vld [vmem:[%s543 + $0xb0] sm:$0xff]
      %v573 = vld [vmem:[%s543 + $0xb8] sm:$0x1]
      %v574 = vld [vmem:[%s543 + $0xc0] sm:$0xff]
      %v575 = vld [vmem:[%s543 + $0xc8] sm:$0xff]
      %v576 = vld [vmem:[%s543 + $0xd0] sm:$0x1]
      %v577 = vld [vmem:[%s543 + $0xd8] sm:$0xff]
      %v578 = vld [vmem:[%s543 + $0xe0] sm:$0xff]
      %v579 = vld [vmem:[%s543 + $0xe8] sm:$0x1]
      %v580 = vld [vmem:[%s543 + $0xf0] sm:$0xff]
      %v581 = vld [vmem:[%s543 + $0xf8] sm:$0xff]
      %v582 = vld [vmem:[%s543 + $0x100] sm:$0x1]
      %v583 = vld [vmem:[%s543 + $0x108] sm:$0xff]
      %v584 = vld [vmem:[%s543 + $0x110] sm:$0xff]
      %v585 = vld [vmem:[%s543 + $0x118] sm:$0x1]
      %v586 = vld [vmem:[%s543 + $0x120] sm:$0xff]
      %v587 = vld [vmem:[%s543 + $0x128] sm:$0xff]
      %v588 = vld [vmem:[%s543 + $0x130] sm:$0x1]
      %v589 = vld [vmem:[%s543 + $0x138] sm:$0xff]
      %v590 = vld [vmem:[%s543 + $0x140] sm:$0xff]
      %v591 = vld [vmem:[%s543 + $0x148] sm:$0x1]
      %v592 = vld [vmem:[%s543 + $0x150] sm:$0xff]
      %v593 = vld [vmem:[%s543 + $0x158] sm:$0xff]
      %v594 = vld [vmem:[%s543 + $0x160] sm:$0x1]
      %v595 = vld [vmem:[%s543 + $0x168] sm:$0xff]
      %v596 = vld [vmem:[%s543 + $0x170] sm:$0xff]
      %v597 = vld [vmem:[%s543 + $0x178] sm:$0x1]
      %v598 = vld [vmem:[%s543 + $0x180] sm:$0xff]
      %v599 = vld [vmem:[%s543 + $0x188] sm:$0xff]
      %v600 = vld [vmem:[%s543 + $0x190] sm:$0x1]
      %v601 = vld [vmem:[%s1] sm:$0x1]
      %603 = vset.pattern.permute.xlu0 0
      %604 = vperm.xlu0 %603, %v550
      %v605 = vpop.permute.xlu0 %604
      %608 = vset.pattern.permute.xlu0 0
      %609 = vperm.xlu0 %608, %v551
      %v610 = vpop.permute.xlu0 %609
      %613 = vset.pattern.permute.xlu0 0
      %614 = vperm.xlu0 %613, %v553
      %v615 = vpop.permute.xlu0 %614
      %618 = vset.pattern.permute.xlu0 0
      %619 = vperm.xlu0 %618, %v554
      %v620 = vpop.permute.xlu0 %619
      %623 = vset.pattern.permute.xlu0 0
      %624 = vperm.xlu0 %623, %v556
      %v625 = vpop.permute.xlu0 %624
      %628 = vset.pattern.permute.xlu0 0
      %629 = vperm.xlu0 %628, %v557
      %v630 = vpop.permute.xlu0 %629
      %633 = vset.pattern.permute.xlu0 0
      %634 = vperm.xlu0 %633, %v559
      %v635 = vpop.permute.xlu0 %634
      %638 = vset.pattern.permute.xlu0 0
      %639 = vperm.xlu0 %638, %v560
      %v640 = vpop.permute.xlu0 %639
      %643 = vset.pattern.permute.xlu0 0
      %644 = vperm.xlu0 %643, %v562
      %v645 = vpop.permute.xlu0 %644
      %648 = vset.pattern.permute.xlu0 0
      %649 = vperm.xlu0 %648, %v563
      %v650 = vpop.permute.xlu0 %649
      %653 = vset.pattern.permute.xlu0 0
      %654 = vperm.xlu0 %653, %v565
      %v655 = vpop.permute.xlu0 %654
      %658 = vset.pattern.permute.xlu0 0
      %659 = vperm.xlu0 %658, %v566
      %v660 = vpop.permute.xlu0 %659
      %663 = vset.pattern.permute.xlu0 0
      %664 = vperm.xlu0 %663, %v568
      %v665 = vpop.permute.xlu0 %664
      %668 = vset.pattern.permute.xlu0 0
      %669 = vperm.xlu0 %668, %v569
      %v670 = vpop.permute.xlu0 %669
      %673 = vset.pattern.permute.xlu0 0
      %674 = vperm.xlu0 %673, %v571
      %v675 = vpop.permute.xlu0 %674
      %678 = vset.pattern.permute.xlu0 0
      %679 = vperm.xlu0 %678, %v572
      %v680 = vpop.permute.xlu0 %679
      %683 = vset.pattern.permute.xlu0 0
      %684 = vperm.xlu0 %683, %v574
      %v685 = vpop.permute.xlu0 %684
      %688 = vset.pattern.permute.xlu0 0
      %689 = vperm.xlu0 %688, %v575
      %v690 = vpop.permute.xlu0 %689
      %693 = vset.pattern.permute.xlu0 0
      %694 = vperm.xlu0 %693, %v577
      %v695 = vpop.permute.xlu0 %694
      %698 = vset.pattern.permute.xlu0 0
      %699 = vperm.xlu0 %698, %v578
      %v700 = vpop.permute.xlu0 %699
      %703 = vset.pattern.permute.xlu0 0
      %704 = vperm.xlu0 %703, %v580
      %v705 = vpop.permute.xlu0 %704
      %708 = vset.pattern.permute.xlu0 0
      %709 = vperm.xlu0 %708, %v581
      %v710 = vpop.permute.xlu0 %709
      %713 = vset.pattern.permute.xlu0 0
      %714 = vperm.xlu0 %713, %v583
      %v715 = vpop.permute.xlu0 %714
      %718 = vset.pattern.permute.xlu0 0
      %719 = vperm.xlu0 %718, %v584
      %v720 = vpop.permute.xlu0 %719
      %723 = vset.pattern.permute.xlu0 0
      %724 = vperm.xlu0 %723, %v586
      %v725 = vpop.permute.xlu0 %724
      %728 = vset.pattern.permute.xlu0 0
      %729 = vperm.xlu0 %728, %v587
      %v730 = vpop.permute.xlu0 %729
      %733 = vset.pattern.permute.xlu0 0
      %734 = vperm.xlu0 %733, %v589
      %v735 = vpop.permute.xlu0 %734
      %738 = vset.pattern.permute.xlu0 0
      %739 = vperm.xlu0 %738, %v590
      %v740 = vpop.permute.xlu0 %739
      %743 = vset.pattern.permute.xlu0 0
      %744 = vperm.xlu0 %743, %v592
      %v745 = vpop.permute.xlu0 %744
      %748 = vset.pattern.permute.xlu0 0
      %749 = vperm.xlu0 %748, %v593
      %v750 = vpop.permute.xlu0 %749
      %753 = vset.pattern.permute.xlu0 0
      %754 = vperm.xlu0 %753, %v595
      %v755 = vpop.permute.xlu0 %754
      %758 = vset.pattern.permute.xlu0 0
      %759 = vperm.xlu0 %758, %v596
      %v760 = vpop.permute.xlu0 %759
      %v762 = vperm.slane %v601, 0
      %v763 = vmul.f32 %v605, %v762
      %v764 = vmul.f32 %v610, %v762
      %v765 = vmul.f32 %v615, %v762
      %v766 = vmul.f32 %v620, %v762
      %v767 = vmul.f32 %v625, %v762
      %v768 = vmul.f32 %v630, %v762
      %v769 = vmul.f32 %v635, %v762
      %v770 = vmul.f32 %v640, %v762
      %v771 = vmul.f32 %v645, %v762
      %v772 = vmul.f32 %v650, %v762
      %v773 = vmul.f32 %v655, %v762
      %v774 = vmul.f32 %v660, %v762
      %v775 = vmul.f32 %v665, %v762
      %v776 = vmul.f32 %v670, %v762
      %v777 = vmul.f32 %v675, %v762
      %v778 = vmul.f32 %v680, %v762
      %v779 = vmul.f32 %v685, %v762
      %v780 = vmul.f32 %v690, %v762
      %v781 = vmul.f32 %v695, %v762
      %v782 = vmul.f32 %v700, %v762
      %v783 = vmul.f32 %v705, %v762
      %v784 = vmul.f32 %v710, %v762
      %v785 = vmul.f32 %v715, %v762
      %v786 = vmul.f32 %v720, %v762
      %v787 = vmul.f32 %v725, %v762
      %v788 = vmul.f32 %v730, %v762
      %v789 = vmul.f32 %v735, %v762
      %v790 = vmul.f32 %v740, %v762
      %v791 = vmul.f32 %v745, %v762
      %v792 = vmul.f32 %v750, %v762
      %v793 = vmul.f32 %v755, %v762
      %v794 = vmul.f32 %v760, %v762
      %v795 = vadd.f32 %v763, 0.0
      %v796 = vadd.f32 %v764, 0.0
      %v797 = vadd.f32 %v765, 0.0
      %v798 = vadd.f32 %v766, 0.0
      %v799 = vadd.f32 %v767, 0.0
      %v800 = vadd.f32 %v768, 0.0
      %v801 = vadd.f32 %v769, 0.0
      %v802 = vadd.f32 %v770, 0.0
      %v803 = vadd.f32 %v771, 0.0
      %v804 = vadd.f32 %v772, 0.0
      %v805 = vadd.f32 %v773, 0.0
      %v806 = vadd.f32 %v774, 0.0
      %v807 = vadd.f32 %v775, 0.0
      %v808 = vadd.f32 %v776, 0.0
      %v809 = vadd.f32 %v777, 0.0
      %v810 = vadd.f32 %v778, 0.0
      %v811 = vadd.f32 %v779, 0.0
      %v812 = vadd.f32 %v780, 0.0
      %v813 = vadd.f32 %v781, 0.0
      %v814 = vadd.f32 %v782, 0.0
      %v815 = vadd.f32 %v783, 0.0
      %v816 = vadd.f32 %v784, 0.0
      %v817 = vadd.f32 %v785, 0.0
      %v818 = vadd.f32 %v786, 0.0
      %v819 = vadd.f32 %v787, 0.0
      %v820 = vadd.f32 %v788, 0.0
      %v821 = vadd.f32 %v789, 0.0
      %v822 = vadd.f32 %v790, 0.0
      %v823 = vadd.f32 %v791, 0.0
      %v824 = vadd.f32 %v792, 0.0
      %v825 = vadd.f32 %v793, 0.0
      %v826 = vadd.f32 %v794, 0.0
      %v827 = vld [vmem:[%s1 + $0x1] sm:$0x1]
      %828 = vset.pattern.permute.xlu0 1
      %829 = vperm.xlu0 %828, %v550
      %v830 = vpop.permute.xlu0 %829
      %832 = vset.pattern.permute.xlu0 1
      %833 = vperm.xlu0 %832, %v551
      %v834 = vpop.permute.xlu0 %833
      %836 = vset.pattern.permute.xlu0 1
      %837 = vperm.xlu0 %836, %v553
      %v838 = vpop.permute.xlu0 %837
      %840 = vset.pattern.permute.xlu0 1
      %841 = vperm.xlu0 %840, %v554
      %v842 = vpop.permute.xlu0 %841
      %844 = vset.pattern.permute.xlu0 1
      %845 = vperm.xlu0 %844, %v556
      %v846 = vpop.permute.xlu0 %845
      %848 = vset.pattern.permute.xlu0 1
      %849 = vperm.xlu0 %848, %v557
      %v850 = vpop.permute.xlu0 %849
      %852 = vset.pattern.permute.xlu0 1
      %853 = vperm.xlu0 %852, %v559
      %v854 = vpop.permute.xlu0 %853
      %856 = vset.pattern.permute.xlu0 1
      %857 = vperm.xlu0 %856, %v560
      %v858 = vpop.permute.xlu0 %857
      %860 = vset.pattern.permute.xlu0 1
      %861 = vperm.xlu0 %860, %v562
      %v862 = vpop.permute.xlu0 %861
      %864 = vset.pattern.permute.xlu0 1
      %865 = vperm.xlu0 %864, %v563
      %v866 = vpop.permute.xlu0 %865
      %868 = vset.pattern.permute.xlu0 1
      %869 = vperm.xlu0 %868, %v565
      %v870 = vpop.permute.xlu0 %869
      %872 = vset.pattern.permute.xlu0 1
      %873 = vperm.xlu0 %872, %v566
      %v874 = vpop.permute.xlu0 %873
      %876 = vset.pattern.permute.xlu0 1
      %877 = vperm.xlu0 %876, %v568
      %v878 = vpop.permute.xlu0 %877
      %880 = vset.pattern.permute.xlu0 1
      %881 = vperm.xlu0 %880, %v569
      %v882 = vpop.permute.xlu0 %881
      %884 = vset.pattern.permute.xlu0 1
      %885 = vperm.xlu0 %884, %v571
      %v886 = vpop.permute.xlu0 %885
      %888 = vset.pattern.permute.xlu0 1
      %889 = vperm.xlu0 %888, %v572
      %v890 = vpop.permute.xlu0 %889
      %892 = vset.pattern.permute.xlu0 1
      %893 = vperm.xlu0 %892, %v574
      %v894 = vpop.permute.xlu0 %893
      %896 = vset.pattern.permute.xlu0 1
      %897 = vperm.xlu0 %896, %v575
      %v898 = vpop.permute.xlu0 %897
      %900 = vset.pattern.permute.xlu0 1
      %901 = vperm.xlu0 %900, %v577
      %v902 = vpop.permute.xlu0 %901
      %904 = vset.pattern.permute.xlu0 1
      %905 = vperm.xlu0 %904, %v578
      %v906 = vpop.permute.xlu0 %905
      %908 = vset.pattern.permute.xlu0 1
      %909 = vperm.xlu0 %908, %v580
      %v910 = vpop.permute.xlu0 %909
      %912 = vset.pattern.permute.xlu0 1
      %913 = vperm.xlu0 %912, %v581
      %v914 = vpop.permute.xlu0 %913
      %916 = vset.pattern.permute.xlu0 1
      %917 = vperm.xlu0 %916, %v583
      %v918 = vpop.permute.xlu0 %917
      %920 = vset.pattern.permute.xlu0 1
      %921 = vperm.xlu0 %920, %v584
      %v922 = vpop.permute.xlu0 %921
      %924 = vset.pattern.permute.xlu0 1
      %925 = vperm.xlu0 %924, %v586
      %v926 = vpop.permute.xlu0 %925
      %928 = vset.pattern.permute.xlu0 1
      %929 = vperm.xlu0 %928, %v587
      %v930 = vpop.permute.xlu0 %929
      %932 = vset.pattern.permute.xlu0 1
      %933 = vperm.xlu0 %932, %v589
      %v934 = vpop.permute.xlu0 %933
      %936 = vset.pattern.permute.xlu0 1
      %937 = vperm.xlu0 %936, %v590
      %v938 = vpop.permute.xlu0 %937
      %940 = vset.pattern.permute.xlu0 1
      %941 = vperm.xlu0 %940, %v592
      %v942 = vpop.permute.xlu0 %941
      %944 = vset.pattern.permute.xlu0 1
      %945 = vperm.xlu0 %944, %v593
      %v946 = vpop.permute.xlu0 %945
      %948 = vset.pattern.permute.xlu0 1
      %949 = vperm.xlu0 %948, %v595
      %v950 = vpop.permute.xlu0 %949
      %952 = vset.pattern.permute.xlu0 1
      %953 = vperm.xlu0 %952, %v596
      %v954 = vpop.permute.xlu0 %953
      %v956 = vperm.slane %v827, 0
      %v957 = vmul.f32 %v830, %v956
      %v958 = vmul.f32 %v834, %v956
      %v959 = vmul.f32 %v838, %v956
      %v960 = vmul.f32 %v842, %v956
      %v961 = vmul.f32 %v846, %v956
      %v962 = vmul.f32 %v850, %v956
      %v963 = vmul.f32 %v854, %v956
      %v964 = vmul.f32 %v858, %v956
      %v965 = vmul.f32 %v862, %v956
      %v966 = vmul.f32 %v866, %v956
      %v967 = vmul.f32 %v870, %v956
      %v968 = vmul.f32 %v874, %v956
      %v969 = vmul.f32 %v878, %v956
      %v970 = vmul.f32 %v882, %v956
      %v971 = vmul.f32 %v886, %v956
      %v972 = vmul.f32 %v890, %v956
      %v973 = vmul.f32 %v894, %v956
      %v974 = vmul.f32 %v898, %v956
      %v975 = vmul.f32 %v902, %v956
      %v976 = vmul.f32 %v906, %v956
      %v977 = vmul.f32 %v910, %v956
      %v978 = vmul.f32 %v914, %v956
      %v979 = vmul.f32 %v918, %v956
      %v980 = vmul.f32 %v922, %v956
      %v981 = vmul.f32 %v926, %v956
      %v982 = vmul.f32 %v930, %v956
      %v983 = vmul.f32 %v934, %v956
      %v984 = vmul.f32 %v938, %v956
      %v985 = vmul.f32 %v942, %v956
      %v986 = vmul.f32 %v946, %v956
      %v987 = vmul.f32 %v950, %v956
      %v988 = vmul.f32 %v954, %v956
      %v989 = vadd.f32 %v795, %v957
      %v990 = vadd.f32 %v796, %v958
      %v991 = vadd.f32 %v797, %v959
      %v992 = vadd.f32 %v798, %v960
      %v993 = vadd.f32 %v799, %v961
      %v994 = vadd.f32 %v800, %v962
      %v995 = vadd.f32 %v801, %v963
      %v996 = vadd.f32 %v802, %v964
      %v997 = vadd.f32 %v803, %v965
      %v998 = vadd.f32 %v804, %v966
      %v999 = vadd.f32 %v805, %v967
      %v1000 = vadd.f32 %v806, %v968
      %v1001 = vadd.f32 %v807, %v969
      %v1002 = vadd.f32 %v808, %v970
      %v1003 = vadd.f32 %v809, %v971
      %v1004 = vadd.f32 %v810, %v972
      %v1005 = vadd.f32 %v811, %v973
      %v1006 = vadd.f32 %v812, %v974
      %v1007 = vadd.f32 %v813, %v975
      %v1008 = vadd.f32 %v814, %v976
      %v1009 = vadd.f32 %v815, %v977
      %v1010 = vadd.f32 %v816, %v978
      %v1011 = vadd.f32 %v817, %v979
      %v1012 = vadd.f32 %v818, %v980
      %v1013 = vadd.f32 %v819, %v981
      %v1014 = vadd.f32 %v820, %v982
      %v1015 = vadd.f32 %v821, %v983
      %v1016 = vadd.f32 %v822, %v984
      %v1017 = vadd.f32 %v823, %v985
      %v1018 = vadd.f32 %v824, %v986
      %v1019 = vadd.f32 %v825, %v987
      %v1020 = vadd.f32 %v826, %v988
      %v1021 = vld [vmem:[%s1 + $0x2] sm:$0x1]
      %1022 = vset.pattern.permute.xlu0 2
      %1023 = vperm.xlu0 %1022, %v550
      %v1024 = vpop.permute.xlu0 %1023
      %1026 = vset.pattern.permute.xlu0 2
      %1027 = vperm.xlu0 %1026, %v551
      %v1028 = vpop.permute.xlu0 %1027
      %1030 = vset.pattern.permute.xlu0 2
      %1031 = vperm.xlu0 %1030, %v553
      %v1032 = vpop.permute.xlu0 %1031
      %1034 = vset.pattern.permute.xlu0 2
      %1035 = vperm.xlu0 %1034, %v554
      %v1036 = vpop.permute.xlu0 %1035
      %1038 = vset.pattern.permute.xlu0 2
      %1039 = vperm.xlu0 %1038, %v556
      %v1040 = vpop.permute.xlu0 %1039
      %1042 = vset.pattern.permute.xlu0 2
      %1043 = vperm.xlu0 %1042, %v557
      %v1044 = vpop.permute.xlu0 %1043
      %1046 = vset.pattern.permute.xlu0 2
      %1047 = vperm.xlu0 %1046, %v559
      %v1048 = vpop.permute.xlu0 %1047
      %1050 = vset.pattern.permute.xlu0 2
      %1051 = vperm.xlu0 %1050, %v560
      %v1052 = vpop.permute.xlu0 %1051
      %1054 = vset.pattern.permute.xlu0 2
      %1055 = vperm.xlu0 %1054, %v562
      %v1056 = vpop.permute.xlu0 %1055
      %1058 = vset.pattern.permute.xlu0 2
      %1059 = vperm.xlu0 %1058, %v563
      %v1060 = vpop.permute.xlu0 %1059
      %1062 = vset.pattern.permute.xlu0 2
      %1063 = vperm.xlu0 %1062, %v565
      %v1064 = vpop.permute.xlu0 %1063
      %1066 = vset.pattern.permute.xlu0 2
      %1067 = vperm.xlu0 %1066, %v566
      %v1068 = vpop.permute.xlu0 %1067
      %1070 = vset.pattern.permute.xlu0 2
      %1071 = vperm.xlu0 %1070, %v568
      %v1072 = vpop.permute.xlu0 %1071
      %1074 = vset.pattern.permute.xlu0 2
      %1075 = vperm.xlu0 %1074, %v569
      %v1076 = vpop.permute.xlu0 %1075
      %1078 = vset.pattern.permute.xlu0 2
      %1079 = vperm.xlu0 %1078, %v571
      %v1080 = vpop.permute.xlu0 %1079
      %1082 = vset.pattern.permute.xlu0 2
      %1083 = vperm.xlu0 %1082, %v572
      %v1084 = vpop.permute.xlu0 %1083
      %1086 = vset.pattern.permute.xlu0 2
      %1087 = vperm.xlu0 %1086, %v574
      %v1088 = vpop.permute.xlu0 %1087
      %1090 = vset.pattern.permute.xlu0 2
      %1091 = vperm.xlu0 %1090, %v575
      %v1092 = vpop.permute.xlu0 %1091
      %1094 = vset.pattern.permute.xlu0 2
      %1095 = vperm.xlu0 %1094, %v577
      %v1096 = vpop.permute.xlu0 %1095
      %1098 = vset.pattern.permute.xlu0 2
      %1099 = vperm.xlu0 %1098, %v578
      %v1100 = vpop.permute.xlu0 %1099
      %1102 = vset.pattern.permute.xlu0 2
      %1103 = vperm.xlu0 %1102, %v580
      %v1104 = vpop.permute.xlu0 %1103
      %1106 = vset.pattern.permute.xlu0 2
      %1107 = vperm.xlu0 %1106, %v581
      %v1108 = vpop.permute.xlu0 %1107
      %1110 = vset.pattern.permute.xlu0 2
      %1111 = vperm.xlu0 %1110, %v583
      %v1112 = vpop.permute.xlu0 %1111
      %1114 = vset.pattern.permute.xlu0 2
      %1115 = vperm.xlu0 %1114, %v584
      %v1116 = vpop.permute.xlu0 %1115
      %1118 = vset.pattern.permute.xlu0 2
      %1119 = vperm.xlu0 %1118, %v586
      %v1120 = vpop.permute.xlu0 %1119
      %1122 = vset.pattern.permute.xlu0 2
      %1123 = vperm.xlu0 %1122, %v587
      %v1124 = vpop.permute.xlu0 %1123
      %1126 = vset.pattern.permute.xlu0 2
      %1127 = vperm.xlu0 %1126, %v589
      %v1128 = vpop.permute.xlu0 %1127
      %1130 = vset.pattern.permute.xlu0 2
      %1131 = vperm.xlu0 %1130, %v590
      %v1132 = vpop.permute.xlu0 %1131
      %1134 = vset.pattern.permute.xlu0 2
      %1135 = vperm.xlu0 %1134, %v592
      %v1136 = vpop.permute.xlu0 %1135
      %1138 = vset.pattern.permute.xlu0 2
      %1139 = vperm.xlu0 %1138, %v593
      %v1140 = vpop.permute.xlu0 %1139
      %1142 = vset.pattern.permute.xlu0 2
      %1143 = vperm.xlu0 %1142, %v595
      %v1144 = vpop.permute.xlu0 %1143
      %1146 = vset.pattern.permute.xlu0 2
      %1147 = vperm.xlu0 %1146, %v596
      %v1148 = vpop.permute.xlu0 %1147
      %v1150 = vperm.slane %v1021, 0
      %v1151 = vmul.f32 %v1024, %v1150
      %v1152 = vmul.f32 %v1028, %v1150
      %v1153 = vmul.f32 %v1032, %v1150
      %v1154 = vmul.f32 %v1036, %v1150
      %v1155 = vmul.f32 %v1040, %v1150
      %v1156 = vmul.f32 %v1044, %v1150
      %v1157 = vmul.f32 %v1048, %v1150
      %v1158 = vmul.f32 %v1052, %v1150
      %v1159 = vmul.f32 %v1056, %v1150
      %v1160 = vmul.f32 %v1060, %v1150
      %v1161 = vmul.f32 %v1064, %v1150
      %v1162 = vmul.f32 %v1068, %v1150
      %v1163 = vmul.f32 %v1072, %v1150
      %v1164 = vmul.f32 %v1076, %v1150
      %v1165 = vmul.f32 %v1080, %v1150
      %v1166 = vmul.f32 %v1084, %v1150
      %v1167 = vmul.f32 %v1088, %v1150
      %v1168 = vmul.f32 %v1092, %v1150
      %v1169 = vmul.f32 %v1096, %v1150
      %v1170 = vmul.f32 %v1100, %v1150
      %v1171 = vmul.f32 %v1104, %v1150
      %v1172 = vmul.f32 %v1108, %v1150
      %v1173 = vmul.f32 %v1112, %v1150
      %v1174 = vmul.f32 %v1116, %v1150
      %v1175 = vmul.f32 %v1120, %v1150
      %v1176 = vmul.f32 %v1124, %v1150
      %v1177 = vmul.f32 %v1128, %v1150
      %v1178 = vmul.f32 %v1132, %v1150
      %v1179 = vmul.f32 %v1136, %v1150
      %v1180 = vmul.f32 %v1140, %v1150
      %v1181 = vmul.f32 %v1144, %v1150
      %v1182 = vmul.f32 %v1148, %v1150
      %v1183 = vadd.f32 %v989, %v1151
      %v1184 = vadd.f32 %v990, %v1152
      %v1185 = vadd.f32 %v991, %v1153
      %v1186 = vadd.f32 %v992, %v1154
      %v1187 = vadd.f32 %v993, %v1155
      %v1188 = vadd.f32 %v994, %v1156
      %v1189 = vadd.f32 %v995, %v1157
      %v1190 = vadd.f32 %v996, %v1158
      %v1191 = vadd.f32 %v997, %v1159
      %v1192 = vadd.f32 %v998, %v1160
      %v1193 = vadd.f32 %v999, %v1161
      %v1194 = vadd.f32 %v1000, %v1162
      %v1195 = vadd.f32 %v1001, %v1163
      %v1196 = vadd.f32 %v1002, %v1164
      %v1197 = vadd.f32 %v1003, %v1165
      %v1198 = vadd.f32 %v1004, %v1166
      %v1199 = vadd.f32 %v1005, %v1167
      %v1200 = vadd.f32 %v1006, %v1168
      %v1201 = vadd.f32 %v1007, %v1169
      %v1202 = vadd.f32 %v1008, %v1170
      %v1203 = vadd.f32 %v1009, %v1171
      %v1204 = vadd.f32 %v1010, %v1172
      %v1205 = vadd.f32 %v1011, %v1173
      %v1206 = vadd.f32 %v1012, %v1174
      %v1207 = vadd.f32 %v1013, %v1175
      %v1208 = vadd.f32 %v1014, %v1176
      %v1209 = vadd.f32 %v1015, %v1177
      %v1210 = vadd.f32 %v1016, %v1178
      %v1211 = vadd.f32 %v1017, %v1179
      %v1212 = vadd.f32 %v1018, %v1180
      %v1213 = vadd.f32 %v1019, %v1181
      %v1214 = vadd.f32 %v1020, %v1182
      %v1215 = vld [vmem:[%s1 + $0x3] sm:$0x1]
      %1216 = vset.pattern.permute.xlu0 3
      %1217 = vperm.xlu0 %1216, %v550
      %v1218 = vpop.permute.xlu0 %1217
      %1220 = vset.pattern.permute.xlu0 3
      %1221 = vperm.xlu0 %1220, %v551
      %v1222 = vpop.permute.xlu0 %1221
      %1224 = vset.pattern.permute.xlu0 3
      %1225 = vperm.xlu0 %1224, %v553
      %v1226 = vpop.permute.xlu0 %1225
      %1228 = vset.pattern.permute.xlu0 3
      %1229 = vperm.xlu0 %1228, %v554
      %v1230 = vpop.permute.xlu0 %1229
      %1232 = vset.pattern.permute.xlu0 3
      %1233 = vperm.xlu0 %1232, %v556
      %v1234 = vpop.permute.xlu0 %1233
      %1236 = vset.pattern.permute.xlu0 3
      %1237 = vperm.xlu0 %1236, %v557
      %v1238 = vpop.permute.xlu0 %1237
      %1240 = vset.pattern.permute.xlu0 3
      %1241 = vperm.xlu0 %1240, %v559
      %v1242 = vpop.permute.xlu0 %1241
      %1244 = vset.pattern.permute.xlu0 3
      %1245 = vperm.xlu0 %1244, %v560
      %v1246 = vpop.permute.xlu0 %1245
      %1248 = vset.pattern.permute.xlu0 3
      %1249 = vperm.xlu0 %1248, %v562
      %v1250 = vpop.permute.xlu0 %1249
      %1252 = vset.pattern.permute.xlu0 3
      %1253 = vperm.xlu0 %1252, %v563
      %v1254 = vpop.permute.xlu0 %1253
      %1256 = vset.pattern.permute.xlu0 3
      %1257 = vperm.xlu0 %1256, %v565
      %v1258 = vpop.permute.xlu0 %1257
      %1260 = vset.pattern.permute.xlu0 3
      %1261 = vperm.xlu0 %1260, %v566
      %v1262 = vpop.permute.xlu0 %1261
      %1264 = vset.pattern.permute.xlu0 3
      %1265 = vperm.xlu0 %1264, %v568
      %v1266 = vpop.permute.xlu0 %1265
      %1268 = vset.pattern.permute.xlu0 3
      %1269 = vperm.xlu0 %1268, %v569
      %v1270 = vpop.permute.xlu0 %1269
      %1272 = vset.pattern.permute.xlu0 3
      %1273 = vperm.xlu0 %1272, %v571
      %v1274 = vpop.permute.xlu0 %1273
      %1276 = vset.pattern.permute.xlu0 3
      %1277 = vperm.xlu0 %1276, %v572
      %v1278 = vpop.permute.xlu0 %1277
      %1280 = vset.pattern.permute.xlu0 3
      %1281 = vperm.xlu0 %1280, %v574
      %v1282 = vpop.permute.xlu0 %1281
      %1284 = vset.pattern.permute.xlu0 3
      %1285 = vperm.xlu0 %1284, %v575
      %v1286 = vpop.permute.xlu0 %1285
      %1288 = vset.pattern.permute.xlu0 3
      %1289 = vperm.xlu0 %1288, %v577
      %v1290 = vpop.permute.xlu0 %1289
      %1292 = vset.pattern.permute.xlu0 3
      %1293 = vperm.xlu0 %1292, %v578
      %v1294 = vpop.permute.xlu0 %1293
      %1296 = vset.pattern.permute.xlu0 3
      %1297 = vperm.xlu0 %1296, %v580
      %v1298 = vpop.permute.xlu0 %1297
      %1300 = vset.pattern.permute.xlu0 3
      %1301 = vperm.xlu0 %1300, %v581
      %v1302 = vpop.permute.xlu0 %1301
      %1304 = vset.pattern.permute.xlu0 3
      %1305 = vperm.xlu0 %1304, %v583
      %v1306 = vpop.permute.xlu0 %1305
      %1308 = vset.pattern.permute.xlu0 3
      %1309 = vperm.xlu0 %1308, %v584
      %v1310 = vpop.permute.xlu0 %1309
      %1312 = vset.pattern.permute.xlu0 3
      %1313 = vperm.xlu0 %1312, %v586
      %v1314 = vpop.permute.xlu0 %1313
      %1316 = vset.pattern.permute.xlu0 3
      %1317 = vperm.xlu0 %1316, %v587
      %v1318 = vpop.permute.xlu0 %1317
      %1320 = vset.pattern.permute.xlu0 3
      %1321 = vperm.xlu0 %1320, %v589
      %v1322 = vpop.permute.xlu0 %1321
      %1324 = vset.pattern.permute.xlu0 3
      %1325 = vperm.xlu0 %1324, %v590
      %v1326 = vpop.permute.xlu0 %1325
      %1328 = vset.pattern.permute.xlu0 3
      %1329 = vperm.xlu0 %1328, %v592
      %v1330 = vpop.permute.xlu0 %1329
      %1332 = vset.pattern.permute.xlu0 3
      %1333 = vperm.xlu0 %1332, %v593
      %v1334 = vpop.permute.xlu0 %1333
      %1336 = vset.pattern.permute.xlu0 3
      %1337 = vperm.xlu0 %1336, %v595
      %v1338 = vpop.permute.xlu0 %1337
      %1340 = vset.pattern.permute.xlu0 3
      %1341 = vperm.xlu0 %1340, %v596
      %v1342 = vpop.permute.xlu0 %1341
      %v1344 = vperm.slane %v1215, 0
      %v1345 = vmul.f32 %v1218, %v1344
      %v1346 = vmul.f32 %v1222, %v1344
      %v1347 = vmul.f32 %v1226, %v1344
      %v1348 = vmul.f32 %v1230, %v1344
      %v1349 = vmul.f32 %v1234, %v1344
      %v1350 = vmul.f32 %v1238, %v1344
      %v1351 = vmul.f32 %v1242, %v1344
      %v1352 = vmul.f32 %v1246, %v1344
      %v1353 = vmul.f32 %v1250, %v1344
      %v1354 = vmul.f32 %v1254, %v1344
      %v1355 = vmul.f32 %v1258, %v1344
      %v1356 = vmul.f32 %v1262, %v1344
      %v1357 = vmul.f32 %v1266, %v1344
      %v1358 = vmul.f32 %v1270, %v1344
      %v1359 = vmul.f32 %v1274, %v1344
      %v1360 = vmul.f32 %v1278, %v1344
      %v1361 = vmul.f32 %v1282, %v1344
      %v1362 = vmul.f32 %v1286, %v1344
      %v1363 = vmul.f32 %v1290, %v1344
      %v1364 = vmul.f32 %v1294, %v1344
      %v1365 = vmul.f32 %v1298, %v1344
      %v1366 = vmul.f32 %v1302, %v1344
      %v1367 = vmul.f32 %v1306, %v1344
      %v1368 = vmul.f32 %v1310, %v1344
      %v1369 = vmul.f32 %v1314, %v1344
      %v1370 = vmul.f32 %v1318, %v1344
      %v1371 = vmul.f32 %v1322, %v1344
      %v1372 = vmul.f32 %v1326, %v1344
      %v1373 = vmul.f32 %v1330, %v1344
      %v1374 = vmul.f32 %v1334, %v1344
      %v1375 = vmul.f32 %v1338, %v1344
      %v1376 = vmul.f32 %v1342, %v1344
      %v1377 = vadd.f32 %v1183, %v1345
      %v1378 = vadd.f32 %v1184, %v1346
      %v1379 = vadd.f32 %v1185, %v1347
      %v1380 = vadd.f32 %v1186, %v1348
      %v1381 = vadd.f32 %v1187, %v1349
      %v1382 = vadd.f32 %v1188, %v1350
      %v1383 = vadd.f32 %v1189, %v1351
      %v1384 = vadd.f32 %v1190, %v1352
      %v1385 = vadd.f32 %v1191, %v1353
      %v1386 = vadd.f32 %v1192, %v1354
      %v1387 = vadd.f32 %v1193, %v1355
      %v1388 = vadd.f32 %v1194, %v1356
      %v1389 = vadd.f32 %v1195, %v1357
      %v1390 = vadd.f32 %v1196, %v1358
      %v1391 = vadd.f32 %v1197, %v1359
      %v1392 = vadd.f32 %v1198, %v1360
      %v1393 = vadd.f32 %v1199, %v1361
      %v1394 = vadd.f32 %v1200, %v1362
      %v1395 = vadd.f32 %v1201, %v1363
      %v1396 = vadd.f32 %v1202, %v1364
      %v1397 = vadd.f32 %v1203, %v1365
      %v1398 = vadd.f32 %v1204, %v1366
      %v1399 = vadd.f32 %v1205, %v1367
      %v1400 = vadd.f32 %v1206, %v1368
      %v1401 = vadd.f32 %v1207, %v1369
      %v1402 = vadd.f32 %v1208, %v1370
      %v1403 = vadd.f32 %v1209, %v1371
      %v1404 = vadd.f32 %v1210, %v1372
      %v1405 = vadd.f32 %v1211, %v1373
      %v1406 = vadd.f32 %v1212, %v1374
      %v1407 = vadd.f32 %v1213, %v1375
      %v1408 = vadd.f32 %v1214, %v1376
      %v1409 = vld [vmem:[%s1 + $0x4] sm:$0x1]
      %1410 = vset.pattern.permute.xlu0 4
      %1411 = vperm.xlu0 %1410, %v550
      %v1412 = vpop.permute.xlu0 %1411
      %1414 = vset.pattern.permute.xlu0 4
      %1415 = vperm.xlu0 %1414, %v551
      %v1416 = vpop.permute.xlu0 %1415
      %1418 = vset.pattern.permute.xlu0 4
      %1419 = vperm.xlu0 %1418, %v553
      %v1420 = vpop.permute.xlu0 %1419
      %1422 = vset.pattern.permute.xlu0 4
      %1423 = vperm.xlu0 %1422, %v554
      %v1424 = vpop.permute.xlu0 %1423
      %1426 = vset.pattern.permute.xlu0 4
      %1427 = vperm.xlu0 %1426, %v556
      %v1428 = vpop.permute.xlu0 %1427
      %1430 = vset.pattern.permute.xlu0 4
      %1431 = vperm.xlu0 %1430, %v557
      %v1432 = vpop.permute.xlu0 %1431
      %1434 = vset.pattern.permute.xlu0 4
      %1435 = vperm.xlu0 %1434, %v559
      %v1436 = vpop.permute.xlu0 %1435
      %1438 = vset.pattern.permute.xlu0 4
      %1439 = vperm.xlu0 %1438, %v560
      %v1440 = vpop.permute.xlu0 %1439
      %1442 = vset.pattern.permute.xlu0 4
      %1443 = vperm.xlu0 %1442, %v562
      %v1444 = vpop.permute.xlu0 %1443
      %1446 = vset.pattern.permute.xlu0 4
      %1447 = vperm.xlu0 %1446, %v563
      %v1448 = vpop.permute.xlu0 %1447
      %1450 = vset.pattern.permute.xlu0 4
      %1451 = vperm.xlu0 %1450, %v565
      %v1452 = vpop.permute.xlu0 %1451
      %1454 = vset.pattern.permute.xlu0 4
      %1455 = vperm.xlu0 %1454, %v566
      %v1456 = vpop.permute.xlu0 %1455
      %1458 = vset.pattern.permute.xlu0 4
      %1459 = vperm.xlu0 %1458, %v568
      %v1460 = vpop.permute.xlu0 %1459
      %1462 = vset.pattern.permute.xlu0 4
      %1463 = vperm.xlu0 %1462, %v569
      %v1464 = vpop.permute.xlu0 %1463
      %1466 = vset.pattern.permute.xlu0 4
      %1467 = vperm.xlu0 %1466, %v571
      %v1468 = vpop.permute.xlu0 %1467
      %1470 = vset.pattern.permute.xlu0 4
      %1471 = vperm.xlu0 %1470, %v572
      %v1472 = vpop.permute.xlu0 %1471
      %1474 = vset.pattern.permute.xlu0 4
      %1475 = vperm.xlu0 %1474, %v574
      %v1476 = vpop.permute.xlu0 %1475
      %1478 = vset.pattern.permute.xlu0 4
      %1479 = vperm.xlu0 %1478, %v575
      %v1480 = vpop.permute.xlu0 %1479
      %1482 = vset.pattern.permute.xlu0 4
      %1483 = vperm.xlu0 %1482, %v577
      %v1484 = vpop.permute.xlu0 %1483
      %1486 = vset.pattern.permute.xlu0 4
      %1487 = vperm.xlu0 %1486, %v578
      %v1488 = vpop.permute.xlu0 %1487
      %1490 = vset.pattern.permute.xlu0 4
      %1491 = vperm.xlu0 %1490, %v580
      %v1492 = vpop.permute.xlu0 %1491
      %1494 = vset.pattern.permute.xlu0 4
      %1495 = vperm.xlu0 %1494, %v581
      %v1496 = vpop.permute.xlu0 %1495
      %1498 = vset.pattern.permute.xlu0 4
      %1499 = vperm.xlu0 %1498, %v583
      %v1500 = vpop.permute.xlu0 %1499
      %1502 = vset.pattern.permute.xlu0 4
      %1503 = vperm.xlu0 %1502, %v584
      %v1504 = vpop.permute.xlu0 %1503
      %1506 = vset.pattern.permute.xlu0 4
      %1507 = vperm.xlu0 %1506, %v586
      %v1508 = vpop.permute.xlu0 %1507
      %1510 = vset.pattern.permute.xlu0 4
      %1511 = vperm.xlu0 %1510, %v587
      %v1512 = vpop.permute.xlu0 %1511
      %1514 = vset.pattern.permute.xlu0 4
      %1515 = vperm.xlu0 %1514, %v589
      %v1516 = vpop.permute.xlu0 %1515
      %1518 = vset.pattern.permute.xlu0 4
      %1519 = vperm.xlu0 %1518, %v590
      %v1520 = vpop.permute.xlu0 %1519
      %1522 = vset.pattern.permute.xlu0 4
      %1523 = vperm.xlu0 %1522, %v592
      %v1524 = vpop.permute.xlu0 %1523
      %1526 = vset.pattern.permute.xlu0 4
      %1527 = vperm.xlu0 %1526, %v593
      %v1528 = vpop.permute.xlu0 %1527
      %1530 = vset.pattern.permute.xlu0 4
      %1531 = vperm.xlu0 %1530, %v595
      %v1532 = vpop.permute.xlu0 %1531
      %1534 = vset.pattern.permute.xlu0 4
      %1535 = vperm.xlu0 %1534, %v596
      %v1536 = vpop.permute.xlu0 %1535
      %v1538 = vperm.slane %v1409, 0
      %v1539 = vmul.f32 %v1412, %v1538
      %v1540 = vmul.f32 %v1416, %v1538
      %v1541 = vmul.f32 %v1420, %v1538
      %v1542 = vmul.f32 %v1424, %v1538
      %v1543 = vmul.f32 %v1428, %v1538
      %v1544 = vmul.f32 %v1432, %v1538
      %v1545 = vmul.f32 %v1436, %v1538
      %v1546 = vmul.f32 %v1440, %v1538
      %v1547 = vmul.f32 %v1444, %v1538
      %v1548 = vmul.f32 %v1448, %v1538
      %v1549 = vmul.f32 %v1452, %v1538
      %v1550 = vmul.f32 %v1456, %v1538
      %v1551 = vmul.f32 %v1460, %v1538
      %v1552 = vmul.f32 %v1464, %v1538
      %v1553 = vmul.f32 %v1468, %v1538
      %v1554 = vmul.f32 %v1472, %v1538
      %v1555 = vmul.f32 %v1476, %v1538
      %v1556 = vmul.f32 %v1480, %v1538
      %v1557 = vmul.f32 %v1484, %v1538
      %v1558 = vmul.f32 %v1488, %v1538
      %v1559 = vmul.f32 %v1492, %v1538
      %v1560 = vmul.f32 %v1496, %v1538
      %v1561 = vmul.f32 %v1500, %v1538
      %v1562 = vmul.f32 %v1504, %v1538
      %v1563 = vmul.f32 %v1508, %v1538
      %v1564 = vmul.f32 %v1512, %v1538
      %v1565 = vmul.f32 %v1516, %v1538
      %v1566 = vmul.f32 %v1520, %v1538
      %v1567 = vmul.f32 %v1524, %v1538
      %v1568 = vmul.f32 %v1528, %v1538
      %v1569 = vmul.f32 %v1532, %v1538
      %v1570 = vmul.f32 %v1536, %v1538
      %v1571 = vadd.f32 %v1377, %v1539
      %v1572 = vadd.f32 %v1378, %v1540
      %v1573 = vadd.f32 %v1379, %v1541
      %v1574 = vadd.f32 %v1380, %v1542
      %v1575 = vadd.f32 %v1381, %v1543
      %v1576 = vadd.f32 %v1382, %v1544
      %v1577 = vadd.f32 %v1383, %v1545
      %v1578 = vadd.f32 %v1384, %v1546
      %v1579 = vadd.f32 %v1385, %v1547
      %v1580 = vadd.f32 %v1386, %v1548
      %v1581 = vadd.f32 %v1387, %v1549
      %v1582 = vadd.f32 %v1388, %v1550
      %v1583 = vadd.f32 %v1389, %v1551
      %v1584 = vadd.f32 %v1390, %v1552
      %v1585 = vadd.f32 %v1391, %v1553
      %v1586 = vadd.f32 %v1392, %v1554
      %v1587 = vadd.f32 %v1393, %v1555
      %v1588 = vadd.f32 %v1394, %v1556
      %v1589 = vadd.f32 %v1395, %v1557
      %v1590 = vadd.f32 %v1396, %v1558
      %v1591 = vadd.f32 %v1397, %v1559
      %v1592 = vadd.f32 %v1398, %v1560
      %v1593 = vadd.f32 %v1399, %v1561
      %v1594 = vadd.f32 %v1400, %v1562
      %v1595 = vadd.f32 %v1401, %v1563
      %v1596 = vadd.f32 %v1402, %v1564
      %v1597 = vadd.f32 %v1403, %v1565
      %v1598 = vadd.f32 %v1404, %v1566
      %v1599 = vadd.f32 %v1405, %v1567
      %v1600 = vadd.f32 %v1406, %v1568
      %v1601 = vadd.f32 %v1407, %v1569
      %v1602 = vadd.f32 %v1408, %v1570
      %v1603 = vld [vmem:[%s1 + $0x5] sm:$0x1]
      %1604 = vset.pattern.permute.xlu0 5
      %1605 = vperm.xlu0 %1604, %v550
      %v1606 = vpop.permute.xlu0 %1605
      %1608 = vset.pattern.permute.xlu0 5
      %1609 = vperm.xlu0 %1608, %v551
      %v1610 = vpop.permute.xlu0 %1609
      %1612 = vset.pattern.permute.xlu0 5
      %1613 = vperm.xlu0 %1612, %v553
      %v1614 = vpop.permute.xlu0 %1613
      %1616 = vset.pattern.permute.xlu0 5
      %1617 = vperm.xlu0 %1616, %v554
      %v1618 = vpop.permute.xlu0 %1617
      %1620 = vset.pattern.permute.xlu0 5
      %1621 = vperm.xlu0 %1620, %v556
      %v1622 = vpop.permute.xlu0 %1621
      %1624 = vset.pattern.permute.xlu0 5
      %1625 = vperm.xlu0 %1624, %v557
      %v1626 = vpop.permute.xlu0 %1625
      %1628 = vset.pattern.permute.xlu0 5
      %1629 = vperm.xlu0 %1628, %v559
      %v1630 = vpop.permute.xlu0 %1629
      %1632 = vset.pattern.permute.xlu0 5
      %1633 = vperm.xlu0 %1632, %v560
      %v1634 = vpop.permute.xlu0 %1633
      %1636 = vset.pattern.permute.xlu0 5
      %1637 = vperm.xlu0 %1636, %v562
      %v1638 = vpop.permute.xlu0 %1637
      %1640 = vset.pattern.permute.xlu0 5
      %1641 = vperm.xlu0 %1640, %v563
      %v1642 = vpop.permute.xlu0 %1641
      %1644 = vset.pattern.permute.xlu0 5
      %1645 = vperm.xlu0 %1644, %v565
      %v1646 = vpop.permute.xlu0 %1645
      %1648 = vset.pattern.permute.xlu0 5
      %1649 = vperm.xlu0 %1648, %v566
      %v1650 = vpop.permute.xlu0 %1649
      %1652 = vset.pattern.permute.xlu0 5
      %1653 = vperm.xlu0 %1652, %v568
      %v1654 = vpop.permute.xlu0 %1653
      %1656 = vset.pattern.permute.xlu0 5
      %1657 = vperm.xlu0 %1656, %v569
      %v1658 = vpop.permute.xlu0 %1657
      %1660 = vset.pattern.permute.xlu0 5
      %1661 = vperm.xlu0 %1660, %v571
      %v1662 = vpop.permute.xlu0 %1661
      %1664 = vset.pattern.permute.xlu0 5
      %1665 = vperm.xlu0 %1664, %v572
      %v1666 = vpop.permute.xlu0 %1665
      %1668 = vset.pattern.permute.xlu0 5
      %1669 = vperm.xlu0 %1668, %v574
      %v1670 = vpop.permute.xlu0 %1669
      %1672 = vset.pattern.permute.xlu0 5
      %1673 = vperm.xlu0 %1672, %v575
      %v1674 = vpop.permute.xlu0 %1673
      %1676 = vset.pattern.permute.xlu0 5
      %1677 = vperm.xlu0 %1676, %v577
      %v1678 = vpop.permute.xlu0 %1677
      %1680 = vset.pattern.permute.xlu0 5
      %1681 = vperm.xlu0 %1680, %v578
      %v1682 = vpop.permute.xlu0 %1681
      %1684 = vset.pattern.permute.xlu0 5
      %1685 = vperm.xlu0 %1684, %v580
      %v1686 = vpop.permute.xlu0 %1685
      %1688 = vset.pattern.permute.xlu0 5
      %1689 = vperm.xlu0 %1688, %v581
      %v1690 = vpop.permute.xlu0 %1689
      %1692 = vset.pattern.permute.xlu0 5
      %1693 = vperm.xlu0 %1692, %v583
      %v1694 = vpop.permute.xlu0 %1693
      %1696 = vset.pattern.permute.xlu0 5
      %1697 = vperm.xlu0 %1696, %v584
      %v1698 = vpop.permute.xlu0 %1697
      %1700 = vset.pattern.permute.xlu0 5
      %1701 = vperm.xlu0 %1700, %v586
      %v1702 = vpop.permute.xlu0 %1701
      %1704 = vset.pattern.permute.xlu0 5
      %1705 = vperm.xlu0 %1704, %v587
      %v1706 = vpop.permute.xlu0 %1705
      %1708 = vset.pattern.permute.xlu0 5
      %1709 = vperm.xlu0 %1708, %v589
      %v1710 = vpop.permute.xlu0 %1709
      %1712 = vset.pattern.permute.xlu0 5
      %1713 = vperm.xlu0 %1712, %v590
      %v1714 = vpop.permute.xlu0 %1713
      %1716 = vset.pattern.permute.xlu0 5
      %1717 = vperm.xlu0 %1716, %v592
      %v1718 = vpop.permute.xlu0 %1717
      %1720 = vset.pattern.permute.xlu0 5
      %1721 = vperm.xlu0 %1720, %v593
      %v1722 = vpop.permute.xlu0 %1721
      %1724 = vset.pattern.permute.xlu0 5
      %1725 = vperm.xlu0 %1724, %v595
      %v1726 = vpop.permute.xlu0 %1725
      %1728 = vset.pattern.permute.xlu0 5
      %1729 = vperm.xlu0 %1728, %v596
      %v1730 = vpop.permute.xlu0 %1729
      %v1732 = vperm.slane %v1603, 0
      %v1733 = vmul.f32 %v1606, %v1732
      %v1734 = vmul.f32 %v1610, %v1732
      %v1735 = vmul.f32 %v1614, %v1732
      %v1736 = vmul.f32 %v1618, %v1732
      %v1737 = vmul.f32 %v1622, %v1732
      %v1738 = vmul.f32 %v1626, %v1732
      %v1739 = vmul.f32 %v1630, %v1732
      %v1740 = vmul.f32 %v1634, %v1732
      %v1741 = vmul.f32 %v1638, %v1732
      %v1742 = vmul.f32 %v1642, %v1732
      %v1743 = vmul.f32 %v1646, %v1732
      %v1744 = vmul.f32 %v1650, %v1732
      %v1745 = vmul.f32 %v1654, %v1732
      %v1746 = vmul.f32 %v1658, %v1732
      %v1747 = vmul.f32 %v1662, %v1732
      %v1748 = vmul.f32 %v1666, %v1732
      %v1749 = vmul.f32 %v1670, %v1732
      %v1750 = vmul.f32 %v1674, %v1732
      %v1751 = vmul.f32 %v1678, %v1732
      %v1752 = vmul.f32 %v1682, %v1732
      %v1753 = vmul.f32 %v1686, %v1732
      %v1754 = vmul.f32 %v1690, %v1732
      %v1755 = vmul.f32 %v1694, %v1732
      %v1756 = vmul.f32 %v1698, %v1732
      %v1757 = vmul.f32 %v1702, %v1732
      %v1758 = vmul.f32 %v1706, %v1732
      %v1759 = vmul.f32 %v1710, %v1732
      %v1760 = vmul.f32 %v1714, %v1732
      %v1761 = vmul.f32 %v1718, %v1732
      %v1762 = vmul.f32 %v1722, %v1732
      %v1763 = vmul.f32 %v1726, %v1732
      %v1764 = vmul.f32 %v1730, %v1732
      %v1765 = vadd.f32 %v1571, %v1733
      %v1766 = vadd.f32 %v1572, %v1734
      %v1767 = vadd.f32 %v1573, %v1735
      %v1768 = vadd.f32 %v1574, %v1736
      %v1769 = vadd.f32 %v1575, %v1737
      %v1770 = vadd.f32 %v1576, %v1738
      %v1771 = vadd.f32 %v1577, %v1739
      %v1772 = vadd.f32 %v1578, %v1740
      %v1773 = vadd.f32 %v1579, %v1741
      %v1774 = vadd.f32 %v1580, %v1742
      %v1775 = vadd.f32 %v1581, %v1743
      %v1776 = vadd.f32 %v1582, %v1744
      %v1777 = vadd.f32 %v1583, %v1745
      %v1778 = vadd.f32 %v1584, %v1746
      %v1779 = vadd.f32 %v1585, %v1747
      %v1780 = vadd.f32 %v1586, %v1748
      %v1781 = vadd.f32 %v1587, %v1749
      %v1782 = vadd.f32 %v1588, %v1750
      %v1783 = vadd.f32 %v1589, %v1751
      %v1784 = vadd.f32 %v1590, %v1752
      %v1785 = vadd.f32 %v1591, %v1753
      %v1786 = vadd.f32 %v1592, %v1754
      %v1787 = vadd.f32 %v1593, %v1755
      %v1788 = vadd.f32 %v1594, %v1756
      %v1789 = vadd.f32 %v1595, %v1757
      %v1790 = vadd.f32 %v1596, %v1758
      %v1791 = vadd.f32 %v1597, %v1759
      %v1792 = vadd.f32 %v1598, %v1760
      %v1793 = vadd.f32 %v1599, %v1761
      %v1794 = vadd.f32 %v1600, %v1762
      %v1795 = vadd.f32 %v1601, %v1763
      %v1796 = vadd.f32 %v1602, %v1764
      %v1797 = vld [vmem:[%s1 + $0x6] sm:$0x1]
      %1799 = vset.pattern.permute.xlu0 0
      %1800 = vperm.xlu0 %1799, %v552
      %v1801 = vpop.permute.xlu0 %1800
      %1804 = vset.pattern.permute.xlu0 0
      %1805 = vperm.xlu0 %1804, %v555
      %v1806 = vpop.permute.xlu0 %1805
      %1809 = vset.pattern.permute.xlu0 0
      %1810 = vperm.xlu0 %1809, %v558
      %v1811 = vpop.permute.xlu0 %1810
      %1814 = vset.pattern.permute.xlu0 0
      %1815 = vperm.xlu0 %1814, %v561
      %v1816 = vpop.permute.xlu0 %1815
      %1819 = vset.pattern.permute.xlu0 0
      %1820 = vperm.xlu0 %1819, %v564
      %v1821 = vpop.permute.xlu0 %1820
      %1824 = vset.pattern.permute.xlu0 0
      %1825 = vperm.xlu0 %1824, %v567
      %v1826 = vpop.permute.xlu0 %1825
      %1829 = vset.pattern.permute.xlu0 0
      %1830 = vperm.xlu0 %1829, %v570
      %v1831 = vpop.permute.xlu0 %1830
      %1834 = vset.pattern.permute.xlu0 0
      %1835 = vperm.xlu0 %1834, %v573
      %v1836 = vpop.permute.xlu0 %1835
      %1839 = vset.pattern.permute.xlu0 0
      %1840 = vperm.xlu0 %1839, %v576
      %v1841 = vpop.permute.xlu0 %1840
      %1844 = vset.pattern.permute.xlu0 0
      %1845 = vperm.xlu0 %1844, %v579
      %v1846 = vpop.permute.xlu0 %1845
      %1849 = vset.pattern.permute.xlu0 0
      %1850 = vperm.xlu0 %1849, %v582
      %v1851 = vpop.permute.xlu0 %1850
      %1854 = vset.pattern.permute.xlu0 0
      %1855 = vperm.xlu0 %1854, %v585
      %v1856 = vpop.permute.xlu0 %1855
      %1859 = vset.pattern.permute.xlu0 0
      %1860 = vperm.xlu0 %1859, %v588
      %v1861 = vpop.permute.xlu0 %1860
      %1864 = vset.pattern.permute.xlu0 0
      %1865 = vperm.xlu0 %1864, %v591
      %v1866 = vpop.permute.xlu0 %1865
      %1869 = vset.pattern.permute.xlu0 0
      %1870 = vperm.xlu0 %1869, %v594
      %v1871 = vpop.permute.xlu0 %1870
      %1874 = vset.pattern.permute.xlu0 0
      %1875 = vperm.xlu0 %1874, %v597
      %v1876 = vpop.permute.xlu0 %1875
      %v1878 = vperm.slane %v1797, 0
      %v1879 = vmul.f32 %v605, %v1878
      %v1880 = vmul.f32 %v610, %v1878
      %v1881 = vmul.f32 %v1801, %v1878
      %v1882 = vmul.f32 %v615, %v1878
      %v1883 = vmul.f32 %v620, %v1878
      %v1884 = vmul.f32 %v1806, %v1878
      %v1885 = vmul.f32 %v625, %v1878
      %v1886 = vmul.f32 %v630, %v1878
      %v1887 = vmul.f32 %v1811, %v1878
      %v1888 = vmul.f32 %v635, %v1878
      %v1889 = vmul.f32 %v640, %v1878
      %v1890 = vmul.f32 %v1816, %v1878
      %v1891 = vmul.f32 %v645, %v1878
      %v1892 = vmul.f32 %v650, %v1878
      %v1893 = vmul.f32 %v1821, %v1878
      %v1894 = vmul.f32 %v655, %v1878
      %v1895 = vmul.f32 %v660, %v1878
      %v1896 = vmul.f32 %v1826, %v1878
      %v1897 = vmul.f32 %v665, %v1878
      %v1898 = vmul.f32 %v670, %v1878
      %v1899 = vmul.f32 %v1831, %v1878
      %v1900 = vmul.f32 %v675, %v1878
      %v1901 = vmul.f32 %v680, %v1878
      %v1902 = vmul.f32 %v1836, %v1878
      %v1903 = vmul.f32 %v685, %v1878
      %v1904 = vmul.f32 %v690, %v1878
      %v1905 = vmul.f32 %v1841, %v1878
      %v1906 = vmul.f32 %v695, %v1878
      %v1907 = vmul.f32 %v700, %v1878
      %v1908 = vmul.f32 %v1846, %v1878
      %v1909 = vmul.f32 %v705, %v1878
      %v1910 = vmul.f32 %v710, %v1878
      %v1911 = vmul.f32 %v1851, %v1878
      %v1912 = vmul.f32 %v715, %v1878
      %v1913 = vmul.f32 %v720, %v1878
      %v1914 = vmul.f32 %v1856, %v1878
      %v1915 = vmul.f32 %v725, %v1878
      %v1916 = vmul.f32 %v730, %v1878
      %v1917 = vmul.f32 %v1861, %v1878
      %v1918 = vmul.f32 %v735, %v1878
      %v1919 = vmul.f32 %v740, %v1878
      %v1920 = vmul.f32 %v1866, %v1878
      %v1921 = vmul.f32 %v745, %v1878
      %v1922 = vmul.f32 %v750, %v1878
      %v1923 = vmul.f32 %v1871, %v1878
      %v1924 = vmul.f32 %v755, %v1878
      %v1925 = vmul.f32 %v760, %v1878
      %v1926 = vmul.f32 %v1876, %v1878
      %vm1975 = vcmask 1046528
      %v1976 = vrot.slane %v1879, 1
      %v1977 = vrot.slane %v1880, 1
      %v1978 = vsel %vm1975, %v1976, %v1977
      %v1979 = vrot.slane %v1881, 1
      %v1980 = vsel %vm1975, %v1977, %v1979
      %v1981 = vrot.slane %v1882, 1
      %v1982 = vrot.slane %v1883, 1
      %v1983 = vsel %vm1975, %v1981, %v1982
      %v1984 = vrot.slane %v1884, 1
      %v1985 = vsel %vm1975, %v1982, %v1984
      %v1986 = vrot.slane %v1885, 1
      %v1987 = vrot.slane %v1886, 1
      %v1988 = vsel %vm1975, %v1986, %v1987
      %v1989 = vrot.slane %v1887, 1
      %v1990 = vsel %vm1975, %v1987, %v1989
      %v1991 = vrot.slane %v1888, 1
      %v1992 = vrot.slane %v1889, 1
      %v1993 = vsel %vm1975, %v1991, %v1992
      %v1994 = vrot.slane %v1890, 1
      %v1995 = vsel %vm1975, %v1992, %v1994
      %v1996 = vrot.slane %v1891, 1
      %v1997 = vrot.slane %v1892, 1
      %v1998 = vsel %vm1975, %v1996, %v1997
      %v1999 = vrot.slane %v1893, 1
      %v2000 = vsel %vm1975, %v1997, %v1999
      %v2001 = vrot.slane %v1894, 1
      %v2002 = vrot.slane %v1895, 1
      %v2003 = vsel %vm1975, %v2001, %v2002
      %v2004 = vrot.slane %v1896, 1
      %v2005 = vsel %vm1975, %v2002, %v2004
      %v2006 = vrot.slane %v1897, 1
      %v2007 = vrot.slane %v1898, 1
      %v2008 = vsel %vm1975, %v2006, %v2007
      %v2009 = vrot.slane %v1899, 1
      %v2010 = vsel %vm1975, %v2007, %v2009
      %v2011 = vrot.slane %v1900, 1
      %v2012 = vrot.slane %v1901, 1
      %v2013 = vsel %vm1975, %v2011, %v2012
      %v2014 = vrot.slane %v1902, 1
      %v2015 = vsel %vm1975, %v2012, %v2014
      %v2016 = vrot.slane %v1903, 1
      %v2017 = vrot.slane %v1904, 1
      %v2018 = vsel %vm1975, %v2016, %v2017
      %v2019 = vrot.slane %v1905, 1
      %v2020 = vsel %vm1975, %v2017, %v2019
      %v2021 = vrot.slane %v1906, 1
      %v2022 = vrot.slane %v1907, 1
      %v2023 = vsel %vm1975, %v2021, %v2022
      %v2024 = vrot.slane %v1908, 1
      %v2025 = vsel %vm1975, %v2022, %v2024
      %v2026 = vrot.slane %v1909, 1
      %v2027 = vrot.slane %v1910, 1
      %v2028 = vsel %vm1975, %v2026, %v2027
      %v2029 = vrot.slane %v1911, 1
      %v2030 = vsel %vm1975, %v2027, %v2029
      %v2031 = vrot.slane %v1912, 1
      %v2032 = vrot.slane %v1913, 1
      %v2033 = vsel %vm1975, %v2031, %v2032
      %v2034 = vrot.slane %v1914, 1
      %v2035 = vsel %vm1975, %v2032, %v2034
      %v2036 = vrot.slane %v1915, 1
      %v2037 = vrot.slane %v1916, 1
      %v2038 = vsel %vm1975, %v2036, %v2037
      %v2039 = vrot.slane %v1917, 1
      %v2040 = vsel %vm1975, %v2037, %v2039
      %v2041 = vrot.slane %v1918, 1
      %v2042 = vrot.slane %v1919, 1
      %v2043 = vsel %vm1975, %v2041, %v2042
      %v2044 = vrot.slane %v1920, 1
      %v2045 = vsel %vm1975, %v2042, %v2044
      %v2046 = vrot.slane %v1921, 1
      %v2047 = vrot.slane %v1922, 1
      %v2048 = vsel %vm1975, %v2046, %v2047
      %v2049 = vrot.slane %v1923, 1
      %v2050 = vsel %vm1975, %v2047, %v2049
      %v2051 = vrot.slane %v1924, 1
      %v2052 = vrot.slane %v1925, 1
      %v2053 = vsel %vm1975, %v2051, %v2052
      %v2054 = vrot.slane %v1926, 1
      %v2055 = vsel %vm1975, %v2052, %v2054
      %v2088 = vadd.f32 %v1765, %v1978
      %v2089 = vadd.f32 %v1766, %v1980
      %v2090 = vadd.f32 %v1767, %v1983
      %v2091 = vadd.f32 %v1768, %v1985
      %v2092 = vadd.f32 %v1769, %v1988
      %v2093 = vadd.f32 %v1770, %v1990
      %v2094 = vadd.f32 %v1771, %v1993
      %v2095 = vadd.f32 %v1772, %v1995
      %v2096 = vadd.f32 %v1773, %v1998
      %v2097 = vadd.f32 %v1774, %v2000
      %v2098 = vadd.f32 %v1775, %v2003
      %v2099 = vadd.f32 %v1776, %v2005
      %v2100 = vadd.f32 %v1777, %v2008
      %v2101 = vadd.f32 %v1778, %v2010
      %v2102 = vadd.f32 %v1779, %v2013
      %v2103 = vadd.f32 %v1780, %v2015
      %v2104 = vadd.f32 %v1781, %v2018
      %v2105 = vadd.f32 %v1782, %v2020
      %v2106 = vadd.f32 %v1783, %v2023
      %v2107 = vadd.f32 %v1784, %v2025
      %v2108 = vadd.f32 %v1785, %v2028
      %v2109 = vadd.f32 %v1786, %v2030
      %v2110 = vadd.f32 %v1787, %v2033
      %v2111 = vadd.f32 %v1788, %v2035
      %v2112 = vadd.f32 %v1789, %v2038
      %v2113 = vadd.f32 %v1790, %v2040
      %v2114 = vadd.f32 %v1791, %v2043
      %v2115 = vadd.f32 %v1792, %v2045
      %v2116 = vadd.f32 %v1793, %v2048
      %v2117 = vadd.f32 %v1794, %v2050
      %v2118 = vadd.f32 %v1795, %v2053
      %v2119 = vadd.f32 %v1796, %v2055
      %v2120 = vld [vmem:[%s1 + $0x7] sm:$0x1]
      %2121 = vset.pattern.permute.xlu0 1
      %2122 = vperm.xlu0 %2121, %v552
      %v2123 = vpop.permute.xlu0 %2122
      %2125 = vset.pattern.permute.xlu0 1
      %2126 = vperm.xlu0 %2125, %v555
      %v2127 = vpop.permute.xlu0 %2126
      %2129 = vset.pattern.permute.xlu0 1
      %2130 = vperm.xlu0 %2129, %v558
      %v2131 = vpop.permute.xlu0 %2130
      %2133 = vset.pattern.permute.xlu0 1
      %2134 = vperm.xlu0 %2133, %v561
      %v2135 = vpop.permute.xlu0 %2134
      %2137 = vset.pattern.permute.xlu0 1
      %2138 = vperm.xlu0 %2137, %v564
      %v2139 = vpop.permute.xlu0 %2138
      %2141 = vset.pattern.permute.xlu0 1
      %2142 = vperm.xlu0 %2141, %v567
      %v2143 = vpop.permute.xlu0 %2142
      %2145 = vset.pattern.permute.xlu0 1
      %2146 = vperm.xlu0 %2145, %v570
      %v2147 = vpop.permute.xlu0 %2146
      %2149 = vset.pattern.permute.xlu0 1
      %2150 = vperm.xlu0 %2149, %v573
      %v2151 = vpop.permute.xlu0 %2150
      %2153 = vset.pattern.permute.xlu0 1
      %2154 = vperm.xlu0 %2153, %v576
      %v2155 = vpop.permute.xlu0 %2154
      %2157 = vset.pattern.permute.xlu0 1
      %2158 = vperm.xlu0 %2157, %v579
      %v2159 = vpop.permute.xlu0 %2158
      %2161 = vset.pattern.permute.xlu0 1
      %2162 = vperm.xlu0 %2161, %v582
      %v2163 = vpop.permute.xlu0 %2162
      %2165 = vset.pattern.permute.xlu0 1
      %2166 = vperm.xlu0 %2165, %v585
      %v2167 = vpop.permute.xlu0 %2166
      %2169 = vset.pattern.permute.xlu0 1
      %2170 = vperm.xlu0 %2169, %v588
      %v2171 = vpop.permute.xlu0 %2170
      %2173 = vset.pattern.permute.xlu0 1
      %2174 = vperm.xlu0 %2173, %v591
      %v2175 = vpop.permute.xlu0 %2174
      %2177 = vset.pattern.permute.xlu0 1
      %2178 = vperm.xlu0 %2177, %v594
      %v2179 = vpop.permute.xlu0 %2178
      %2181 = vset.pattern.permute.xlu0 1
      %2182 = vperm.xlu0 %2181, %v597
      %v2183 = vpop.permute.xlu0 %2182
      %v2185 = vperm.slane %v2120, 0
      %v2186 = vmul.f32 %v830, %v2185
      %v2187 = vmul.f32 %v834, %v2185
      %v2188 = vmul.f32 %v2123, %v2185
      %v2189 = vmul.f32 %v838, %v2185
      %v2190 = vmul.f32 %v842, %v2185
      %v2191 = vmul.f32 %v2127, %v2185
      %v2192 = vmul.f32 %v846, %v2185
      %v2193 = vmul.f32 %v850, %v2185
      %v2194 = vmul.f32 %v2131, %v2185
      %v2195 = vmul.f32 %v854, %v2185
      %v2196 = vmul.f32 %v858, %v2185
      %v2197 = vmul.f32 %v2135, %v2185
      %v2198 = vmul.f32 %v862, %v2185
      %v2199 = vmul.f32 %v866, %v2185
      %v2200 = vmul.f32 %v2139, %v2185
      %v2201 = vmul.f32 %v870, %v2185
      %v2202 = vmul.f32 %v874, %v2185
      %v2203 = vmul.f32 %v2143, %v2185
      %v2204 = vmul.f32 %v878, %v2185
      %v2205 = vmul.f32 %v882, %v2185
      %v2206 = vmul.f32 %v2147, %v2185
      %v2207 = vmul.f32 %v886, %v2185
      %v2208 = vmul.f32 %v890, %v2185
      %v2209 = vmul.f32 %v2151, %v2185
      %v2210 = vmul.f32 %v894, %v2185
      %v2211 = vmul.f32 %v898, %v2185
      %v2212 = vmul.f32 %v2155, %v2185
      %v2213 = vmul.f32 %v902, %v2185
      %v2214 = vmul.f32 %v906, %v2185
      %v2215 = vmul.f32 %v2159, %v2185
      %v2216 = vmul.f32 %v910, %v2185
      %v2217 = vmul.f32 %v914, %v2185
      %v2218 = vmul.f32 %v2163, %v2185
      %v2219 = vmul.f32 %v918, %v2185
      %v2220 = vmul.f32 %v922, %v2185
      %v2221 = vmul.f32 %v2167, %v2185
      %v2222 = vmul.f32 %v926, %v2185
      %v2223 = vmul.f32 %v930, %v2185
      %v2224 = vmul.f32 %v2171, %v2185
      %v2225 = vmul.f32 %v934, %v2185
      %v2226 = vmul.f32 %v938, %v2185
      %v2227 = vmul.f32 %v2175, %v2185
      %v2228 = vmul.f32 %v942, %v2185
      %v2229 = vmul.f32 %v946, %v2185
      %v2230 = vmul.f32 %v2179, %v2185
      %v2231 = vmul.f32 %v950, %v2185
      %v2232 = vmul.f32 %v954, %v2185
      %v2233 = vmul.f32 %v2183, %v2185
      %v2282 = vrot.slane %v2186, 1
      %v2283 = vrot.slane %v2187, 1
      %v2284 = vsel %vm1975, %v2282, %v2283
      %v2285 = vrot.slane %v2188, 1
      %v2286 = vsel %vm1975, %v2283, %v2285
      %v2287 = vrot.slane %v2189, 1
      %v2288 = vrot.slane %v2190, 1
      %v2289 = vsel %vm1975, %v2287, %v2288
      %v2290 = vrot.slane %v2191, 1
      %v2291 = vsel %vm1975, %v2288, %v2290
      %v2292 = vrot.slane %v2192, 1
      %v2293 = vrot.slane %v2193, 1
      %v2294 = vsel %vm1975, %v2292, %v2293
      %v2295 = vrot.slane %v2194, 1
      %v2296 = vsel %vm1975, %v2293, %v2295
      %v2297 = vrot.slane %v2195, 1
      %v2298 = vrot.slane %v2196, 1
      %v2299 = vsel %vm1975, %v2297, %v2298
      %v2300 = vrot.slane %v2197, 1
      %v2301 = vsel %vm1975, %v2298, %v2300
      %v2302 = vrot.slane %v2198, 1
      %v2303 = vrot.slane %v2199, 1
      %v2304 = vsel %vm1975, %v2302, %v2303
      %v2305 = vrot.slane %v2200, 1
      %v2306 = vsel %vm1975, %v2303, %v2305
      %v2307 = vrot.slane %v2201, 1
      %v2308 = vrot.slane %v2202, 1
      %v2309 = vsel %vm1975, %v2307, %v2308
      %v2310 = vrot.slane %v2203, 1
      %v2311 = vsel %vm1975, %v2308, %v2310
      %v2312 = vrot.slane %v2204, 1
      %v2313 = vrot.slane %v2205, 1
      %v2314 = vsel %vm1975, %v2312, %v2313
      %v2315 = vrot.slane %v2206, 1
      %v2316 = vsel %vm1975, %v2313, %v2315
      %v2317 = vrot.slane %v2207, 1
      %v2318 = vrot.slane %v2208, 1
      %v2319 = vsel %vm1975, %v2317, %v2318
      %v2320 = vrot.slane %v2209, 1
      %v2321 = vsel %vm1975, %v2318, %v2320
      %v2322 = vrot.slane %v2210, 1
      %v2323 = vrot.slane %v2211, 1
      %v2324 = vsel %vm1975, %v2322, %v2323
      %v2325 = vrot.slane %v2212, 1
      %v2326 = vsel %vm1975, %v2323, %v2325
      %v2327 = vrot.slane %v2213, 1
      %v2328 = vrot.slane %v2214, 1
      %v2329 = vsel %vm1975, %v2327, %v2328
      %v2330 = vrot.slane %v2215, 1
      %v2331 = vsel %vm1975, %v2328, %v2330
      %v2332 = vrot.slane %v2216, 1
      %v2333 = vrot.slane %v2217, 1
      %v2334 = vsel %vm1975, %v2332, %v2333
      %v2335 = vrot.slane %v2218, 1
      %v2336 = vsel %vm1975, %v2333, %v2335
      %v2337 = vrot.slane %v2219, 1
      %v2338 = vrot.slane %v2220, 1
      %v2339 = vsel %vm1975, %v2337, %v2338
      %v2340 = vrot.slane %v2221, 1
      %v2341 = vsel %vm1975, %v2338, %v2340
      %v2342 = vrot.slane %v2222, 1
      %v2343 = vrot.slane %v2223, 1
      %v2344 = vsel %vm1975, %v2342, %v2343
      %v2345 = vrot.slane %v2224, 1
      %v2346 = vsel %vm1975, %v2343, %v2345
      %v2347 = vrot.slane %v2225, 1
      %v2348 = vrot.slane %v2226, 1
      %v2349 = vsel %vm1975, %v2347, %v2348
      %v2350 = vrot.slane %v2227, 1
      %v2351 = vsel %vm1975, %v2348, %v2350
      %v2352 = vrot.slane %v2228, 1
      %v2353 = vrot.slane %v2229, 1
      %v2354 = vsel %vm1975, %v2352, %v2353
      %v2355 = vrot.slane %v2230, 1
      %v2356 = vsel %vm1975, %v2353, %v2355
      %v2357 = vrot.slane %v2231, 1
      %v2358 = vrot.slane %v2232, 1
      %v2359 = vsel %vm1975, %v2357, %v2358
      %v2360 = vrot.slane %v2233, 1
      %v2361 = vsel %vm1975, %v2358, %v2360
      %v2394 = vadd.f32 %v2088, %v2284
      %v2395 = vadd.f32 %v2089, %v2286
      %v2396 = vadd.f32 %v2090, %v2289
      %v2397 = vadd.f32 %v2091, %v2291
      %v2398 = vadd.f32 %v2092, %v2294
      %v2399 = vadd.f32 %v2093, %v2296
      %v2400 = vadd.f32 %v2094, %v2299
      %v2401 = vadd.f32 %v2095, %v2301
      %v2402 = vadd.f32 %v2096, %v2304
      %v2403 = vadd.f32 %v2097, %v2306
      %v2404 = vadd.f32 %v2098, %v2309
      %v2405 = vadd.f32 %v2099, %v2311
      %v2406 = vadd.f32 %v2100, %v2314
      %v2407 = vadd.f32 %v2101, %v2316
      %v2408 = vadd.f32 %v2102, %v2319
      %v2409 = vadd.f32 %v2103, %v2321
      %v2410 = vadd.f32 %v2104, %v2324
      %v2411 = vadd.f32 %v2105, %v2326
      %v2412 = vadd.f32 %v2106, %v2329
      %v2413 = vadd.f32 %v2107, %v2331
      %v2414 = vadd.f32 %v2108, %v2334
      %v2415 = vadd.f32 %v2109, %v2336
      %v2416 = vadd.f32 %v2110, %v2339
      %v2417 = vadd.f32 %v2111, %v2341
      %v2418 = vadd.f32 %v2112, %v2344
      %v2419 = vadd.f32 %v2113, %v2346
      %v2420 = vadd.f32 %v2114, %v2349
      %v2421 = vadd.f32 %v2115, %v2351
      %v2422 = vadd.f32 %v2116, %v2354
      %v2423 = vadd.f32 %v2117, %v2356
      %v2424 = vadd.f32 %v2118, %v2359
      %v2425 = vadd.f32 %v2119, %v2361
      %v2426 = vld [vmem:[%s1 + $0x8] sm:$0x1]
      %2427 = vset.pattern.permute.xlu0 2
      %2428 = vperm.xlu0 %2427, %v552
      %v2429 = vpop.permute.xlu0 %2428
      %2431 = vset.pattern.permute.xlu0 2
      %2432 = vperm.xlu0 %2431, %v555
      %v2433 = vpop.permute.xlu0 %2432
      %2435 = vset.pattern.permute.xlu0 2
      %2436 = vperm.xlu0 %2435, %v558
      %v2437 = vpop.permute.xlu0 %2436
      %2439 = vset.pattern.permute.xlu0 2
      %2440 = vperm.xlu0 %2439, %v561
      %v2441 = vpop.permute.xlu0 %2440
      %2443 = vset.pattern.permute.xlu0 2
      %2444 = vperm.xlu0 %2443, %v564
      %v2445 = vpop.permute.xlu0 %2444
      %2447 = vset.pattern.permute.xlu0 2
      %2448 = vperm.xlu0 %2447, %v567
      %v2449 = vpop.permute.xlu0 %2448
      %2451 = vset.pattern.permute.xlu0 2
      %2452 = vperm.xlu0 %2451, %v570
      %v2453 = vpop.permute.xlu0 %2452
      %2455 = vset.pattern.permute.xlu0 2
      %2456 = vperm.xlu0 %2455, %v573
      %v2457 = vpop.permute.xlu0 %2456
      %2459 = vset.pattern.permute.xlu0 2
      %2460 = vperm.xlu0 %2459, %v576
      %v2461 = vpop.permute.xlu0 %2460
      %2463 = vset.pattern.permute.xlu0 2
      %2464 = vperm.xlu0 %2463, %v579
      %v2465 = vpop.permute.xlu0 %2464
      %2467 = vset.pattern.permute.xlu0 2
      %2468 = vperm.xlu0 %2467, %v582
      %v2469 = vpop.permute.xlu0 %2468
      %2471 = vset.pattern.permute.xlu0 2
      %2472 = vperm.xlu0 %2471, %v585
      %v2473 = vpop.permute.xlu0 %2472
      %2475 = vset.pattern.permute.xlu0 2
      %2476 = vperm.xlu0 %2475, %v588
      %v2477 = vpop.permute.xlu0 %2476
      %2479 = vset.pattern.permute.xlu0 2
      %2480 = vperm.xlu0 %2479, %v591
      %v2481 = vpop.permute.xlu0 %2480
      %2483 = vset.pattern.permute.xlu0 2
      %2484 = vperm.xlu0 %2483, %v594
      %v2485 = vpop.permute.xlu0 %2484
      %2487 = vset.pattern.permute.xlu0 2
      %2488 = vperm.xlu0 %2487, %v597
      %v2489 = vpop.permute.xlu0 %2488
      %v2491 = vperm.slane %v2426, 0
      %v2492 = vmul.f32 %v1024, %v2491
      %v2493 = vmul.f32 %v1028, %v2491
      %v2494 = vmul.f32 %v2429, %v2491
      %v2495 = vmul.f32 %v1032, %v2491
      %v2496 = vmul.f32 %v1036, %v2491
      %v2497 = vmul.f32 %v2433, %v2491
      %v2498 = vmul.f32 %v1040, %v2491
      %v2499 = vmul.f32 %v1044, %v2491
      %v2500 = vmul.f32 %v2437, %v2491
      %v2501 = vmul.f32 %v1048, %v2491
      %v2502 = vmul.f32 %v1052, %v2491
      %v2503 = vmul.f32 %v2441, %v2491
      %v2504 = vmul.f32 %v1056, %v2491
      %v2505 = vmul.f32 %v1060, %v2491
      %v2506 = vmul.f32 %v2445, %v2491
      %v2507 = vmul.f32 %v1064, %v2491
      %v2508 = vmul.f32 %v1068, %v2491
      %v2509 = vmul.f32 %v2449, %v2491
      %v2510 = vmul.f32 %v1072, %v2491
      %v2511 = vmul.f32 %v1076, %v2491
      %v2512 = vmul.f32 %v2453, %v2491
      %v2513 = vmul.f32 %v1080, %v2491
      %v2514 = vmul.f32 %v1084, %v2491
      %v2515 = vmul.f32 %v2457, %v2491
      %v2516 = vmul.f32 %v1088, %v2491
      %v2517 = vmul.f32 %v1092, %v2491
      %v2518 = vmul.f32 %v2461, %v2491
      %v2519 = vmul.f32 %v1096, %v2491
      %v2520 = vmul.f32 %v1100, %v2491
      %v2521 = vmul.f32 %v2465, %v2491
      %v2522 = vmul.f32 %v1104, %v2491
      %v2523 = vmul.f32 %v1108, %v2491
      %v2524 = vmul.f32 %v2469, %v2491
      %v2525 = vmul.f32 %v1112, %v2491
      %v2526 = vmul.f32 %v1116, %v2491
      %v2527 = vmul.f32 %v2473, %v2491
      %v2528 = vmul.f32 %v1120, %v2491
      %v2529 = vmul.f32 %v1124, %v2491
      %v2530 = vmul.f32 %v2477, %v2491
      %v2531 = vmul.f32 %v1128, %v2491
      %v2532 = vmul.f32 %v1132, %v2491
      %v2533 = vmul.f32 %v2481, %v2491
      %v2534 = vmul.f32 %v1136, %v2491
      %v2535 = vmul.f32 %v1140, %v2491
      %v2536 = vmul.f32 %v2485, %v2491
      %v2537 = vmul.f32 %v1144, %v2491
      %v2538 = vmul.f32 %v1148, %v2491
      %v2539 = vmul.f32 %v2489, %v2491
      %v2588 = vrot.slane %v2492, 1
      %v2589 = vrot.slane %v2493, 1
      %v2590 = vsel %vm1975, %v2588, %v2589
      %v2591 = vrot.slane %v2494, 1
      %v2592 = vsel %vm1975, %v2589, %v2591
      %v2593 = vrot.slane %v2495, 1
      %v2594 = vrot.slane %v2496, 1
      %v2595 = vsel %vm1975, %v2593, %v2594
      %v2596 = vrot.slane %v2497, 1
      %v2597 = vsel %vm1975, %v2594, %v2596
      %v2598 = vrot.slane %v2498, 1
      %v2599 = vrot.slane %v2499, 1
      %v2600 = vsel %vm1975, %v2598, %v2599
      %v2601 = vrot.slane %v2500, 1
      %v2602 = vsel %vm1975, %v2599, %v2601
      %v2603 = vrot.slane %v2501, 1
      %v2604 = vrot.slane %v2502, 1
      %v2605 = vsel %vm1975, %v2603, %v2604
      %v2606 = vrot.slane %v2503, 1
      %v2607 = vsel %vm1975, %v2604, %v2606
      %v2608 = vrot.slane %v2504, 1
      %v2609 = vrot.slane %v2505, 1
      %v2610 = vsel %vm1975, %v2608, %v2609
      %v2611 = vrot.slane %v2506, 1
      %v2612 = vsel %vm1975, %v2609, %v2611
      %v2613 = vrot.slane %v2507, 1
      %v2614 = vrot.slane %v2508, 1
      %v2615 = vsel %vm1975, %v2613, %v2614
      %v2616 = vrot.slane %v2509, 1
      %v2617 = vsel %vm1975, %v2614, %v2616
      %v2618 = vrot.slane %v2510, 1
      %v2619 = vrot.slane %v2511, 1
      %v2620 = vsel %vm1975, %v2618, %v2619
      %v2621 = vrot.slane %v2512, 1
      %v2622 = vsel %vm1975, %v2619, %v2621
      %v2623 = vrot.slane %v2513, 1
      %v2624 = vrot.slane %v2514, 1
      %v2625 = vsel %vm1975, %v2623, %v2624
      %v2626 = vrot.slane %v2515, 1
      %v2627 = vsel %vm1975, %v2624, %v2626
      %v2628 = vrot.slane %v2516, 1
      %v2629 = vrot.slane %v2517, 1
      %v2630 = vsel %vm1975, %v2628, %v2629
      %v2631 = vrot.slane %v2518, 1
      %v2632 = vsel %vm1975, %v2629, %v2631
      %v2633 = vrot.slane %v2519, 1
      %v2634 = vrot.slane %v2520, 1
      %v2635 = vsel %vm1975, %v2633, %v2634
      %v2636 = vrot.slane %v2521, 1
      %v2637 = vsel %vm1975, %v2634, %v2636
      %v2638 = vrot.slane %v2522, 1
      %v2639 = vrot.slane %v2523, 1
      %v2640 = vsel %vm1975, %v2638, %v2639
      %v2641 = vrot.slane %v2524, 1
      %v2642 = vsel %vm1975, %v2639, %v2641
      %v2643 = vrot.slane %v2525, 1
      %v2644 = vrot.slane %v2526, 1
      %v2645 = vsel %vm1975, %v2643, %v2644
      %v2646 = vrot.slane %v2527, 1
      %v2647 = vsel %vm1975, %v2644, %v2646
      %v2648 = vrot.slane %v2528, 1
      %v2649 = vrot.slane %v2529, 1
      %v2650 = vsel %vm1975, %v2648, %v2649
      %v2651 = vrot.slane %v2530, 1
      %v2652 = vsel %vm1975, %v2649, %v2651
      %v2653 = vrot.slane %v2531, 1
      %v2654 = vrot.slane %v2532, 1
      %v2655 = vsel %vm1975, %v2653, %v2654
      %v2656 = vrot.slane %v2533, 1
      %v2657 = vsel %vm1975, %v2654, %v2656
      %v2658 = vrot.slane %v2534, 1
      %v2659 = vrot.slane %v2535, 1
      %v2660 = vsel %vm1975, %v2658, %v2659
      %v2661 = vrot.slane %v2536, 1
      %v2662 = vsel %vm1975, %v2659, %v2661
      %v2663 = vrot.slane %v2537, 1
      %v2664 = vrot.slane %v2538, 1
      %v2665 = vsel %vm1975, %v2663, %v2664
      %v2666 = vrot.slane %v2539, 1
      %v2667 = vsel %vm1975, %v2664, %v2666
      %v2700 = vadd.f32 %v2394, %v2590
      %v2701 = vadd.f32 %v2395, %v2592
      %v2702 = vadd.f32 %v2396, %v2595
      %v2703 = vadd.f32 %v2397, %v2597
      %v2704 = vadd.f32 %v2398, %v2600
      %v2705 = vadd.f32 %v2399, %v2602
      %v2706 = vadd.f32 %v2400, %v2605
      %v2707 = vadd.f32 %v2401, %v2607
      %v2708 = vadd.f32 %v2402, %v2610
      %v2709 = vadd.f32 %v2403, %v2612
      %v2710 = vadd.f32 %v2404, %v2615
      %v2711 = vadd.f32 %v2405, %v2617
      %v2712 = vadd.f32 %v2406, %v2620
      %v2713 = vadd.f32 %v2407, %v2622
      %v2714 = vadd.f32 %v2408, %v2625
      %v2715 = vadd.f32 %v2409, %v2627
      %v2716 = vadd.f32 %v2410, %v2630
      %v2717 = vadd.f32 %v2411, %v2632
      %v2718 = vadd.f32 %v2412, %v2635
      %v2719 = vadd.f32 %v2413, %v2637
      %v2720 = vadd.f32 %v2414, %v2640
      %v2721 = vadd.f32 %v2415, %v2642
      %v2722 = vadd.f32 %v2416, %v2645
      %v2723 = vadd.f32 %v2417, %v2647
      %v2724 = vadd.f32 %v2418, %v2650
      %v2725 = vadd.f32 %v2419, %v2652
      %v2726 = vadd.f32 %v2420, %v2655
      %v2727 = vadd.f32 %v2421, %v2657
      %v2728 = vadd.f32 %v2422, %v2660
      %v2729 = vadd.f32 %v2423, %v2662
      %v2730 = vadd.f32 %v2424, %v2665
      %v2731 = vadd.f32 %v2425, %v2667
      %v2732 = vld [vmem:[%s1 + $0x9] sm:$0x1]
      %2733 = vset.pattern.permute.xlu0 6
      %2734 = vperm.xlu0 %2733, %v550
      %v2735 = vpop.permute.xlu0 %2734
      %2737 = vset.pattern.permute.xlu0 6
      %2738 = vperm.xlu0 %2737, %v551
      %v2739 = vpop.permute.xlu0 %2738
      %2741 = vset.pattern.permute.xlu0 6
      %2742 = vperm.xlu0 %2741, %v553
      %v2743 = vpop.permute.xlu0 %2742
      %2745 = vset.pattern.permute.xlu0 6
      %2746 = vperm.xlu0 %2745, %v554
      %v2747 = vpop.permute.xlu0 %2746
      %2749 = vset.pattern.permute.xlu0 6
      %2750 = vperm.xlu0 %2749, %v556
      %v2751 = vpop.permute.xlu0 %2750
      %2753 = vset.pattern.permute.xlu0 6
      %2754 = vperm.xlu0 %2753, %v557
      %v2755 = vpop.permute.xlu0 %2754
      %2757 = vset.pattern.permute.xlu0 6
      %2758 = vperm.xlu0 %2757, %v559
      %v2759 = vpop.permute.xlu0 %2758
      %2761 = vset.pattern.permute.xlu0 6
      %2762 = vperm.xlu0 %2761, %v560
      %v2763 = vpop.permute.xlu0 %2762
      %2765 = vset.pattern.permute.xlu0 6
      %2766 = vperm.xlu0 %2765, %v562
      %v2767 = vpop.permute.xlu0 %2766
      %2769 = vset.pattern.permute.xlu0 6
      %2770 = vperm.xlu0 %2769, %v563
      %v2771 = vpop.permute.xlu0 %2770
      %2773 = vset.pattern.permute.xlu0 6
      %2774 = vperm.xlu0 %2773, %v565
      %v2775 = vpop.permute.xlu0 %2774
      %2777 = vset.pattern.permute.xlu0 6
      %2778 = vperm.xlu0 %2777, %v566
      %v2779 = vpop.permute.xlu0 %2778
      %2781 = vset.pattern.permute.xlu0 6
      %2782 = vperm.xlu0 %2781, %v568
      %v2783 = vpop.permute.xlu0 %2782
      %2785 = vset.pattern.permute.xlu0 6
      %2786 = vperm.xlu0 %2785, %v569
      %v2787 = vpop.permute.xlu0 %2786
      %2789 = vset.pattern.permute.xlu0 6
      %2790 = vperm.xlu0 %2789, %v571
      %v2791 = vpop.permute.xlu0 %2790
      %2793 = vset.pattern.permute.xlu0 6
      %2794 = vperm.xlu0 %2793, %v572
      %v2795 = vpop.permute.xlu0 %2794
      %2797 = vset.pattern.permute.xlu0 6
      %2798 = vperm.xlu0 %2797, %v574
      %v2799 = vpop.permute.xlu0 %2798
      %2801 = vset.pattern.permute.xlu0 6
      %2802 = vperm.xlu0 %2801, %v575
      %v2803 = vpop.permute.xlu0 %2802
      %2805 = vset.pattern.permute.xlu0 6
      %2806 = vperm.xlu0 %2805, %v577
      %v2807 = vpop.permute.xlu0 %2806
      %2809 = vset.pattern.permute.xlu0 6
      %2810 = vperm.xlu0 %2809, %v578
      %v2811 = vpop.permute.xlu0 %2810
      %2813 = vset.pattern.permute.xlu0 6
      %2814 = vperm.xlu0 %2813, %v580
      %v2815 = vpop.permute.xlu0 %2814
      %2817 = vset.pattern.permute.xlu0 6
      %2818 = vperm.xlu0 %2817, %v581
      %v2819 = vpop.permute.xlu0 %2818
      %2821 = vset.pattern.permute.xlu0 6
      %2822 = vperm.xlu0 %2821, %v583
      %v2823 = vpop.permute.xlu0 %2822
      %2825 = vset.pattern.permute.xlu0 6
      %2826 = vperm.xlu0 %2825, %v584
      %v2827 = vpop.permute.xlu0 %2826
      %2829 = vset.pattern.permute.xlu0 6
      %2830 = vperm.xlu0 %2829, %v586
      %v2831 = vpop.permute.xlu0 %2830
      %2833 = vset.pattern.permute.xlu0 6
      %2834 = vperm.xlu0 %2833, %v587
      %v2835 = vpop.permute.xlu0 %2834
      %2837 = vset.pattern.permute.xlu0 6
      %2838 = vperm.xlu0 %2837, %v589
      %v2839 = vpop.permute.xlu0 %2838
      %2841 = vset.pattern.permute.xlu0 6
      %2842 = vperm.xlu0 %2841, %v590
      %v2843 = vpop.permute.xlu0 %2842
      %2845 = vset.pattern.permute.xlu0 6
      %2846 = vperm.xlu0 %2845, %v592
      %v2847 = vpop.permute.xlu0 %2846
      %2849 = vset.pattern.permute.xlu0 6
      %2850 = vperm.xlu0 %2849, %v593
      %v2851 = vpop.permute.xlu0 %2850
      %2853 = vset.pattern.permute.xlu0 6
      %2854 = vperm.xlu0 %2853, %v595
      %v2855 = vpop.permute.xlu0 %2854
      %2857 = vset.pattern.permute.xlu0 6
      %2858 = vperm.xlu0 %2857, %v596
      %v2859 = vpop.permute.xlu0 %2858
      %v2861 = vperm.slane %v2732, 0
      %v2862 = vmul.f32 %v2735, %v2861
      %v2863 = vmul.f32 %v2739, %v2861
      %v2864 = vmul.f32 %v2743, %v2861
      %v2865 = vmul.f32 %v2747, %v2861
      %v2866 = vmul.f32 %v2751, %v2861
      %v2867 = vmul.f32 %v2755, %v2861
      %v2868 = vmul.f32 %v2759, %v2861
      %v2869 = vmul.f32 %v2763, %v2861
      %v2870 = vmul.f32 %v2767, %v2861
      %v2871 = vmul.f32 %v2771, %v2861
      %v2872 = vmul.f32 %v2775, %v2861
      %v2873 = vmul.f32 %v2779, %v2861
      %v2874 = vmul.f32 %v2783, %v2861
      %v2875 = vmul.f32 %v2787, %v2861
      %v2876 = vmul.f32 %v2791, %v2861
      %v2877 = vmul.f32 %v2795, %v2861
      %v2878 = vmul.f32 %v2799, %v2861
      %v2879 = vmul.f32 %v2803, %v2861
      %v2880 = vmul.f32 %v2807, %v2861
      %v2881 = vmul.f32 %v2811, %v2861
      %v2882 = vmul.f32 %v2815, %v2861
      %v2883 = vmul.f32 %v2819, %v2861
      %v2884 = vmul.f32 %v2823, %v2861
      %v2885 = vmul.f32 %v2827, %v2861
      %v2886 = vmul.f32 %v2831, %v2861
      %v2887 = vmul.f32 %v2835, %v2861
      %v2888 = vmul.f32 %v2839, %v2861
      %v2889 = vmul.f32 %v2843, %v2861
      %v2890 = vmul.f32 %v2847, %v2861
      %v2891 = vmul.f32 %v2851, %v2861
      %v2892 = vmul.f32 %v2855, %v2861
      %v2893 = vmul.f32 %v2859, %v2861
      %v2894 = vadd.f32 %v2700, %v2862
      %v2895 = vadd.f32 %v2701, %v2863
      %v2896 = vadd.f32 %v2702, %v2864
      %v2897 = vadd.f32 %v2703, %v2865
      %v2898 = vadd.f32 %v2704, %v2866
      %v2899 = vadd.f32 %v2705, %v2867
      %v2900 = vadd.f32 %v2706, %v2868
      %v2901 = vadd.f32 %v2707, %v2869
      %v2902 = vadd.f32 %v2708, %v2870
      %v2903 = vadd.f32 %v2709, %v2871
      %v2904 = vadd.f32 %v2710, %v2872
      %v2905 = vadd.f32 %v2711, %v2873
      %v2906 = vadd.f32 %v2712, %v2874
      %v2907 = vadd.f32 %v2713, %v2875
      %v2908 = vadd.f32 %v2714, %v2876
      %v2909 = vadd.f32 %v2715, %v2877
      %v2910 = vadd.f32 %v2716, %v2878
      %v2911 = vadd.f32 %v2717, %v2879
      %v2912 = vadd.f32 %v2718, %v2880
      %v2913 = vadd.f32 %v2719, %v2881
      %v2914 = vadd.f32 %v2720, %v2882
      %v2915 = vadd.f32 %v2721, %v2883
      %v2916 = vadd.f32 %v2722, %v2884
      %v2917 = vadd.f32 %v2723, %v2885
      %v2918 = vadd.f32 %v2724, %v2886
      %v2919 = vadd.f32 %v2725, %v2887
      %v2920 = vadd.f32 %v2726, %v2888
      %v2921 = vadd.f32 %v2727, %v2889
      %v2922 = vadd.f32 %v2728, %v2890
      %v2923 = vadd.f32 %v2729, %v2891
      %v2924 = vadd.f32 %v2730, %v2892
      %v2925 = vadd.f32 %v2731, %v2893
      %v2926 = vld [vmem:[%s1 + $0xa] sm:$0x1]
      %2927 = vset.pattern.permute.xlu0 7
      %2928 = vperm.xlu0 %2927, %v550
      %v2929 = vpop.permute.xlu0 %2928
      %2931 = vset.pattern.permute.xlu0 7
      %2932 = vperm.xlu0 %2931, %v551
      %v2933 = vpop.permute.xlu0 %2932
      %2935 = vset.pattern.permute.xlu0 7
      %2936 = vperm.xlu0 %2935, %v553
      %v2937 = vpop.permute.xlu0 %2936
      %2939 = vset.pattern.permute.xlu0 7
      %2940 = vperm.xlu0 %2939, %v554
      %v2941 = vpop.permute.xlu0 %2940
      %2943 = vset.pattern.permute.xlu0 7
      %2944 = vperm.xlu0 %2943, %v556
      %v2945 = vpop.permute.xlu0 %2944
      %2947 = vset.pattern.permute.xlu0 7
      %2948 = vperm.xlu0 %2947, %v557
      %v2949 = vpop.permute.xlu0 %2948
      %2951 = vset.pattern.permute.xlu0 7
      %2952 = vperm.xlu0 %2951, %v559
      %v2953 = vpop.permute.xlu0 %2952
      %2955 = vset.pattern.permute.xlu0 7
      %2956 = vperm.xlu0 %2955, %v560
      %v2957 = vpop.permute.xlu0 %2956
      %2959 = vset.pattern.permute.xlu0 7
      %2960 = vperm.xlu0 %2959, %v562
      %v2961 = vpop.permute.xlu0 %2960
      %2963 = vset.pattern.permute.xlu0 7
      %2964 = vperm.xlu0 %2963, %v563
      %v2965 = vpop.permute.xlu0 %2964
      %2967 = vset.pattern.permute.xlu0 7
      %2968 = vperm.xlu0 %2967, %v565
      %v2969 = vpop.permute.xlu0 %2968
      %2971 = vset.pattern.permute.xlu0 7
      %2972 = vperm.xlu0 %2971, %v566
      %v2973 = vpop.permute.xlu0 %2972
      %2975 = vset.pattern.permute.xlu0 7
      %2976 = vperm.xlu0 %2975, %v568
      %v2977 = vpop.permute.xlu0 %2976
      %2979 = vset.pattern.permute.xlu0 7
      %2980 = vperm.xlu0 %2979, %v569
      %v2981 = vpop.permute.xlu0 %2980
      %2983 = vset.pattern.permute.xlu0 7
      %2984 = vperm.xlu0 %2983, %v571
      %v2985 = vpop.permute.xlu0 %2984
      %2987 = vset.pattern.permute.xlu0 7
      %2988 = vperm.xlu0 %2987, %v572
      %v2989 = vpop.permute.xlu0 %2988
      %2991 = vset.pattern.permute.xlu0 7
      %2992 = vperm.xlu0 %2991, %v574
      %v2993 = vpop.permute.xlu0 %2992
      %2995 = vset.pattern.permute.xlu0 7
      %2996 = vperm.xlu0 %2995, %v575
      %v2997 = vpop.permute.xlu0 %2996
      %2999 = vset.pattern.permute.xlu0 7
      %3000 = vperm.xlu0 %2999, %v577
      %v3001 = vpop.permute.xlu0 %3000
      %3003 = vset.pattern.permute.xlu0 7
      %3004 = vperm.xlu0 %3003, %v578
      %v3005 = vpop.permute.xlu0 %3004
      %3007 = vset.pattern.permute.xlu0 7
      %3008 = vperm.xlu0 %3007, %v580
      %v3009 = vpop.permute.xlu0 %3008
      %3011 = vset.pattern.permute.xlu0 7
      %3012 = vperm.xlu0 %3011, %v581
      %v3013 = vpop.permute.xlu0 %3012
      %3015 = vset.pattern.permute.xlu0 7
      %3016 = vperm.xlu0 %3015, %v583
      %v3017 = vpop.permute.xlu0 %3016
      %3019 = vset.pattern.permute.xlu0 7
      %3020 = vperm.xlu0 %3019, %v584
      %v3021 = vpop.permute.xlu0 %3020
      %3023 = vset.pattern.permute.xlu0 7
      %3024 = vperm.xlu0 %3023, %v586
      %v3025 = vpop.permute.xlu0 %3024
      %3027 = vset.pattern.permute.xlu0 7
      %3028 = vperm.xlu0 %3027, %v587
      %v3029 = vpop.permute.xlu0 %3028
      %3031 = vset.pattern.permute.xlu0 7
      %3032 = vperm.xlu0 %3031, %v589
      %v3033 = vpop.permute.xlu0 %3032
      %3035 = vset.pattern.permute.xlu0 7
      %3036 = vperm.xlu0 %3035, %v590
      %v3037 = vpop.permute.xlu0 %3036
      %3039 = vset.pattern.permute.xlu0 7
      %3040 = vperm.xlu0 %3039, %v592
      %v3041 = vpop.permute.xlu0 %3040
      %3043 = vset.pattern.permute.xlu0 7
      %3044 = vperm.xlu0 %3043, %v593
      %v3045 = vpop.permute.xlu0 %3044
      %3047 = vset.pattern.permute.xlu0 7
      %3048 = vperm.xlu0 %3047, %v595
      %v3049 = vpop.permute.xlu0 %3048
      %3051 = vset.pattern.permute.xlu0 7
      %3052 = vperm.xlu0 %3051, %v596
      %v3053 = vpop.permute.xlu0 %3052
      %v3055 = vperm.slane %v2926, 0
      %v3056 = vmul.f32 %v2929, %v3055
      %v3057 = vmul.f32 %v2933, %v3055
      %v3058 = vmul.f32 %v2937, %v3055
      %v3059 = vmul.f32 %v2941, %v3055
      %v3060 = vmul.f32 %v2945, %v3055
      %v3061 = vmul.f32 %v2949, %v3055
      %v3062 = vmul.f32 %v2953, %v3055
      %v3063 = vmul.f32 %v2957, %v3055
      %v3064 = vmul.f32 %v2961, %v3055
      %v3065 = vmul.f32 %v2965, %v3055
      %v3066 = vmul.f32 %v2969, %v3055
      %v3067 = vmul.f32 %v2973, %v3055
      %v3068 = vmul.f32 %v2977, %v3055
      %v3069 = vmul.f32 %v2981, %v3055
      %v3070 = vmul.f32 %v2985, %v3055
      %v3071 = vmul.f32 %v2989, %v3055
      %v3072 = vmul.f32 %v2993, %v3055
      %v3073 = vmul.f32 %v2997, %v3055
      %v3074 = vmul.f32 %v3001, %v3055
      %v3075 = vmul.f32 %v3005, %v3055
      %v3076 = vmul.f32 %v3009, %v3055
      %v3077 = vmul.f32 %v3013, %v3055
      %v3078 = vmul.f32 %v3017, %v3055
      %v3079 = vmul.f32 %v3021, %v3055
      %v3080 = vmul.f32 %v3025, %v3055
      %v3081 = vmul.f32 %v3029, %v3055
      %v3082 = vmul.f32 %v3033, %v3055
      %v3083 = vmul.f32 %v3037, %v3055
      %v3084 = vmul.f32 %v3041, %v3055
      %v3085 = vmul.f32 %v3045, %v3055
      %v3086 = vmul.f32 %v3049, %v3055
      %v3087 = vmul.f32 %v3053, %v3055
      %v3088 = vadd.f32 %v2894, %v3056
      %v3089 = vadd.f32 %v2895, %v3057
      %v3090 = vadd.f32 %v2896, %v3058
      %v3091 = vadd.f32 %v2897, %v3059
      %v3092 = vadd.f32 %v2898, %v3060
      %v3093 = vadd.f32 %v2899, %v3061
      %v3094 = vadd.f32 %v2900, %v3062
      %v3095 = vadd.f32 %v2901, %v3063
      %v3096 = vadd.f32 %v2902, %v3064
      %v3097 = vadd.f32 %v2903, %v3065
      %v3098 = vadd.f32 %v2904, %v3066
      %v3099 = vadd.f32 %v2905, %v3067
      %v3100 = vadd.f32 %v2906, %v3068
      %v3101 = vadd.f32 %v2907, %v3069
      %v3102 = vadd.f32 %v2908, %v3070
      %v3103 = vadd.f32 %v2909, %v3071
      %v3104 = vadd.f32 %v2910, %v3072
      %v3105 = vadd.f32 %v2911, %v3073
      %v3106 = vadd.f32 %v2912, %v3074
      %v3107 = vadd.f32 %v2913, %v3075
      %v3108 = vadd.f32 %v2914, %v3076
      %v3109 = vadd.f32 %v2915, %v3077
      %v3110 = vadd.f32 %v2916, %v3078
      %v3111 = vadd.f32 %v2917, %v3079
      %v3112 = vadd.f32 %v2918, %v3080
      %v3113 = vadd.f32 %v2919, %v3081
      %v3114 = vadd.f32 %v2920, %v3082
      %v3115 = vadd.f32 %v2921, %v3083
      %v3116 = vadd.f32 %v2922, %v3084
      %v3117 = vadd.f32 %v2923, %v3085
      %v3118 = vadd.f32 %v2924, %v3086
      %v3119 = vadd.f32 %v2925, %v3087
      %v3120 = vld [vmem:[%s1 + $0xb] sm:$0x1]
      %3121 = vset.pattern.permute.xlu0 8
      %3122 = vperm.xlu0 %3121, %v550
      %v3123 = vpop.permute.xlu0 %3122
      %3125 = vset.pattern.permute.xlu0 8
      %3126 = vperm.xlu0 %3125, %v551
      %v3127 = vpop.permute.xlu0 %3126
      %3129 = vset.pattern.permute.xlu0 8
      %3130 = vperm.xlu0 %3129, %v553
      %v3131 = vpop.permute.xlu0 %3130
      %3133 = vset.pattern.permute.xlu0 8
      %3134 = vperm.xlu0 %3133, %v554
      %v3135 = vpop.permute.xlu0 %3134
      %3137 = vset.pattern.permute.xlu0 8
      %3138 = vperm.xlu0 %3137, %v556
      %v3139 = vpop.permute.xlu0 %3138
      %3141 = vset.pattern.permute.xlu0 8
      %3142 = vperm.xlu0 %3141, %v557
      %v3143 = vpop.permute.xlu0 %3142
      %3145 = vset.pattern.permute.xlu0 8
      %3146 = vperm.xlu0 %3145, %v559
      %v3147 = vpop.permute.xlu0 %3146
      %3149 = vset.pattern.permute.xlu0 8
      %3150 = vperm.xlu0 %3149, %v560
      %v3151 = vpop.permute.xlu0 %3150
      %3153 = vset.pattern.permute.xlu0 8
      %3154 = vperm.xlu0 %3153, %v562
      %v3155 = vpop.permute.xlu0 %3154
      %3157 = vset.pattern.permute.xlu0 8
      %3158 = vperm.xlu0 %3157, %v563
      %v3159 = vpop.permute.xlu0 %3158
      %3161 = vset.pattern.permute.xlu0 8
      %3162 = vperm.xlu0 %3161, %v565
      %v3163 = vpop.permute.xlu0 %3162
      %3165 = vset.pattern.permute.xlu0 8
      %3166 = vperm.xlu0 %3165, %v566
      %v3167 = vpop.permute.xlu0 %3166
      %3169 = vset.pattern.permute.xlu0 8
      %3170 = vperm.xlu0 %3169, %v568
      %v3171 = vpop.permute.xlu0 %3170
      %3173 = vset.pattern.permute.xlu0 8
      %3174 = vperm.xlu0 %3173, %v569
      %v3175 = vpop.permute.xlu0 %3174
      %3177 = vset.pattern.permute.xlu0 8
      %3178 = vperm.xlu0 %3177, %v571
      %v3179 = vpop.permute.xlu0 %3178
      %3181 = vset.pattern.permute.xlu0 8
      %3182 = vperm.xlu0 %3181, %v572
      %v3183 = vpop.permute.xlu0 %3182
      %3185 = vset.pattern.permute.xlu0 8
      %3186 = vperm.xlu0 %3185, %v574
      %v3187 = vpop.permute.xlu0 %3186
      %3189 = vset.pattern.permute.xlu0 8
      %3190 = vperm.xlu0 %3189, %v575
      %v3191 = vpop.permute.xlu0 %3190
      %3193 = vset.pattern.permute.xlu0 8
      %3194 = vperm.xlu0 %3193, %v577
      %v3195 = vpop.permute.xlu0 %3194
      %3197 = vset.pattern.permute.xlu0 8
      %3198 = vperm.xlu0 %3197, %v578
      %v3199 = vpop.permute.xlu0 %3198
      %3201 = vset.pattern.permute.xlu0 8
      %3202 = vperm.xlu0 %3201, %v580
      %v3203 = vpop.permute.xlu0 %3202
      %3205 = vset.pattern.permute.xlu0 8
      %3206 = vperm.xlu0 %3205, %v581
      %v3207 = vpop.permute.xlu0 %3206
      %3209 = vset.pattern.permute.xlu0 8
      %3210 = vperm.xlu0 %3209, %v583
      %v3211 = vpop.permute.xlu0 %3210
      %3213 = vset.pattern.permute.xlu0 8
      %3214 = vperm.xlu0 %3213, %v584
      %v3215 = vpop.permute.xlu0 %3214
      %3217 = vset.pattern.permute.xlu0 8
      %3218 = vperm.xlu0 %3217, %v586
      %v3219 = vpop.permute.xlu0 %3218
      %3221 = vset.pattern.permute.xlu0 8
      %3222 = vperm.xlu0 %3221, %v587
      %v3223 = vpop.permute.xlu0 %3222
      %3225 = vset.pattern.permute.xlu0 8
      %3226 = vperm.xlu0 %3225, %v589
      %v3227 = vpop.permute.xlu0 %3226
      %3229 = vset.pattern.permute.xlu0 8
      %3230 = vperm.xlu0 %3229, %v590
      %v3231 = vpop.permute.xlu0 %3230
      %3233 = vset.pattern.permute.xlu0 8
      %3234 = vperm.xlu0 %3233, %v592
      %v3235 = vpop.permute.xlu0 %3234
      %3237 = vset.pattern.permute.xlu0 8
      %3238 = vperm.xlu0 %3237, %v593
      %v3239 = vpop.permute.xlu0 %3238
      %3241 = vset.pattern.permute.xlu0 8
      %3242 = vperm.xlu0 %3241, %v595
      %v3243 = vpop.permute.xlu0 %3242
      %3245 = vset.pattern.permute.xlu0 8
      %3246 = vperm.xlu0 %3245, %v596
      %v3247 = vpop.permute.xlu0 %3246
      %v3249 = vperm.slane %v3120, 0
      %v3250 = vmul.f32 %v3123, %v3249
      %v3251 = vmul.f32 %v3127, %v3249
      %v3252 = vmul.f32 %v3131, %v3249
      %v3253 = vmul.f32 %v3135, %v3249
      %v3254 = vmul.f32 %v3139, %v3249
      %v3255 = vmul.f32 %v3143, %v3249
      %v3256 = vmul.f32 %v3147, %v3249
      %v3257 = vmul.f32 %v3151, %v3249
      %v3258 = vmul.f32 %v3155, %v3249
      %v3259 = vmul.f32 %v3159, %v3249
      %v3260 = vmul.f32 %v3163, %v3249
      %v3261 = vmul.f32 %v3167, %v3249
      %v3262 = vmul.f32 %v3171, %v3249
      %v3263 = vmul.f32 %v3175, %v3249
      %v3264 = vmul.f32 %v3179, %v3249
      %v3265 = vmul.f32 %v3183, %v3249
      %v3266 = vmul.f32 %v3187, %v3249
      %v3267 = vmul.f32 %v3191, %v3249
      %v3268 = vmul.f32 %v3195, %v3249
      %v3269 = vmul.f32 %v3199, %v3249
      %v3270 = vmul.f32 %v3203, %v3249
      %v3271 = vmul.f32 %v3207, %v3249
      %v3272 = vmul.f32 %v3211, %v3249
      %v3273 = vmul.f32 %v3215, %v3249
      %v3274 = vmul.f32 %v3219, %v3249
      %v3275 = vmul.f32 %v3223, %v3249
      %v3276 = vmul.f32 %v3227, %v3249
      %v3277 = vmul.f32 %v3231, %v3249
      %v3278 = vmul.f32 %v3235, %v3249
      %v3279 = vmul.f32 %v3239, %v3249
      %v3280 = vmul.f32 %v3243, %v3249
      %v3281 = vmul.f32 %v3247, %v3249
      %v3282 = vadd.f32 %v3088, %v3250
      %v3283 = vadd.f32 %v3089, %v3251
      %v3284 = vadd.f32 %v3090, %v3252
      %v3285 = vadd.f32 %v3091, %v3253
      %v3286 = vadd.f32 %v3092, %v3254
      %v3287 = vadd.f32 %v3093, %v3255
      %v3288 = vadd.f32 %v3094, %v3256
      %v3289 = vadd.f32 %v3095, %v3257
      %v3290 = vadd.f32 %v3096, %v3258
      %v3291 = vadd.f32 %v3097, %v3259
      %v3292 = vadd.f32 %v3098, %v3260
      %v3293 = vadd.f32 %v3099, %v3261
      %v3294 = vadd.f32 %v3100, %v3262
      %v3295 = vadd.f32 %v3101, %v3263
      %v3296 = vadd.f32 %v3102, %v3264
      %v3297 = vadd.f32 %v3103, %v3265
      %v3298 = vadd.f32 %v3104, %v3266
      %v3299 = vadd.f32 %v3105, %v3267
      %v3300 = vadd.f32 %v3106, %v3268
      %v3301 = vadd.f32 %v3107, %v3269
      %v3302 = vadd.f32 %v3108, %v3270
      %v3303 = vadd.f32 %v3109, %v3271
      %v3304 = vadd.f32 %v3110, %v3272
      %v3305 = vadd.f32 %v3111, %v3273
      %v3306 = vadd.f32 %v3112, %v3274
      %v3307 = vadd.f32 %v3113, %v3275
      %v3308 = vadd.f32 %v3114, %v3276
      %v3309 = vadd.f32 %v3115, %v3277
      %v3310 = vadd.f32 %v3116, %v3278
      %v3311 = vadd.f32 %v3117, %v3279
      %v3312 = vadd.f32 %v3118, %v3280
      %v3313 = vadd.f32 %v3119, %v3281
      %v3314 = vld [vmem:[%s1 + $0xc] sm:$0x1]
      %3315 = vset.pattern.permute.xlu0 9
      %3316 = vperm.xlu0 %3315, %v550
      %v3317 = vpop.permute.xlu0 %3316
      %3319 = vset.pattern.permute.xlu0 9
      %3320 = vperm.xlu0 %3319, %v551
      %v3321 = vpop.permute.xlu0 %3320
      %3323 = vset.pattern.permute.xlu0 9
      %3324 = vperm.xlu0 %3323, %v553
      %v3325 = vpop.permute.xlu0 %3324
      %3327 = vset.pattern.permute.xlu0 9
      %3328 = vperm.xlu0 %3327, %v554
      %v3329 = vpop.permute.xlu0 %3328
      %3331 = vset.pattern.permute.xlu0 9
      %3332 = vperm.xlu0 %3331, %v556
      %v3333 = vpop.permute.xlu0 %3332
      %3335 = vset.pattern.permute.xlu0 9
      %3336 = vperm.xlu0 %3335, %v557
      %v3337 = vpop.permute.xlu0 %3336
      %3339 = vset.pattern.permute.xlu0 9
      %3340 = vperm.xlu0 %3339, %v559
      %v3341 = vpop.permute.xlu0 %3340
      %3343 = vset.pattern.permute.xlu0 9
      %3344 = vperm.xlu0 %3343, %v560
      %v3345 = vpop.permute.xlu0 %3344
      %3347 = vset.pattern.permute.xlu0 9
      %3348 = vperm.xlu0 %3347, %v562
      %v3349 = vpop.permute.xlu0 %3348
      %3351 = vset.pattern.permute.xlu0 9
      %3352 = vperm.xlu0 %3351, %v563
      %v3353 = vpop.permute.xlu0 %3352
      %3355 = vset.pattern.permute.xlu0 9
      %3356 = vperm.xlu0 %3355, %v565
      %v3357 = vpop.permute.xlu0 %3356
      %3359 = vset.pattern.permute.xlu0 9
      %3360 = vperm.xlu0 %3359, %v566
      %v3361 = vpop.permute.xlu0 %3360
      %3363 = vset.pattern.permute.xlu0 9
      %3364 = vperm.xlu0 %3363, %v568
      %v3365 = vpop.permute.xlu0 %3364
      %3367 = vset.pattern.permute.xlu0 9
      %3368 = vperm.xlu0 %3367, %v569
      %v3369 = vpop.permute.xlu0 %3368
      %3371 = vset.pattern.permute.xlu0 9
      %3372 = vperm.xlu0 %3371, %v571
      %v3373 = vpop.permute.xlu0 %3372
      %3375 = vset.pattern.permute.xlu0 9
      %3376 = vperm.xlu0 %3375, %v572
      %v3377 = vpop.permute.xlu0 %3376
      %3379 = vset.pattern.permute.xlu0 9
      %3380 = vperm.xlu0 %3379, %v574
      %v3381 = vpop.permute.xlu0 %3380
      %3383 = vset.pattern.permute.xlu0 9
      %3384 = vperm.xlu0 %3383, %v575
      %v3385 = vpop.permute.xlu0 %3384
      %3387 = vset.pattern.permute.xlu0 9
      %3388 = vperm.xlu0 %3387, %v577
      %v3389 = vpop.permute.xlu0 %3388
      %3391 = vset.pattern.permute.xlu0 9
      %3392 = vperm.xlu0 %3391, %v578
      %v3393 = vpop.permute.xlu0 %3392
      %3395 = vset.pattern.permute.xlu0 9
      %3396 = vperm.xlu0 %3395, %v580
      %v3397 = vpop.permute.xlu0 %3396
      %3399 = vset.pattern.permute.xlu0 9
      %3400 = vperm.xlu0 %3399, %v581
      %v3401 = vpop.permute.xlu0 %3400
      %3403 = vset.pattern.permute.xlu0 9
      %3404 = vperm.xlu0 %3403, %v583
      %v3405 = vpop.permute.xlu0 %3404
      %3407 = vset.pattern.permute.xlu0 9
      %3408 = vperm.xlu0 %3407, %v584
      %v3409 = vpop.permute.xlu0 %3408
      %3411 = vset.pattern.permute.xlu0 9
      %3412 = vperm.xlu0 %3411, %v586
      %v3413 = vpop.permute.xlu0 %3412
      %3415 = vset.pattern.permute.xlu0 9
      %3416 = vperm.xlu0 %3415, %v587
      %v3417 = vpop.permute.xlu0 %3416
      %3419 = vset.pattern.permute.xlu0 9
      %3420 = vperm.xlu0 %3419, %v589
      %v3421 = vpop.permute.xlu0 %3420
      %3423 = vset.pattern.permute.xlu0 9
      %3424 = vperm.xlu0 %3423, %v590
      %v3425 = vpop.permute.xlu0 %3424
      %3427 = vset.pattern.permute.xlu0 9
      %3428 = vperm.xlu0 %3427, %v592
      %v3429 = vpop.permute.xlu0 %3428
      %3431 = vset.pattern.permute.xlu0 9
      %3432 = vperm.xlu0 %3431, %v593
      %v3433 = vpop.permute.xlu0 %3432
      %3435 = vset.pattern.permute.xlu0 9
      %3436 = vperm.xlu0 %3435, %v595
      %v3437 = vpop.permute.xlu0 %3436
      %3439 = vset.pattern.permute.xlu0 9
      %3440 = vperm.xlu0 %3439, %v596
      %v3441 = vpop.permute.xlu0 %3440
      %v3443 = vperm.slane %v3314, 0
      %v3444 = vmul.f32 %v3317, %v3443
      %v3445 = vmul.f32 %v3321, %v3443
      %v3446 = vmul.f32 %v3325, %v3443
      %v3447 = vmul.f32 %v3329, %v3443
      %v3448 = vmul.f32 %v3333, %v3443
      %v3449 = vmul.f32 %v3337, %v3443
      %v3450 = vmul.f32 %v3341, %v3443
      %v3451 = vmul.f32 %v3345, %v3443
      %v3452 = vmul.f32 %v3349, %v3443
      %v3453 = vmul.f32 %v3353, %v3443
      %v3454 = vmul.f32 %v3357, %v3443
      %v3455 = vmul.f32 %v3361, %v3443
      %v3456 = vmul.f32 %v3365, %v3443
      %v3457 = vmul.f32 %v3369, %v3443
      %v3458 = vmul.f32 %v3373, %v3443
      %v3459 = vmul.f32 %v3377, %v3443
      %v3460 = vmul.f32 %v3381, %v3443
      %v3461 = vmul.f32 %v3385, %v3443
      %v3462 = vmul.f32 %v3389, %v3443
      %v3463 = vmul.f32 %v3393, %v3443
      %v3464 = vmul.f32 %v3397, %v3443
      %v3465 = vmul.f32 %v3401, %v3443
      %v3466 = vmul.f32 %v3405, %v3443
      %v3467 = vmul.f32 %v3409, %v3443
      %v3468 = vmul.f32 %v3413, %v3443
      %v3469 = vmul.f32 %v3417, %v3443
      %v3470 = vmul.f32 %v3421, %v3443
      %v3471 = vmul.f32 %v3425, %v3443
      %v3472 = vmul.f32 %v3429, %v3443
      %v3473 = vmul.f32 %v3433, %v3443
      %v3474 = vmul.f32 %v3437, %v3443
      %v3475 = vmul.f32 %v3441, %v3443
      %v3476 = vadd.f32 %v3282, %v3444
      %v3477 = vadd.f32 %v3283, %v3445
      %v3478 = vadd.f32 %v3284, %v3446
      %v3479 = vadd.f32 %v3285, %v3447
      %v3480 = vadd.f32 %v3286, %v3448
      %v3481 = vadd.f32 %v3287, %v3449
      %v3482 = vadd.f32 %v3288, %v3450
      %v3483 = vadd.f32 %v3289, %v3451
      %v3484 = vadd.f32 %v3290, %v3452
      %v3485 = vadd.f32 %v3291, %v3453
      %v3486 = vadd.f32 %v3292, %v3454
      %v3487 = vadd.f32 %v3293, %v3455
      %v3488 = vadd.f32 %v3294, %v3456
      %v3489 = vadd.f32 %v3295, %v3457
      %v3490 = vadd.f32 %v3296, %v3458
      %v3491 = vadd.f32 %v3297, %v3459
      %v3492 = vadd.f32 %v3298, %v3460
      %v3493 = vadd.f32 %v3299, %v3461
      %v3494 = vadd.f32 %v3300, %v3462
      %v3495 = vadd.f32 %v3301, %v3463
      %v3496 = vadd.f32 %v3302, %v3464
      %v3497 = vadd.f32 %v3303, %v3465
      %v3498 = vadd.f32 %v3304, %v3466
      %v3499 = vadd.f32 %v3305, %v3467
      %v3500 = vadd.f32 %v3306, %v3468
      %v3501 = vadd.f32 %v3307, %v3469
      %v3502 = vadd.f32 %v3308, %v3470
      %v3503 = vadd.f32 %v3309, %v3471
      %v3504 = vadd.f32 %v3310, %v3472
      %v3505 = vadd.f32 %v3311, %v3473
      %v3506 = vadd.f32 %v3312, %v3474
      %v3507 = vadd.f32 %v3313, %v3475
      %v3508 = vld [vmem:[%s1 + $0xd] sm:$0x1]
      %3509 = vset.pattern.permute.xlu0 10
      %3510 = vperm.xlu0 %3509, %v550
      %v3511 = vpop.permute.xlu0 %3510
      %3513 = vset.pattern.permute.xlu0 10
      %3514 = vperm.xlu0 %3513, %v551
      %v3515 = vpop.permute.xlu0 %3514
      %3517 = vset.pattern.permute.xlu0 10
      %3518 = vperm.xlu0 %3517, %v553
      %v3519 = vpop.permute.xlu0 %3518
      %3521 = vset.pattern.permute.xlu0 10
      %3522 = vperm.xlu0 %3521, %v554
      %v3523 = vpop.permute.xlu0 %3522
      %3525 = vset.pattern.permute.xlu0 10
      %3526 = vperm.xlu0 %3525, %v556
      %v3527 = vpop.permute.xlu0 %3526
      %3529 = vset.pattern.permute.xlu0 10
      %3530 = vperm.xlu0 %3529, %v557
      %v3531 = vpop.permute.xlu0 %3530
      %3533 = vset.pattern.permute.xlu0 10
      %3534 = vperm.xlu0 %3533, %v559
      %v3535 = vpop.permute.xlu0 %3534
      %3537 = vset.pattern.permute.xlu0 10
      %3538 = vperm.xlu0 %3537, %v560
      %v3539 = vpop.permute.xlu0 %3538
      %3541 = vset.pattern.permute.xlu0 10
      %3542 = vperm.xlu0 %3541, %v562
      %v3543 = vpop.permute.xlu0 %3542
      %3545 = vset.pattern.permute.xlu0 10
      %3546 = vperm.xlu0 %3545, %v563
      %v3547 = vpop.permute.xlu0 %3546
      %3549 = vset.pattern.permute.xlu0 10
      %3550 = vperm.xlu0 %3549, %v565
      %v3551 = vpop.permute.xlu0 %3550
      %3553 = vset.pattern.permute.xlu0 10
      %3554 = vperm.xlu0 %3553, %v566
      %v3555 = vpop.permute.xlu0 %3554
      %3557 = vset.pattern.permute.xlu0 10
      %3558 = vperm.xlu0 %3557, %v568
      %v3559 = vpop.permute.xlu0 %3558
      %3561 = vset.pattern.permute.xlu0 10
      %3562 = vperm.xlu0 %3561, %v569
      %v3563 = vpop.permute.xlu0 %3562
      %3565 = vset.pattern.permute.xlu0 10
      %3566 = vperm.xlu0 %3565, %v571
      %v3567 = vpop.permute.xlu0 %3566
      %3569 = vset.pattern.permute.xlu0 10
      %3570 = vperm.xlu0 %3569, %v572
      %v3571 = vpop.permute.xlu0 %3570
      %3573 = vset.pattern.permute.xlu0 10
      %3574 = vperm.xlu0 %3573, %v574
      %v3575 = vpop.permute.xlu0 %3574
      %3577 = vset.pattern.permute.xlu0 10
      %3578 = vperm.xlu0 %3577, %v575
      %v3579 = vpop.permute.xlu0 %3578
      %3581 = vset.pattern.permute.xlu0 10
      %3582 = vperm.xlu0 %3581, %v577
      %v3583 = vpop.permute.xlu0 %3582
      %3585 = vset.pattern.permute.xlu0 10
      %3586 = vperm.xlu0 %3585, %v578
      %v3587 = vpop.permute.xlu0 %3586
      %3589 = vset.pattern.permute.xlu0 10
      %3590 = vperm.xlu0 %3589, %v580
      %v3591 = vpop.permute.xlu0 %3590
      %3593 = vset.pattern.permute.xlu0 10
      %3594 = vperm.xlu0 %3593, %v581
      %v3595 = vpop.permute.xlu0 %3594
      %3597 = vset.pattern.permute.xlu0 10
      %3598 = vperm.xlu0 %3597, %v583
      %v3599 = vpop.permute.xlu0 %3598
      %3601 = vset.pattern.permute.xlu0 10
      %3602 = vperm.xlu0 %3601, %v584
      %v3603 = vpop.permute.xlu0 %3602
      %3605 = vset.pattern.permute.xlu0 10
      %3606 = vperm.xlu0 %3605, %v586
      %v3607 = vpop.permute.xlu0 %3606
      %3609 = vset.pattern.permute.xlu0 10
      %3610 = vperm.xlu0 %3609, %v587
      %v3611 = vpop.permute.xlu0 %3610
      %3613 = vset.pattern.permute.xlu0 10
      %3614 = vperm.xlu0 %3613, %v589
      %v3615 = vpop.permute.xlu0 %3614
      %3617 = vset.pattern.permute.xlu0 10
      %3618 = vperm.xlu0 %3617, %v590
      %v3619 = vpop.permute.xlu0 %3618
      %3621 = vset.pattern.permute.xlu0 10
      %3622 = vperm.xlu0 %3621, %v592
      %v3623 = vpop.permute.xlu0 %3622
      %3625 = vset.pattern.permute.xlu0 10
      %3626 = vperm.xlu0 %3625, %v593
      %v3627 = vpop.permute.xlu0 %3626
      %3629 = vset.pattern.permute.xlu0 10
      %3630 = vperm.xlu0 %3629, %v595
      %v3631 = vpop.permute.xlu0 %3630
      %3633 = vset.pattern.permute.xlu0 10
      %3634 = vperm.xlu0 %3633, %v596
      %v3635 = vpop.permute.xlu0 %3634
      %v3637 = vperm.slane %v3508, 0
      %v3638 = vmul.f32 %v3511, %v3637
      %v3639 = vmul.f32 %v3515, %v3637
      %v3640 = vmul.f32 %v3519, %v3637
      %v3641 = vmul.f32 %v3523, %v3637
      %v3642 = vmul.f32 %v3527, %v3637
      %v3643 = vmul.f32 %v3531, %v3637
      %v3644 = vmul.f32 %v3535, %v3637
      %v3645 = vmul.f32 %v3539, %v3637
      %v3646 = vmul.f32 %v3543, %v3637
      %v3647 = vmul.f32 %v3547, %v3637
      %v3648 = vmul.f32 %v3551, %v3637
      %v3649 = vmul.f32 %v3555, %v3637
      %v3650 = vmul.f32 %v3559, %v3637
      %v3651 = vmul.f32 %v3563, %v3637
      %v3652 = vmul.f32 %v3567, %v3637
      %v3653 = vmul.f32 %v3571, %v3637
      %v3654 = vmul.f32 %v3575, %v3637
      %v3655 = vmul.f32 %v3579, %v3637
      %v3656 = vmul.f32 %v3583, %v3637
      %v3657 = vmul.f32 %v3587, %v3637
      %v3658 = vmul.f32 %v3591, %v3637
      %v3659 = vmul.f32 %v3595, %v3637
      %v3660 = vmul.f32 %v3599, %v3637
      %v3661 = vmul.f32 %v3603, %v3637
      %v3662 = vmul.f32 %v3607, %v3637
      %v3663 = vmul.f32 %v3611, %v3637
      %v3664 = vmul.f32 %v3615, %v3637
      %v3665 = vmul.f32 %v3619, %v3637
      %v3666 = vmul.f32 %v3623, %v3637
      %v3667 = vmul.f32 %v3627, %v3637
      %v3668 = vmul.f32 %v3631, %v3637
      %v3669 = vmul.f32 %v3635, %v3637
      %v3670 = vadd.f32 %v3476, %v3638
      %v3671 = vadd.f32 %v3477, %v3639
      %v3672 = vadd.f32 %v3478, %v3640
      %v3673 = vadd.f32 %v3479, %v3641
      %v3674 = vadd.f32 %v3480, %v3642
      %v3675 = vadd.f32 %v3481, %v3643
      %v3676 = vadd.f32 %v3482, %v3644
      %v3677 = vadd.f32 %v3483, %v3645
      %v3678 = vadd.f32 %v3484, %v3646
      %v3679 = vadd.f32 %v3485, %v3647
      %v3680 = vadd.f32 %v3486, %v3648
      %v3681 = vadd.f32 %v3487, %v3649
      %v3682 = vadd.f32 %v3488, %v3650
      %v3683 = vadd.f32 %v3489, %v3651
      %v3684 = vadd.f32 %v3490, %v3652
      %v3685 = vadd.f32 %v3491, %v3653
      %v3686 = vadd.f32 %v3492, %v3654
      %v3687 = vadd.f32 %v3493, %v3655
      %v3688 = vadd.f32 %v3494, %v3656
      %v3689 = vadd.f32 %v3495, %v3657
      %v3690 = vadd.f32 %v3496, %v3658
      %v3691 = vadd.f32 %v3497, %v3659
      %v3692 = vadd.f32 %v3498, %v3660
      %v3693 = vadd.f32 %v3499, %v3661
      %v3694 = vadd.f32 %v3500, %v3662
      %v3695 = vadd.f32 %v3501, %v3663
      %v3696 = vadd.f32 %v3502, %v3664
      %v3697 = vadd.f32 %v3503, %v3665
      %v3698 = vadd.f32 %v3504, %v3666
      %v3699 = vadd.f32 %v3505, %v3667
      %v3700 = vadd.f32 %v3506, %v3668
      %v3701 = vadd.f32 %v3507, %v3669
      %v3702 = vld [vmem:[%s1 + $0xe] sm:$0x1]
      %3703 = vset.pattern.permute.xlu0 11
      %3704 = vperm.xlu0 %3703, %v550
      %v3705 = vpop.permute.xlu0 %3704
      %3707 = vset.pattern.permute.xlu0 11
      %3708 = vperm.xlu0 %3707, %v551
      %v3709 = vpop.permute.xlu0 %3708
      %3711 = vset.pattern.permute.xlu0 11
      %3712 = vperm.xlu0 %3711, %v553
      %v3713 = vpop.permute.xlu0 %3712
      %3715 = vset.pattern.permute.xlu0 11
      %3716 = vperm.xlu0 %3715, %v554
      %v3717 = vpop.permute.xlu0 %3716
      %3719 = vset.pattern.permute.xlu0 11
      %3720 = vperm.xlu0 %3719, %v556
      %v3721 = vpop.permute.xlu0 %3720
      %3723 = vset.pattern.permute.xlu0 11
      %3724 = vperm.xlu0 %3723, %v557
      %v3725 = vpop.permute.xlu0 %3724
      %3727 = vset.pattern.permute.xlu0 11
      %3728 = vperm.xlu0 %3727, %v559
      %v3729 = vpop.permute.xlu0 %3728
      %3731 = vset.pattern.permute.xlu0 11
      %3732 = vperm.xlu0 %3731, %v560
      %v3733 = vpop.permute.xlu0 %3732
      %3735 = vset.pattern.permute.xlu0 11
      %3736 = vperm.xlu0 %3735, %v562
      %v3737 = vpop.permute.xlu0 %3736
      %3739 = vset.pattern.permute.xlu0 11
      %3740 = vperm.xlu0 %3739, %v563
      %v3741 = vpop.permute.xlu0 %3740
      %3743 = vset.pattern.permute.xlu0 11
      %3744 = vperm.xlu0 %3743, %v565
      %v3745 = vpop.permute.xlu0 %3744
      %3747 = vset.pattern.permute.xlu0 11
      %3748 = vperm.xlu0 %3747, %v566
      %v3749 = vpop.permute.xlu0 %3748
      %3751 = vset.pattern.permute.xlu0 11
      %3752 = vperm.xlu0 %3751, %v568
      %v3753 = vpop.permute.xlu0 %3752
      %3755 = vset.pattern.permute.xlu0 11
      %3756 = vperm.xlu0 %3755, %v569
      %v3757 = vpop.permute.xlu0 %3756
      %3759 = vset.pattern.permute.xlu0 11
      %3760 = vperm.xlu0 %3759, %v571
      %v3761 = vpop.permute.xlu0 %3760
      %3763 = vset.pattern.permute.xlu0 11
      %3764 = vperm.xlu0 %3763, %v572
      %v3765 = vpop.permute.xlu0 %3764
      %3767 = vset.pattern.permute.xlu0 11
      %3768 = vperm.xlu0 %3767, %v574
      %v3769 = vpop.permute.xlu0 %3768
      %3771 = vset.pattern.permute.xlu0 11
      %3772 = vperm.xlu0 %3771, %v575
      %v3773 = vpop.permute.xlu0 %3772
      %3775 = vset.pattern.permute.xlu0 11
      %3776 = vperm.xlu0 %3775, %v577
      %v3777 = vpop.permute.xlu0 %3776
      %3779 = vset.pattern.permute.xlu0 11
      %3780 = vperm.xlu0 %3779, %v578
      %v3781 = vpop.permute.xlu0 %3780
      %3783 = vset.pattern.permute.xlu0 11
      %3784 = vperm.xlu0 %3783, %v580
      %v3785 = vpop.permute.xlu0 %3784
      %3787 = vset.pattern.permute.xlu0 11
      %3788 = vperm.xlu0 %3787, %v581
      %v3789 = vpop.permute.xlu0 %3788
      %3791 = vset.pattern.permute.xlu0 11
      %3792 = vperm.xlu0 %3791, %v583
      %v3793 = vpop.permute.xlu0 %3792
      %3795 = vset.pattern.permute.xlu0 11
      %3796 = vperm.xlu0 %3795, %v584
      %v3797 = vpop.permute.xlu0 %3796
      %3799 = vset.pattern.permute.xlu0 11
      %3800 = vperm.xlu0 %3799, %v586
      %v3801 = vpop.permute.xlu0 %3800
      %3803 = vset.pattern.permute.xlu0 11
      %3804 = vperm.xlu0 %3803, %v587
      %v3805 = vpop.permute.xlu0 %3804
      %3807 = vset.pattern.permute.xlu0 11
      %3808 = vperm.xlu0 %3807, %v589
      %v3809 = vpop.permute.xlu0 %3808
      %3811 = vset.pattern.permute.xlu0 11
      %3812 = vperm.xlu0 %3811, %v590
      %v3813 = vpop.permute.xlu0 %3812
      %3815 = vset.pattern.permute.xlu0 11
      %3816 = vperm.xlu0 %3815, %v592
      %v3817 = vpop.permute.xlu0 %3816
      %3819 = vset.pattern.permute.xlu0 11
      %3820 = vperm.xlu0 %3819, %v593
      %v3821 = vpop.permute.xlu0 %3820
      %3823 = vset.pattern.permute.xlu0 11
      %3824 = vperm.xlu0 %3823, %v595
      %v3825 = vpop.permute.xlu0 %3824
      %3827 = vset.pattern.permute.xlu0 11
      %3828 = vperm.xlu0 %3827, %v596
      %v3829 = vpop.permute.xlu0 %3828
      %v3831 = vperm.slane %v3702, 0
      %v3832 = vmul.f32 %v3705, %v3831
      %v3833 = vmul.f32 %v3709, %v3831
      %v3834 = vmul.f32 %v3713, %v3831
      %v3835 = vmul.f32 %v3717, %v3831
      %v3836 = vmul.f32 %v3721, %v3831
      %v3837 = vmul.f32 %v3725, %v3831
      %v3838 = vmul.f32 %v3729, %v3831
      %v3839 = vmul.f32 %v3733, %v3831
      %v3840 = vmul.f32 %v3737, %v3831
      %v3841 = vmul.f32 %v3741, %v3831
      %v3842 = vmul.f32 %v3745, %v3831
      %v3843 = vmul.f32 %v3749, %v3831
      %v3844 = vmul.f32 %v3753, %v3831
      %v3845 = vmul.f32 %v3757, %v3831
      %v3846 = vmul.f32 %v3761, %v3831
      %v3847 = vmul.f32 %v3765, %v3831
      %v3848 = vmul.f32 %v3769, %v3831
      %v3849 = vmul.f32 %v3773, %v3831
      %v3850 = vmul.f32 %v3777, %v3831
      %v3851 = vmul.f32 %v3781, %v3831
      %v3852 = vmul.f32 %v3785, %v3831
      %v3853 = vmul.f32 %v3789, %v3831
      %v3854 = vmul.f32 %v3793, %v3831
      %v3855 = vmul.f32 %v3797, %v3831
      %v3856 = vmul.f32 %v3801, %v3831
      %v3857 = vmul.f32 %v3805, %v3831
      %v3858 = vmul.f32 %v3809, %v3831
      %v3859 = vmul.f32 %v3813, %v3831
      %v3860 = vmul.f32 %v3817, %v3831
      %v3861 = vmul.f32 %v3821, %v3831
      %v3862 = vmul.f32 %v3825, %v3831
      %v3863 = vmul.f32 %v3829, %v3831
      %v3864 = vadd.f32 %v3670, %v3832
      %v3865 = vadd.f32 %v3671, %v3833
      %v3866 = vadd.f32 %v3672, %v3834
      %v3867 = vadd.f32 %v3673, %v3835
      %v3868 = vadd.f32 %v3674, %v3836
      %v3869 = vadd.f32 %v3675, %v3837
      %v3870 = vadd.f32 %v3676, %v3838
      %v3871 = vadd.f32 %v3677, %v3839
      %v3872 = vadd.f32 %v3678, %v3840
      %v3873 = vadd.f32 %v3679, %v3841
      %v3874 = vadd.f32 %v3680, %v3842
      %v3875 = vadd.f32 %v3681, %v3843
      %v3876 = vadd.f32 %v3682, %v3844
      %v3877 = vadd.f32 %v3683, %v3845
      %v3878 = vadd.f32 %v3684, %v3846
      %v3879 = vadd.f32 %v3685, %v3847
      %v3880 = vadd.f32 %v3686, %v3848
      %v3881 = vadd.f32 %v3687, %v3849
      %v3882 = vadd.f32 %v3688, %v3850
      %v3883 = vadd.f32 %v3689, %v3851
      %v3884 = vadd.f32 %v3690, %v3852
      %v3885 = vadd.f32 %v3691, %v3853
      %v3886 = vadd.f32 %v3692, %v3854
      %v3887 = vadd.f32 %v3693, %v3855
      %v3888 = vadd.f32 %v3694, %v3856
      %v3889 = vadd.f32 %v3695, %v3857
      %v3890 = vadd.f32 %v3696, %v3858
      %v3891 = vadd.f32 %v3697, %v3859
      %v3892 = vadd.f32 %v3698, %v3860
      %v3893 = vadd.f32 %v3699, %v3861
      %v3894 = vadd.f32 %v3700, %v3862
      %v3895 = vadd.f32 %v3701, %v3863
      %v3896 = vld [vmem:[%s1 + $0xf] sm:$0x1]
      %3897 = vset.pattern.permute.xlu0 6
      %3898 = vperm.xlu0 %3897, %v552
      %v3899 = vpop.permute.xlu0 %3898
      %3901 = vset.pattern.permute.xlu0 6
      %3902 = vperm.xlu0 %3901, %v555
      %v3903 = vpop.permute.xlu0 %3902
      %3905 = vset.pattern.permute.xlu0 6
      %3906 = vperm.xlu0 %3905, %v558
      %v3907 = vpop.permute.xlu0 %3906
      %3909 = vset.pattern.permute.xlu0 6
      %3910 = vperm.xlu0 %3909, %v561
      %v3911 = vpop.permute.xlu0 %3910
      %3913 = vset.pattern.permute.xlu0 6
      %3914 = vperm.xlu0 %3913, %v564
      %v3915 = vpop.permute.xlu0 %3914
      %3917 = vset.pattern.permute.xlu0 6
      %3918 = vperm.xlu0 %3917, %v567
      %v3919 = vpop.permute.xlu0 %3918
      %3921 = vset.pattern.permute.xlu0 6
      %3922 = vperm.xlu0 %3921, %v570
      %v3923 = vpop.permute.xlu0 %3922
      %3925 = vset.pattern.permute.xlu0 6
      %3926 = vperm.xlu0 %3925, %v573
      %v3927 = vpop.permute.xlu0 %3926
      %3929 = vset.pattern.permute.xlu0 6
      %3930 = vperm.xlu0 %3929, %v576
      %v3931 = vpop.permute.xlu0 %3930
      %3933 = vset.pattern.permute.xlu0 6
      %3934 = vperm.xlu0 %3933, %v579
      %v3935 = vpop.permute.xlu0 %3934
      %3937 = vset.pattern.permute.xlu0 6
      %3938 = vperm.xlu0 %3937, %v582
      %v3939 = vpop.permute.xlu0 %3938
      %3941 = vset.pattern.permute.xlu0 6
      %3942 = vperm.xlu0 %3941, %v585
      %v3943 = vpop.permute.xlu0 %3942
      %3945 = vset.pattern.permute.xlu0 6
      %3946 = vperm.xlu0 %3945, %v588
      %v3947 = vpop.permute.xlu0 %3946
      %3949 = vset.pattern.permute.xlu0 6
      %3950 = vperm.xlu0 %3949, %v591
      %v3951 = vpop.permute.xlu0 %3950
      %3953 = vset.pattern.permute.xlu0 6
      %3954 = vperm.xlu0 %3953, %v594
      %v3955 = vpop.permute.xlu0 %3954
      %3957 = vset.pattern.permute.xlu0 6
      %3958 = vperm.xlu0 %3957, %v597
      %v3959 = vpop.permute.xlu0 %3958
      %v3961 = vperm.slane %v3896, 0
      %v3962 = vmul.f32 %v2735, %v3961
      %v3963 = vmul.f32 %v2739, %v3961
      %v3964 = vmul.f32 %v3899, %v3961
      %v3965 = vmul.f32 %v2743, %v3961
      %v3966 = vmul.f32 %v2747, %v3961
      %v3967 = vmul.f32 %v3903, %v3961
      %v3968 = vmul.f32 %v2751, %v3961
      %v3969 = vmul.f32 %v2755, %v3961
      %v3970 = vmul.f32 %v3907, %v3961
      %v3971 = vmul.f32 %v2759, %v3961
      %v3972 = vmul.f32 %v2763, %v3961
      %v3973 = vmul.f32 %v3911, %v3961
      %v3974 = vmul.f32 %v2767, %v3961
      %v3975 = vmul.f32 %v2771, %v3961
      %v3976 = vmul.f32 %v3915, %v3961
      %v3977 = vmul.f32 %v2775, %v3961
      %v3978 = vmul.f32 %v2779, %v3961
      %v3979 = vmul.f32 %v3919, %v3961
      %v3980 = vmul.f32 %v2783, %v3961
      %v3981 = vmul.f32 %v2787, %v3961
      %v3982 = vmul.f32 %v3923, %v3961
      %v3983 = vmul.f32 %v2791, %v3961
      %v3984 = vmul.f32 %v2795, %v3961
      %v3985 = vmul.f32 %v3927, %v3961
      %v3986 = vmul.f32 %v2799, %v3961
      %v3987 = vmul.f32 %v2803, %v3961
      %v3988 = vmul.f32 %v3931, %v3961
      %v3989 = vmul.f32 %v2807, %v3961
      %v3990 = vmul.f32 %v2811, %v3961
      %v3991 = vmul.f32 %v3935, %v3961
      %v3992 = vmul.f32 %v2815, %v3961
      %v3993 = vmul.f32 %v2819, %v3961
      %v3994 = vmul.f32 %v3939, %v3961
      %v3995 = vmul.f32 %v2823, %v3961
      %v3996 = vmul.f32 %v2827, %v3961
      %v3997 = vmul.f32 %v3943, %v3961
      %v3998 = vmul.f32 %v2831, %v3961
      %v3999 = vmul.f32 %v2835, %v3961
      %v4000 = vmul.f32 %v3947, %v3961
      %v4001 = vmul.f32 %v2839, %v3961
      %v4002 = vmul.f32 %v2843, %v3961
      %v4003 = vmul.f32 %v3951, %v3961
      %v4004 = vmul.f32 %v2847, %v3961
      %v4005 = vmul.f32 %v2851, %v3961
      %v4006 = vmul.f32 %v3955, %v3961
      %v4007 = vmul.f32 %v2855, %v3961
      %v4008 = vmul.f32 %v2859, %v3961
      %v4009 = vmul.f32 %v3959, %v3961
      %v4058 = vrot.slane %v3962, 1
      %v4059 = vrot.slane %v3963, 1
      %v4060 = vsel %vm1975, %v4058, %v4059
      %v4061 = vrot.slane %v3964, 1
      %v4062 = vsel %vm1975, %v4059, %v4061
      %v4063 = vrot.slane %v3965, 1
      %v4064 = vrot.slane %v3966, 1
      %v4065 = vsel %vm1975, %v4063, %v4064
      %v4066 = vrot.slane %v3967, 1
      %v4067 = vsel %vm1975, %v4064, %v4066
      %v4068 = vrot.slane %v3968, 1
      %v4069 = vrot.slane %v3969, 1
      %v4070 = vsel %vm1975, %v4068, %v4069
      %v4071 = vrot.slane %v3970, 1
      %v4072 = vsel %vm1975, %v4069, %v4071
      %v4073 = vrot.slane %v3971, 1
      %v4074 = vrot.slane %v3972, 1
      %v4075 = vsel %vm1975, %v4073, %v4074
      %v4076 = vrot.slane %v3973, 1
      %v4077 = vsel %vm1975, %v4074, %v4076
      %v4078 = vrot.slane %v3974, 1
      %v4079 = vrot.slane %v3975, 1
      %v4080 = vsel %vm1975, %v4078, %v4079
      %v4081 = vrot.slane %v3976, 1
      %v4082 = vsel %vm1975, %v4079, %v4081
      %v4083 = vrot.slane %v3977, 1
      %v4084 = vrot.slane %v3978, 1
      %v4085 = vsel %vm1975, %v4083, %v4084
      %v4086 = vrot.slane %v3979, 1
      %v4087 = vsel %vm1975, %v4084, %v4086
      %v4088 = vrot.slane %v3980, 1
      %v4089 = vrot.slane %v3981, 1
      %v4090 = vsel %vm1975, %v4088, %v4089
      %v4091 = vrot.slane %v3982, 1
      %v4092 = vsel %vm1975, %v4089, %v4091
      %v4093 = vrot.slane %v3983, 1
      %v4094 = vrot.slane %v3984, 1
      %v4095 = vsel %vm1975, %v4093, %v4094
      %v4096 = vrot.slane %v3985, 1
      %v4097 = vsel %vm1975, %v4094, %v4096
      %v4098 = vrot.slane %v3986, 1
      %v4099 = vrot.slane %v3987, 1
      %v4100 = vsel %vm1975, %v4098, %v4099
      %v4101 = vrot.slane %v3988, 1
      %v4102 = vsel %vm1975, %v4099, %v4101
      %v4103 = vrot.slane %v3989, 1
      %v4104 = vrot.slane %v3990, 1
      %v4105 = vsel %vm1975, %v4103, %v4104
      %v4106 = vrot.slane %v3991, 1
      %v4107 = vsel %vm1975, %v4104, %v4106
      %v4108 = vrot.slane %v3992, 1
      %v4109 = vrot.slane %v3993, 1
      %v4110 = vsel %vm1975, %v4108, %v4109
      %v4111 = vrot.slane %v3994, 1
      %v4112 = vsel %vm1975, %v4109, %v4111
      %v4113 = vrot.slane %v3995, 1
      %v4114 = vrot.slane %v3996, 1
      %v4115 = vsel %vm1975, %v4113, %v4114
      %v4116 = vrot.slane %v3997, 1
      %v4117 = vsel %vm1975, %v4114, %v4116
      %v4118 = vrot.slane %v3998, 1
      %v4119 = vrot.slane %v3999, 1
      %v4120 = vsel %vm1975, %v4118, %v4119
      %v4121 = vrot.slane %v4000, 1
      %v4122 = vsel %vm1975, %v4119, %v4121
      %v4123 = vrot.slane %v4001, 1
      %v4124 = vrot.slane %v4002, 1
      %v4125 = vsel %vm1975, %v4123, %v4124
      %v4126 = vrot.slane %v4003, 1
      %v4127 = vsel %vm1975, %v4124, %v4126
      %v4128 = vrot.slane %v4004, 1
      %v4129 = vrot.slane %v4005, 1
      %v4130 = vsel %vm1975, %v4128, %v4129
      %v4131 = vrot.slane %v4006, 1
      %v4132 = vsel %vm1975, %v4129, %v4131
      %v4133 = vrot.slane %v4007, 1
      %v4134 = vrot.slane %v4008, 1
      %v4135 = vsel %vm1975, %v4133, %v4134
      %v4136 = vrot.slane %v4009, 1
      %v4137 = vsel %vm1975, %v4134, %v4136
      %v4170 = vadd.f32 %v3864, %v4060
      %v4171 = vadd.f32 %v3865, %v4062
      %v4172 = vadd.f32 %v3866, %v4065
      %v4173 = vadd.f32 %v3867, %v4067
      %v4174 = vadd.f32 %v3868, %v4070
      %v4175 = vadd.f32 %v3869, %v4072
      %v4176 = vadd.f32 %v3870, %v4075
      %v4177 = vadd.f32 %v3871, %v4077
      %v4178 = vadd.f32 %v3872, %v4080
      %v4179 = vadd.f32 %v3873, %v4082
      %v4180 = vadd.f32 %v3874, %v4085
      %v4181 = vadd.f32 %v3875, %v4087
      %v4182 = vadd.f32 %v3876, %v4090
      %v4183 = vadd.f32 %v3877, %v4092
      %v4184 = vadd.f32 %v3878, %v4095
      %v4185 = vadd.f32 %v3879, %v4097
      %v4186 = vadd.f32 %v3880, %v4100
      %v4187 = vadd.f32 %v3881, %v4102
      %v4188 = vadd.f32 %v3882, %v4105
      %v4189 = vadd.f32 %v3883, %v4107
      %v4190 = vadd.f32 %v3884, %v4110
      %v4191 = vadd.f32 %v3885, %v4112
      %v4192 = vadd.f32 %v3886, %v4115
      %v4193 = vadd.f32 %v3887, %v4117
      %v4194 = vadd.f32 %v3888, %v4120
      %v4195 = vadd.f32 %v3889, %v4122
      %v4196 = vadd.f32 %v3890, %v4125
      %v4197 = vadd.f32 %v3891, %v4127
      %v4198 = vadd.f32 %v3892, %v4130
      %v4199 = vadd.f32 %v3893, %v4132
      %v4200 = vadd.f32 %v3894, %v4135
      %v4201 = vadd.f32 %v3895, %v4137
      %v4202 = vld [vmem:[%s1 + $0x10] sm:$0x1]
      %4203 = vset.pattern.permute.xlu0 7
      %4204 = vperm.xlu0 %4203, %v552
      %v4205 = vpop.permute.xlu0 %4204
      %4207 = vset.pattern.permute.xlu0 7
      %4208 = vperm.xlu0 %4207, %v555
      %v4209 = vpop.permute.xlu0 %4208
      %4211 = vset.pattern.permute.xlu0 7
      %4212 = vperm.xlu0 %4211, %v558
      %v4213 = vpop.permute.xlu0 %4212
      %4215 = vset.pattern.permute.xlu0 7
      %4216 = vperm.xlu0 %4215, %v561
      %v4217 = vpop.permute.xlu0 %4216
      %4219 = vset.pattern.permute.xlu0 7
      %4220 = vperm.xlu0 %4219, %v564
      %v4221 = vpop.permute.xlu0 %4220
      %4223 = vset.pattern.permute.xlu0 7
      %4224 = vperm.xlu0 %4223, %v567
      %v4225 = vpop.permute.xlu0 %4224
      %4227 = vset.pattern.permute.xlu0 7
      %4228 = vperm.xlu0 %4227, %v570
      %v4229 = vpop.permute.xlu0 %4228
      %4231 = vset.pattern.permute.xlu0 7
      %4232 = vperm.xlu0 %4231, %v573
      %v4233 = vpop.permute.xlu0 %4232
      %4235 = vset.pattern.permute.xlu0 7
      %4236 = vperm.xlu0 %4235, %v576
      %v4237 = vpop.permute.xlu0 %4236
      %4239 = vset.pattern.permute.xlu0 7
      %4240 = vperm.xlu0 %4239, %v579
      %v4241 = vpop.permute.xlu0 %4240
      %4243 = vset.pattern.permute.xlu0 7
      %4244 = vperm.xlu0 %4243, %v582
      %v4245 = vpop.permute.xlu0 %4244
      %4247 = vset.pattern.permute.xlu0 7
      %4248 = vperm.xlu0 %4247, %v585
      %v4249 = vpop.permute.xlu0 %4248
      %4251 = vset.pattern.permute.xlu0 7
      %4252 = vperm.xlu0 %4251, %v588
      %v4253 = vpop.permute.xlu0 %4252
      %4255 = vset.pattern.permute.xlu0 7
      %4256 = vperm.xlu0 %4255, %v591
      %v4257 = vpop.permute.xlu0 %4256
      %4259 = vset.pattern.permute.xlu0 7
      %4260 = vperm.xlu0 %4259, %v594
      %v4261 = vpop.permute.xlu0 %4260
      %4263 = vset.pattern.permute.xlu0 7
      %4264 = vperm.xlu0 %4263, %v597
      %v4265 = vpop.permute.xlu0 %4264
      %v4267 = vperm.slane %v4202, 0
      %v4268 = vmul.f32 %v2929, %v4267
      %v4269 = vmul.f32 %v2933, %v4267
      %v4270 = vmul.f32 %v4205, %v4267
      %v4271 = vmul.f32 %v2937, %v4267
      %v4272 = vmul.f32 %v2941, %v4267
      %v4273 = vmul.f32 %v4209, %v4267
      %v4274 = vmul.f32 %v2945, %v4267
      %v4275 = vmul.f32 %v2949, %v4267
      %v4276 = vmul.f32 %v4213, %v4267
      %v4277 = vmul.f32 %v2953, %v4267
      %v4278 = vmul.f32 %v2957, %v4267
      %v4279 = vmul.f32 %v4217, %v4267
      %v4280 = vmul.f32 %v2961, %v4267
      %v4281 = vmul.f32 %v2965, %v4267
      %v4282 = vmul.f32 %v4221, %v4267
      %v4283 = vmul.f32 %v2969, %v4267
      %v4284 = vmul.f32 %v2973, %v4267
      %v4285 = vmul.f32 %v4225, %v4267
      %v4286 = vmul.f32 %v2977, %v4267
      %v4287 = vmul.f32 %v2981, %v4267
      %v4288 = vmul.f32 %v4229, %v4267
      %v4289 = vmul.f32 %v2985, %v4267
      %v4290 = vmul.f32 %v2989, %v4267
      %v4291 = vmul.f32 %v4233, %v4267
      %v4292 = vmul.f32 %v2993, %v4267
      %v4293 = vmul.f32 %v2997, %v4267
      %v4294 = vmul.f32 %v4237, %v4267
      %v4295 = vmul.f32 %v3001, %v4267
      %v4296 = vmul.f32 %v3005, %v4267
      %v4297 = vmul.f32 %v4241, %v4267
      %v4298 = vmul.f32 %v3009, %v4267
      %v4299 = vmul.f32 %v3013, %v4267
      %v4300 = vmul.f32 %v4245, %v4267
      %v4301 = vmul.f32 %v3017, %v4267
      %v4302 = vmul.f32 %v3021, %v4267
      %v4303 = vmul.f32 %v4249, %v4267
      %v4304 = vmul.f32 %v3025, %v4267
      %v4305 = vmul.f32 %v3029, %v4267
      %v4306 = vmul.f32 %v4253, %v4267
      %v4307 = vmul.f32 %v3033, %v4267
      %v4308 = vmul.f32 %v3037, %v4267
      %v4309 = vmul.f32 %v4257, %v4267
      %v4310 = vmul.f32 %v3041, %v4267
      %v4311 = vmul.f32 %v3045, %v4267
      %v4312 = vmul.f32 %v4261, %v4267
      %v4313 = vmul.f32 %v3049, %v4267
      %v4314 = vmul.f32 %v3053, %v4267
      %v4315 = vmul.f32 %v4265, %v4267
      %v4364 = vrot.slane %v4268, 1
      %v4365 = vrot.slane %v4269, 1
      %v4366 = vsel %vm1975, %v4364, %v4365
      %v4367 = vrot.slane %v4270, 1
      %v4368 = vsel %vm1975, %v4365, %v4367
      %v4369 = vrot.slane %v4271, 1
      %v4370 = vrot.slane %v4272, 1
      %v4371 = vsel %vm1975, %v4369, %v4370
      %v4372 = vrot.slane %v4273, 1
      %v4373 = vsel %vm1975, %v4370, %v4372
      %v4374 = vrot.slane %v4274, 1
      %v4375 = vrot.slane %v4275, 1
      %v4376 = vsel %vm1975, %v4374, %v4375
      %v4377 = vrot.slane %v4276, 1
      %v4378 = vsel %vm1975, %v4375, %v4377
      %v4379 = vrot.slane %v4277, 1
      %v4380 = vrot.slane %v4278, 1
      %v4381 = vsel %vm1975, %v4379, %v4380
      %v4382 = vrot.slane %v4279, 1
      %v4383 = vsel %vm1975, %v4380, %v4382
      %v4384 = vrot.slane %v4280, 1
      %v4385 = vrot.slane %v4281, 1
      %v4386 = vsel %vm1975, %v4384, %v4385
      %v4387 = vrot.slane %v4282, 1
      %v4388 = vsel %vm1975, %v4385, %v4387
      %v4389 = vrot.slane %v4283, 1
      %v4390 = vrot.slane %v4284, 1
      %v4391 = vsel %vm1975, %v4389, %v4390
      %v4392 = vrot.slane %v4285, 1
      %v4393 = vsel %vm1975, %v4390, %v4392
      %v4394 = vrot.slane %v4286, 1
      %v4395 = vrot.slane %v4287, 1
      %v4396 = vsel %vm1975, %v4394, %v4395
      %v4397 = vrot.slane %v4288, 1
      %v4398 = vsel %vm1975, %v4395, %v4397
      %v4399 = vrot.slane %v4289, 1
      %v4400 = vrot.slane %v4290, 1
      %v4401 = vsel %vm1975, %v4399, %v4400
      %v4402 = vrot.slane %v4291, 1
      %v4403 = vsel %vm1975, %v4400, %v4402
      %v4404 = vrot.slane %v4292, 1
      %v4405 = vrot.slane %v4293, 1
      %v4406 = vsel %vm1975, %v4404, %v4405
      %v4407 = vrot.slane %v4294, 1
      %v4408 = vsel %vm1975, %v4405, %v4407
      %v4409 = vrot.slane %v4295, 1
      %v4410 = vrot.slane %v4296, 1
      %v4411 = vsel %vm1975, %v4409, %v4410
      %v4412 = vrot.slane %v4297, 1
      %v4413 = vsel %vm1975, %v4410, %v4412
      %v4414 = vrot.slane %v4298, 1
      %v4415 = vrot.slane %v4299, 1
      %v4416 = vsel %vm1975, %v4414, %v4415
      %v4417 = vrot.slane %v4300, 1
      %v4418 = vsel %vm1975, %v4415, %v4417
      %v4419 = vrot.slane %v4301, 1
      %v4420 = vrot.slane %v4302, 1
      %v4421 = vsel %vm1975, %v4419, %v4420
      %v4422 = vrot.slane %v4303, 1
      %v4423 = vsel %vm1975, %v4420, %v4422
      %v4424 = vrot.slane %v4304, 1
      %v4425 = vrot.slane %v4305, 1
      %v4426 = vsel %vm1975, %v4424, %v4425
      %v4427 = vrot.slane %v4306, 1
      %v4428 = vsel %vm1975, %v4425, %v4427
      %v4429 = vrot.slane %v4307, 1
      %v4430 = vrot.slane %v4308, 1
      %v4431 = vsel %vm1975, %v4429, %v4430
      %v4432 = vrot.slane %v4309, 1
      %v4433 = vsel %vm1975, %v4430, %v4432
      %v4434 = vrot.slane %v4310, 1
      %v4435 = vrot.slane %v4311, 1
      %v4436 = vsel %vm1975, %v4434, %v4435
      %v4437 = vrot.slane %v4312, 1
      %v4438 = vsel %vm1975, %v4435, %v4437
      %v4439 = vrot.slane %v4313, 1
      %v4440 = vrot.slane %v4314, 1
      %v4441 = vsel %vm1975, %v4439, %v4440
      %v4442 = vrot.slane %v4315, 1
      %v4443 = vsel %vm1975, %v4440, %v4442
      %v4476 = vadd.f32 %v4170, %v4366
      %v4477 = vadd.f32 %v4171, %v4368
      %v4478 = vadd.f32 %v4172, %v4371
      %v4479 = vadd.f32 %v4173, %v4373
      %v4480 = vadd.f32 %v4174, %v4376
      %v4481 = vadd.f32 %v4175, %v4378
      %v4482 = vadd.f32 %v4176, %v4381
      %v4483 = vadd.f32 %v4177, %v4383
      %v4484 = vadd.f32 %v4178, %v4386
      %v4485 = vadd.f32 %v4179, %v4388
      %v4486 = vadd.f32 %v4180, %v4391
      %v4487 = vadd.f32 %v4181, %v4393
      %v4488 = vadd.f32 %v4182, %v4396
      %v4489 = vadd.f32 %v4183, %v4398
      %v4490 = vadd.f32 %v4184, %v4401
      %v4491 = vadd.f32 %v4185, %v4403
      %v4492 = vadd.f32 %v4186, %v4406
      %v4493 = vadd.f32 %v4187, %v4408
      %v4494 = vadd.f32 %v4188, %v4411
      %v4495 = vadd.f32 %v4189, %v4413
      %v4496 = vadd.f32 %v4190, %v4416
      %v4497 = vadd.f32 %v4191, %v4418
      %v4498 = vadd.f32 %v4192, %v4421
      %v4499 = vadd.f32 %v4193, %v4423
      %v4500 = vadd.f32 %v4194, %v4426
      %v4501 = vadd.f32 %v4195, %v4428
      %v4502 = vadd.f32 %v4196, %v4431
      %v4503 = vadd.f32 %v4197, %v4433
      %v4504 = vadd.f32 %v4198, %v4436
      %v4505 = vadd.f32 %v4199, %v4438
      %v4506 = vadd.f32 %v4200, %v4441
      %v4507 = vadd.f32 %v4201, %v4443
      %v4508 = vld [vmem:[%s1 + $0x11] sm:$0x1]
      %4509 = vset.pattern.permute.xlu0 8
      %4510 = vperm.xlu0 %4509, %v552
      %v4511 = vpop.permute.xlu0 %4510
      %4513 = vset.pattern.permute.xlu0 8
      %4514 = vperm.xlu0 %4513, %v555
      %v4515 = vpop.permute.xlu0 %4514
      %4517 = vset.pattern.permute.xlu0 8
      %4518 = vperm.xlu0 %4517, %v558
      %v4519 = vpop.permute.xlu0 %4518
      %4521 = vset.pattern.permute.xlu0 8
      %4522 = vperm.xlu0 %4521, %v561
      %v4523 = vpop.permute.xlu0 %4522
      %4525 = vset.pattern.permute.xlu0 8
      %4526 = vperm.xlu0 %4525, %v564
      %v4527 = vpop.permute.xlu0 %4526
      %4529 = vset.pattern.permute.xlu0 8
      %4530 = vperm.xlu0 %4529, %v567
      %v4531 = vpop.permute.xlu0 %4530
      %4533 = vset.pattern.permute.xlu0 8
      %4534 = vperm.xlu0 %4533, %v570
      %v4535 = vpop.permute.xlu0 %4534
      %4537 = vset.pattern.permute.xlu0 8
      %4538 = vperm.xlu0 %4537, %v573
      %v4539 = vpop.permute.xlu0 %4538
      %4541 = vset.pattern.permute.xlu0 8
      %4542 = vperm.xlu0 %4541, %v576
      %v4543 = vpop.permute.xlu0 %4542
      %4545 = vset.pattern.permute.xlu0 8
      %4546 = vperm.xlu0 %4545, %v579
      %v4547 = vpop.permute.xlu0 %4546
      %4549 = vset.pattern.permute.xlu0 8
      %4550 = vperm.xlu0 %4549, %v582
      %v4551 = vpop.permute.xlu0 %4550
      %4553 = vset.pattern.permute.xlu0 8
      %4554 = vperm.xlu0 %4553, %v585
      %v4555 = vpop.permute.xlu0 %4554
      %4557 = vset.pattern.permute.xlu0 8
      %4558 = vperm.xlu0 %4557, %v588
      %v4559 = vpop.permute.xlu0 %4558
      %4561 = vset.pattern.permute.xlu0 8
      %4562 = vperm.xlu0 %4561, %v591
      %v4563 = vpop.permute.xlu0 %4562
      %4565 = vset.pattern.permute.xlu0 8
      %4566 = vperm.xlu0 %4565, %v594
      %v4567 = vpop.permute.xlu0 %4566
      %4569 = vset.pattern.permute.xlu0 8
      %4570 = vperm.xlu0 %4569, %v597
      %v4571 = vpop.permute.xlu0 %4570
      %v4573 = vperm.slane %v4508, 0
      %v4574 = vmul.f32 %v3123, %v4573
      %v4575 = vmul.f32 %v3127, %v4573
      %v4576 = vmul.f32 %v4511, %v4573
      %v4577 = vmul.f32 %v3131, %v4573
      %v4578 = vmul.f32 %v3135, %v4573
      %v4579 = vmul.f32 %v4515, %v4573
      %v4580 = vmul.f32 %v3139, %v4573
      %v4581 = vmul.f32 %v3143, %v4573
      %v4582 = vmul.f32 %v4519, %v4573
      %v4583 = vmul.f32 %v3147, %v4573
      %v4584 = vmul.f32 %v3151, %v4573
      %v4585 = vmul.f32 %v4523, %v4573
      %v4586 = vmul.f32 %v3155, %v4573
      %v4587 = vmul.f32 %v3159, %v4573
      %v4588 = vmul.f32 %v4527, %v4573
      %v4589 = vmul.f32 %v3163, %v4573
      %v4590 = vmul.f32 %v3167, %v4573
      %v4591 = vmul.f32 %v4531, %v4573
      %v4592 = vmul.f32 %v3171, %v4573
      %v4593 = vmul.f32 %v3175, %v4573
      %v4594 = vmul.f32 %v4535, %v4573
      %v4595 = vmul.f32 %v3179, %v4573
      %v4596 = vmul.f32 %v3183, %v4573
      %v4597 = vmul.f32 %v4539, %v4573
      %v4598 = vmul.f32 %v3187, %v4573
      %v4599 = vmul.f32 %v3191, %v4573
      %v4600 = vmul.f32 %v4543, %v4573
      %v4601 = vmul.f32 %v3195, %v4573
      %v4602 = vmul.f32 %v3199, %v4573
      %v4603 = vmul.f32 %v4547, %v4573
      %v4604 = vmul.f32 %v3203, %v4573
      %v4605 = vmul.f32 %v3207, %v4573
      %v4606 = vmul.f32 %v4551, %v4573
      %v4607 = vmul.f32 %v3211, %v4573
      %v4608 = vmul.f32 %v3215, %v4573
      %v4609 = vmul.f32 %v4555, %v4573
      %v4610 = vmul.f32 %v3219, %v4573
      %v4611 = vmul.f32 %v3223, %v4573
      %v4612 = vmul.f32 %v4559, %v4573
      %v4613 = vmul.f32 %v3227, %v4573
      %v4614 = vmul.f32 %v3231, %v4573
      %v4615 = vmul.f32 %v4563, %v4573
      %v4616 = vmul.f32 %v3235, %v4573
      %v4617 = vmul.f32 %v3239, %v4573
      %v4618 = vmul.f32 %v4567, %v4573
      %v4619 = vmul.f32 %v3243, %v4573
      %v4620 = vmul.f32 %v3247, %v4573
      %v4621 = vmul.f32 %v4571, %v4573
      %v4670 = vrot.slane %v4574, 1
      %v4671 = vrot.slane %v4575, 1
      %v4672 = vsel %vm1975, %v4670, %v4671
      %v4673 = vrot.slane %v4576, 1
      %v4674 = vsel %vm1975, %v4671, %v4673
      %v4675 = vrot.slane %v4577, 1
      %v4676 = vrot.slane %v4578, 1
      %v4677 = vsel %vm1975, %v4675, %v4676
      %v4678 = vrot.slane %v4579, 1
      %v4679 = vsel %vm1975, %v4676, %v4678
      %v4680 = vrot.slane %v4580, 1
      %v4681 = vrot.slane %v4581, 1
      %v4682 = vsel %vm1975, %v4680, %v4681
      %v4683 = vrot.slane %v4582, 1
      %v4684 = vsel %vm1975, %v4681, %v4683
      %v4685 = vrot.slane %v4583, 1
      %v4686 = vrot.slane %v4584, 1
      %v4687 = vsel %vm1975, %v4685, %v4686
      %v4688 = vrot.slane %v4585, 1
      %v4689 = vsel %vm1975, %v4686, %v4688
      %v4690 = vrot.slane %v4586, 1
      %v4691 = vrot.slane %v4587, 1
      %v4692 = vsel %vm1975, %v4690, %v4691
      %v4693 = vrot.slane %v4588, 1
      %v4694 = vsel %vm1975, %v4691, %v4693
      %v4695 = vrot.slane %v4589, 1
      %v4696 = vrot.slane %v4590, 1
      %v4697 = vsel %vm1975, %v4695, %v4696
      %v4698 = vrot.slane %v4591, 1
      %v4699 = vsel %vm1975, %v4696, %v4698
      %v4700 = vrot.slane %v4592, 1
      %v4701 = vrot.slane %v4593, 1
      %v4702 = vsel %vm1975, %v4700, %v4701
      %v4703 = vrot.slane %v4594, 1
      %v4704 = vsel %vm1975, %v4701, %v4703
      %v4705 = vrot.slane %v4595, 1
      %v4706 = vrot.slane %v4596, 1
      %v4707 = vsel %vm1975, %v4705, %v4706
      %v4708 = vrot.slane %v4597, 1
      %v4709 = vsel %vm1975, %v4706, %v4708
      %v4710 = vrot.slane %v4598, 1
      %v4711 = vrot.slane %v4599, 1
      %v4712 = vsel %vm1975, %v4710, %v4711
      %v4713 = vrot.slane %v4600, 1
      %v4714 = vsel %vm1975, %v4711, %v4713
      %v4715 = vrot.slane %v4601, 1
      %v4716 = vrot.slane %v4602, 1
      %v4717 = vsel %vm1975, %v4715, %v4716
      %v4718 = vrot.slane %v4603, 1
      %v4719 = vsel %vm1975, %v4716, %v4718
      %v4720 = vrot.slane %v4604, 1
      %v4721 = vrot.slane %v4605, 1
      %v4722 = vsel %vm1975, %v4720, %v4721
      %v4723 = vrot.slane %v4606, 1
      %v4724 = vsel %vm1975, %v4721, %v4723
      %v4725 = vrot.slane %v4607, 1
      %v4726 = vrot.slane %v4608, 1
      %v4727 = vsel %vm1975, %v4725, %v4726
      %v4728 = vrot.slane %v4609, 1
      %v4729 = vsel %vm1975, %v4726, %v4728
      %v4730 = vrot.slane %v4610, 1
      %v4731 = vrot.slane %v4611, 1
      %v4732 = vsel %vm1975, %v4730, %v4731
      %v4733 = vrot.slane %v4612, 1
      %v4734 = vsel %vm1975, %v4731, %v4733
      %v4735 = vrot.slane %v4613, 1
      %v4736 = vrot.slane %v4614, 1
      %v4737 = vsel %vm1975, %v4735, %v4736
      %v4738 = vrot.slane %v4615, 1
      %v4739 = vsel %vm1975, %v4736, %v4738
      %v4740 = vrot.slane %v4616, 1
      %v4741 = vrot.slane %v4617, 1
      %v4742 = vsel %vm1975, %v4740, %v4741
      %v4743 = vrot.slane %v4618, 1
      %v4744 = vsel %vm1975, %v4741, %v4743
      %v4745 = vrot.slane %v4619, 1
      %v4746 = vrot.slane %v4620, 1
      %v4747 = vsel %vm1975, %v4745, %v4746
      %v4748 = vrot.slane %v4621, 1
      %v4749 = vsel %vm1975, %v4746, %v4748
      %v4782 = vadd.f32 %v4476, %v4672
      %v4783 = vadd.f32 %v4477, %v4674
      %v4784 = vadd.f32 %v4478, %v4677
      %v4785 = vadd.f32 %v4479, %v4679
      %v4786 = vadd.f32 %v4480, %v4682
      %v4787 = vadd.f32 %v4481, %v4684
      %v4788 = vadd.f32 %v4482, %v4687
      %v4789 = vadd.f32 %v4483, %v4689
      %v4790 = vadd.f32 %v4484, %v4692
      %v4791 = vadd.f32 %v4485, %v4694
      %v4792 = vadd.f32 %v4486, %v4697
      %v4793 = vadd.f32 %v4487, %v4699
      %v4794 = vadd.f32 %v4488, %v4702
      %v4795 = vadd.f32 %v4489, %v4704
      %v4796 = vadd.f32 %v4490, %v4707
      %v4797 = vadd.f32 %v4491, %v4709
      %v4798 = vadd.f32 %v4492, %v4712
      %v4799 = vadd.f32 %v4493, %v4714
      %v4800 = vadd.f32 %v4494, %v4717
      %v4801 = vadd.f32 %v4495, %v4719
      %v4802 = vadd.f32 %v4496, %v4722
      %v4803 = vadd.f32 %v4497, %v4724
      %v4804 = vadd.f32 %v4498, %v4727
      %v4805 = vadd.f32 %v4499, %v4729
      %v4806 = vadd.f32 %v4500, %v4732
      %v4807 = vadd.f32 %v4501, %v4734
      %v4808 = vadd.f32 %v4502, %v4737
      %v4809 = vadd.f32 %v4503, %v4739
      %v4810 = vadd.f32 %v4504, %v4742
      %v4811 = vadd.f32 %v4505, %v4744
      %v4812 = vadd.f32 %v4506, %v4747
      %v4813 = vadd.f32 %v4507, %v4749
      %v4814 = vld [vmem:[%s1 + $0x12] sm:$0x1]
      %4816 = vset.pattern.permute.xlu0 0
      %4817 = vperm.xlu0 %4816, %v598
      %v4818 = vpop.permute.xlu0 %4817
      %4821 = vset.pattern.permute.xlu0 0
      %4822 = vperm.xlu0 %4821, %v599
      %v4823 = vpop.permute.xlu0 %4822
      %v4825 = vperm.slane %v4814, 0
      %v4826 = vmul.f32 %v615, %v4825
      %v4827 = vmul.f32 %v620, %v4825
      %v4828 = vmul.f32 %v625, %v4825
      %v4829 = vmul.f32 %v630, %v4825
      %v4830 = vmul.f32 %v635, %v4825
      %v4831 = vmul.f32 %v640, %v4825
      %v4832 = vmul.f32 %v645, %v4825
      %v4833 = vmul.f32 %v650, %v4825
      %v4834 = vmul.f32 %v655, %v4825
      %v4835 = vmul.f32 %v660, %v4825
      %v4836 = vmul.f32 %v665, %v4825
      %v4837 = vmul.f32 %v670, %v4825
      %v4838 = vmul.f32 %v675, %v4825
      %v4839 = vmul.f32 %v680, %v4825
      %v4840 = vmul.f32 %v685, %v4825
      %v4841 = vmul.f32 %v690, %v4825
      %v4842 = vmul.f32 %v695, %v4825
      %v4843 = vmul.f32 %v700, %v4825
      %v4844 = vmul.f32 %v705, %v4825
      %v4845 = vmul.f32 %v710, %v4825
      %v4846 = vmul.f32 %v715, %v4825
      %v4847 = vmul.f32 %v720, %v4825
      %v4848 = vmul.f32 %v725, %v4825
      %v4849 = vmul.f32 %v730, %v4825
      %v4850 = vmul.f32 %v735, %v4825
      %v4851 = vmul.f32 %v740, %v4825
      %v4852 = vmul.f32 %v745, %v4825
      %v4853 = vmul.f32 %v750, %v4825
      %v4854 = vmul.f32 %v755, %v4825
      %v4855 = vmul.f32 %v760, %v4825
      %v4856 = vmul.f32 %v4818, %v4825
      %v4857 = vmul.f32 %v4823, %v4825
      %v4858 = vadd.f32 %v4782, %v4826
      %v4859 = vadd.f32 %v4783, %v4827
      %v4860 = vadd.f32 %v4784, %v4828
      %v4861 = vadd.f32 %v4785, %v4829
      %v4862 = vadd.f32 %v4786, %v4830
      %v4863 = vadd.f32 %v4787, %v4831
      %v4864 = vadd.f32 %v4788, %v4832
      %v4865 = vadd.f32 %v4789, %v4833
      %v4866 = vadd.f32 %v4790, %v4834
      %v4867 = vadd.f32 %v4791, %v4835
      %v4868 = vadd.f32 %v4792, %v4836
      %v4869 = vadd.f32 %v4793, %v4837
      %v4870 = vadd.f32 %v4794, %v4838
      %v4871 = vadd.f32 %v4795, %v4839
      %v4872 = vadd.f32 %v4796, %v4840
      %v4873 = vadd.f32 %v4797, %v4841
      %v4874 = vadd.f32 %v4798, %v4842
      %v4875 = vadd.f32 %v4799, %v4843
      %v4876 = vadd.f32 %v4800, %v4844
      %v4877 = vadd.f32 %v4801, %v4845
      %v4878 = vadd.f32 %v4802, %v4846
      %v4879 = vadd.f32 %v4803, %v4847
      %v4880 = vadd.f32 %v4804, %v4848
      %v4881 = vadd.f32 %v4805, %v4849
      %v4882 = vadd.f32 %v4806, %v4850
      %v4883 = vadd.f32 %v4807, %v4851
      %v4884 = vadd.f32 %v4808, %v4852
      %v4885 = vadd.f32 %v4809, %v4853
      %v4886 = vadd.f32 %v4810, %v4854
      %v4887 = vadd.f32 %v4811, %v4855
      %v4888 = vadd.f32 %v4812, %v4856
      %v4889 = vadd.f32 %v4813, %v4857
      %v4890 = vld [vmem:[%s1 + $0x13] sm:$0x1]
      %4891 = vset.pattern.permute.xlu0 1
      %4892 = vperm.xlu0 %4891, %v598
      %v4893 = vpop.permute.xlu0 %4892
      %4895 = vset.pattern.permute.xlu0 1
      %4896 = vperm.xlu0 %4895, %v599
      %v4897 = vpop.permute.xlu0 %4896
      %v4899 = vperm.slane %v4890, 0
      %v4900 = vmul.f32 %v838, %v4899
      %v4901 = vmul.f32 %v842, %v4899
      %v4902 = vmul.f32 %v846, %v4899
      %v4903 = vmul.f32 %v850, %v4899
      %v4904 = vmul.f32 %v854, %v4899
      %v4905 = vmul.f32 %v858, %v4899
      %v4906 = vmul.f32 %v862, %v4899
      %v4907 = vmul.f32 %v866, %v4899
      %v4908 = vmul.f32 %v870, %v4899
      %v4909 = vmul.f32 %v874, %v4899
      %v4910 = vmul.f32 %v878, %v4899
      %v4911 = vmul.f32 %v882, %v4899
      %v4912 = vmul.f32 %v886, %v4899
      %v4913 = vmul.f32 %v890, %v4899
      %v4914 = vmul.f32 %v894, %v4899
      %v4915 = vmul.f32 %v898, %v4899
      %v4916 = vmul.f32 %v902, %v4899
      %v4917 = vmul.f32 %v906, %v4899
      %v4918 = vmul.f32 %v910, %v4899
      %v4919 = vmul.f32 %v914, %v4899
      %v4920 = vmul.f32 %v918, %v4899
      %v4921 = vmul.f32 %v922, %v4899
      %v4922 = vmul.f32 %v926, %v4899
      %v4923 = vmul.f32 %v930, %v4899
      %v4924 = vmul.f32 %v934, %v4899
      %v4925 = vmul.f32 %v938, %v4899
      %v4926 = vmul.f32 %v942, %v4899
      %v4927 = vmul.f32 %v946, %v4899
      %v4928 = vmul.f32 %v950, %v4899
      %v4929 = vmul.f32 %v954, %v4899
      %v4930 = vmul.f32 %v4893, %v4899
      %v4931 = vmul.f32 %v4897, %v4899
      %v4932 = vadd.f32 %v4858, %v4900
      %v4933 = vadd.f32 %v4859, %v4901
      %v4934 = vadd.f32 %v4860, %v4902
      %v4935 = vadd.f32 %v4861, %v4903
      %v4936 = vadd.f32 %v4862, %v4904
      %v4937 = vadd.f32 %v4863, %v4905
      %v4938 = vadd.f32 %v4864, %v4906
      %v4939 = vadd.f32 %v4865, %v4907
      %v4940 = vadd.f32 %v4866, %v4908
      %v4941 = vadd.f32 %v4867, %v4909
      %v4942 = vadd.f32 %v4868, %v4910
      %v4943 = vadd.f32 %v4869, %v4911
      %v4944 = vadd.f32 %v4870, %v4912
      %v4945 = vadd.f32 %v4871, %v4913
      %v4946 = vadd.f32 %v4872, %v4914
      %v4947 = vadd.f32 %v4873, %v4915
      %v4948 = vadd.f32 %v4874, %v4916
      %v4949 = vadd.f32 %v4875, %v4917
      %v4950 = vadd.f32 %v4876, %v4918
      %v4951 = vadd.f32 %v4877, %v4919
      %v4952 = vadd.f32 %v4878, %v4920
      %v4953 = vadd.f32 %v4879, %v4921
      %v4954 = vadd.f32 %v4880, %v4922
      %v4955 = vadd.f32 %v4881, %v4923
      %v4956 = vadd.f32 %v4882, %v4924
      %v4957 = vadd.f32 %v4883, %v4925
      %v4958 = vadd.f32 %v4884, %v4926
      %v4959 = vadd.f32 %v4885, %v4927
      %v4960 = vadd.f32 %v4886, %v4928
      %v4961 = vadd.f32 %v4887, %v4929
      %v4962 = vadd.f32 %v4888, %v4930
      %v4963 = vadd.f32 %v4889, %v4931
      %v4964 = vld [vmem:[%s1 + $0x14] sm:$0x1]
      %4965 = vset.pattern.permute.xlu0 2
      %4966 = vperm.xlu0 %4965, %v598
      %v4967 = vpop.permute.xlu0 %4966
      %4969 = vset.pattern.permute.xlu0 2
      %4970 = vperm.xlu0 %4969, %v599
      %v4971 = vpop.permute.xlu0 %4970
      %v4973 = vperm.slane %v4964, 0
      %v4974 = vmul.f32 %v1032, %v4973
      %v4975 = vmul.f32 %v1036, %v4973
      %v4976 = vmul.f32 %v1040, %v4973
      %v4977 = vmul.f32 %v1044, %v4973
      %v4978 = vmul.f32 %v1048, %v4973
      %v4979 = vmul.f32 %v1052, %v4973
      %v4980 = vmul.f32 %v1056, %v4973
      %v4981 = vmul.f32 %v1060, %v4973
      %v4982 = vmul.f32 %v1064, %v4973
      %v4983 = vmul.f32 %v1068, %v4973
      %v4984 = vmul.f32 %v1072, %v4973
      %v4985 = vmul.f32 %v1076, %v4973
      %v4986 = vmul.f32 %v1080, %v4973
      %v4987 = vmul.f32 %v1084, %v4973
      %v4988 = vmul.f32 %v1088, %v4973
      %v4989 = vmul.f32 %v1092, %v4973
      %v4990 = vmul.f32 %v1096, %v4973
      %v4991 = vmul.f32 %v1100, %v4973
      %v4992 = vmul.f32 %v1104, %v4973
      %v4993 = vmul.f32 %v1108, %v4973
      %v4994 = vmul.f32 %v1112, %v4973
      %v4995 = vmul.f32 %v1116, %v4973
      %v4996 = vmul.f32 %v1120, %v4973
      %v4997 = vmul.f32 %v1124, %v4973
      %v4998 = vmul.f32 %v1128, %v4973
      %v4999 = vmul.f32 %v1132, %v4973
      %v5000 = vmul.f32 %v1136, %v4973
      %v5001 = vmul.f32 %v1140, %v4973
      %v5002 = vmul.f32 %v1144, %v4973
      %v5003 = vmul.f32 %v1148, %v4973
      %v5004 = vmul.f32 %v4967, %v4973
      %v5005 = vmul.f32 %v4971, %v4973
      %v5006 = vadd.f32 %v4932, %v4974
      %v5007 = vadd.f32 %v4933, %v4975
      %v5008 = vadd.f32 %v4934, %v4976
      %v5009 = vadd.f32 %v4935, %v4977
      %v5010 = vadd.f32 %v4936, %v4978
      %v5011 = vadd.f32 %v4937, %v4979
      %v5012 = vadd.f32 %v4938, %v4980
      %v5013 = vadd.f32 %v4939, %v4981
      %v5014 = vadd.f32 %v4940, %v4982
      %v5015 = vadd.f32 %v4941, %v4983
      %v5016 = vadd.f32 %v4942, %v4984
      %v5017 = vadd.f32 %v4943, %v4985
      %v5018 = vadd.f32 %v4944, %v4986
      %v5019 = vadd.f32 %v4945, %v4987
      %v5020 = vadd.f32 %v4946, %v4988
      %v5021 = vadd.f32 %v4947, %v4989
      %v5022 = vadd.f32 %v4948, %v4990
      %v5023 = vadd.f32 %v4949, %v4991
      %v5024 = vadd.f32 %v4950, %v4992
      %v5025 = vadd.f32 %v4951, %v4993
      %v5026 = vadd.f32 %v4952, %v4994
      %v5027 = vadd.f32 %v4953, %v4995
      %v5028 = vadd.f32 %v4954, %v4996
      %v5029 = vadd.f32 %v4955, %v4997
      %v5030 = vadd.f32 %v4956, %v4998
      %v5031 = vadd.f32 %v4957, %v4999
      %v5032 = vadd.f32 %v4958, %v5000
      %v5033 = vadd.f32 %v4959, %v5001
      %v5034 = vadd.f32 %v4960, %v5002
      %v5035 = vadd.f32 %v4961, %v5003
      %v5036 = vadd.f32 %v4962, %v5004
      %v5037 = vadd.f32 %v4963, %v5005
      %v5038 = vld [vmem:[%s1 + $0x15] sm:$0x1]
      %5039 = vset.pattern.permute.xlu0 3
      %5040 = vperm.xlu0 %5039, %v598
      %v5041 = vpop.permute.xlu0 %5040
      %5043 = vset.pattern.permute.xlu0 3
      %5044 = vperm.xlu0 %5043, %v599
      %v5045 = vpop.permute.xlu0 %5044
      %v5047 = vperm.slane %v5038, 0
      %v5048 = vmul.f32 %v1226, %v5047
      %v5049 = vmul.f32 %v1230, %v5047
      %v5050 = vmul.f32 %v1234, %v5047
      %v5051 = vmul.f32 %v1238, %v5047
      %v5052 = vmul.f32 %v1242, %v5047
      %v5053 = vmul.f32 %v1246, %v5047
      %v5054 = vmul.f32 %v1250, %v5047
      %v5055 = vmul.f32 %v1254, %v5047
      %v5056 = vmul.f32 %v1258, %v5047
      %v5057 = vmul.f32 %v1262, %v5047
      %v5058 = vmul.f32 %v1266, %v5047
      %v5059 = vmul.f32 %v1270, %v5047
      %v5060 = vmul.f32 %v1274, %v5047
      %v5061 = vmul.f32 %v1278, %v5047
      %v5062 = vmul.f32 %v1282, %v5047
      %v5063 = vmul.f32 %v1286, %v5047
      %v5064 = vmul.f32 %v1290, %v5047
      %v5065 = vmul.f32 %v1294, %v5047
      %v5066 = vmul.f32 %v1298, %v5047
      %v5067 = vmul.f32 %v1302, %v5047
      %v5068 = vmul.f32 %v1306, %v5047
      %v5069 = vmul.f32 %v1310, %v5047
      %v5070 = vmul.f32 %v1314, %v5047
      %v5071 = vmul.f32 %v1318, %v5047
      %v5072 = vmul.f32 %v1322, %v5047
      %v5073 = vmul.f32 %v1326, %v5047
      %v5074 = vmul.f32 %v1330, %v5047
      %v5075 = vmul.f32 %v1334, %v5047
      %v5076 = vmul.f32 %v1338, %v5047
      %v5077 = vmul.f32 %v1342, %v5047
      %v5078 = vmul.f32 %v5041, %v5047
      %v5079 = vmul.f32 %v5045, %v5047
      %v5080 = vadd.f32 %v5006, %v5048
      %v5081 = vadd.f32 %v5007, %v5049
      %v5082 = vadd.f32 %v5008, %v5050
      %v5083 = vadd.f32 %v5009, %v5051
      %v5084 = vadd.f32 %v5010, %v5052
      %v5085 = vadd.f32 %v5011, %v5053
      %v5086 = vadd.f32 %v5012, %v5054
      %v5087 = vadd.f32 %v5013, %v5055
      %v5088 = vadd.f32 %v5014, %v5056
      %v5089 = vadd.f32 %v5015, %v5057
      %v5090 = vadd.f32 %v5016, %v5058
      %v5091 = vadd.f32 %v5017, %v5059
      %v5092 = vadd.f32 %v5018, %v5060
      %v5093 = vadd.f32 %v5019, %v5061
      %v5094 = vadd.f32 %v5020, %v5062
      %v5095 = vadd.f32 %v5021, %v5063
      %v5096 = vadd.f32 %v5022, %v5064
      %v5097 = vadd.f32 %v5023, %v5065
      %v5098 = vadd.f32 %v5024, %v5066
      %v5099 = vadd.f32 %v5025, %v5067
      %v5100 = vadd.f32 %v5026, %v5068
      %v5101 = vadd.f32 %v5027, %v5069
      %v5102 = vadd.f32 %v5028, %v5070
      %v5103 = vadd.f32 %v5029, %v5071
      %v5104 = vadd.f32 %v5030, %v5072
      %v5105 = vadd.f32 %v5031, %v5073
      %v5106 = vadd.f32 %v5032, %v5074
      %v5107 = vadd.f32 %v5033, %v5075
      %v5108 = vadd.f32 %v5034, %v5076
      %v5109 = vadd.f32 %v5035, %v5077
      %v5110 = vadd.f32 %v5036, %v5078
      %v5111 = vadd.f32 %v5037, %v5079
      %v5112 = vld [vmem:[%s1 + $0x16] sm:$0x1]
      %5113 = vset.pattern.permute.xlu0 4
      %5114 = vperm.xlu0 %5113, %v598
      %v5115 = vpop.permute.xlu0 %5114
      %5117 = vset.pattern.permute.xlu0 4
      %5118 = vperm.xlu0 %5117, %v599
      %v5119 = vpop.permute.xlu0 %5118
      %v5121 = vperm.slane %v5112, 0
      %v5122 = vmul.f32 %v1420, %v5121
      %v5123 = vmul.f32 %v1424, %v5121
      %v5124 = vmul.f32 %v1428, %v5121
      %v5125 = vmul.f32 %v1432, %v5121
      %v5126 = vmul.f32 %v1436, %v5121
      %v5127 = vmul.f32 %v1440, %v5121
      %v5128 = vmul.f32 %v1444, %v5121
      %v5129 = vmul.f32 %v1448, %v5121
      %v5130 = vmul.f32 %v1452, %v5121
      %v5131 = vmul.f32 %v1456, %v5121
      %v5132 = vmul.f32 %v1460, %v5121
      %v5133 = vmul.f32 %v1464, %v5121
      %v5134 = vmul.f32 %v1468, %v5121
      %v5135 = vmul.f32 %v1472, %v5121
      %v5136 = vmul.f32 %v1476, %v5121
      %v5137 = vmul.f32 %v1480, %v5121
      %v5138 = vmul.f32 %v1484, %v5121
      %v5139 = vmul.f32 %v1488, %v5121
      %v5140 = vmul.f32 %v1492, %v5121
      %v5141 = vmul.f32 %v1496, %v5121
      %v5142 = vmul.f32 %v1500, %v5121
      %v5143 = vmul.f32 %v1504, %v5121
      %v5144 = vmul.f32 %v1508, %v5121
      %v5145 = vmul.f32 %v1512, %v5121
      %v5146 = vmul.f32 %v1516, %v5121
      %v5147 = vmul.f32 %v1520, %v5121
      %v5148 = vmul.f32 %v1524, %v5121
      %v5149 = vmul.f32 %v1528, %v5121
      %v5150 = vmul.f32 %v1532, %v5121
      %v5151 = vmul.f32 %v1536, %v5121
      %v5152 = vmul.f32 %v5115, %v5121
      %v5153 = vmul.f32 %v5119, %v5121
      %v5154 = vadd.f32 %v5080, %v5122
      %v5155 = vadd.f32 %v5081, %v5123
      %v5156 = vadd.f32 %v5082, %v5124
      %v5157 = vadd.f32 %v5083, %v5125
      %v5158 = vadd.f32 %v5084, %v5126
      %v5159 = vadd.f32 %v5085, %v5127
      %v5160 = vadd.f32 %v5086, %v5128
      %v5161 = vadd.f32 %v5087, %v5129
      %v5162 = vadd.f32 %v5088, %v5130
      %v5163 = vadd.f32 %v5089, %v5131
      %v5164 = vadd.f32 %v5090, %v5132
      %v5165 = vadd.f32 %v5091, %v5133
      %v5166 = vadd.f32 %v5092, %v5134
      %v5167 = vadd.f32 %v5093, %v5135
      %v5168 = vadd.f32 %v5094, %v5136
      %v5169 = vadd.f32 %v5095, %v5137
      %v5170 = vadd.f32 %v5096, %v5138
      %v5171 = vadd.f32 %v5097, %v5139
      %v5172 = vadd.f32 %v5098, %v5140
      %v5173 = vadd.f32 %v5099, %v5141
      %v5174 = vadd.f32 %v5100, %v5142
      %v5175 = vadd.f32 %v5101, %v5143
      %v5176 = vadd.f32 %v5102, %v5144
      %v5177 = vadd.f32 %v5103, %v5145
      %v5178 = vadd.f32 %v5104, %v5146
      %v5179 = vadd.f32 %v5105, %v5147
      %v5180 = vadd.f32 %v5106, %v5148
      %v5181 = vadd.f32 %v5107, %v5149
      %v5182 = vadd.f32 %v5108, %v5150
      %v5183 = vadd.f32 %v5109, %v5151
      %v5184 = vadd.f32 %v5110, %v5152
      %v5185 = vadd.f32 %v5111, %v5153
      %v5186 = vld [vmem:[%s1 + $0x17] sm:$0x1]
      %5187 = vset.pattern.permute.xlu0 5
      %5188 = vperm.xlu0 %5187, %v598
      %v5189 = vpop.permute.xlu0 %5188
      %5191 = vset.pattern.permute.xlu0 5
      %5192 = vperm.xlu0 %5191, %v599
      %v5193 = vpop.permute.xlu0 %5192
      %v5195 = vperm.slane %v5186, 0
      %v5196 = vmul.f32 %v1614, %v5195
      %v5197 = vmul.f32 %v1618, %v5195
      %v5198 = vmul.f32 %v1622, %v5195
      %v5199 = vmul.f32 %v1626, %v5195
      %v5200 = vmul.f32 %v1630, %v5195
      %v5201 = vmul.f32 %v1634, %v5195
      %v5202 = vmul.f32 %v1638, %v5195
      %v5203 = vmul.f32 %v1642, %v5195
      %v5204 = vmul.f32 %v1646, %v5195
      %v5205 = vmul.f32 %v1650, %v5195
      %v5206 = vmul.f32 %v1654, %v5195
      %v5207 = vmul.f32 %v1658, %v5195
      %v5208 = vmul.f32 %v1662, %v5195
      %v5209 = vmul.f32 %v1666, %v5195
      %v5210 = vmul.f32 %v1670, %v5195
      %v5211 = vmul.f32 %v1674, %v5195
      %v5212 = vmul.f32 %v1678, %v5195
      %v5213 = vmul.f32 %v1682, %v5195
      %v5214 = vmul.f32 %v1686, %v5195
      %v5215 = vmul.f32 %v1690, %v5195
      %v5216 = vmul.f32 %v1694, %v5195
      %v5217 = vmul.f32 %v1698, %v5195
      %v5218 = vmul.f32 %v1702, %v5195
      %v5219 = vmul.f32 %v1706, %v5195
      %v5220 = vmul.f32 %v1710, %v5195
      %v5221 = vmul.f32 %v1714, %v5195
      %v5222 = vmul.f32 %v1718, %v5195
      %v5223 = vmul.f32 %v1722, %v5195
      %v5224 = vmul.f32 %v1726, %v5195
      %v5225 = vmul.f32 %v1730, %v5195
      %v5226 = vmul.f32 %v5189, %v5195
      %v5227 = vmul.f32 %v5193, %v5195
      %v5228 = vadd.f32 %v5154, %v5196
      %v5229 = vadd.f32 %v5155, %v5197
      %v5230 = vadd.f32 %v5156, %v5198
      %v5231 = vadd.f32 %v5157, %v5199
      %v5232 = vadd.f32 %v5158, %v5200
      %v5233 = vadd.f32 %v5159, %v5201
      %v5234 = vadd.f32 %v5160, %v5202
      %v5235 = vadd.f32 %v5161, %v5203
      %v5236 = vadd.f32 %v5162, %v5204
      %v5237 = vadd.f32 %v5163, %v5205
      %v5238 = vadd.f32 %v5164, %v5206
      %v5239 = vadd.f32 %v5165, %v5207
      %v5240 = vadd.f32 %v5166, %v5208
      %v5241 = vadd.f32 %v5167, %v5209
      %v5242 = vadd.f32 %v5168, %v5210
      %v5243 = vadd.f32 %v5169, %v5211
      %v5244 = vadd.f32 %v5170, %v5212
      %v5245 = vadd.f32 %v5171, %v5213
      %v5246 = vadd.f32 %v5172, %v5214
      %v5247 = vadd.f32 %v5173, %v5215
      %v5248 = vadd.f32 %v5174, %v5216
      %v5249 = vadd.f32 %v5175, %v5217
      %v5250 = vadd.f32 %v5176, %v5218
      %v5251 = vadd.f32 %v5177, %v5219
      %v5252 = vadd.f32 %v5178, %v5220
      %v5253 = vadd.f32 %v5179, %v5221
      %v5254 = vadd.f32 %v5180, %v5222
      %v5255 = vadd.f32 %v5181, %v5223
      %v5256 = vadd.f32 %v5182, %v5224
      %v5257 = vadd.f32 %v5183, %v5225
      %v5258 = vadd.f32 %v5184, %v5226
      %v5259 = vadd.f32 %v5185, %v5227
      %v5260 = vld [vmem:[%s1 + $0x18] sm:$0x1]
      %5262 = vset.pattern.permute.xlu0 0
      %5263 = vperm.xlu0 %5262, %v600
      %v5264 = vpop.permute.xlu0 %5263
      %v5266 = vperm.slane %v5260, 0
      %v5267 = vmul.f32 %v615, %v5266
      %v5268 = vmul.f32 %v620, %v5266
      %v5269 = vmul.f32 %v1806, %v5266
      %v5270 = vmul.f32 %v625, %v5266
      %v5271 = vmul.f32 %v630, %v5266
      %v5272 = vmul.f32 %v1811, %v5266
      %v5273 = vmul.f32 %v635, %v5266
      %v5274 = vmul.f32 %v640, %v5266
      %v5275 = vmul.f32 %v1816, %v5266
      %v5276 = vmul.f32 %v645, %v5266
      %v5277 = vmul.f32 %v650, %v5266
      %v5278 = vmul.f32 %v1821, %v5266
      %v5279 = vmul.f32 %v655, %v5266
      %v5280 = vmul.f32 %v660, %v5266
      %v5281 = vmul.f32 %v1826, %v5266
      %v5282 = vmul.f32 %v665, %v5266
      %v5283 = vmul.f32 %v670, %v5266
      %v5284 = vmul.f32 %v1831, %v5266
      %v5285 = vmul.f32 %v675, %v5266
      %v5286 = vmul.f32 %v680, %v5266
      %v5287 = vmul.f32 %v1836, %v5266
      %v5288 = vmul.f32 %v685, %v5266
      %v5289 = vmul.f32 %v690, %v5266
      %v5290 = vmul.f32 %v1841, %v5266
      %v5291 = vmul.f32 %v695, %v5266
      %v5292 = vmul.f32 %v700, %v5266
      %v5293 = vmul.f32 %v1846, %v5266
      %v5294 = vmul.f32 %v705, %v5266
      %v5295 = vmul.f32 %v710, %v5266
      %v5296 = vmul.f32 %v1851, %v5266
      %v5297 = vmul.f32 %v715, %v5266
      %v5298 = vmul.f32 %v720, %v5266
      %v5299 = vmul.f32 %v1856, %v5266
      %v5300 = vmul.f32 %v725, %v5266
      %v5301 = vmul.f32 %v730, %v5266
      %v5302 = vmul.f32 %v1861, %v5266
      %v5303 = vmul.f32 %v735, %v5266
      %v5304 = vmul.f32 %v740, %v5266
      %v5305 = vmul.f32 %v1866, %v5266
      %v5306 = vmul.f32 %v745, %v5266
      %v5307 = vmul.f32 %v750, %v5266
      %v5308 = vmul.f32 %v1871, %v5266
      %v5309 = vmul.f32 %v755, %v5266
      %v5310 = vmul.f32 %v760, %v5266
      %v5311 = vmul.f32 %v1876, %v5266
      %v5312 = vmul.f32 %v4818, %v5266
      %v5313 = vmul.f32 %v4823, %v5266
      %v5314 = vmul.f32 %v5264, %v5266
      %v5363 = vrot.slane %v5267, 1
      %v5364 = vrot.slane %v5268, 1
      %v5365 = vsel %vm1975, %v5363, %v5364
      %v5366 = vrot.slane %v5269, 1
      %v5367 = vsel %vm1975, %v5364, %v5366
      %v5368 = vrot.slane %v5270, 1
      %v5369 = vrot.slane %v5271, 1
      %v5370 = vsel %vm1975, %v5368, %v5369
      %v5371 = vrot.slane %v5272, 1
      %v5372 = vsel %vm1975, %v5369, %v5371
      %v5373 = vrot.slane %v5273, 1
      %v5374 = vrot.slane %v5274, 1
      %v5375 = vsel %vm1975, %v5373, %v5374
      %v5376 = vrot.slane %v5275, 1
      %v5377 = vsel %vm1975, %v5374, %v5376
      %v5378 = vrot.slane %v5276, 1
      %v5379 = vrot.slane %v5277, 1
      %v5380 = vsel %vm1975, %v5378, %v5379
      %v5381 = vrot.slane %v5278, 1
      %v5382 = vsel %vm1975, %v5379, %v5381
      %v5383 = vrot.slane %v5279, 1
      %v5384 = vrot.slane %v5280, 1
      %v5385 = vsel %vm1975, %v5383, %v5384
      %v5386 = vrot.slane %v5281, 1
      %v5387 = vsel %vm1975, %v5384, %v5386
      %v5388 = vrot.slane %v5282, 1
      %v5389 = vrot.slane %v5283, 1
      %v5390 = vsel %vm1975, %v5388, %v5389
      %v5391 = vrot.slane %v5284, 1
      %v5392 = vsel %vm1975, %v5389, %v5391
      %v5393 = vrot.slane %v5285, 1
      %v5394 = vrot.slane %v5286, 1
      %v5395 = vsel %vm1975, %v5393, %v5394
      %v5396 = vrot.slane %v5287, 1
      %v5397 = vsel %vm1975, %v5394, %v5396
      %v5398 = vrot.slane %v5288, 1
      %v5399 = vrot.slane %v5289, 1
      %v5400 = vsel %vm1975, %v5398, %v5399
      %v5401 = vrot.slane %v5290, 1
      %v5402 = vsel %vm1975, %v5399, %v5401
      %v5403 = vrot.slane %v5291, 1
      %v5404 = vrot.slane %v5292, 1
      %v5405 = vsel %vm1975, %v5403, %v5404
      %v5406 = vrot.slane %v5293, 1
      %v5407 = vsel %vm1975, %v5404, %v5406
      %v5408 = vrot.slane %v5294, 1
      %v5409 = vrot.slane %v5295, 1
      %v5410 = vsel %vm1975, %v5408, %v5409
      %v5411 = vrot.slane %v5296, 1
      %v5412 = vsel %vm1975, %v5409, %v5411
      %v5413 = vrot.slane %v5297, 1
      %v5414 = vrot.slane %v5298, 1
      %v5415 = vsel %vm1975, %v5413, %v5414
      %v5416 = vrot.slane %v5299, 1
      %v5417 = vsel %vm1975, %v5414, %v5416
      %v5418 = vrot.slane %v5300, 1
      %v5419 = vrot.slane %v5301, 1
      %v5420 = vsel %vm1975, %v5418, %v5419
      %v5421 = vrot.slane %v5302, 1
      %v5422 = vsel %vm1975, %v5419, %v5421
      %v5423 = vrot.slane %v5303, 1
      %v5424 = vrot.slane %v5304, 1
      %v5425 = vsel %vm1975, %v5423, %v5424
      %v5426 = vrot.slane %v5305, 1
      %v5427 = vsel %vm1975, %v5424, %v5426
      %v5428 = vrot.slane %v5306, 1
      %v5429 = vrot.slane %v5307, 1
      %v5430 = vsel %vm1975, %v5428, %v5429
      %v5431 = vrot.slane %v5308, 1
      %v5432 = vsel %vm1975, %v5429, %v5431
      %v5433 = vrot.slane %v5309, 1
      %v5434 = vrot.slane %v5310, 1
      %v5435 = vsel %vm1975, %v5433, %v5434
      %v5436 = vrot.slane %v5311, 1
      %v5437 = vsel %vm1975, %v5434, %v5436
      %v5438 = vrot.slane %v5312, 1
      %v5439 = vrot.slane %v5313, 1
      %v5440 = vsel %vm1975, %v5438, %v5439
      %v5441 = vrot.slane %v5314, 1
      %v5442 = vsel %vm1975, %v5439, %v5441
      %v5475 = vadd.f32 %v5228, %v5365
      %v5476 = vadd.f32 %v5229, %v5367
      %v5477 = vadd.f32 %v5230, %v5370
      %v5478 = vadd.f32 %v5231, %v5372
      %v5479 = vadd.f32 %v5232, %v5375
      %v5480 = vadd.f32 %v5233, %v5377
      %v5481 = vadd.f32 %v5234, %v5380
      %v5482 = vadd.f32 %v5235, %v5382
      %v5483 = vadd.f32 %v5236, %v5385
      %v5484 = vadd.f32 %v5237, %v5387
      %v5485 = vadd.f32 %v5238, %v5390
      %v5486 = vadd.f32 %v5239, %v5392
      %v5487 = vadd.f32 %v5240, %v5395
      %v5488 = vadd.f32 %v5241, %v5397
      %v5489 = vadd.f32 %v5242, %v5400
      %v5490 = vadd.f32 %v5243, %v5402
      %v5491 = vadd.f32 %v5244, %v5405
      %v5492 = vadd.f32 %v5245, %v5407
      %v5493 = vadd.f32 %v5246, %v5410
      %v5494 = vadd.f32 %v5247, %v5412
      %v5495 = vadd.f32 %v5248, %v5415
      %v5496 = vadd.f32 %v5249, %v5417
      %v5497 = vadd.f32 %v5250, %v5420
      %v5498 = vadd.f32 %v5251, %v5422
      %v5499 = vadd.f32 %v5252, %v5425
      %v5500 = vadd.f32 %v5253, %v5427
      %v5501 = vadd.f32 %v5254, %v5430
      %v5502 = vadd.f32 %v5255, %v5432
      %v5503 = vadd.f32 %v5256, %v5435
      %v5504 = vadd.f32 %v5257, %v5437
      %v5505 = vadd.f32 %v5258, %v5440
      %v5506 = vadd.f32 %v5259, %v5442
      %v5507 = vld [vmem:[%s1 + $0x19] sm:$0x1]
      %5508 = vset.pattern.permute.xlu0 1
      %5509 = vperm.xlu0 %5508, %v600
      %v5510 = vpop.permute.xlu0 %5509
      %v5512 = vperm.slane %v5507, 0
      %v5513 = vmul.f32 %v838, %v5512
      %v5514 = vmul.f32 %v842, %v5512
      %v5515 = vmul.f32 %v2127, %v5512
      %v5516 = vmul.f32 %v846, %v5512
      %v5517 = vmul.f32 %v850, %v5512
      %v5518 = vmul.f32 %v2131, %v5512
      %v5519 = vmul.f32 %v854, %v5512
      %v5520 = vmul.f32 %v858, %v5512
      %v5521 = vmul.f32 %v2135, %v5512
      %v5522 = vmul.f32 %v862, %v5512
      %v5523 = vmul.f32 %v866, %v5512
      %v5524 = vmul.f32 %v2139, %v5512
      %v5525 = vmul.f32 %v870, %v5512
      %v5526 = vmul.f32 %v874, %v5512
      %v5527 = vmul.f32 %v2143, %v5512
      %v5528 = vmul.f32 %v878, %v5512
      %v5529 = vmul.f32 %v882, %v5512
      %v5530 = vmul.f32 %v2147, %v5512
      %v5531 = vmul.f32 %v886, %v5512
      %v5532 = vmul.f32 %v890, %v5512
      %v5533 = vmul.f32 %v2151, %v5512
      %v5534 = vmul.f32 %v894, %v5512
      %v5535 = vmul.f32 %v898, %v5512
      %v5536 = vmul.f32 %v2155, %v5512
      %v5537 = vmul.f32 %v902, %v5512
      %v5538 = vmul.f32 %v906, %v5512
      %v5539 = vmul.f32 %v2159, %v5512
      %v5540 = vmul.f32 %v910, %v5512
      %v5541 = vmul.f32 %v914, %v5512
      %v5542 = vmul.f32 %v2163, %v5512
      %v5543 = vmul.f32 %v918, %v5512
      %v5544 = vmul.f32 %v922, %v5512
      %v5545 = vmul.f32 %v2167, %v5512
      %v5546 = vmul.f32 %v926, %v5512
      %v5547 = vmul.f32 %v930, %v5512
      %v5548 = vmul.f32 %v2171, %v5512
      %v5549 = vmul.f32 %v934, %v5512
      %v5550 = vmul.f32 %v938, %v5512
      %v5551 = vmul.f32 %v2175, %v5512
      %v5552 = vmul.f32 %v942, %v5512
      %v5553 = vmul.f32 %v946, %v5512
      %v5554 = vmul.f32 %v2179, %v5512
      %v5555 = vmul.f32 %v950, %v5512
      %v5556 = vmul.f32 %v954, %v5512
      %v5557 = vmul.f32 %v2183, %v5512
      %v5558 = vmul.f32 %v4893, %v5512
      %v5559 = vmul.f32 %v4897, %v5512
      %v5560 = vmul.f32 %v5510, %v5512
      %v5609 = vrot.slane %v5513, 1
      %v5610 = vrot.slane %v5514, 1
      %v5611 = vsel %vm1975, %v5609, %v5610
      %v5612 = vrot.slane %v5515, 1
      %v5613 = vsel %vm1975, %v5610, %v5612
      %v5614 = vrot.slane %v5516, 1
      %v5615 = vrot.slane %v5517, 1
      %v5616 = vsel %vm1975, %v5614, %v5615
      %v5617 = vrot.slane %v5518, 1
      %v5618 = vsel %vm1975, %v5615, %v5617
      %v5619 = vrot.slane %v5519, 1
      %v5620 = vrot.slane %v5520, 1
      %v5621 = vsel %vm1975, %v5619, %v5620
      %v5622 = vrot.slane %v5521, 1
      %v5623 = vsel %vm1975, %v5620, %v5622
      %v5624 = vrot.slane %v5522, 1
      %v5625 = vrot.slane %v5523, 1
      %v5626 = vsel %vm1975, %v5624, %v5625
      %v5627 = vrot.slane %v5524, 1
      %v5628 = vsel %vm1975, %v5625, %v5627
      %v5629 = vrot.slane %v5525, 1
      %v5630 = vrot.slane %v5526, 1
      %v5631 = vsel %vm1975, %v5629, %v5630
      %v5632 = vrot.slane %v5527, 1
      %v5633 = vsel %vm1975, %v5630, %v5632
      %v5634 = vrot.slane %v5528, 1
      %v5635 = vrot.slane %v5529, 1
      %v5636 = vsel %vm1975, %v5634, %v5635
      %v5637 = vrot.slane %v5530, 1
      %v5638 = vsel %vm1975, %v5635, %v5637
      %v5639 = vrot.slane %v5531, 1
      %v5640 = vrot.slane %v5532, 1
      %v5641 = vsel %vm1975, %v5639, %v5640
      %v5642 = vrot.slane %v5533, 1
      %v5643 = vsel %vm1975, %v5640, %v5642
      %v5644 = vrot.slane %v5534, 1
      %v5645 = vrot.slane %v5535, 1
      %v5646 = vsel %vm1975, %v5644, %v5645
      %v5647 = vrot.slane %v5536, 1
      %v5648 = vsel %vm1975, %v5645, %v5647
      %v5649 = vrot.slane %v5537, 1
      %v5650 = vrot.slane %v5538, 1
      %v5651 = vsel %vm1975, %v5649, %v5650
      %v5652 = vrot.slane %v5539, 1
      %v5653 = vsel %vm1975, %v5650, %v5652
      %v5654 = vrot.slane %v5540, 1
      %v5655 = vrot.slane %v5541, 1
      %v5656 = vsel %vm1975, %v5654, %v5655
      %v5657 = vrot.slane %v5542, 1
      %v5658 = vsel %vm1975, %v5655, %v5657
      %v5659 = vrot.slane %v5543, 1
      %v5660 = vrot.slane %v5544, 1
      %v5661 = vsel %vm1975, %v5659, %v5660
      %v5662 = vrot.slane %v5545, 1
      %v5663 = vsel %vm1975, %v5660, %v5662
      %v5664 = vrot.slane %v5546, 1
      %v5665 = vrot.slane %v5547, 1
      %v5666 = vsel %vm1975, %v5664, %v5665
      %v5667 = vrot.slane %v5548, 1
      %v5668 = vsel %vm1975, %v5665, %v5667
      %v5669 = vrot.slane %v5549, 1
      %v5670 = vrot.slane %v5550, 1
      %v5671 = vsel %vm1975, %v5669, %v5670
      %v5672 = vrot.slane %v5551, 1
      %v5673 = vsel %vm1975, %v5670, %v5672
      %v5674 = vrot.slane %v5552, 1
      %v5675 = vrot.slane %v5553, 1
      %v5676 = vsel %vm1975, %v5674, %v5675
      %v5677 = vrot.slane %v5554, 1
      %v5678 = vsel %vm1975, %v5675, %v5677
      %v5679 = vrot.slane %v5555, 1
      %v5680 = vrot.slane %v5556, 1
      %v5681 = vsel %vm1975, %v5679, %v5680
      %v5682 = vrot.slane %v5557, 1
      %v5683 = vsel %vm1975, %v5680, %v5682
      %v5684 = vrot.slane %v5558, 1
      %v5685 = vrot.slane %v5559, 1
      %v5686 = vsel %vm1975, %v5684, %v5685
      %v5687 = vrot.slane %v5560, 1
      %v5688 = vsel %vm1975, %v5685, %v5687
      %v5721 = vadd.f32 %v5475, %v5611
      %v5722 = vadd.f32 %v5476, %v5613
      %v5723 = vadd.f32 %v5477, %v5616
      %v5724 = vadd.f32 %v5478, %v5618
      %v5725 = vadd.f32 %v5479, %v5621
      %v5726 = vadd.f32 %v5480, %v5623
      %v5727 = vadd.f32 %v5481, %v5626
      %v5728 = vadd.f32 %v5482, %v5628
      %v5729 = vadd.f32 %v5483, %v5631
      %v5730 = vadd.f32 %v5484, %v5633
      %v5731 = vadd.f32 %v5485, %v5636
      %v5732 = vadd.f32 %v5486, %v5638
      %v5733 = vadd.f32 %v5487, %v5641
      %v5734 = vadd.f32 %v5488, %v5643
      %v5735 = vadd.f32 %v5489, %v5646
      %v5736 = vadd.f32 %v5490, %v5648
      %v5737 = vadd.f32 %v5491, %v5651
      %v5738 = vadd.f32 %v5492, %v5653
      %v5739 = vadd.f32 %v5493, %v5656
      %v5740 = vadd.f32 %v5494, %v5658
      %v5741 = vadd.f32 %v5495, %v5661
      %v5742 = vadd.f32 %v5496, %v5663
      %v5743 = vadd.f32 %v5497, %v5666
      %v5744 = vadd.f32 %v5498, %v5668
      %v5745 = vadd.f32 %v5499, %v5671
      %v5746 = vadd.f32 %v5500, %v5673
      %v5747 = vadd.f32 %v5501, %v5676
      %v5748 = vadd.f32 %v5502, %v5678
      %v5749 = vadd.f32 %v5503, %v5681
      %v5750 = vadd.f32 %v5504, %v5683
      %v5751 = vadd.f32 %v5505, %v5686
      %v5752 = vadd.f32 %v5506, %v5688
      %v5753 = vld [vmem:[%s1 + $0x1a] sm:$0x1]
      %5754 = vset.pattern.permute.xlu0 2
      %5755 = vperm.xlu0 %5754, %v600
      %v5756 = vpop.permute.xlu0 %5755
      %v5758 = vperm.slane %v5753, 0
      %v5759 = vmul.f32 %v1032, %v5758
      %v5760 = vmul.f32 %v1036, %v5758
      %v5761 = vmul.f32 %v2433, %v5758
      %v5762 = vmul.f32 %v1040, %v5758
      %v5763 = vmul.f32 %v1044, %v5758
      %v5764 = vmul.f32 %v2437, %v5758
      %v5765 = vmul.f32 %v1048, %v5758
      %v5766 = vmul.f32 %v1052, %v5758
      %v5767 = vmul.f32 %v2441, %v5758
      %v5768 = vmul.f32 %v1056, %v5758
      %v5769 = vmul.f32 %v1060, %v5758
      %v5770 = vmul.f32 %v2445, %v5758
      %v5771 = vmul.f32 %v1064, %v5758
      %v5772 = vmul.f32 %v1068, %v5758
      %v5773 = vmul.f32 %v2449, %v5758
      %v5774 = vmul.f32 %v1072, %v5758
      %v5775 = vmul.f32 %v1076, %v5758
      %v5776 = vmul.f32 %v2453, %v5758
      %v5777 = vmul.f32 %v1080, %v5758
      %v5778 = vmul.f32 %v1084, %v5758
      %v5779 = vmul.f32 %v2457, %v5758
      %v5780 = vmul.f32 %v1088, %v5758
      %v5781 = vmul.f32 %v1092, %v5758
      %v5782 = vmul.f32 %v2461, %v5758
      %v5783 = vmul.f32 %v1096, %v5758
      %v5784 = vmul.f32 %v1100, %v5758
      %v5785 = vmul.f32 %v2465, %v5758
      %v5786 = vmul.f32 %v1104, %v5758
      %v5787 = vmul.f32 %v1108, %v5758
      %v5788 = vmul.f32 %v2469, %v5758
      %v5789 = vmul.f32 %v1112, %v5758
      %v5790 = vmul.f32 %v1116, %v5758
      %v5791 = vmul.f32 %v2473, %v5758
      %v5792 = vmul.f32 %v1120, %v5758
      %v5793 = vmul.f32 %v1124, %v5758
      %v5794 = vmul.f32 %v2477, %v5758
      %v5795 = vmul.f32 %v1128, %v5758
      %v5796 = vmul.f32 %v1132, %v5758
      %v5797 = vmul.f32 %v2481, %v5758
      %v5798 = vmul.f32 %v1136, %v5758
      %v5799 = vmul.f32 %v1140, %v5758
      %v5800 = vmul.f32 %v2485, %v5758
      %v5801 = vmul.f32 %v1144, %v5758
      %v5802 = vmul.f32 %v1148, %v5758
      %v5803 = vmul.f32 %v2489, %v5758
      %v5804 = vmul.f32 %v4967, %v5758
      %v5805 = vmul.f32 %v4971, %v5758
      %v5806 = vmul.f32 %v5756, %v5758
      %v5855 = vrot.slane %v5759, 1
      %v5856 = vrot.slane %v5760, 1
      %v5857 = vsel %vm1975, %v5855, %v5856
      %v5858 = vrot.slane %v5761, 1
      %v5859 = vsel %vm1975, %v5856, %v5858
      %v5860 = vrot.slane %v5762, 1
      %v5861 = vrot.slane %v5763, 1
      %v5862 = vsel %vm1975, %v5860, %v5861
      %v5863 = vrot.slane %v5764, 1
      %v5864 = vsel %vm1975, %v5861, %v5863
      %v5865 = vrot.slane %v5765, 1
      %v5866 = vrot.slane %v5766, 1
      %v5867 = vsel %vm1975, %v5865, %v5866
      %v5868 = vrot.slane %v5767, 1
      %v5869 = vsel %vm1975, %v5866, %v5868
      %v5870 = vrot.slane %v5768, 1
      %v5871 = vrot.slane %v5769, 1
      %v5872 = vsel %vm1975, %v5870, %v5871
      %v5873 = vrot.slane %v5770, 1
      %v5874 = vsel %vm1975, %v5871, %v5873
      %v5875 = vrot.slane %v5771, 1
      %v5876 = vrot.slane %v5772, 1
      %v5877 = vsel %vm1975, %v5875, %v5876
      %v5878 = vrot.slane %v5773, 1
      %v5879 = vsel %vm1975, %v5876, %v5878
      %v5880 = vrot.slane %v5774, 1
      %v5881 = vrot.slane %v5775, 1
      %v5882 = vsel %vm1975, %v5880, %v5881
      %v5883 = vrot.slane %v5776, 1
      %v5884 = vsel %vm1975, %v5881, %v5883
      %v5885 = vrot.slane %v5777, 1
      %v5886 = vrot.slane %v5778, 1
      %v5887 = vsel %vm1975, %v5885, %v5886
      %v5888 = vrot.slane %v5779, 1
      %v5889 = vsel %vm1975, %v5886, %v5888
      %v5890 = vrot.slane %v5780, 1
      %v5891 = vrot.slane %v5781, 1
      %v5892 = vsel %vm1975, %v5890, %v5891
      %v5893 = vrot.slane %v5782, 1
      %v5894 = vsel %vm1975, %v5891, %v5893
      %v5895 = vrot.slane %v5783, 1
      %v5896 = vrot.slane %v5784, 1
      %v5897 = vsel %vm1975, %v5895, %v5896
      %v5898 = vrot.slane %v5785, 1
      %v5899 = vsel %vm1975, %v5896, %v5898
      %v5900 = vrot.slane %v5786, 1
      %v5901 = vrot.slane %v5787, 1
      %v5902 = vsel %vm1975, %v5900, %v5901
      %v5903 = vrot.slane %v5788, 1
      %v5904 = vsel %vm1975, %v5901, %v5903
      %v5905 = vrot.slane %v5789, 1
      %v5906 = vrot.slane %v5790, 1
      %v5907 = vsel %vm1975, %v5905, %v5906
      %v5908 = vrot.slane %v5791, 1
      %v5909 = vsel %vm1975, %v5906, %v5908
      %v5910 = vrot.slane %v5792, 1
      %v5911 = vrot.slane %v5793, 1
      %v5912 = vsel %vm1975, %v5910, %v5911
      %v5913 = vrot.slane %v5794, 1
      %v5914 = vsel %vm1975, %v5911, %v5913
      %v5915 = vrot.slane %v5795, 1
      %v5916 = vrot.slane %v5796, 1
      %v5917 = vsel %vm1975, %v5915, %v5916
      %v5918 = vrot.slane %v5797, 1
      %v5919 = vsel %vm1975, %v5916, %v5918
      %v5920 = vrot.slane %v5798, 1
      %v5921 = vrot.slane %v5799, 1
      %v5922 = vsel %vm1975, %v5920, %v5921
      %v5923 = vrot.slane %v5800, 1
      %v5924 = vsel %vm1975, %v5921, %v5923
      %v5925 = vrot.slane %v5801, 1
      %v5926 = vrot.slane %v5802, 1
      %v5927 = vsel %vm1975, %v5925, %v5926
      %v5928 = vrot.slane %v5803, 1
      %v5929 = vsel %vm1975, %v5926, %v5928
      %v5930 = vrot.slane %v5804, 1
      %v5931 = vrot.slane %v5805, 1
      %v5932 = vsel %vm1975, %v5930, %v5931
      %v5933 = vrot.slane %v5806, 1
      %v5934 = vsel %vm1975, %v5931, %v5933
      %v5967 = vadd.f32 %v5721, %v5857
      %v5968 = vadd.f32 %v5722, %v5859
      %v5969 = vadd.f32 %v5723, %v5862
      %v5970 = vadd.f32 %v5724, %v5864
      %v5971 = vadd.f32 %v5725, %v5867
      %v5972 = vadd.f32 %v5726, %v5869
      %v5973 = vadd.f32 %v5727, %v5872
      %v5974 = vadd.f32 %v5728, %v5874
      %v5975 = vadd.f32 %v5729, %v5877
      %v5976 = vadd.f32 %v5730, %v5879
      %v5977 = vadd.f32 %v5731, %v5882
      %v5978 = vadd.f32 %v5732, %v5884
      %v5979 = vadd.f32 %v5733, %v5887
      %v5980 = vadd.f32 %v5734, %v5889
      %v5981 = vadd.f32 %v5735, %v5892
      %v5982 = vadd.f32 %v5736, %v5894
      %v5983 = vadd.f32 %v5737, %v5897
      %v5984 = vadd.f32 %v5738, %v5899
      %v5985 = vadd.f32 %v5739, %v5902
      %v5986 = vadd.f32 %v5740, %v5904
      %v5987 = vadd.f32 %v5741, %v5907
      %v5988 = vadd.f32 %v5742, %v5909
      %v5989 = vadd.f32 %v5743, %v5912
      %v5990 = vadd.f32 %v5744, %v5914
      %v5991 = vadd.f32 %v5745, %v5917
      %v5992 = vadd.f32 %v5746, %v5919
      %v5993 = vadd.f32 %v5747, %v5922
      %v5994 = vadd.f32 %v5748, %v5924
      %v5995 = vadd.f32 %v5749, %v5927
      %v5996 = vadd.f32 %v5750, %v5929
      %v5997 = vadd.f32 %v5751, %v5932
      %v5998 = vadd.f32 %v5752, %v5934
      %v5999 = vld [vmem:[%s2] sm:$0x1]
      %v6001 = vperm.slane %v5999, 0
      %v6003 = vadd.f32 %v5967, %v6001
      %v6004 = vadd.f32 %v5968, %v6001
      %v6005 = vadd.f32 %v5969, %v6001
      %v6006 = vadd.f32 %v5970, %v6001
      %v6007 = vadd.f32 %v5971, %v6001
      %v6008 = vadd.f32 %v5972, %v6001
      %v6009 = vadd.f32 %v5973, %v6001
      %v6010 = vadd.f32 %v5974, %v6001
      %v6011 = vadd.f32 %v5975, %v6001
      %v6012 = vadd.f32 %v5976, %v6001
      %v6013 = vadd.f32 %v5977, %v6001
      %v6014 = vadd.f32 %v5978, %v6001
      %v6015 = vadd.f32 %v5979, %v6001
      %v6016 = vadd.f32 %v5980, %v6001
      %v6017 = vadd.f32 %v5981, %v6001
      %v6018 = vadd.f32 %v5982, %v6001
      %v6019 = vadd.f32 %v5983, %v6001
      %v6020 = vadd.f32 %v5984, %v6001
      %v6021 = vadd.f32 %v5985, %v6001
      %v6022 = vadd.f32 %v5986, %v6001
      %v6023 = vadd.f32 %v5987, %v6001
      %v6024 = vadd.f32 %v5988, %v6001
      %v6025 = vadd.f32 %v5989, %v6001
      %v6026 = vadd.f32 %v5990, %v6001
      %v6027 = vadd.f32 %v5991, %v6001
      %v6028 = vadd.f32 %v5992, %v6001
      %v6029 = vadd.f32 %v5993, %v6001
      %v6030 = vadd.f32 %v5994, %v6001
      %v6031 = vadd.f32 %v5995, %v6001
      %v6032 = vadd.f32 %v5996, %v6001
      %v6033 = vadd.f32 %v5997, %v6001
      %v6034 = vadd.f32 %v5998, %v6001
      %v6035 = vadd.f32 %v6003, 3.0
      %v6036 = vadd.f32 %v6004, 3.0
      %v6037 = vadd.f32 %v6005, 3.0
      %v6038 = vadd.f32 %v6006, 3.0
      %v6039 = vadd.f32 %v6007, 3.0
      %v6040 = vadd.f32 %v6008, 3.0
      %v6041 = vadd.f32 %v6009, 3.0
      %v6042 = vadd.f32 %v6010, 3.0
      %v6043 = vadd.f32 %v6011, 3.0
      %v6044 = vadd.f32 %v6012, 3.0
      %v6045 = vadd.f32 %v6013, 3.0
      %v6046 = vadd.f32 %v6014, 3.0
      %v6047 = vadd.f32 %v6015, 3.0
      %v6048 = vadd.f32 %v6016, 3.0
      %v6049 = vadd.f32 %v6017, 3.0
      %v6050 = vadd.f32 %v6018, 3.0
      %v6051 = vadd.f32 %v6019, 3.0
      %v6052 = vadd.f32 %v6020, 3.0
      %v6053 = vadd.f32 %v6021, 3.0
      %v6054 = vadd.f32 %v6022, 3.0
      %v6055 = vadd.f32 %v6023, 3.0
      %v6056 = vadd.f32 %v6024, 3.0
      %v6057 = vadd.f32 %v6025, 3.0
      %v6058 = vadd.f32 %v6026, 3.0
      %v6059 = vadd.f32 %v6027, 3.0
      %v6060 = vadd.f32 %v6028, 3.0
      %v6061 = vadd.f32 %v6029, 3.0
      %v6062 = vadd.f32 %v6030, 3.0
      %v6063 = vadd.f32 %v6031, 3.0
      %v6064 = vadd.f32 %v6032, 3.0
      %v6065 = vadd.f32 %v6033, 3.0
      %v6066 = vadd.f32 %v6034, 3.0
      %v6067 = vmax.f32 %v6035, 0.0
      %v6068 = vmax.f32 %v6036, 0.0
      %v6069 = vmax.f32 %v6037, 0.0
      %v6070 = vmax.f32 %v6038, 0.0
      %v6071 = vmax.f32 %v6039, 0.0
      %v6072 = vmax.f32 %v6040, 0.0
      %v6073 = vmax.f32 %v6041, 0.0
      %v6074 = vmax.f32 %v6042, 0.0
      %v6075 = vmax.f32 %v6043, 0.0
      %v6076 = vmax.f32 %v6044, 0.0
      %v6077 = vmax.f32 %v6045, 0.0
      %v6078 = vmax.f32 %v6046, 0.0
      %v6079 = vmax.f32 %v6047, 0.0
      %v6080 = vmax.f32 %v6048, 0.0
      %v6081 = vmax.f32 %v6049, 0.0
      %v6082 = vmax.f32 %v6050, 0.0
      %v6083 = vmax.f32 %v6051, 0.0
      %v6084 = vmax.f32 %v6052, 0.0
      %v6085 = vmax.f32 %v6053, 0.0
      %v6086 = vmax.f32 %v6054, 0.0
      %v6087 = vmax.f32 %v6055, 0.0
      %v6088 = vmax.f32 %v6056, 0.0
      %v6089 = vmax.f32 %v6057, 0.0
      %v6090 = vmax.f32 %v6058, 0.0
      %v6091 = vmax.f32 %v6059, 0.0
      %v6092 = vmax.f32 %v6060, 0.0
      %v6093 = vmax.f32 %v6061, 0.0
      %v6094 = vmax.f32 %v6062, 0.0
      %v6095 = vmax.f32 %v6063, 0.0
      %v6096 = vmax.f32 %v6064, 0.0
      %v6097 = vmax.f32 %v6065, 0.0
      %v6098 = vmax.f32 %v6066, 0.0
      %v6099 = vmin.f32 %v6067, 6.0
      %v6100 = vmin.f32 %v6068, 6.0
      %v6101 = vmin.f32 %v6069, 6.0
      %v6102 = vmin.f32 %v6070, 6.0
      %v6103 = vmin.f32 %v6071, 6.0
      %v6104 = vmin.f32 %v6072, 6.0
      %v6105 = vmin.f32 %v6073, 6.0
      %v6106 = vmin.f32 %v6074, 6.0
      %v6107 = vmin.f32 %v6075, 6.0
      %v6108 = vmin.f32 %v6076, 6.0
      %v6109 = vmin.f32 %v6077, 6.0
      %v6110 = vmin.f32 %v6078, 6.0
      %v6111 = vmin.f32 %v6079, 6.0
      %v6112 = vmin.f32 %v6080, 6.0
      %v6113 = vmin.f32 %v6081, 6.0
      %v6114 = vmin.f32 %v6082, 6.0
      %v6115 = vmin.f32 %v6083, 6.0
      %v6116 = vmin.f32 %v6084, 6.0
      %v6117 = vmin.f32 %v6085, 6.0
      %v6118 = vmin.f32 %v6086, 6.0
      %v6119 = vmin.f32 %v6087, 6.0
      %v6120 = vmin.f32 %v6088, 6.0
      %v6121 = vmin.f32 %v6089, 6.0
      %v6122 = vmin.f32 %v6090, 6.0
      %v6123 = vmin.f32 %v6091, 6.0
      %v6124 = vmin.f32 %v6092, 6.0
      %v6125 = vmin.f32 %v6093, 6.0
      %v6126 = vmin.f32 %v6094, 6.0
      %v6127 = vmin.f32 %v6095, 6.0
      %v6128 = vmin.f32 %v6096, 6.0
      %v6129 = vmin.f32 %v6097, 6.0
      %v6130 = vmin.f32 %v6098, 6.0
      %v6131 = vmul.f32 %v6003, %v6099
      %v6132 = vmul.f32 %v6004, %v6100
      %v6133 = vmul.f32 %v6005, %v6101
      %v6134 = vmul.f32 %v6006, %v6102
      %v6135 = vmul.f32 %v6007, %v6103
      %v6136 = vmul.f32 %v6008, %v6104
      %v6137 = vmul.f32 %v6009, %v6105
      %v6138 = vmul.f32 %v6010, %v6106
      %v6139 = vmul.f32 %v6011, %v6107
      %v6140 = vmul.f32 %v6012, %v6108
      %v6141 = vmul.f32 %v6013, %v6109
      %v6142 = vmul.f32 %v6014, %v6110
      %v6143 = vmul.f32 %v6015, %v6111
      %v6144 = vmul.f32 %v6016, %v6112
      %v6145 = vmul.f32 %v6017, %v6113
      %v6146 = vmul.f32 %v6018, %v6114
      %v6147 = vmul.f32 %v6019, %v6115
      %v6148 = vmul.f32 %v6020, %v6116
      %v6149 = vmul.f32 %v6021, %v6117
      %v6150 = vmul.f32 %v6022, %v6118
      %v6151 = vmul.f32 %v6023, %v6119
      %v6152 = vmul.f32 %v6024, %v6120
      %v6153 = vmul.f32 %v6025, %v6121
      %v6154 = vmul.f32 %v6026, %v6122
      %v6155 = vmul.f32 %v6027, %v6123
      %v6156 = vmul.f32 %v6028, %v6124
      %v6157 = vmul.f32 %v6029, %v6125
      %v6158 = vmul.f32 %v6030, %v6126
      %v6159 = vmul.f32 %v6031, %v6127
      %v6160 = vmul.f32 %v6032, %v6128
      %v6161 = vmul.f32 %v6033, %v6129
      %v6162 = vmul.f32 %v6034, %v6130
      %v6163 = vmul.f32 %v6131, 0.16666667
      %v6164 = vmul.f32 %v6132, 0.16666667
      %v6165 = vmul.f32 %v6133, 0.16666667
      %v6166 = vmul.f32 %v6134, 0.16666667
      %v6167 = vmul.f32 %v6135, 0.16666667
      %v6168 = vmul.f32 %v6136, 0.16666667
      %v6169 = vmul.f32 %v6137, 0.16666667
      %v6170 = vmul.f32 %v6138, 0.16666667
      %v6171 = vmul.f32 %v6139, 0.16666667
      %v6172 = vmul.f32 %v6140, 0.16666667
      %v6173 = vmul.f32 %v6141, 0.16666667
      %v6174 = vmul.f32 %v6142, 0.16666667
      %v6175 = vmul.f32 %v6143, 0.16666667
      %v6176 = vmul.f32 %v6144, 0.16666667
      %v6177 = vmul.f32 %v6145, 0.16666667
      %v6178 = vmul.f32 %v6146, 0.16666667
      %v6179 = vmul.f32 %v6147, 0.16666667
      %v6180 = vmul.f32 %v6148, 0.16666667
      %v6181 = vmul.f32 %v6149, 0.16666667
      %v6182 = vmul.f32 %v6150, 0.16666667
      %v6183 = vmul.f32 %v6151, 0.16666667
      %v6184 = vmul.f32 %v6152, 0.16666667
      %v6185 = vmul.f32 %v6153, 0.16666667
      %v6186 = vmul.f32 %v6154, 0.16666667
      %v6187 = vmul.f32 %v6155, 0.16666667
      %v6188 = vmul.f32 %v6156, 0.16666667
      %v6189 = vmul.f32 %v6157, 0.16666667
      %v6190 = vmul.f32 %v6158, 0.16666667
      %v6191 = vmul.f32 %v6159, 0.16666667
      %v6192 = vmul.f32 %v6160, 0.16666667
      %v6193 = vmul.f32 %v6161, 0.16666667
      %v6194 = vmul.f32 %v6162, 0.16666667
      %v6195 = vpack.c.bf16 %v6164, %v6163
      %v6196 = vpack.c.bf16 %v6166, %v6165
      %v6197 = vpack.c.bf16 %v6168, %v6167
      %v6198 = vpack.c.bf16 %v6170, %v6169
      %v6199 = vpack.c.bf16 %v6172, %v6171
      %v6200 = vpack.c.bf16 %v6174, %v6173
      %v6201 = vpack.c.bf16 %v6176, %v6175
      %v6202 = vpack.c.bf16 %v6178, %v6177
      %v6203 = vpack.c.bf16 %v6180, %v6179
      %v6204 = vpack.c.bf16 %v6182, %v6181
      %v6205 = vpack.c.bf16 %v6184, %v6183
      %v6206 = vpack.c.bf16 %v6186, %v6185
      %v6207 = vpack.c.bf16 %v6188, %v6187
      %v6208 = vpack.c.bf16 %v6190, %v6189
      %v6209 = vpack.c.bf16 %v6192, %v6191
      %v6210 = vpack.c.bf16 %v6194, %v6193
      %v6211 = vld [vmem:[%s3] sm:$0xf]
      %v6212 = vld [vmem:[%s3 + $0x4] sm:$0xf]
      %v6213 = vld [vmem:[%s4] sm:$0x1]
      %v6215 = vperm.slane %v6213, 0
      %v6219 = vunpack.c.l.b16 %v6211
      %v6220 = vunpack.c.l.b16 %v6212
      %v6221 = vpack.c.b16 %v6220, %v6219
      %vm6223 = vcmask 130048
      %v6225 = vsel %vm6223, %v6195, 0
      %v6228 = vsel %vm6223, %v6196, 0
      %v6231 = vsel %vm6223, %v6197, 0
      %v6234 = vsel %vm6223, %v6198, 0
      %v6237 = vsel %vm6223, %v6199, 0
      %v6240 = vsel %vm6223, %v6200, 0
      %v6243 = vsel %vm6223, %v6201, 0
      %v6246 = vsel %vm6223, %v6202, 0
      %v6249 = vsel %vm6223, %v6203, 0
      %v6252 = vsel %vm6223, %v6204, 0
      %v6255 = vsel %vm6223, %v6205, 0
      %v6258 = vsel %vm6223, %v6206, 0
      %v6261 = vsel %vm6223, %v6207, 0
      %v6264 = vsel %vm6223, %v6208, 0
      %v6267 = vsel %vm6223, %v6209, 0
      %v6270 = vsel %vm6223, %v6210, 0
      %6272 = vmatpush.bf16.msra.mxu0 0
      %6273 = vmatpush.bf16.msra.mxu0 0
      %6274 = vmatpush.bf16.msra.mxu0 0
      %6275 = vmatpush.bf16.msra.mxu0 0
      %6276 = vmatpush.bf16.msra.mxu0 0
      %6277 = vmatpush.bf16.msra.mxu0 0
      %6278 = vmatpush.bf16.msra.mxu0 0
      %6279 = vmatpush.bf16.msra.mxu0 %v6221
      %6280 = vmatmul.bf16.gmra.mxu0 %v6225
      %v6281 = vpop.f32.mrf.mxu0
      %v6282 = vadd.f32 %v6215, %v6281
      %v6283 = vpop.f32.mrf.mxu0
      %v6284 = vadd.f32 %v6215, %v6283
      %6285 = vmatmul.bf16.gmra.mxu0 %v6228
      %v6286 = vpop.f32.mrf.mxu0
      %v6287 = vadd.f32 %v6215, %v6286
      %v6288 = vpop.f32.mrf.mxu0
      %v6289 = vadd.f32 %v6215, %v6288
      %6290 = vmatmul.bf16.gmra.mxu0 %v6231
      %v6291 = vpop.f32.mrf.mxu0
      %v6292 = vadd.f32 %v6215, %v6291
      %v6293 = vpop.f32.mrf.mxu0
      %v6294 = vadd.f32 %v6215, %v6293
      %6295 = vmatmul.bf16.gmra.mxu0 %v6234
      %v6296 = vpop.f32.mrf.mxu0
      %v6297 = vadd.f32 %v6215, %v6296
      %v6298 = vpop.f32.mrf.mxu0
      %v6299 = vadd.f32 %v6215, %v6298
      %6300 = vmatmul.bf16.gmra.mxu0 %v6237
      %v6301 = vpop.f32.mrf.mxu0
      %v6302 = vadd.f32 %v6215, %v6301
      %v6303 = vpop.f32.mrf.mxu0
      %v6304 = vadd.f32 %v6215, %v6303
      %6305 = vmatmul.bf16.gmra.mxu0 %v6240
      %v6306 = vpop.f32.mrf.mxu0
      %v6307 = vadd.f32 %v6215, %v6306
      %v6308 = vpop.f32.mrf.mxu0
      %v6309 = vadd.f32 %v6215, %v6308
      %6310 = vmatmul.bf16.gmra.mxu0 %v6243
      %v6311 = vpop.f32.mrf.mxu0
      %v6312 = vadd.f32 %v6215, %v6311
      %v6313 = vpop.f32.mrf.mxu0
      %v6314 = vadd.f32 %v6215, %v6313
      %6315 = vmatmul.bf16.gmra.mxu0 %v6246
      %v6316 = vpop.f32.mrf.mxu0
      %v6317 = vadd.f32 %v6215, %v6316
      %v6318 = vpop.f32.mrf.mxu0
      %v6319 = vadd.f32 %v6215, %v6318
      %6320 = vmatmul.bf16.gmra.mxu0 %v6249
      %v6321 = vpop.f32.mrf.mxu0
      %v6322 = vadd.f32 %v6215, %v6321
      %v6323 = vpop.f32.mrf.mxu0
      %v6324 = vadd.f32 %v6215, %v6323
      %6325 = vmatmul.bf16.gmra.mxu0 %v6252
      %v6326 = vpop.f32.mrf.mxu0
      %v6327 = vadd.f32 %v6215, %v6326
      %v6328 = vpop.f32.mrf.mxu0
      %v6329 = vadd.f32 %v6215, %v6328
      %6330 = vmatmul.bf16.gmra.mxu0 %v6255
      %v6331 = vpop.f32.mrf.mxu0
      %v6332 = vadd.f32 %v6215, %v6331
      %v6333 = vpop.f32.mrf.mxu0
      %v6334 = vadd.f32 %v6215, %v6333
      %6335 = vmatmul.bf16.gmra.mxu0 %v6258
      %v6336 = vpop.f32.mrf.mxu0
      %v6337 = vadd.f32 %v6215, %v6336
      %v6338 = vpop.f32.mrf.mxu0
      %v6339 = vadd.f32 %v6215, %v6338
      %6340 = vmatmul.bf16.gmra.mxu0 %v6261
      %v6341 = vpop.f32.mrf.mxu0
      %v6342 = vadd.f32 %v6215, %v6341
      %v6343 = vpop.f32.mrf.mxu0
      %v6344 = vadd.f32 %v6215, %v6343
      %6345 = vmatmul.bf16.gmra.mxu0 %v6264
      %v6346 = vpop.f32.mrf.mxu0
      %v6347 = vadd.f32 %v6215, %v6346
      %v6348 = vpop.f32.mrf.mxu0
      %v6349 = vadd.f32 %v6215, %v6348
      %6350 = vmatmul.bf16.gmra.mxu0 %v6267
      %v6351 = vpop.f32.mrf.mxu0
      %v6352 = vadd.f32 %v6215, %v6351
      %v6353 = vpop.f32.mrf.mxu0
      %v6354 = vadd.f32 %v6215, %v6353
      %6355 = vmatmul.bf16.gmra.mxu0 %v6270
      %v6356 = vpop.f32.mrf.mxu0
      %v6357 = vadd.f32 %v6215, %v6356
      %v6358 = vpop.f32.mrf.mxu0
      %v6359 = vadd.f32 %v6215, %v6358
      %6360 = vdwg.mxu0
      %v6361 = vadd.f32 %v6282, 3.0
      %v6362 = vadd.f32 %v6284, 3.0
      %v6363 = vadd.f32 %v6287, 3.0
      %v6364 = vadd.f32 %v6289, 3.0
      %v6365 = vadd.f32 %v6292, 3.0
      %v6366 = vadd.f32 %v6294, 3.0
      %v6367 = vadd.f32 %v6297, 3.0
      %v6368 = vadd.f32 %v6299, 3.0
      %v6369 = vadd.f32 %v6302, 3.0
      %v6370 = vadd.f32 %v6304, 3.0
      %v6371 = vadd.f32 %v6307, 3.0
      %v6372 = vadd.f32 %v6309, 3.0
      %v6373 = vadd.f32 %v6312, 3.0
      %v6374 = vadd.f32 %v6314, 3.0
      %v6375 = vadd.f32 %v6317, 3.0
      %v6376 = vadd.f32 %v6319, 3.0
      %v6377 = vadd.f32 %v6322, 3.0
      %v6378 = vadd.f32 %v6324, 3.0
      %v6379 = vadd.f32 %v6327, 3.0
      %v6380 = vadd.f32 %v6329, 3.0
      %v6381 = vadd.f32 %v6332, 3.0
      %v6382 = vadd.f32 %v6334, 3.0
      %v6383 = vadd.f32 %v6337, 3.0
      %v6384 = vadd.f32 %v6339, 3.0
      %v6385 = vadd.f32 %v6342, 3.0
      %v6386 = vadd.f32 %v6344, 3.0
      %v6387 = vadd.f32 %v6347, 3.0
      %v6388 = vadd.f32 %v6349, 3.0
      %v6389 = vadd.f32 %v6352, 3.0
      %v6390 = vadd.f32 %v6354, 3.0
      %v6391 = vadd.f32 %v6357, 3.0
      %v6392 = vadd.f32 %v6359, 3.0
      %v6393 = vmax.f32 %v6361, 0.0
      %v6394 = vmax.f32 %v6362, 0.0
      %v6395 = vmax.f32 %v6363, 0.0
      %v6396 = vmax.f32 %v6364, 0.0
      %v6397 = vmax.f32 %v6365, 0.0
      %v6398 = vmax.f32 %v6366, 0.0
      %v6399 = vmax.f32 %v6367, 0.0
      %v6400 = vmax.f32 %v6368, 0.0
      %v6401 = vmax.f32 %v6369, 0.0
      %v6402 = vmax.f32 %v6370, 0.0
      %v6403 = vmax.f32 %v6371, 0.0
      %v6404 = vmax.f32 %v6372, 0.0
      %v6405 = vmax.f32 %v6373, 0.0
      %v6406 = vmax.f32 %v6374, 0.0
      %v6407 = vmax.f32 %v6375, 0.0
      %v6408 = vmax.f32 %v6376, 0.0
      %v6409 = vmax.f32 %v6377, 0.0
      %v6410 = vmax.f32 %v6378, 0.0
      %v6411 = vmax.f32 %v6379, 0.0
      %v6412 = vmax.f32 %v6380, 0.0
      %v6413 = vmax.f32 %v6381, 0.0
      %v6414 = vmax.f32 %v6382, 0.0
      %v6415 = vmax.f32 %v6383, 0.0
      %v6416 = vmax.f32 %v6384, 0.0
      %v6417 = vmax.f32 %v6385, 0.0
      %v6418 = vmax.f32 %v6386, 0.0
      %v6419 = vmax.f32 %v6387, 0.0
      %v6420 = vmax.f32 %v6388, 0.0
      %v6421 = vmax.f32 %v6389, 0.0
      %v6422 = vmax.f32 %v6390, 0.0
      %v6423 = vmax.f32 %v6391, 0.0
      %v6424 = vmax.f32 %v6392, 0.0
      %v6425 = vmin.f32 %v6393, 6.0
      %v6426 = vmin.f32 %v6394, 6.0
      %v6427 = vmin.f32 %v6395, 6.0
      %v6428 = vmin.f32 %v6396, 6.0
      %v6429 = vmin.f32 %v6397, 6.0
      %v6430 = vmin.f32 %v6398, 6.0
      %v6431 = vmin.f32 %v6399, 6.0
      %v6432 = vmin.f32 %v6400, 6.0
      %v6433 = vmin.f32 %v6401, 6.0
      %v6434 = vmin.f32 %v6402, 6.0
      %v6435 = vmin.f32 %v6403, 6.0
      %v6436 = vmin.f32 %v6404, 6.0
      %v6437 = vmin.f32 %v6405, 6.0
      %v6438 = vmin.f32 %v6406, 6.0
      %v6439 = vmin.f32 %v6407, 6.0
      %v6440 = vmin.f32 %v6408, 6.0
      %v6441 = vmin.f32 %v6409, 6.0
      %v6442 = vmin.f32 %v6410, 6.0
      %v6443 = vmin.f32 %v6411, 6.0
      %v6444 = vmin.f32 %v6412, 6.0
      %v6445 = vmin.f32 %v6413, 6.0
      %v6446 = vmin.f32 %v6414, 6.0
      %v6447 = vmin.f32 %v6415, 6.0
      %v6448 = vmin.f32 %v6416, 6.0
      %v6449 = vmin.f32 %v6417, 6.0
      %v6450 = vmin.f32 %v6418, 6.0
      %v6451 = vmin.f32 %v6419, 6.0
      %v6452 = vmin.f32 %v6420, 6.0
      %v6453 = vmin.f32 %v6421, 6.0
      %v6454 = vmin.f32 %v6422, 6.0
      %v6455 = vmin.f32 %v6423, 6.0
      %v6456 = vmin.f32 %v6424, 6.0
      %v6457 = vmul.f32 %v6282, %v6425
      %v6458 = vmul.f32 %v6284, %v6426
      %v6459 = vmul.f32 %v6287, %v6427
      %v6460 = vmul.f32 %v6289, %v6428
      %v6461 = vmul.f32 %v6292, %v6429
      %v6462 = vmul.f32 %v6294, %v6430
      %v6463 = vmul.f32 %v6297, %v6431
      %v6464 = vmul.f32 %v6299, %v6432
      %v6465 = vmul.f32 %v6302, %v6433
      %v6466 = vmul.f32 %v6304, %v6434
      %v6467 = vmul.f32 %v6307, %v6435
      %v6468 = vmul.f32 %v6309, %v6436
      %v6469 = vmul.f32 %v6312, %v6437
      %v6470 = vmul.f32 %v6314, %v6438
      %v6471 = vmul.f32 %v6317, %v6439
      %v6472 = vmul.f32 %v6319, %v6440
      %v6473 = vmul.f32 %v6322, %v6441
      %v6474 = vmul.f32 %v6324, %v6442
      %v6475 = vmul.f32 %v6327, %v6443
      %v6476 = vmul.f32 %v6329, %v6444
      %v6477 = vmul.f32 %v6332, %v6445
      %v6478 = vmul.f32 %v6334, %v6446
      %v6479 = vmul.f32 %v6337, %v6447
      %v6480 = vmul.f32 %v6339, %v6448
      %v6481 = vmul.f32 %v6342, %v6449
      %v6482 = vmul.f32 %v6344, %v6450
      %v6483 = vmul.f32 %v6347, %v6451
      %v6484 = vmul.f32 %v6349, %v6452
      %v6485 = vmul.f32 %v6352, %v6453
      %v6486 = vmul.f32 %v6354, %v6454
      %v6487 = vmul.f32 %v6357, %v6455
      %v6488 = vmul.f32 %v6359, %v6456
      %v6489 = vmul.f32 %v6457, 0.16666667
      %v6490 = vmul.f32 %v6458, 0.16666667
      %v6491 = vmul.f32 %v6459, 0.16666667
      %v6492 = vmul.f32 %v6460, 0.16666667
      %v6493 = vmul.f32 %v6461, 0.16666667
      %v6494 = vmul.f32 %v6462, 0.16666667
      %v6495 = vmul.f32 %v6463, 0.16666667
      %v6496 = vmul.f32 %v6464, 0.16666667
      %v6497 = vmul.f32 %v6465, 0.16666667
      %v6498 = vmul.f32 %v6466, 0.16666667
      %v6499 = vmul.f32 %v6467, 0.16666667
      %v6500 = vmul.f32 %v6468, 0.16666667
      %v6501 = vmul.f32 %v6469, 0.16666667
      %v6502 = vmul.f32 %v6470, 0.16666667
      %v6503 = vmul.f32 %v6471, 0.16666667
      %v6504 = vmul.f32 %v6472, 0.16666667
      %v6505 = vmul.f32 %v6473, 0.16666667
      %v6506 = vmul.f32 %v6474, 0.16666667
      %v6507 = vmul.f32 %v6475, 0.16666667
      %v6508 = vmul.f32 %v6476, 0.16666667
      %v6509 = vmul.f32 %v6477, 0.16666667
      %v6510 = vmul.f32 %v6478, 0.16666667
      %v6511 = vmul.f32 %v6479, 0.16666667
      %v6512 = vmul.f32 %v6480, 0.16666667
      %v6513 = vmul.f32 %v6481, 0.16666667
      %v6514 = vmul.f32 %v6482, 0.16666667
      %v6515 = vmul.f32 %v6483, 0.16666667
      %v6516 = vmul.f32 %v6484, 0.16666667
      %v6517 = vmul.f32 %v6485, 0.16666667
      %v6518 = vmul.f32 %v6486, 0.16666667
      %v6519 = vmul.f32 %v6487, 0.16666667
      %v6520 = vmul.f32 %v6488, 0.16666667
      %vm6521 = vcmask 523264
      %6522 = vst.msk [vmem:[#allocation2] sm:$0xff] %vm6521, 0.0
      %6523 = vst.msk [vmem:[#allocation2 + $0x8] sm:$0xff] %vm6521, 0.0
      %6524 = vst.msk [vmem:[#allocation2 + $0x10] sm:$0xff] %vm6521, 0.0
      %vm6525 = vcmask 516096
      %6526 = vst.msk [vmem:[#allocation2 + $0x18] sm:$0x1] %vm6525, 0.0
      %6527 = vst.msk [vmem:[#allocation2 + $0x20] sm:$0xff] %vm6521, 0.0
      %6528 = vst.msk [vmem:[#allocation2 + $0x28] sm:$0xff] %vm6521, 0.0
      %6529 = vst.msk [vmem:[#allocation2 + $0x30] sm:$0xff] %vm6521, 0.0
      %6530 = vst.msk [vmem:[#allocation2 + $0x38] sm:$0x1] %vm6525, 0.0
      %6531 = vst.msk [vmem:[#allocation2 + $0x40] sm:$0xff] %vm6521, 0.0
      %6532 = vst.msk [vmem:[#allocation2 + $0x48] sm:$0xff] %vm6521, 0.0
      %6533 = vst.msk [vmem:[#allocation2 + $0x50] sm:$0xff] %vm6521, 0.0
      %6534 = vst.msk [vmem:[#allocation2 + $0x58] sm:$0x1] %vm6525, 0.0
      %6535 = vst.msk [vmem:[#allocation2 + $0x60] sm:$0xff] %vm6521, 0.0
      %6536 = vst.msk [vmem:[#allocation2 + $0x68] sm:$0xff] %vm6521, 0.0
      %6537 = vst.msk [vmem:[#allocation2 + $0x70] sm:$0xff] %vm6521, 0.0
      %6538 = vst.msk [vmem:[#allocation2 + $0x78] sm:$0x1] %vm6525, 0.0
      %6539 = vst.msk [vmem:[#allocation2 + $0x80] sm:$0xff] %vm6521, 0.0
      %6540 = vst.msk [vmem:[#allocation2 + $0x88] sm:$0xff] %vm6521, 0.0
      %6541 = vst.msk [vmem:[#allocation2 + $0x90] sm:$0xff] %vm6521, 0.0
      %6542 = vst.msk [vmem:[#allocation2 + $0x98] sm:$0x1] %vm6525, 0.0
      %6543 = vst.msk [vmem:[#allocation2 + $0xa0] sm:$0xff] %vm6521, 0.0
      %6544 = vst.msk [vmem:[#allocation2 + $0xa8] sm:$0xff] %vm6521, 0.0
      %6545 = vst.msk [vmem:[#allocation2 + $0xb0] sm:$0xff] %vm6521, 0.0
      %6546 = vst.msk [vmem:[#allocation2 + $0xb8] sm:$0x1] %vm6525, 0.0
      %6547 = vst.msk [vmem:[#allocation2 + $0xc0] sm:$0xff] %vm6521, 0.0
      %6548 = vst.msk [vmem:[#allocation2 + $0xc8] sm:$0xff] %vm6521, 0.0
      %6549 = vst.msk [vmem:[#allocation2 + $0xd0] sm:$0xff] %vm6521, 0.0
      %6550 = vst.msk [vmem:[#allocation2 + $0xd8] sm:$0x1] %vm6525, 0.0
      %6551 = vst.msk [vmem:[#allocation2 + $0xe0] sm:$0xff] %vm6521, 0.0
      %6552 = vst.msk [vmem:[#allocation2 + $0xe8] sm:$0xff] %vm6521, 0.0
      %6553 = vst.msk [vmem:[#allocation2 + $0xf0] sm:$0xff] %vm6521, 0.0
      %6554 = vst.msk [vmem:[#allocation2 + $0xf8] sm:$0x1] %vm6525, 0.0
      %6555 = vst.msk [vmem:[#allocation2 + $0x100] sm:$0xff] %vm6521, 0.0
      %6556 = vst.msk [vmem:[#allocation2 + $0x108] sm:$0xff] %vm6521, 0.0
      %6557 = vst.msk [vmem:[#allocation2 + $0x110] sm:$0xff] %vm6521, 0.0
      %6558 = vst.msk [vmem:[#allocation2 + $0x118] sm:$0x1] %vm6525, 0.0
      %6559 = vst.msk [vmem:[#allocation2 + $0x120] sm:$0xff] %vm6521, 0.0
      %6560 = vst.msk [vmem:[#allocation2 + $0x128] sm:$0xff] %vm6521, 0.0
      %6561 = vst.msk [vmem:[#allocation2 + $0x130] sm:$0xff] %vm6521, 0.0
      %6562 = vst.msk [vmem:[#allocation2 + $0x138] sm:$0x1] %vm6525, 0.0
      %6563 = vst.msk [vmem:[#allocation2 + $0x140] sm:$0xff] %vm6521, 0.0
      %6564 = vst.msk [vmem:[#allocation2 + $0x148] sm:$0xff] %vm6521, 0.0
      %6565 = vst.msk [vmem:[#allocation2 + $0x150] sm:$0xff] %vm6521, 0.0
      %6566 = vst.msk [vmem:[#allocation2 + $0x158] sm:$0x1] %vm6525, 0.0
      %6567 = vst.msk [vmem:[#allocation2 + $0x160] sm:$0xff] %vm6521, 0.0
      %6568 = vst.msk [vmem:[#allocation2 + $0x168] sm:$0xff] %vm6521, 0.0
      %6569 = vst.msk [vmem:[#allocation2 + $0x170] sm:$0xff] %vm6521, 0.0
      %6570 = vst.msk [vmem:[#allocation2 + $0x178] sm:$0x1] %vm6525, 0.0
      %6571 = vst.msk [vmem:[#allocation2 + $0x180] sm:$0xff] %vm6521, 0.0
      %6572 = vst.msk [vmem:[#allocation2 + $0x188] sm:$0xff] %vm6521, 0.0
      %6573 = vst.msk [vmem:[#allocation2 + $0x190] sm:$0xff] %vm6521, 0.0
      %6574 = vst.msk [vmem:[#allocation2 + $0x198] sm:$0x1] %vm6525, 0.0
      %6575 = vst.msk [vmem:[#allocation2 + $0x1a0] sm:$0xff] %vm6521, 0.0
      %6576 = vst.msk [vmem:[#allocation2 + $0x1a8] sm:$0xff] %vm6521, 0.0
      %6577 = vst.msk [vmem:[#allocation2 + $0x1b0] sm:$0xff] %vm6521, 0.0
      %6578 = vst.msk [vmem:[#allocation2 + $0x1b8] sm:$0x1] %vm6525, 0.0
      %6579 = vst.msk [vmem:[#allocation2 + $0x1c0] sm:$0xff] %vm6521, 0.0
      %6580 = vst.msk [vmem:[#allocation2 + $0x1c8] sm:$0xff] %vm6521, 0.0
      %6581 = vst.msk [vmem:[#allocation2 + $0x1d0] sm:$0xff] %vm6521, 0.0
      %6582 = vst.msk [vmem:[#allocation2 + $0x1d8] sm:$0x1] %vm6525, 0.0
      %6583 = vst.msk [vmem:[#allocation2 + $0x1e0] sm:$0xff] %vm6521, 0.0
      %6584 = vst.msk [vmem:[#allocation2 + $0x1e8] sm:$0xff] %vm6521, 0.0
      %6585 = vst.msk [vmem:[#allocation2 + $0x1f0] sm:$0xff] %vm6521, 0.0
      %6586 = vst.msk [vmem:[#allocation2 + $0x1f8] sm:$0x1] %vm6525, 0.0
      %6587 = vst.msk [vmem:[#allocation2 + $0x200] sm:$0xff] %vm6521, 0.0
      %6588 = vst.msk [vmem:[#allocation2 + $0x208] sm:$0xff] %vm6521, 0.0
      %6589 = vst.msk [vmem:[#allocation2 + $0x210] sm:$0xff] %vm6521, 0.0
      %6590 = vst.msk [vmem:[#allocation2 + $0x218] sm:$0x1] %vm6525, 0.0
      %6591 = vst.msk [vmem:[#allocation2 + $0x220] sm:$0xff] %vm6521, 0.0
      %6592 = vst.msk [vmem:[#allocation2 + $0x228] sm:$0xff] %vm6521, 0.0
      %6593 = vst.msk [vmem:[#allocation2 + $0x230] sm:$0xff] %vm6521, 0.0
      %6594 = vst.msk [vmem:[#allocation2 + $0x238] sm:$0x1] %vm6525, 0.0
      %s6595 = scalar_lea.vmem [#allocation2], 32
      %6596 = vst.msk [vmem:[%s6595 + $0x8] sm:$0xff] %vm6521, %v6489
      %6597 = vst.msk [vmem:[%s6595 + $0x10] sm:$0xff] %vm6521, %v6490
      %6598 = vst.msk [vmem:[%s6595 + $0x28] sm:$0xff] %vm6521, %v6491
      %6599 = vst.msk [vmem:[%s6595 + $0x30] sm:$0xff] %vm6521, %v6492
      %6600 = vst.msk [vmem:[%s6595 + $0x48] sm:$0xff] %vm6521, %v6493
      %6601 = vst.msk [vmem:[%s6595 + $0x50] sm:$0xff] %vm6521, %v6494
      %6602 = vst.msk [vmem:[%s6595 + $0x68] sm:$0xff] %vm6521, %v6495
      %6603 = vst.msk [vmem:[%s6595 + $0x70] sm:$0xff] %vm6521, %v6496
      %6604 = vst.msk [vmem:[%s6595 + $0x88] sm:$0xff] %vm6521, %v6497
      %6605 = vst.msk [vmem:[%s6595 + $0x90] sm:$0xff] %vm6521, %v6498
      %6606 = vst.msk [vmem:[%s6595 + $0xa8] sm:$0xff] %vm6521, %v6499
      %6607 = vst.msk [vmem:[%s6595 + $0xb0] sm:$0xff] %vm6521, %v6500
      %6608 = vst.msk [vmem:[%s6595 + $0xc8] sm:$0xff] %vm6521, %v6501
      %6609 = vst.msk [vmem:[%s6595 + $0xd0] sm:$0xff] %vm6521, %v6502
      %6610 = vst.msk [vmem:[%s6595 + $0xe8] sm:$0xff] %vm6521, %v6503
      %6611 = vst.msk [vmem:[%s6595 + $0xf0] sm:$0xff] %vm6521, %v6504
      %6612 = vst.msk [vmem:[%s6595 + $0x108] sm:$0xff] %vm6521, %v6505
      %6613 = vst.msk [vmem:[%s6595 + $0x110] sm:$0xff] %vm6521, %v6506
      %6614 = vst.msk [vmem:[%s6595 + $0x128] sm:$0xff] %vm6521, %v6507
      %6615 = vst.msk [vmem:[%s6595 + $0x130] sm:$0xff] %vm6521, %v6508
      %6616 = vst.msk [vmem:[%s6595 + $0x148] sm:$0xff] %vm6521, %v6509
      %6617 = vst.msk [vmem:[%s6595 + $0x150] sm:$0xff] %vm6521, %v6510
      %6618 = vst.msk [vmem:[%s6595 + $0x168] sm:$0xff] %vm6521, %v6511
      %6619 = vst.msk [vmem:[%s6595 + $0x170] sm:$0xff] %vm6521, %v6512
      %6620 = vst.msk [vmem:[%s6595 + $0x188] sm:$0xff] %vm6521, %v6513
      %6621 = vst.msk [vmem:[%s6595 + $0x190] sm:$0xff] %vm6521, %v6514
      %6622 = vst.msk [vmem:[%s6595 + $0x1a8] sm:$0xff] %vm6521, %v6515
      %6623 = vst.msk [vmem:[%s6595 + $0x1b0] sm:$0xff] %vm6521, %v6516
      %6624 = vst.msk [vmem:[%s6595 + $0x1c8] sm:$0xff] %vm6521, %v6517
      %6625 = vst.msk [vmem:[%s6595 + $0x1d0] sm:$0xff] %vm6521, %v6518
      %6626 = vst.msk [vmem:[%s6595 + $0x1e8] sm:$0xff] %vm6521, %v6519
      %6627 = vst.msk [vmem:[%s6595 + $0x1f0] sm:$0xff] %vm6521, %v6520
      %v6628 = vld [vmem:[#allocation2 + $0x7] sm:$0xff]
      %v6629 = vld [vmem:[#allocation2 + $0xf] sm:$0xff]
      %v6630 = vld [vmem:[#allocation2 + $0x27] sm:$0xff]
      %v6631 = vld [vmem:[#allocation2 + $0x2f] sm:$0xff]
      %v6632 = vld [vmem:[#allocation2 + $0x47] sm:$0xff]
      %v6633 = vld [vmem:[#allocation2 + $0x4f] sm:$0xff]
      %v6634 = vld [vmem:[#allocation2 + $0x67] sm:$0xff]
      %v6635 = vld [vmem:[#allocation2 + $0x6f] sm:$0xff]
      %v6636 = vld [vmem:[#allocation2 + $0x87] sm:$0xff]
      %v6637 = vld [vmem:[#allocation2 + $0x8f] sm:$0xff]
      %v6638 = vld [vmem:[#allocation2 + $0xa7] sm:$0xff]
      %v6639 = vld [vmem:[#allocation2 + $0xaf] sm:$0xff]
      %v6640 = vld [vmem:[#allocation2 + $0xc7] sm:$0xff]
      %v6641 = vld [vmem:[#allocation2 + $0xcf] sm:$0xff]
      %v6642 = vld [vmem:[#allocation2 + $0xe7] sm:$0xff]
      %v6643 = vld [vmem:[#allocation2 + $0xef] sm:$0xff]
      %v6644 = vld [vmem:[#allocation2 + $0x107] sm:$0xff]
      %v6645 = vld [vmem:[#allocation2 + $0x10f] sm:$0xff]
      %v6646 = vld [vmem:[#allocation2 + $0x127] sm:$0xff]
      %v6647 = vld [vmem:[#allocation2 + $0x12f] sm:$0xff]
      %v6648 = vld [vmem:[#allocation2 + $0x147] sm:$0xff]
      %v6649 = vld [vmem:[#allocation2 + $0x14f] sm:$0xff]
      %v6650 = vld [vmem:[#allocation2 + $0x167] sm:$0xff]
      %v6651 = vld [vmem:[#allocation2 + $0x16f] sm:$0xff]
      %v6652 = vld [vmem:[#allocation2 + $0x187] sm:$0xff]
      %v6653 = vld [vmem:[#allocation2 + $0x18f] sm:$0xff]
      %v6654 = vld [vmem:[#allocation2 + $0x1a7] sm:$0xff]
      %v6655 = vld [vmem:[#allocation2 + $0x1af] sm:$0xff]
      %v6656 = vld [vmem:[#allocation2 + $0x1c7] sm:$0xff]
      %v6657 = vld [vmem:[#allocation2 + $0x1cf] sm:$0xff]
      %v6658 = vld [vmem:[#allocation2 + $0x1e7] sm:$0xff]
      %v6659 = vld [vmem:[#allocation2 + $0x1ef] sm:$0xff]
      %v6660 = vld [vmem:[#allocation2 + $0x207] sm:$0xff]
      %v6661 = vld [vmem:[#allocation2 + $0x20f] sm:$0xff]
      %v6662 = vld [vmem:[#allocation2 + $0x227] sm:$0xff]
      %v6663 = vld [vmem:[#allocation2 + $0x22f] sm:$0xff]
      %v6664 = vld [vmem:[%s5] sm:$0x1]
      %v6665 = vperm.slane %v6664, 0
      %v6666 = vmul.f32 %v6628, %v6665
      %v6667 = vmul.f32 %v6629, %v6665
      %v6668 = vmul.f32 %v6630, %v6665
      %v6669 = vmul.f32 %v6631, %v6665
      %v6670 = vmul.f32 %v6632, %v6665
      %v6671 = vmul.f32 %v6633, %v6665
      %v6672 = vmul.f32 %v6634, %v6665
      %v6673 = vmul.f32 %v6635, %v6665
      %v6674 = vmul.f32 %v6636, %v6665
      %v6675 = vmul.f32 %v6637, %v6665
      %v6676 = vmul.f32 %v6638, %v6665
      %v6677 = vmul.f32 %v6639, %v6665
      %v6678 = vmul.f32 %v6640, %v6665
      %v6679 = vmul.f32 %v6641, %v6665
      %v6680 = vmul.f32 %v6642, %v6665
      %v6681 = vmul.f32 %v6643, %v6665
      %v6682 = vmul.f32 %v6644, %v6665
      %v6683 = vmul.f32 %v6645, %v6665
      %v6684 = vmul.f32 %v6646, %v6665
      %v6685 = vmul.f32 %v6647, %v6665
      %v6686 = vmul.f32 %v6648, %v6665
      %v6687 = vmul.f32 %v6649, %v6665
      %v6688 = vmul.f32 %v6650, %v6665
      %v6689 = vmul.f32 %v6651, %v6665
      %v6690 = vmul.f32 %v6652, %v6665
      %v6691 = vmul.f32 %v6653, %v6665
      %v6692 = vmul.f32 %v6654, %v6665
      %v6693 = vmul.f32 %v6655, %v6665
      %v6694 = vmul.f32 %v6656, %v6665
      %v6695 = vmul.f32 %v6657, %v6665
      %v6696 = vmul.f32 %v6658, %v6665
      %v6697 = vmul.f32 %v6659, %v6665
      %v6698 = vadd.f32 %v6666, 0.0
      %v6699 = vadd.f32 %v6667, 0.0
      %v6700 = vadd.f32 %v6668, 0.0
      %v6701 = vadd.f32 %v6669, 0.0
      %v6702 = vadd.f32 %v6670, 0.0
      %v6703 = vadd.f32 %v6671, 0.0
      %v6704 = vadd.f32 %v6672, 0.0
      %v6705 = vadd.f32 %v6673, 0.0
      %v6706 = vadd.f32 %v6674, 0.0
      %v6707 = vadd.f32 %v6675, 0.0
      %v6708 = vadd.f32 %v6676, 0.0
      %v6709 = vadd.f32 %v6677, 0.0
      %v6710 = vadd.f32 %v6678, 0.0
      %v6711 = vadd.f32 %v6679, 0.0
      %v6712 = vadd.f32 %v6680, 0.0
      %v6713 = vadd.f32 %v6681, 0.0
      %v6714 = vadd.f32 %v6682, 0.0
      %v6715 = vadd.f32 %v6683, 0.0
      %v6716 = vadd.f32 %v6684, 0.0
      %v6717 = vadd.f32 %v6685, 0.0
      %v6718 = vadd.f32 %v6686, 0.0
      %v6719 = vadd.f32 %v6687, 0.0
      %v6720 = vadd.f32 %v6688, 0.0
      %v6721 = vadd.f32 %v6689, 0.0
      %v6722 = vadd.f32 %v6690, 0.0
      %v6723 = vadd.f32 %v6691, 0.0
      %v6724 = vadd.f32 %v6692, 0.0
      %v6725 = vadd.f32 %v6693, 0.0
      %v6726 = vadd.f32 %v6694, 0.0
      %v6727 = vadd.f32 %v6695, 0.0
      %v6728 = vadd.f32 %v6696, 0.0
      %v6729 = vadd.f32 %v6697, 0.0
      %v6730 = vld [vmem:[%s5 + $0x3] sm:$0x1]
      %v6731 = vperm.slane %v6730, 0
      %v6732 = vmul.f32 %v6630, %v6731
      %v6733 = vmul.f32 %v6631, %v6731
      %v6734 = vmul.f32 %v6632, %v6731
      %v6735 = vmul.f32 %v6633, %v6731
      %v6736 = vmul.f32 %v6634, %v6731
      %v6737 = vmul.f32 %v6635, %v6731
      %v6738 = vmul.f32 %v6636, %v6731
      %v6739 = vmul.f32 %v6637, %v6731
      %v6740 = vmul.f32 %v6638, %v6731
      %v6741 = vmul.f32 %v6639, %v6731
      %v6742 = vmul.f32 %v6640, %v6731
      %v6743 = vmul.f32 %v6641, %v6731
      %v6744 = vmul.f32 %v6642, %v6731
      %v6745 = vmul.f32 %v6643, %v6731
      %v6746 = vmul.f32 %v6644, %v6731
      %v6747 = vmul.f32 %v6645, %v6731
      %v6748 = vmul.f32 %v6646, %v6731
      %v6749 = vmul.f32 %v6647, %v6731
      %v6750 = vmul.f32 %v6648, %v6731
      %v6751 = vmul.f32 %v6649, %v6731
      %v6752 = vmul.f32 %v6650, %v6731
      %v6753 = vmul.f32 %v6651, %v6731
      %v6754 = vmul.f32 %v6652, %v6731
      %v6755 = vmul.f32 %v6653, %v6731
      %v6756 = vmul.f32 %v6654, %v6731
      %v6757 = vmul.f32 %v6655, %v6731
      %v6758 = vmul.f32 %v6656, %v6731
      %v6759 = vmul.f32 %v6657, %v6731
      %v6760 = vmul.f32 %v6658, %v6731
      %v6761 = vmul.f32 %v6659, %v6731
      %v6762 = vmul.f32 %v6660, %v6731
      %v6763 = vmul.f32 %v6661, %v6731
      %v6764 = vadd.f32 %v6698, %v6732
      %v6765 = vadd.f32 %v6699, %v6733
      %v6766 = vadd.f32 %v6700, %v6734
      %v6767 = vadd.f32 %v6701, %v6735
      %v6768 = vadd.f32 %v6702, %v6736
      %v6769 = vadd.f32 %v6703, %v6737
      %v6770 = vadd.f32 %v6704, %v6738
      %v6771 = vadd.f32 %v6705, %v6739
      %v6772 = vadd.f32 %v6706, %v6740
      %v6773 = vadd.f32 %v6707, %v6741
      %v6774 = vadd.f32 %v6708, %v6742
      %v6775 = vadd.f32 %v6709, %v6743
      %v6776 = vadd.f32 %v6710, %v6744
      %v6777 = vadd.f32 %v6711, %v6745
      %v6778 = vadd.f32 %v6712, %v6746
      %v6779 = vadd.f32 %v6713, %v6747
      %v6780 = vadd.f32 %v6714, %v6748
      %v6781 = vadd.f32 %v6715, %v6749
      %v6782 = vadd.f32 %v6716, %v6750
      %v6783 = vadd.f32 %v6717, %v6751
      %v6784 = vadd.f32 %v6718, %v6752
      %v6785 = vadd.f32 %v6719, %v6753
      %v6786 = vadd.f32 %v6720, %v6754
      %v6787 = vadd.f32 %v6721, %v6755
      %v6788 = vadd.f32 %v6722, %v6756
      %v6789 = vadd.f32 %v6723, %v6757
      %v6790 = vadd.f32 %v6724, %v6758
      %v6791 = vadd.f32 %v6725, %v6759
      %v6792 = vadd.f32 %v6726, %v6760
      %v6793 = vadd.f32 %v6727, %v6761
      %v6794 = vadd.f32 %v6728, %v6762
      %v6795 = vadd.f32 %v6729, %v6763
      %v6796 = vld [vmem:[%s5 + $0x6] sm:$0x1]
      %v6797 = vperm.slane %v6796, 0
      %v6798 = vmul.f32 %v6632, %v6797
      %v6799 = vmul.f32 %v6633, %v6797
      %v6800 = vmul.f32 %v6634, %v6797
      %v6801 = vmul.f32 %v6635, %v6797
      %v6802 = vmul.f32 %v6636, %v6797
      %v6803 = vmul.f32 %v6637, %v6797
      %v6804 = vmul.f32 %v6638, %v6797
      %v6805 = vmul.f32 %v6639, %v6797
      %v6806 = vmul.f32 %v6640, %v6797
      %v6807 = vmul.f32 %v6641, %v6797
      %v6808 = vmul.f32 %v6642, %v6797
      %v6809 = vmul.f32 %v6643, %v6797
      %v6810 = vmul.f32 %v6644, %v6797
      %v6811 = vmul.f32 %v6645, %v6797
      %v6812 = vmul.f32 %v6646, %v6797
      %v6813 = vmul.f32 %v6647, %v6797
      %v6814 = vmul.f32 %v6648, %v6797
      %v6815 = vmul.f32 %v6649, %v6797
      %v6816 = vmul.f32 %v6650, %v6797
      %v6817 = vmul.f32 %v6651, %v6797
      %v6818 = vmul.f32 %v6652, %v6797
      %v6819 = vmul.f32 %v6653, %v6797
      %v6820 = vmul.f32 %v6654, %v6797
      %v6821 = vmul.f32 %v6655, %v6797
      %v6822 = vmul.f32 %v6656, %v6797
      %v6823 = vmul.f32 %v6657, %v6797
      %v6824 = vmul.f32 %v6658, %v6797
      %v6825 = vmul.f32 %v6659, %v6797
      %v6826 = vmul.f32 %v6660, %v6797
      %v6827 = vmul.f32 %v6661, %v6797
      %v6828 = vmul.f32 %v6662, %v6797
      %v6829 = vmul.f32 %v6663, %v6797
      %v6830 = vadd.f32 %v6764, %v6798
      %v6831 = vadd.f32 %v6765, %v6799
      %v6832 = vadd.f32 %v6766, %v6800
      %v6833 = vadd.f32 %v6767, %v6801
      %v6834 = vadd.f32 %v6768, %v6802
      %v6835 = vadd.f32 %v6769, %v6803
      %v6836 = vadd.f32 %v6770, %v6804
      %v6837 = vadd.f32 %v6771, %v6805
      %v6838 = vadd.f32 %v6772, %v6806
      %v6839 = vadd.f32 %v6773, %v6807
      %v6840 = vadd.f32 %v6774, %v6808
      %v6841 = vadd.f32 %v6775, %v6809
      %v6842 = vadd.f32 %v6776, %v6810
      %v6843 = vadd.f32 %v6777, %v6811
      %v6844 = vadd.f32 %v6778, %v6812
      %v6845 = vadd.f32 %v6779, %v6813
      %v6846 = vadd.f32 %v6780, %v6814
      %v6847 = vadd.f32 %v6781, %v6815
      %v6848 = vadd.f32 %v6782, %v6816
      %v6849 = vadd.f32 %v6783, %v6817
      %v6850 = vadd.f32 %v6784, %v6818
      %v6851 = vadd.f32 %v6785, %v6819
      %v6852 = vadd.f32 %v6786, %v6820
      %v6853 = vadd.f32 %v6787, %v6821
      %v6854 = vadd.f32 %v6788, %v6822
      %v6855 = vadd.f32 %v6789, %v6823
      %v6856 = vadd.f32 %v6790, %v6824
      %v6857 = vadd.f32 %v6791, %v6825
      %v6858 = vadd.f32 %v6792, %v6826
      %v6859 = vadd.f32 %v6793, %v6827
      %v6860 = vadd.f32 %v6794, %v6828
      %v6861 = vadd.f32 %v6795, %v6829
      %v6862 = vld [vmem:[#allocation2 + $0x8] sm:$0xff]
      %v6863 = vld [vmem:[#allocation2 + $0x10] sm:$0xff]
      %v6864 = vld [vmem:[#allocation2 + $0x28] sm:$0xff]
      %v6865 = vld [vmem:[#allocation2 + $0x30] sm:$0xff]
      %v6866 = vld [vmem:[#allocation2 + $0x48] sm:$0xff]
      %v6867 = vld [vmem:[#allocation2 + $0x50] sm:$0xff]
      %v6868 = vld [vmem:[#allocation2 + $0x68] sm:$0xff]
      %v6869 = vld [vmem:[#allocation2 + $0x70] sm:$0xff]
      %v6870 = vld [vmem:[#allocation2 + $0x88] sm:$0xff]
      %v6871 = vld [vmem:[#allocation2 + $0x90] sm:$0xff]
      %v6872 = vld [vmem:[#allocation2 + $0xa8] sm:$0xff]
      %v6873 = vld [vmem:[#allocation2 + $0xb0] sm:$0xff]
      %v6874 = vld [vmem:[#allocation2 + $0xc8] sm:$0xff]
      %v6875 = vld [vmem:[#allocation2 + $0xd0] sm:$0xff]
      %v6876 = vld [vmem:[#allocation2 + $0xe8] sm:$0xff]
      %v6877 = vld [vmem:[#allocation2 + $0xf0] sm:$0xff]
      %v6878 = vld [vmem:[#allocation2 + $0x108] sm:$0xff]
      %v6879 = vld [vmem:[#allocation2 + $0x110] sm:$0xff]
      %v6880 = vld [vmem:[#allocation2 + $0x128] sm:$0xff]
      %v6881 = vld [vmem:[#allocation2 + $0x130] sm:$0xff]
      %v6882 = vld [vmem:[#allocation2 + $0x148] sm:$0xff]
      %v6883 = vld [vmem:[#allocation2 + $0x150] sm:$0xff]
      %v6884 = vld [vmem:[#allocation2 + $0x168] sm:$0xff]
      %v6885 = vld [vmem:[#allocation2 + $0x170] sm:$0xff]
      %v6886 = vld [vmem:[#allocation2 + $0x188] sm:$0xff]
      %v6887 = vld [vmem:[#allocation2 + $0x190] sm:$0xff]
      %v6888 = vld [vmem:[#allocation2 + $0x1a8] sm:$0xff]
      %v6889 = vld [vmem:[#allocation2 + $0x1b0] sm:$0xff]
      %v6890 = vld [vmem:[#allocation2 + $0x1c8] sm:$0xff]
      %v6891 = vld [vmem:[#allocation2 + $0x1d0] sm:$0xff]
      %v6892 = vld [vmem:[#allocation2 + $0x1e8] sm:$0xff]
      %v6893 = vld [vmem:[#allocation2 + $0x1f0] sm:$0xff]
      %v6894 = vld [vmem:[#allocation2 + $0x208] sm:$0xff]
      %v6895 = vld [vmem:[#allocation2 + $0x210] sm:$0xff]
      %v6896 = vld [vmem:[#allocation2 + $0x228] sm:$0xff]
      %v6897 = vld [vmem:[#allocation2 + $0x230] sm:$0xff]
      %v6898 = vld [vmem:[%s5 + $0x1] sm:$0x1]
      %v6899 = vperm.slane %v6898, 0
      %v6900 = vmul.f32 %v6862, %v6899
      %v6901 = vmul.f32 %v6863, %v6899
      %v6902 = vmul.f32 %v6864, %v6899
      %v6903 = vmul.f32 %v6865, %v6899
      %v6904 = vmul.f32 %v6866, %v6899
      %v6905 = vmul.f32 %v6867, %v6899
      %v6906 = vmul.f32 %v6868, %v6899
      %v6907 = vmul.f32 %v6869, %v6899
      %v6908 = vmul.f32 %v6870, %v6899
      %v6909 = vmul.f32 %v6871, %v6899
      %v6910 = vmul.f32 %v6872, %v6899
      %v6911 = vmul.f32 %v6873, %v6899
      %v6912 = vmul.f32 %v6874, %v6899
      %v6913 = vmul.f32 %v6875, %v6899
      %v6914 = vmul.f32 %v6876, %v6899
      %v6915 = vmul.f32 %v6877, %v6899
      %v6916 = vmul.f32 %v6878, %v6899
      %v6917 = vmul.f32 %v6879, %v6899
      %v6918 = vmul.f32 %v6880, %v6899
      %v6919 = vmul.f32 %v6881, %v6899
      %v6920 = vmul.f32 %v6882, %v6899
      %v6921 = vmul.f32 %v6883, %v6899
      %v6922 = vmul.f32 %v6884, %v6899
      %v6923 = vmul.f32 %v6885, %v6899
      %v6924 = vmul.f32 %v6886, %v6899
      %v6925 = vmul.f32 %v6887, %v6899
      %v6926 = vmul.f32 %v6888, %v6899
      %v6927 = vmul.f32 %v6889, %v6899
      %v6928 = vmul.f32 %v6890, %v6899
      %v6929 = vmul.f32 %v6891, %v6899
      %v6930 = vmul.f32 %v6892, %v6899
      %v6931 = vmul.f32 %v6893, %v6899
      %v6932 = vadd.f32 %v6830, %v6900
      %v6933 = vadd.f32 %v6831, %v6901
      %v6934 = vadd.f32 %v6832, %v6902
      %v6935 = vadd.f32 %v6833, %v6903
      %v6936 = vadd.f32 %v6834, %v6904
      %v6937 = vadd.f32 %v6835, %v6905
      %v6938 = vadd.f32 %v6836, %v6906
      %v6939 = vadd.f32 %v6837, %v6907
      %v6940 = vadd.f32 %v6838, %v6908
      %v6941 = vadd.f32 %v6839, %v6909
      %v6942 = vadd.f32 %v6840, %v6910
      %v6943 = vadd.f32 %v6841, %v6911
      %v6944 = vadd.f32 %v6842, %v6912
      %v6945 = vadd.f32 %v6843, %v6913
      %v6946 = vadd.f32 %v6844, %v6914
      %v6947 = vadd.f32 %v6845, %v6915
      %v6948 = vadd.f32 %v6846, %v6916
      %v6949 = vadd.f32 %v6847, %v6917
      %v6950 = vadd.f32 %v6848, %v6918
      %v6951 = vadd.f32 %v6849, %v6919
      %v6952 = vadd.f32 %v6850, %v6920
      %v6953 = vadd.f32 %v6851, %v6921
      %v6954 = vadd.f32 %v6852, %v6922
      %v6955 = vadd.f32 %v6853, %v6923
      %v6956 = vadd.f32 %v6854, %v6924
      %v6957 = vadd.f32 %v6855, %v6925
      %v6958 = vadd.f32 %v6856, %v6926
      %v6959 = vadd.f32 %v6857, %v6927
      %v6960 = vadd.f32 %v6858, %v6928
      %v6961 = vadd.f32 %v6859, %v6929
      %v6962 = vadd.f32 %v6860, %v6930
      %v6963 = vadd.f32 %v6861, %v6931
      %v6964 = vld [vmem:[%s5 + $0x4] sm:$0x1]
      %v6965 = vperm.slane %v6964, 0
      %v6966 = vmul.f32 %v6864, %v6965
      %v6967 = vmul.f32 %v6865, %v6965
      %v6968 = vmul.f32 %v6866, %v6965
      %v6969 = vmul.f32 %v6867, %v6965
      %v6970 = vmul.f32 %v6868, %v6965
      %v6971 = vmul.f32 %v6869, %v6965
      %v6972 = vmul.f32 %v6870, %v6965
      %v6973 = vmul.f32 %v6871, %v6965
      %v6974 = vmul.f32 %v6872, %v6965
      %v6975 = vmul.f32 %v6873, %v6965
      %v6976 = vmul.f32 %v6874, %v6965
      %v6977 = vmul.f32 %v6875, %v6965
      %v6978 = vmul.f32 %v6876, %v6965
      %v6979 = vmul.f32 %v6877, %v6965
      %v6980 = vmul.f32 %v6878, %v6965
      %v6981 = vmul.f32 %v6879, %v6965
      %v6982 = vmul.f32 %v6880, %v6965
      %v6983 = vmul.f32 %v6881, %v6965
      %v6984 = vmul.f32 %v6882, %v6965
      %v6985 = vmul.f32 %v6883, %v6965
      %v6986 = vmul.f32 %v6884, %v6965
      %v6987 = vmul.f32 %v6885, %v6965
      %v6988 = vmul.f32 %v6886, %v6965
      %v6989 = vmul.f32 %v6887, %v6965
      %v6990 = vmul.f32 %v6888, %v6965
      %v6991 = vmul.f32 %v6889, %v6965
      %v6992 = vmul.f32 %v6890, %v6965
      %v6993 = vmul.f32 %v6891, %v6965
      %v6994 = vmul.f32 %v6892, %v6965
      %v6995 = vmul.f32 %v6893, %v6965
      %v6996 = vmul.f32 %v6894, %v6965
      %v6997 = vmul.f32 %v6895, %v6965
      %v6998 = vadd.f32 %v6932, %v6966
      %v6999 = vadd.f32 %v6933, %v6967
      %v7000 = vadd.f32 %v6934, %v6968
      %v7001 = vadd.f32 %v6935, %v6969
      %v7002 = vadd.f32 %v6936, %v6970
      %v7003 = vadd.f32 %v6937, %v6971
      %v7004 = vadd.f32 %v6938, %v6972
      %v7005 = vadd.f32 %v6939, %v6973
      %v7006 = vadd.f32 %v6940, %v6974
      %v7007 = vadd.f32 %v6941, %v6975
      %v7008 = vadd.f32 %v6942, %v6976
      %v7009 = vadd.f32 %v6943, %v6977
      %v7010 = vadd.f32 %v6944, %v6978
      %v7011 = vadd.f32 %v6945, %v6979
      %v7012 = vadd.f32 %v6946, %v6980
      %v7013 = vadd.f32 %v6947, %v6981
      %v7014 = vadd.f32 %v6948, %v6982
      %v7015 = vadd.f32 %v6949, %v6983
      %v7016 = vadd.f32 %v6950, %v6984
      %v7017 = vadd.f32 %v6951, %v6985
      %v7018 = vadd.f32 %v6952, %v6986
      %v7019 = vadd.f32 %v6953, %v6987
      %v7020 = vadd.f32 %v6954, %v6988
      %v7021 = vadd.f32 %v6955, %v6989
      %v7022 = vadd.f32 %v6956, %v6990
      %v7023 = vadd.f32 %v6957, %v6991
      %v7024 = vadd.f32 %v6958, %v6992
      %v7025 = vadd.f32 %v6959, %v6993
      %v7026 = vadd.f32 %v6960, %v6994
      %v7027 = vadd.f32 %v6961, %v6995
      %v7028 = vadd.f32 %v6962, %v6996
      %v7029 = vadd.f32 %v6963, %v6997
      %v7030 = vld [vmem:[%s5 + $0x7] sm:$0x1]
      %v7031 = vperm.slane %v7030, 0
      %v7032 = vmul.f32 %v6866, %v7031
      %v7033 = vmul.f32 %v6867, %v7031
      %v7034 = vmul.f32 %v6868, %v7031
      %v7035 = vmul.f32 %v6869, %v7031
      %v7036 = vmul.f32 %v6870, %v7031
      %v7037 = vmul.f32 %v6871, %v7031
      %v7038 = vmul.f32 %v6872, %v7031
      %v7039 = vmul.f32 %v6873, %v7031
      %v7040 = vmul.f32 %v6874, %v7031
      %v7041 = vmul.f32 %v6875, %v7031
      %v7042 = vmul.f32 %v6876, %v7031
      %v7043 = vmul.f32 %v6877, %v7031
      %v7044 = vmul.f32 %v6878, %v7031
      %v7045 = vmul.f32 %v6879, %v7031
      %v7046 = vmul.f32 %v6880, %v7031
      %v7047 = vmul.f32 %v6881, %v7031
      %v7048 = vmul.f32 %v6882, %v7031
      %v7049 = vmul.f32 %v6883, %v7031
      %v7050 = vmul.f32 %v6884, %v7031
      %v7051 = vmul.f32 %v6885, %v7031
      %v7052 = vmul.f32 %v6886, %v7031
      %v7053 = vmul.f32 %v6887, %v7031
      %v7054 = vmul.f32 %v6888, %v7031
      %v7055 = vmul.f32 %v6889, %v7031
      %v7056 = vmul.f32 %v6890, %v7031
      %v7057 = vmul.f32 %v6891, %v7031
      %v7058 = vmul.f32 %v6892, %v7031
      %v7059 = vmul.f32 %v6893, %v7031
      %v7060 = vmul.f32 %v6894, %v7031
      %v7061 = vmul.f32 %v6895, %v7031
      %v7062 = vmul.f32 %v6896, %v7031
      %v7063 = vmul.f32 %v6897, %v7031
      %v7064 = vadd.f32 %v6998, %v7032
      %v7065 = vadd.f32 %v6999, %v7033
      %v7066 = vadd.f32 %v7000, %v7034
      %v7067 = vadd.f32 %v7001, %v7035
      %v7068 = vadd.f32 %v7002, %v7036
      %v7069 = vadd.f32 %v7003, %v7037
      %v7070 = vadd.f32 %v7004, %v7038
      %v7071 = vadd.f32 %v7005, %v7039
      %v7072 = vadd.f32 %v7006, %v7040
      %v7073 = vadd.f32 %v7007, %v7041
      %v7074 = vadd.f32 %v7008, %v7042
      %v7075 = vadd.f32 %v7009, %v7043
      %v7076 = vadd.f32 %v7010, %v7044
      %v7077 = vadd.f32 %v7011, %v7045
      %v7078 = vadd.f32 %v7012, %v7046
      %v7079 = vadd.f32 %v7013, %v7047
      %v7080 = vadd.f32 %v7014, %v7048
      %v7081 = vadd.f32 %v7015, %v7049
      %v7082 = vadd.f32 %v7016, %v7050
      %v7083 = vadd.f32 %v7017, %v7051
      %v7084 = vadd.f32 %v7018, %v7052
      %v7085 = vadd.f32 %v7019, %v7053
      %v7086 = vadd.f32 %v7020, %v7054
      %v7087 = vadd.f32 %v7021, %v7055
      %v7088 = vadd.f32 %v7022, %v7056
      %v7089 = vadd.f32 %v7023, %v7057
      %v7090 = vadd.f32 %v7024, %v7058
      %v7091 = vadd.f32 %v7025, %v7059
      %v7092 = vadd.f32 %v7026, %v7060
      %v7093 = vadd.f32 %v7027, %v7061
      %v7094 = vadd.f32 %v7028, %v7062
      %v7095 = vadd.f32 %v7029, %v7063
      %v7096 = vld [vmem:[#allocation2 + $0x9] sm:$0xff]
      %v7097 = vld [vmem:[#allocation2 + $0x11] sm:$0xff]
      %v7098 = vld [vmem:[#allocation2 + $0x29] sm:$0xff]
      %v7099 = vld [vmem:[#allocation2 + $0x31] sm:$0xff]
      %v7100 = vld [vmem:[#allocation2 + $0x49] sm:$0xff]
      %v7101 = vld [vmem:[#allocation2 + $0x51] sm:$0xff]
      %v7102 = vld [vmem:[#allocation2 + $0x69] sm:$0xff]
      %v7103 = vld [vmem:[#allocation2 + $0x71] sm:$0xff]
      %v7104 = vld [vmem:[#allocation2 + $0x89] sm:$0xff]
      %v7105 = vld [vmem:[#allocation2 + $0x91] sm:$0xff]
      %v7106 = vld [vmem:[#allocation2 + $0xa9] sm:$0xff]
      %v7107 = vld [vmem:[#allocation2 + $0xb1] sm:$0xff]
      %v7108 = vld [vmem:[#allocation2 + $0xc9] sm:$0xff]
      %v7109 = vld [vmem:[#allocation2 + $0xd1] sm:$0xff]
      %v7110 = vld [vmem:[#allocation2 + $0xe9] sm:$0xff]
      %v7111 = vld [vmem:[#allocation2 + $0xf1] sm:$0xff]
      %v7112 = vld [vmem:[#allocation2 + $0x109] sm:$0xff]
      %v7113 = vld [vmem:[#allocation2 + $0x111] sm:$0xff]
      %v7114 = vld [vmem:[#allocation2 + $0x129] sm:$0xff]
      %v7115 = vld [vmem:[#allocation2 + $0x131] sm:$0xff]
      %v7116 = vld [vmem:[#allocation2 + $0x149] sm:$0xff]
      %v7117 = vld [vmem:[#allocation2 + $0x151] sm:$0xff]
      %v7118 = vld [vmem:[#allocation2 + $0x169] sm:$0xff]
      %v7119 = vld [vmem:[#allocation2 + $0x171] sm:$0xff]
      %v7120 = vld [vmem:[#allocation2 + $0x189] sm:$0xff]
      %v7121 = vld [vmem:[#allocation2 + $0x191] sm:$0xff]
      %v7122 = vld [vmem:[#allocation2 + $0x1a9] sm:$0xff]
      %v7123 = vld [vmem:[#allocation2 + $0x1b1] sm:$0xff]
      %v7124 = vld [vmem:[#allocation2 + $0x1c9] sm:$0xff]
      %v7125 = vld [vmem:[#allocation2 + $0x1d1] sm:$0xff]
      %v7126 = vld [vmem:[#allocation2 + $0x1e9] sm:$0xff]
      %v7127 = vld [vmem:[#allocation2 + $0x1f1] sm:$0xff]
      %v7128 = vld [vmem:[#allocation2 + $0x209] sm:$0xff]
      %v7129 = vld [vmem:[#allocation2 + $0x211] sm:$0xff]
      %v7130 = vld [vmem:[#allocation2 + $0x229] sm:$0xff]
      %v7131 = vld [vmem:[#allocation2 + $0x231] sm:$0xff]
      %v7132 = vld [vmem:[%s5 + $0x2] sm:$0x1]
      %v7133 = vperm.slane %v7132, 0
      %v7134 = vmul.f32 %v7096, %v7133
      %v7135 = vmul.f32 %v7097, %v7133
      %v7136 = vmul.f32 %v7098, %v7133
      %v7137 = vmul.f32 %v7099, %v7133
      %v7138 = vmul.f32 %v7100, %v7133
      %v7139 = vmul.f32 %v7101, %v7133
      %v7140 = vmul.f32 %v7102, %v7133
      %v7141 = vmul.f32 %v7103, %v7133
      %v7142 = vmul.f32 %v7104, %v7133
      %v7143 = vmul.f32 %v7105, %v7133
      %v7144 = vmul.f32 %v7106, %v7133
      %v7145 = vmul.f32 %v7107, %v7133
      %v7146 = vmul.f32 %v7108, %v7133
      %v7147 = vmul.f32 %v7109, %v7133
      %v7148 = vmul.f32 %v7110, %v7133
      %v7149 = vmul.f32 %v7111, %v7133
      %v7150 = vmul.f32 %v7112, %v7133
      %v7151 = vmul.f32 %v7113, %v7133
      %v7152 = vmul.f32 %v7114, %v7133
      %v7153 = vmul.f32 %v7115, %v7133
      %v7154 = vmul.f32 %v7116, %v7133
      %v7155 = vmul.f32 %v7117, %v7133
      %v7156 = vmul.f32 %v7118, %v7133
      %v7157 = vmul.f32 %v7119, %v7133
      %v7158 = vmul.f32 %v7120, %v7133
      %v7159 = vmul.f32 %v7121, %v7133
      %v7160 = vmul.f32 %v7122, %v7133
      %v7161 = vmul.f32 %v7123, %v7133
      %v7162 = vmul.f32 %v7124, %v7133
      %v7163 = vmul.f32 %v7125, %v7133
      %v7164 = vmul.f32 %v7126, %v7133
      %v7165 = vmul.f32 %v7127, %v7133
      %v7166 = vadd.f32 %v7064, %v7134
      %v7167 = vadd.f32 %v7065, %v7135
      %v7168 = vadd.f32 %v7066, %v7136
      %v7169 = vadd.f32 %v7067, %v7137
      %v7170 = vadd.f32 %v7068, %v7138
      %v7171 = vadd.f32 %v7069, %v7139
      %v7172 = vadd.f32 %v7070, %v7140
      %v7173 = vadd.f32 %v7071, %v7141
      %v7174 = vadd.f32 %v7072, %v7142
      %v7175 = vadd.f32 %v7073, %v7143
      %v7176 = vadd.f32 %v7074, %v7144
      %v7177 = vadd.f32 %v7075, %v7145
      %v7178 = vadd.f32 %v7076, %v7146
      %v7179 = vadd.f32 %v7077, %v7147
      %v7180 = vadd.f32 %v7078, %v7148
      %v7181 = vadd.f32 %v7079, %v7149
      %v7182 = vadd.f32 %v7080, %v7150
      %v7183 = vadd.f32 %v7081, %v7151
      %v7184 = vadd.f32 %v7082, %v7152
      %v7185 = vadd.f32 %v7083, %v7153
      %v7186 = vadd.f32 %v7084, %v7154
      %v7187 = vadd.f32 %v7085, %v7155
      %v7188 = vadd.f32 %v7086, %v7156
      %v7189 = vadd.f32 %v7087, %v7157
      %v7190 = vadd.f32 %v7088, %v7158
      %v7191 = vadd.f32 %v7089, %v7159
      %v7192 = vadd.f32 %v7090, %v7160
      %v7193 = vadd.f32 %v7091, %v7161
      %v7194 = vadd.f32 %v7092, %v7162
      %v7195 = vadd.f32 %v7093, %v7163
      %v7196 = vadd.f32 %v7094, %v7164
      %v7197 = vadd.f32 %v7095, %v7165
      %v7198 = vld [vmem:[%s5 + $0x5] sm:$0x1]
      %v7199 = vperm.slane %v7198, 0
      %v7200 = vmul.f32 %v7098, %v7199
      %v7201 = vmul.f32 %v7099, %v7199
      %v7202 = vmul.f32 %v7100, %v7199
      %v7203 = vmul.f32 %v7101, %v7199
      %v7204 = vmul.f32 %v7102, %v7199
      %v7205 = vmul.f32 %v7103, %v7199
      %v7206 = vmul.f32 %v7104, %v7199
      %v7207 = vmul.f32 %v7105, %v7199
      %v7208 = vmul.f32 %v7106, %v7199
      %v7209 = vmul.f32 %v7107, %v7199
      %v7210 = vmul.f32 %v7108, %v7199
      %v7211 = vmul.f32 %v7109, %v7199
      %v7212 = vmul.f32 %v7110, %v7199
      %v7213 = vmul.f32 %v7111, %v7199
      %v7214 = vmul.f32 %v7112, %v7199
      %v7215 = vmul.f32 %v7113, %v7199
      %v7216 = vmul.f32 %v7114, %v7199
      %v7217 = vmul.f32 %v7115, %v7199
      %v7218 = vmul.f32 %v7116, %v7199
      %v7219 = vmul.f32 %v7117, %v7199
      %v7220 = vmul.f32 %v7118, %v7199
      %v7221 = vmul.f32 %v7119, %v7199
      %v7222 = vmul.f32 %v7120, %v7199
      %v7223 = vmul.f32 %v7121, %v7199
      %v7224 = vmul.f32 %v7122, %v7199
      %v7225 = vmul.f32 %v7123, %v7199
      %v7226 = vmul.f32 %v7124, %v7199
      %v7227 = vmul.f32 %v7125, %v7199
      %v7228 = vmul.f32 %v7126, %v7199
      %v7229 = vmul.f32 %v7127, %v7199
      %v7230 = vmul.f32 %v7128, %v7199
      %v7231 = vmul.f32 %v7129, %v7199
      %v7232 = vadd.f32 %v7166, %v7200
      %v7233 = vadd.f32 %v7167, %v7201
      %v7234 = vadd.f32 %v7168, %v7202
      %v7235 = vadd.f32 %v7169, %v7203
      %v7236 = vadd.f32 %v7170, %v7204
      %v7237 = vadd.f32 %v7171, %v7205
      %v7238 = vadd.f32 %v7172, %v7206
      %v7239 = vadd.f32 %v7173, %v7207
      %v7240 = vadd.f32 %v7174, %v7208
      %v7241 = vadd.f32 %v7175, %v7209
      %v7242 = vadd.f32 %v7176, %v7210
      %v7243 = vadd.f32 %v7177, %v7211
      %v7244 = vadd.f32 %v7178, %v7212
      %v7245 = vadd.f32 %v7179, %v7213
      %v7246 = vadd.f32 %v7180, %v7214
      %v7247 = vadd.f32 %v7181, %v7215
      %v7248 = vadd.f32 %v7182, %v7216
      %v7249 = vadd.f32 %v7183, %v7217
      %v7250 = vadd.f32 %v7184, %v7218
      %v7251 = vadd.f32 %v7185, %v7219
      %v7252 = vadd.f32 %v7186, %v7220
      %v7253 = vadd.f32 %v7187, %v7221
      %v7254 = vadd.f32 %v7188, %v7222
      %v7255 = vadd.f32 %v7189, %v7223
      %v7256 = vadd.f32 %v7190, %v7224
      %v7257 = vadd.f32 %v7191, %v7225
      %v7258 = vadd.f32 %v7192, %v7226
      %v7259 = vadd.f32 %v7193, %v7227
      %v7260 = vadd.f32 %v7194, %v7228
      %v7261 = vadd.f32 %v7195, %v7229
      %v7262 = vadd.f32 %v7196, %v7230
      %v7263 = vadd.f32 %v7197, %v7231
      %v7264 = vld [vmem:[%s5 + $0x8] sm:$0x1]
      %v7265 = vperm.slane %v7264, 0
      %v7266 = vmul.f32 %v7100, %v7265
      %v7267 = vmul.f32 %v7101, %v7265
      %v7268 = vmul.f32 %v7102, %v7265
      %v7269 = vmul.f32 %v7103, %v7265
      %v7270 = vmul.f32 %v7104, %v7265
      %v7271 = vmul.f32 %v7105, %v7265
      %v7272 = vmul.f32 %v7106, %v7265
      %v7273 = vmul.f32 %v7107, %v7265
      %v7274 = vmul.f32 %v7108, %v7265
      %v7275 = vmul.f32 %v7109, %v7265
      %v7276 = vmul.f32 %v7110, %v7265
      %v7277 = vmul.f32 %v7111, %v7265
      %v7278 = vmul.f32 %v7112, %v7265
      %v7279 = vmul.f32 %v7113, %v7265
      %v7280 = vmul.f32 %v7114, %v7265
      %v7281 = vmul.f32 %v7115, %v7265
      %v7282 = vmul.f32 %v7116, %v7265
      %v7283 = vmul.f32 %v7117, %v7265
      %v7284 = vmul.f32 %v7118, %v7265
      %v7285 = vmul.f32 %v7119, %v7265
      %v7286 = vmul.f32 %v7120, %v7265
      %v7287 = vmul.f32 %v7121, %v7265
      %v7288 = vmul.f32 %v7122, %v7265
      %v7289 = vmul.f32 %v7123, %v7265
      %v7290 = vmul.f32 %v7124, %v7265
      %v7291 = vmul.f32 %v7125, %v7265
      %v7292 = vmul.f32 %v7126, %v7265
      %v7293 = vmul.f32 %v7127, %v7265
      %v7294 = vmul.f32 %v7128, %v7265
      %v7295 = vmul.f32 %v7129, %v7265
      %v7296 = vmul.f32 %v7130, %v7265
      %v7297 = vmul.f32 %v7131, %v7265
      %v7298 = vadd.f32 %v7232, %v7266
      %v7299 = vadd.f32 %v7233, %v7267
      %v7300 = vadd.f32 %v7234, %v7268
      %v7301 = vadd.f32 %v7235, %v7269
      %v7302 = vadd.f32 %v7236, %v7270
      %v7303 = vadd.f32 %v7237, %v7271
      %v7304 = vadd.f32 %v7238, %v7272
      %v7305 = vadd.f32 %v7239, %v7273
      %v7306 = vadd.f32 %v7240, %v7274
      %v7307 = vadd.f32 %v7241, %v7275
      %v7308 = vadd.f32 %v7242, %v7276
      %v7309 = vadd.f32 %v7243, %v7277
      %v7310 = vadd.f32 %v7244, %v7278
      %v7311 = vadd.f32 %v7245, %v7279
      %v7312 = vadd.f32 %v7246, %v7280
      %v7313 = vadd.f32 %v7247, %v7281
      %v7314 = vadd.f32 %v7248, %v7282
      %v7315 = vadd.f32 %v7249, %v7283
      %v7316 = vadd.f32 %v7250, %v7284
      %v7317 = vadd.f32 %v7251, %v7285
      %v7318 = vadd.f32 %v7252, %v7286
      %v7319 = vadd.f32 %v7253, %v7287
      %v7320 = vadd.f32 %v7254, %v7288
      %v7321 = vadd.f32 %v7255, %v7289
      %v7322 = vadd.f32 %v7256, %v7290
      %v7323 = vadd.f32 %v7257, %v7291
      %v7324 = vadd.f32 %v7258, %v7292
      %v7325 = vadd.f32 %v7259, %v7293
      %v7326 = vadd.f32 %v7260, %v7294
      %v7327 = vadd.f32 %v7261, %v7295
      %v7328 = vadd.f32 %v7262, %v7296
      %v7329 = vadd.f32 %v7263, %v7297
      %v7330 = vld [vmem:[%s6] sm:$0x1]
      %v7332 = vperm.slane %v7330, 0
      %v7334 = vadd.f32 %v7298, %v7332
      %v7335 = vadd.f32 %v7299, %v7332
      %v7336 = vadd.f32 %v7300, %v7332
      %v7337 = vadd.f32 %v7301, %v7332
      %v7338 = vadd.f32 %v7302, %v7332
      %v7339 = vadd.f32 %v7303, %v7332
      %v7340 = vadd.f32 %v7304, %v7332
      %v7341 = vadd.f32 %v7305, %v7332
      %v7342 = vadd.f32 %v7306, %v7332
      %v7343 = vadd.f32 %v7307, %v7332
      %v7344 = vadd.f32 %v7308, %v7332
      %v7345 = vadd.f32 %v7309, %v7332
      %v7346 = vadd.f32 %v7310, %v7332
      %v7347 = vadd.f32 %v7311, %v7332
      %v7348 = vadd.f32 %v7312, %v7332
      %v7349 = vadd.f32 %v7313, %v7332
      %v7350 = vadd.f32 %v7314, %v7332
      %v7351 = vadd.f32 %v7315, %v7332
      %v7352 = vadd.f32 %v7316, %v7332
      %v7353 = vadd.f32 %v7317, %v7332
      %v7354 = vadd.f32 %v7318, %v7332
      %v7355 = vadd.f32 %v7319, %v7332
      %v7356 = vadd.f32 %v7320, %v7332
      %v7357 = vadd.f32 %v7321, %v7332
      %v7358 = vadd.f32 %v7322, %v7332
      %v7359 = vadd.f32 %v7323, %v7332
      %v7360 = vadd.f32 %v7324, %v7332
      %v7361 = vadd.f32 %v7325, %v7332
      %v7362 = vadd.f32 %v7326, %v7332
      %v7363 = vadd.f32 %v7327, %v7332
      %v7364 = vadd.f32 %v7328, %v7332
      %v7365 = vadd.f32 %v7329, %v7332
      %v7366 = vadd.f32 %v7334, 3.0
      %v7367 = vadd.f32 %v7335, 3.0
      %v7368 = vadd.f32 %v7336, 3.0
      %v7369 = vadd.f32 %v7337, 3.0
      %v7370 = vadd.f32 %v7338, 3.0
      %v7371 = vadd.f32 %v7339, 3.0
      %v7372 = vadd.f32 %v7340, 3.0
      %v7373 = vadd.f32 %v7341, 3.0
      %v7374 = vadd.f32 %v7342, 3.0
      %v7375 = vadd.f32 %v7343, 3.0
      %v7376 = vadd.f32 %v7344, 3.0
      %v7377 = vadd.f32 %v7345, 3.0
      %v7378 = vadd.f32 %v7346, 3.0
      %v7379 = vadd.f32 %v7347, 3.0
      %v7380 = vadd.f32 %v7348, 3.0
      %v7381 = vadd.f32 %v7349, 3.0
      %v7382 = vadd.f32 %v7350, 3.0
      %v7383 = vadd.f32 %v7351, 3.0
      %v7384 = vadd.f32 %v7352, 3.0
      %v7385 = vadd.f32 %v7353, 3.0
      %v7386 = vadd.f32 %v7354, 3.0
      %v7387 = vadd.f32 %v7355, 3.0
      %v7388 = vadd.f32 %v7356, 3.0
      %v7389 = vadd.f32 %v7357, 3.0
      %v7390 = vadd.f32 %v7358, 3.0
      %v7391 = vadd.f32 %v7359, 3.0
      %v7392 = vadd.f32 %v7360, 3.0
      %v7393 = vadd.f32 %v7361, 3.0
      %v7394 = vadd.f32 %v7362, 3.0
      %v7395 = vadd.f32 %v7363, 3.0
      %v7396 = vadd.f32 %v7364, 3.0
      %v7397 = vadd.f32 %v7365, 3.0
      %v7398 = vmax.f32 %v7366, 0.0
      %v7399 = vmax.f32 %v7367, 0.0
      %v7400 = vmax.f32 %v7368, 0.0
      %v7401 = vmax.f32 %v7369, 0.0
      %v7402 = vmax.f32 %v7370, 0.0
      %v7403 = vmax.f32 %v7371, 0.0
      %v7404 = vmax.f32 %v7372, 0.0
      %v7405 = vmax.f32 %v7373, 0.0
      %v7406 = vmax.f32 %v7374, 0.0
      %v7407 = vmax.f32 %v7375, 0.0
      %v7408 = vmax.f32 %v7376, 0.0
      %v7409 = vmax.f32 %v7377, 0.0
      %v7410 = vmax.f32 %v7378, 0.0
      %v7411 = vmax.f32 %v7379, 0.0
      %v7412 = vmax.f32 %v7380, 0.0
      %v7413 = vmax.f32 %v7381, 0.0
      %v7414 = vmax.f32 %v7382, 0.0
      %v7415 = vmax.f32 %v7383, 0.0
      %v7416 = vmax.f32 %v7384, 0.0
      %v7417 = vmax.f32 %v7385, 0.0
      %v7418 = vmax.f32 %v7386, 0.0
      %v7419 = vmax.f32 %v7387, 0.0
      %v7420 = vmax.f32 %v7388, 0.0
      %v7421 = vmax.f32 %v7389, 0.0
      %v7422 = vmax.f32 %v7390, 0.0
      %v7423 = vmax.f32 %v7391, 0.0
      %v7424 = vmax.f32 %v7392, 0.0
      %v7425 = vmax.f32 %v7393, 0.0
      %v7426 = vmax.f32 %v7394, 0.0
      %v7427 = vmax.f32 %v7395, 0.0
      %v7428 = vmax.f32 %v7396, 0.0
      %v7429 = vmax.f32 %v7397, 0.0
      %v7430 = vmin.f32 %v7398, 6.0
      %v7431 = vmin.f32 %v7399, 6.0
      %v7432 = vmin.f32 %v7400, 6.0
      %v7433 = vmin.f32 %v7401, 6.0
      %v7434 = vmin.f32 %v7402, 6.0
      %v7435 = vmin.f32 %v7403, 6.0
      %v7436 = vmin.f32 %v7404, 6.0
      %v7437 = vmin.f32 %v7405, 6.0
      %v7438 = vmin.f32 %v7406, 6.0
      %v7439 = vmin.f32 %v7407, 6.0
      %v7440 = vmin.f32 %v7408, 6.0
      %v7441 = vmin.f32 %v7409, 6.0
      %v7442 = vmin.f32 %v7410, 6.0
      %v7443 = vmin.f32 %v7411, 6.0
      %v7444 = vmin.f32 %v7412, 6.0
      %v7445 = vmin.f32 %v7413, 6.0
      %v7446 = vmin.f32 %v7414, 6.0
      %v7447 = vmin.f32 %v7415, 6.0
      %v7448 = vmin.f32 %v7416, 6.0
      %v7449 = vmin.f32 %v7417, 6.0
      %v7450 = vmin.f32 %v7418, 6.0
      %v7451 = vmin.f32 %v7419, 6.0
      %v7452 = vmin.f32 %v7420, 6.0
      %v7453 = vmin.f32 %v7421, 6.0
      %v7454 = vmin.f32 %v7422, 6.0
      %v7455 = vmin.f32 %v7423, 6.0
      %v7456 = vmin.f32 %v7424, 6.0
      %v7457 = vmin.f32 %v7425, 6.0
      %v7458 = vmin.f32 %v7426, 6.0
      %v7459 = vmin.f32 %v7427, 6.0
      %v7460 = vmin.f32 %v7428, 6.0
      %v7461 = vmin.f32 %v7429, 6.0
      %v7462 = vmul.f32 %v7334, %v7430
      %v7463 = vmul.f32 %v7335, %v7431
      %v7464 = vmul.f32 %v7336, %v7432
      %v7465 = vmul.f32 %v7337, %v7433
      %v7466 = vmul.f32 %v7338, %v7434
      %v7467 = vmul.f32 %v7339, %v7435
      %v7468 = vmul.f32 %v7340, %v7436
      %v7469 = vmul.f32 %v7341, %v7437
      %v7470 = vmul.f32 %v7342, %v7438
      %v7471 = vmul.f32 %v7343, %v7439
      %v7472 = vmul.f32 %v7344, %v7440
      %v7473 = vmul.f32 %v7345, %v7441
      %v7474 = vmul.f32 %v7346, %v7442
      %v7475 = vmul.f32 %v7347, %v7443
      %v7476 = vmul.f32 %v7348, %v7444
      %v7477 = vmul.f32 %v7349, %v7445
      %v7478 = vmul.f32 %v7350, %v7446
      %v7479 = vmul.f32 %v7351, %v7447
      %v7480 = vmul.f32 %v7352, %v7448
      %v7481 = vmul.f32 %v7353, %v7449
      %v7482 = vmul.f32 %v7354, %v7450
      %v7483 = vmul.f32 %v7355, %v7451
      %v7484 = vmul.f32 %v7356, %v7452
      %v7485 = vmul.f32 %v7357, %v7453
      %v7486 = vmul.f32 %v7358, %v7454
      %v7487 = vmul.f32 %v7359, %v7455
      %v7488 = vmul.f32 %v7360, %v7456
      %v7489 = vmul.f32 %v7361, %v7457
      %v7490 = vmul.f32 %v7362, %v7458
      %v7491 = vmul.f32 %v7363, %v7459
      %v7492 = vmul.f32 %v7364, %v7460
      %v7493 = vmul.f32 %v7365, %v7461
      %v7494 = vmul.f32 %v7462, 0.16666667
      %v7495 = vmul.f32 %v7463, 0.16666667
      %v7496 = vmul.f32 %v7464, 0.16666667
      %v7497 = vmul.f32 %v7465, 0.16666667
      %v7498 = vmul.f32 %v7466, 0.16666667
      %v7499 = vmul.f32 %v7467, 0.16666667
      %v7500 = vmul.f32 %v7468, 0.16666667
      %v7501 = vmul.f32 %v7469, 0.16666667
      %v7502 = vmul.f32 %v7470, 0.16666667
      %v7503 = vmul.f32 %v7471, 0.16666667
      %v7504 = vmul.f32 %v7472, 0.16666667
      %v7505 = vmul.f32 %v7473, 0.16666667
      %v7506 = vmul.f32 %v7474, 0.16666667
      %v7507 = vmul.f32 %v7475, 0.16666667
      %v7508 = vmul.f32 %v7476, 0.16666667
      %v7509 = vmul.f32 %v7477, 0.16666667
      %v7510 = vmul.f32 %v7478, 0.16666667
      %v7511 = vmul.f32 %v7479, 0.16666667
      %v7512 = vmul.f32 %v7480, 0.16666667
      %v7513 = vmul.f32 %v7481, 0.16666667
      %v7514 = vmul.f32 %v7482, 0.16666667
      %v7515 = vmul.f32 %v7483, 0.16666667
      %v7516 = vmul.f32 %v7484, 0.16666667
      %v7517 = vmul.f32 %v7485, 0.16666667
      %v7518 = vmul.f32 %v7486, 0.16666667
      %v7519 = vmul.f32 %v7487, 0.16666667
      %v7520 = vmul.f32 %v7488, 0.16666667
      %v7521 = vmul.f32 %v7489, 0.16666667
      %v7522 = vmul.f32 %v7490, 0.16666667
      %v7523 = vmul.f32 %v7491, 0.16666667
      %v7524 = vmul.f32 %v7492, 0.16666667
      %v7525 = vmul.f32 %v7493, 0.16666667
      %v7526 = vsel %vm6521, %v7494, 0.0
      %v7527 = vsel %vm6521, %v7495, 0.0
      %v7528 = vadd.f32 %v7526, %v7527
      %v7529 = vsel %vm6521, %v7496, 0.0
      %v7530 = vadd.f32 %v7528, %v7529
      %v7531 = vsel %vm6521, %v7497, 0.0
      %v7532 = vadd.f32 %v7530, %v7531
      %v7533 = vsel %vm6521, %v7498, 0.0
      %v7534 = vadd.f32 %v7532, %v7533
      %v7535 = vsel %vm6521, %v7499, 0.0
      %v7536 = vadd.f32 %v7534, %v7535
      %v7537 = vsel %vm6521, %v7500, 0.0
      %v7538 = vadd.f32 %v7536, %v7537
      %v7539 = vsel %vm6521, %v7501, 0.0
      %v7540 = vadd.f32 %v7538, %v7539
      %v7541 = vsel %vm6521, %v7502, 0.0
      %v7542 = vadd.f32 %v7540, %v7541
      %v7543 = vsel %vm6521, %v7503, 0.0
      %v7544 = vadd.f32 %v7542, %v7543
      %v7545 = vsel %vm6521, %v7504, 0.0
      %v7546 = vadd.f32 %v7544, %v7545
      %v7547 = vsel %vm6521, %v7505, 0.0
      %v7548 = vadd.f32 %v7546, %v7547
      %v7549 = vsel %vm6521, %v7506, 0.0
      %v7550 = vadd.f32 %v7548, %v7549
      %v7551 = vsel %vm6521, %v7507, 0.0
      %v7552 = vadd.f32 %v7550, %v7551
      %v7553 = vsel %vm6521, %v7508, 0.0
      %v7554 = vadd.f32 %v7552, %v7553
      %v7555 = vsel %vm6521, %v7509, 0.0
      %v7556 = vadd.f32 %v7554, %v7555
      %v7557 = vsel %vm6521, %v7510, 0.0
      %v7558 = vadd.f32 %v7556, %v7557
      %v7559 = vsel %vm6521, %v7511, 0.0
      %v7560 = vadd.f32 %v7558, %v7559
      %v7561 = vsel %vm6521, %v7512, 0.0
      %v7562 = vadd.f32 %v7560, %v7561
      %v7563 = vsel %vm6521, %v7513, 0.0
      %v7564 = vadd.f32 %v7562, %v7563
      %v7565 = vsel %vm6521, %v7514, 0.0
      %v7566 = vadd.f32 %v7564, %v7565
      %v7567 = vsel %vm6521, %v7515, 0.0
      %v7568 = vadd.f32 %v7566, %v7567
      %v7569 = vsel %vm6521, %v7516, 0.0
      %v7570 = vadd.f32 %v7568, %v7569
      %v7571 = vsel %vm6521, %v7517, 0.0
      %v7572 = vadd.f32 %v7570, %v7571
      %v7573 = vsel %vm6521, %v7518, 0.0
      %v7574 = vadd.f32 %v7572, %v7573
      %v7575 = vsel %vm6521, %v7519, 0.0
      %v7576 = vadd.f32 %v7574, %v7575
      %v7577 = vsel %vm6521, %v7520, 0.0
      %v7578 = vadd.f32 %v7576, %v7577
      %v7579 = vsel %vm6521, %v7521, 0.0
      %v7580 = vadd.f32 %v7578, %v7579
      %v7581 = vsel %vm6521, %v7522, 0.0
      %v7582 = vadd.f32 %v7580, %v7581
      %v7583 = vsel %vm6521, %v7523, 0.0
      %v7584 = vadd.f32 %v7582, %v7583
      %v7585 = vsel %vm6521, %v7524, 0.0
      %v7586 = vadd.f32 %v7584, %v7585
      %v7587 = vsel %vm6521, %v7525, 0.0
      %v7588 = vadd.f32 %v7586, %v7587
      %v7589 = vrot.slane %v7588, 4
      %v7590 = vadd.f32 %v7588, %v7589
      %v7591 = vrot.slane %v7590, 2
      %v7592 = vadd.f32 %v7590, %v7591
      %v7593 = vrot.slane %v7592, 1
      %v7594 = vadd.f32 %v7592, %v7593
      %v7595 = vrcp.pop 256.0
      %v7596 = vmul.f32 256.0, %v7595
      %v7597 = vsub.f32 1.0, %v7596
      %v7598 = vmul.f32 %v7595, %v7597
      %v7599 = vadd.f32 %v7595, %v7598
      %vm7600 = vweird.f32 %v7595
      %v7601 = vsel %vm7600, %v7595, %v7599
      %v7602 = vmul.f32 %v7594, %v7601
      %v7603 = vld [vmem:[%s7] sm:$0xff]
      %v7604 = vld [vmem:[%s7 + $0x8] sm:$0xff]
      %v7605 = vld [vmem:[%s7 + $0x10] sm:$0xff]
      %v7606 = vld [vmem:[%s7 + $0x18] sm:$0xff]
      %v7607 = vld [vmem:[%s7 + $0x20] sm:$0xff]
      %v7608 = vld [vmem:[%s7 + $0x28] sm:$0xff]
      %v7609 = vld [vmem:[%s7 + $0x30] sm:$0xff]
      %v7610 = vld [vmem:[%s7 + $0x38] sm:$0xff]
      %v7611 = vld [vmem:[%s8] sm:$0x1]
      %v7613 = vsel %vm6521, %v7602, 0
      %7615 = vmatpush.msra.mxu0 0.0
      %7616 = vmatpush.msra.mxu0 0.0
      %7617 = vmatpush.msra.mxu0 0.0
      %7618 = vmatpush.msra.mxu0 0.0
      %7619 = vmatpush.msra.mxu0 0.0
      %7620 = vmatpush.msra.mxu0 0.0
      %7621 = vmatpush.msra.mxu0 0.0
      %7622 = vmatpush.msra.mxu0 0.0
      %7623 = vmatpush.msra.mxu0 %v7610
      %7624 = vmatpush.msra.mxu0 %v7609
      %7625 = vmatpush.msra.mxu0 %v7608
      %7626 = vmatpush.msra.mxu0 %v7607
      %7627 = vmatpush.msra.mxu0 %v7606
      %7628 = vmatpush.msra.mxu0 %v7605
      %7629 = vmatpush.msra.mxu0 %v7604
      %7630 = vmatpush.msra.mxu0 %v7603
      %7631 = vmatmul.f32.gmra.mxu0 %v7613
      %v7632 = vpop.f32.mrf.mxu0
      %v7633 = vadd.f32 %v7611, %v7632
      %7634 = vdwg.mxu0
      %v7635 = vmax.f32 %v7633, 0.0
      %v7636 = vld [vmem:[%s9] sm:$0xff]
      %v7637 = vld [vmem:[%s9 + $0x8] sm:$0xff]
      %v7638 = vld [vmem:[%s10] sm:$0x1]
      %v7640 = vsel %vm6223, %v7635, 0
      %7642 = vmatpush.msra.mxu0 0.0
      %7643 = vmatpush.msra.mxu0 0.0
      %7644 = vmatpush.msra.mxu0 0.0
      %7645 = vmatpush.msra.mxu0 0.0
      %7646 = vmatpush.msra.mxu0 0.0
      %7647 = vmatpush.msra.mxu0 0.0
      %7648 = vmatpush.msra.mxu0 0.0
      %7649 = vmatpush.msra.mxu0 0.0
      %7650 = vmatpush.msra.mxu0 0.0
      %7651 = vmatpush.msra.mxu0 0.0
      %7652 = vmatpush.msra.mxu0 0.0
      %7653 = vmatpush.msra.mxu0 0.0
      %7654 = vmatpush.msra.mxu0 0.0
      %7655 = vmatpush.msra.mxu0 0.0
      %7656 = vmatpush.msra.mxu0 %v7637
      %7657 = vmatpush.msra.mxu0 %v7636
      %7658 = vmatmul.f32.gmra.mxu0 %v7640
      %v7659 = vpop.f32.mrf.mxu0
      %v7660 = vadd.f32 %v7638, %v7659
      %7661 = vdwg.mxu0
      %v7662 = vadd.f32 %v7660, 3.0
      %v7663 = vmax.f32 %v7662, 0.0
      %v7664 = vmin.f32 %v7663, 6.0
      %v7665 = vmul.f32 %v7664, 0.16666667
      %v7666 = vperm.slane %v7665, 0
      %v7667 = vmul.f32 %v7494, %v7666
      %v7668 = vmul.f32 %v7495, %v7666
      %v7669 = vmul.f32 %v7496, %v7666
      %v7670 = vmul.f32 %v7497, %v7666
      %v7671 = vmul.f32 %v7498, %v7666
      %v7672 = vmul.f32 %v7499, %v7666
      %v7673 = vmul.f32 %v7500, %v7666
      %v7674 = vmul.f32 %v7501, %v7666
      %v7675 = vmul.f32 %v7502, %v7666
      %v7676 = vmul.f32 %v7503, %v7666
      %v7677 = vmul.f32 %v7504, %v7666
      %v7678 = vmul.f32 %v7505, %v7666
      %v7679 = vmul.f32 %v7506, %v7666
      %v7680 = vmul.f32 %v7507, %v7666
      %v7681 = vmul.f32 %v7508, %v7666
      %v7682 = vmul.f32 %v7509, %v7666
      %v7683 = vmul.f32 %v7510, %v7666
      %v7684 = vmul.f32 %v7511, %v7666
      %v7685 = vmul.f32 %v7512, %v7666
      %v7686 = vmul.f32 %v7513, %v7666
      %v7687 = vmul.f32 %v7514, %v7666
      %v7688 = vmul.f32 %v7515, %v7666
      %v7689 = vmul.f32 %v7516, %v7666
      %v7690 = vmul.f32 %v7517, %v7666
      %v7691 = vmul.f32 %v7518, %v7666
      %v7692 = vmul.f32 %v7519, %v7666
      %v7693 = vmul.f32 %v7520, %v7666
      %v7694 = vmul.f32 %v7521, %v7666
      %v7695 = vmul.f32 %v7522, %v7666
      %v7696 = vmul.f32 %v7523, %v7666
      %v7697 = vmul.f32 %v7524, %v7666
      %v7698 = vmul.f32 %v7525, %v7666
      %v7699 = vpack.c.bf16 %v7668, %v7667
      %v7700 = vpack.c.bf16 %v7670, %v7669
      %v7701 = vpack.c.bf16 %v7672, %v7671
      %v7702 = vpack.c.bf16 %v7674, %v7673
      %v7703 = vpack.c.bf16 %v7676, %v7675
      %v7704 = vpack.c.bf16 %v7678, %v7677
      %v7705 = vpack.c.bf16 %v7680, %v7679
      %v7706 = vpack.c.bf16 %v7682, %v7681
      %v7707 = vpack.c.bf16 %v7684, %v7683
      %v7708 = vpack.c.bf16 %v7686, %v7685
      %v7709 = vpack.c.bf16 %v7688, %v7687
      %v7710 = vpack.c.bf16 %v7690, %v7689
      %v7711 = vpack.c.bf16 %v7692, %v7691
      %v7712 = vpack.c.bf16 %v7694, %v7693
      %v7713 = vpack.c.bf16 %v7696, %v7695
      %v7714 = vpack.c.bf16 %v7698, %v7697
      %v7715 = vld [vmem:[%s11] sm:$0xf]
      %v7716 = vld [vmem:[%s11 + $0x4] sm:$0xf]
      %v7717 = vld [vmem:[%s11 + $0x8] sm:$0xf]
      %v7718 = vld [vmem:[%s11 + $0xc] sm:$0xf]
      %v7719 = vld [vmem:[%s11 + $0x10] sm:$0xf]
      %v7720 = vld [vmem:[%s11 + $0x14] sm:$0xf]
      %v7721 = vld [vmem:[%s11 + $0x18] sm:$0xf]
      %v7722 = vld [vmem:[%s11 + $0x1c] sm:$0xf]
      %v7723 = vld [vmem:[%s12] sm:$0x1]
      %v7725 = vperm.slane %v7723, 0
      %v7735 = vunpack.c.l.b16 %v7715
      %v7736 = vunpack.c.l.b16 %v7716
      %v7737 = vunpack.c.l.b16 %v7717
      %v7738 = vunpack.c.l.b16 %v7718
      %v7739 = vunpack.c.l.b16 %v7719
      %v7740 = vunpack.c.l.b16 %v7720
      %v7741 = vunpack.c.l.b16 %v7721
      %v7742 = vunpack.c.l.b16 %v7722
      %v7743 = vpack.c.b16 %v7736, %v7735
      %v7744 = vpack.c.b16 %v7738, %v7737
      %v7745 = vpack.c.b16 %v7740, %v7739
      %v7746 = vpack.c.b16 %v7742, %v7741
      %v7752 = vsel %vm6521, %v7699, 0
      %v7755 = vsel %vm6521, %v7700, 0
      %v7758 = vsel %vm6521, %v7701, 0
      %v7761 = vsel %vm6521, %v7702, 0
      %v7764 = vsel %vm6521, %v7703, 0
      %v7767 = vsel %vm6521, %v7704, 0
      %v7770 = vsel %vm6521, %v7705, 0
      %v7773 = vsel %vm6521, %v7706, 0
      %v7776 = vsel %vm6521, %v7707, 0
      %v7779 = vsel %vm6521, %v7708, 0
      %v7782 = vsel %vm6521, %v7709, 0
      %v7785 = vsel %vm6521, %v7710, 0
      %v7788 = vsel %vm6521, %v7711, 0
      %v7791 = vsel %vm6521, %v7712, 0
      %v7794 = vsel %vm6521, %v7713, 0
      %v7797 = vsel %vm6521, %v7714, 0
      %7799 = vmatpush.bf16.msra.mxu0 0
      %7800 = vmatpush.bf16.msra.mxu0 0
      %7801 = vmatpush.bf16.msra.mxu0 0
      %7802 = vmatpush.bf16.msra.mxu0 0
      %7803 = vmatpush.bf16.msra.mxu0 %v7746
      %7804 = vmatpush.bf16.msra.mxu0 %v7745
      %7805 = vmatpush.bf16.msra.mxu0 %v7744
      %7806 = vmatpush.bf16.msra.mxu0 %v7743
      %7807 = vmatmul.bf16.gmra.mxu0 %v7752
      %v7808 = vpop.f32.mrf.mxu0
      %v7809 = vadd.f32 %v7725, %v7808
      %v7810 = vpop.f32.mrf.mxu0
      %v7811 = vadd.f32 %v7725, %v7810
      %7812 = vmatmul.bf16.gmra.mxu0 %v7755
      %v7813 = vpop.f32.mrf.mxu0
      %v7814 = vadd.f32 %v7725, %v7813
      %v7815 = vpop.f32.mrf.mxu0
      %v7816 = vadd.f32 %v7725, %v7815
      %7817 = vmatmul.bf16.gmra.mxu0 %v7758
      %v7818 = vpop.f32.mrf.mxu0
      %v7819 = vadd.f32 %v7725, %v7818
      %v7820 = vpop.f32.mrf.mxu0
      %v7821 = vadd.f32 %v7725, %v7820
      %7822 = vmatmul.bf16.gmra.mxu0 %v7761
      %v7823 = vpop.f32.mrf.mxu0
      %v7824 = vadd.f32 %v7725, %v7823
      %v7825 = vpop.f32.mrf.mxu0
      %v7826 = vadd.f32 %v7725, %v7825
      %7827 = vmatmul.bf16.gmra.mxu0 %v7764
      %v7828 = vpop.f32.mrf.mxu0
      %v7829 = vadd.f32 %v7725, %v7828
      %v7830 = vpop.f32.mrf.mxu0
      %v7831 = vadd.f32 %v7725, %v7830
      %7832 = vmatmul.bf16.gmra.mxu0 %v7767
      %v7833 = vpop.f32.mrf.mxu0
      %v7834 = vadd.f32 %v7725, %v7833
      %v7835 = vpop.f32.mrf.mxu0
      %v7836 = vadd.f32 %v7725, %v7835
      %7837 = vmatmul.bf16.gmra.mxu0 %v7770
      %v7838 = vpop.f32.mrf.mxu0
      %v7839 = vadd.f32 %v7725, %v7838
      %v7840 = vpop.f32.mrf.mxu0
      %v7841 = vadd.f32 %v7725, %v7840
      %7842 = vmatmul.bf16.gmra.mxu0 %v7773
      %v7843 = vpop.f32.mrf.mxu0
      %v7844 = vadd.f32 %v7725, %v7843
      %v7845 = vpop.f32.mrf.mxu0
      %v7846 = vadd.f32 %v7725, %v7845
      %7847 = vmatmul.bf16.gmra.mxu0 %v7776
      %v7848 = vpop.f32.mrf.mxu0
      %v7849 = vadd.f32 %v7725, %v7848
      %v7850 = vpop.f32.mrf.mxu0
      %v7851 = vadd.f32 %v7725, %v7850
      %7852 = vmatmul.bf16.gmra.mxu0 %v7779
      %v7853 = vpop.f32.mrf.mxu0
      %v7854 = vadd.f32 %v7725, %v7853
      %v7855 = vpop.f32.mrf.mxu0
      %v7856 = vadd.f32 %v7725, %v7855
      %7857 = vmatmul.bf16.gmra.mxu0 %v7782
      %v7858 = vpop.f32.mrf.mxu0
      %v7859 = vadd.f32 %v7725, %v7858
      %v7860 = vpop.f32.mrf.mxu0
      %v7861 = vadd.f32 %v7725, %v7860
      %7862 = vmatmul.bf16.gmra.mxu0 %v7785
      %v7863 = vpop.f32.mrf.mxu0
      %v7864 = vadd.f32 %v7725, %v7863
      %v7865 = vpop.f32.mrf.mxu0
      %v7866 = vadd.f32 %v7725, %v7865
      %7867 = vmatmul.bf16.gmra.mxu0 %v7788
      %v7868 = vpop.f32.mrf.mxu0
      %v7869 = vadd.f32 %v7725, %v7868
      %v7870 = vpop.f32.mrf.mxu0
      %v7871 = vadd.f32 %v7725, %v7870
      %7872 = vmatmul.bf16.gmra.mxu0 %v7791
      %v7873 = vpop.f32.mrf.mxu0
      %v7874 = vadd.f32 %v7725, %v7873
      %v7875 = vpop.f32.mrf.mxu0
      %v7876 = vadd.f32 %v7725, %v7875
      %7877 = vmatmul.bf16.gmra.mxu0 %v7794
      %v7878 = vpop.f32.mrf.mxu0
      %v7879 = vadd.f32 %v7725, %v7878
      %v7880 = vpop.f32.mrf.mxu0
      %v7881 = vadd.f32 %v7725, %v7880
      %7882 = vmatmul.bf16.gmra.mxu0 %v7797
      %v7883 = vpop.f32.mrf.mxu0
      %v7884 = vadd.f32 %v7725, %v7883
      %v7885 = vpop.f32.mrf.mxu0
      %v7886 = vadd.f32 %v7725, %v7885
      %7887 = vdwg.mxu0
      %v7888 = vpack.c.bf16 %v7811, %v7809
      %v7889 = vpack.c.bf16 %v7816, %v7814
      %v7890 = vpack.c.bf16 %v7821, %v7819
      %v7891 = vpack.c.bf16 %v7826, %v7824
      %v7892 = vpack.c.bf16 %v7831, %v7829
      %v7893 = vpack.c.bf16 %v7836, %v7834
      %v7894 = vpack.c.bf16 %v7841, %v7839
      %v7895 = vpack.c.bf16 %v7846, %v7844
      %v7896 = vpack.c.bf16 %v7851, %v7849
      %v7897 = vpack.c.bf16 %v7856, %v7854
      %v7898 = vpack.c.bf16 %v7861, %v7859
      %v7899 = vpack.c.bf16 %v7866, %v7864
      %v7900 = vpack.c.bf16 %v7871, %v7869
      %v7901 = vpack.c.bf16 %v7876, %v7874
      %v7902 = vpack.c.bf16 %v7881, %v7879
      %v7903 = vpack.c.bf16 %v7886, %v7884
      %v7904 = vld [vmem:[%s13] sm:$0xf]
      %v7905 = vld [vmem:[%s13 + $0x4] sm:$0xf]
      %v7906 = vld [vmem:[%s13 + $0x8] sm:$0xf]
      %v7907 = vld [vmem:[%s13 + $0xc] sm:$0xf]
      %v7908 = vld [vmem:[%s14] sm:$0x1]
      %v7910 = vperm.slane %v7908, 0
      %v7916 = vunpack.c.l.b16 %v7904
      %v7917 = vunpack.c.l.b16 %v7905
      %v7918 = vunpack.c.l.b16 %v7906
      %v7919 = vunpack.c.l.b16 %v7907
      %v7920 = vpack.c.b16 %v7917, %v7916
      %v7921 = vpack.c.b16 %v7919, %v7918
      %vm7924 = vcmask 261120
      %v7926 = vsel %vm7924, %v7888, 0
      %v7929 = vsel %vm7924, %v7889, 0
      %v7932 = vsel %vm7924, %v7890, 0
      %v7935 = vsel %vm7924, %v7891, 0
      %v7938 = vsel %vm7924, %v7892, 0
      %v7941 = vsel %vm7924, %v7893, 0
      %v7944 = vsel %vm7924, %v7894, 0
      %v7947 = vsel %vm7924, %v7895, 0
      %v7950 = vsel %vm7924, %v7896, 0
      %v7953 = vsel %vm7924, %v7897, 0
      %v7956 = vsel %vm7924, %v7898, 0
      %v7959 = vsel %vm7924, %v7899, 0
      %v7962 = vsel %vm7924, %v7900, 0
      %v7965 = vsel %vm7924, %v7901, 0
      %v7968 = vsel %vm7924, %v7902, 0
      %v7971 = vsel %vm7924, %v7903, 0
      %7973 = vmatpush.bf16.msra.mxu0 0
      %7974 = vmatpush.bf16.msra.mxu0 0
      %7975 = vmatpush.bf16.msra.mxu0 0
      %7976 = vmatpush.bf16.msra.mxu0 0
      %7977 = vmatpush.bf16.msra.mxu0 0
      %7978 = vmatpush.bf16.msra.mxu0 0
      %7979 = vmatpush.bf16.msra.mxu0 %v7921
      %7980 = vmatpush.bf16.msra.mxu0 %v7920
      %7981 = vmatmul.bf16.gmra.mxu0 %v7926
      %v7982 = vpop.f32.mrf.mxu0
      %v7983 = vadd.f32 %v7910, %v7982
      %v7984 = vpop.f32.mrf.mxu0
      %v7985 = vadd.f32 %v7910, %v7984
      %7986 = vmatmul.bf16.gmra.mxu0 %v7929
      %v7987 = vpop.f32.mrf.mxu0
      %v7988 = vadd.f32 %v7910, %v7987
      %v7989 = vpop.f32.mrf.mxu0
      %v7990 = vadd.f32 %v7910, %v7989
      %7991 = vmatmul.bf16.gmra.mxu0 %v7932
      %v7992 = vpop.f32.mrf.mxu0
      %v7993 = vadd.f32 %v7910, %v7992
      %v7994 = vpop.f32.mrf.mxu0
      %v7995 = vadd.f32 %v7910, %v7994
      %7996 = vmatmul.bf16.gmra.mxu0 %v7935
      %v7997 = vpop.f32.mrf.mxu0
      %v7998 = vadd.f32 %v7910, %v7997
      %v7999 = vpop.f32.mrf.mxu0
      %v8000 = vadd.f32 %v7910, %v7999
      %8001 = vmatmul.bf16.gmra.mxu0 %v7938
      %v8002 = vpop.f32.mrf.mxu0
      %v8003 = vadd.f32 %v7910, %v8002
      %v8004 = vpop.f32.mrf.mxu0
      %v8005 = vadd.f32 %v7910, %v8004
      %8006 = vmatmul.bf16.gmra.mxu0 %v7941
      %v8007 = vpop.f32.mrf.mxu0
      %v8008 = vadd.f32 %v7910, %v8007
      %v8009 = vpop.f32.mrf.mxu0
      %v8010 = vadd.f32 %v7910, %v8009
      %8011 = vmatmul.bf16.gmra.mxu0 %v7944
      %v8012 = vpop.f32.mrf.mxu0
      %v8013 = vadd.f32 %v7910, %v8012
      %v8014 = vpop.f32.mrf.mxu0
      %v8015 = vadd.f32 %v7910, %v8014
      %8016 = vmatmul.bf16.gmra.mxu0 %v7947
      %v8017 = vpop.f32.mrf.mxu0
      %v8018 = vadd.f32 %v7910, %v8017
      %v8019 = vpop.f32.mrf.mxu0
      %v8020 = vadd.f32 %v7910, %v8019
      %8021 = vmatmul.bf16.gmra.mxu0 %v7950
      %v8022 = vpop.f32.mrf.mxu0
      %v8023 = vadd.f32 %v7910, %v8022
      %v8024 = vpop.f32.mrf.mxu0
      %v8025 = vadd.f32 %v7910, %v8024
      %8026 = vmatmul.bf16.gmra.mxu0 %v7953
      %v8027 = vpop.f32.mrf.mxu0
      %v8028 = vadd.f32 %v7910, %v8027
      %v8029 = vpop.f32.mrf.mxu0
      %v8030 = vadd.f32 %v7910, %v8029
      %8031 = vmatmul.bf16.gmra.mxu0 %v7956
      %v8032 = vpop.f32.mrf.mxu0
      %v8033 = vadd.f32 %v7910, %v8032
      %v8034 = vpop.f32.mrf.mxu0
      %v8035 = vadd.f32 %v7910, %v8034
      %8036 = vmatmul.bf16.gmra.mxu0 %v7959
      %v8037 = vpop.f32.mrf.mxu0
      %v8038 = vadd.f32 %v7910, %v8037
      %v8039 = vpop.f32.mrf.mxu0
      %v8040 = vadd.f32 %v7910, %v8039
      %8041 = vmatmul.bf16.gmra.mxu0 %v7962
      %v8042 = vpop.f32.mrf.mxu0
      %v8043 = vadd.f32 %v7910, %v8042
      %v8044 = vpop.f32.mrf.mxu0
      %v8045 = vadd.f32 %v7910, %v8044
      %8046 = vmatmul.bf16.gmra.mxu0 %v7965
      %v8047 = vpop.f32.mrf.mxu0
      %v8048 = vadd.f32 %v7910, %v8047
      %v8049 = vpop.f32.mrf.mxu0
      %v8050 = vadd.f32 %v7910, %v8049
      %8051 = vmatmul.bf16.gmra.mxu0 %v7968
      %v8052 = vpop.f32.mrf.mxu0
      %v8053 = vadd.f32 %v7910, %v8052
      %v8054 = vpop.f32.mrf.mxu0
      %v8055 = vadd.f32 %v7910, %v8054
      %8056 = vmatmul.bf16.gmra.mxu0 %v7971
      %v8057 = vpop.f32.mrf.mxu0
      %v8058 = vadd.f32 %v7910, %v8057
      %v8059 = vpop.f32.mrf.mxu0
      %v8060 = vadd.f32 %v7910, %v8059
      %8061 = vdwg.mxu0
      %v8062 = vadd.f32 %v7983, 3.0
      %v8063 = vadd.f32 %v7985, 3.0
      %v8064 = vadd.f32 %v7988, 3.0
      %v8065 = vadd.f32 %v7990, 3.0
      %v8066 = vadd.f32 %v7993, 3.0
      %v8067 = vadd.f32 %v7995, 3.0
      %v8068 = vadd.f32 %v7998, 3.0
      %v8069 = vadd.f32 %v8000, 3.0
      %v8070 = vadd.f32 %v8003, 3.0
      %v8071 = vadd.f32 %v8005, 3.0
      %v8072 = vadd.f32 %v8008, 3.0
      %v8073 = vadd.f32 %v8010, 3.0
      %v8074 = vadd.f32 %v8013, 3.0
      %v8075 = vadd.f32 %v8015, 3.0
      %v8076 = vadd.f32 %v8018, 3.0
      %v8077 = vadd.f32 %v8020, 3.0
      %v8078 = vadd.f32 %v8023, 3.0
      %v8079 = vadd.f32 %v8025, 3.0
      %v8080 = vadd.f32 %v8028, 3.0
      %v8081 = vadd.f32 %v8030, 3.0
      %v8082 = vadd.f32 %v8033, 3.0
      %v8083 = vadd.f32 %v8035, 3.0
      %v8084 = vadd.f32 %v8038, 3.0
      %v8085 = vadd.f32 %v8040, 3.0
      %v8086 = vadd.f32 %v8043, 3.0
      %v8087 = vadd.f32 %v8045, 3.0
      %v8088 = vadd.f32 %v8048, 3.0
      %v8089 = vadd.f32 %v8050, 3.0
      %v8090 = vadd.f32 %v8053, 3.0
      %v8091 = vadd.f32 %v8055, 3.0
      %v8092 = vadd.f32 %v8058, 3.0
      %v8093 = vadd.f32 %v8060, 3.0
      %v8094 = vmax.f32 %v8062, 0.0
      %v8095 = vmax.f32 %v8063, 0.0
      %v8096 = vmax.f32 %v8064, 0.0
      %v8097 = vmax.f32 %v8065, 0.0
      %v8098 = vmax.f32 %v8066, 0.0
      %v8099 = vmax.f32 %v8067, 0.0
      %v8100 = vmax.f32 %v8068, 0.0
      %v8101 = vmax.f32 %v8069, 0.0
      %v8102 = vmax.f32 %v8070, 0.0
      %v8103 = vmax.f32 %v8071, 0.0
      %v8104 = vmax.f32 %v8072, 0.0
      %v8105 = vmax.f32 %v8073, 0.0
      %v8106 = vmax.f32 %v8074, 0.0
      %v8107 = vmax.f32 %v8075, 0.0
      %v8108 = vmax.f32 %v8076, 0.0
      %v8109 = vmax.f32 %v8077, 0.0
      %v8110 = vmax.f32 %v8078, 0.0
      %v8111 = vmax.f32 %v8079, 0.0
      %v8112 = vmax.f32 %v8080, 0.0
      %v8113 = vmax.f32 %v8081, 0.0
      %v8114 = vmax.f32 %v8082, 0.0
      %v8115 = vmax.f32 %v8083, 0.0
      %v8116 = vmax.f32 %v8084, 0.0
      %v8117 = vmax.f32 %v8085, 0.0
      %v8118 = vmax.f32 %v8086, 0.0
      %v8119 = vmax.f32 %v8087, 0.0
      %v8120 = vmax.f32 %v8088, 0.0
      %v8121 = vmax.f32 %v8089, 0.0
      %v8122 = vmax.f32 %v8090, 0.0
      %v8123 = vmax.f32 %v8091, 0.0
      %v8124 = vmax.f32 %v8092, 0.0
      %v8125 = vmax.f32 %v8093, 0.0
      %v8126 = vmin.f32 %v8094, 6.0
      %v8127 = vmin.f32 %v8095, 6.0
      %v8128 = vmin.f32 %v8096, 6.0
      %v8129 = vmin.f32 %v8097, 6.0
      %v8130 = vmin.f32 %v8098, 6.0
      %v8131 = vmin.f32 %v8099, 6.0
      %v8132 = vmin.f32 %v8100, 6.0
      %v8133 = vmin.f32 %v8101, 6.0
      %v8134 = vmin.f32 %v8102, 6.0
      %v8135 = vmin.f32 %v8103, 6.0
      %v8136 = vmin.f32 %v8104, 6.0
      %v8137 = vmin.f32 %v8105, 6.0
      %v8138 = vmin.f32 %v8106, 6.0
      %v8139 = vmin.f32 %v8107, 6.0
      %v8140 = vmin.f32 %v8108, 6.0
      %v8141 = vmin.f32 %v8109, 6.0
      %v8142 = vmin.f32 %v8110, 6.0
      %v8143 = vmin.f32 %v8111, 6.0
      %v8144 = vmin.f32 %v8112, 6.0
      %v8145 = vmin.f32 %v8113, 6.0
      %v8146 = vmin.f32 %v8114, 6.0
      %v8147 = vmin.f32 %v8115, 6.0
      %v8148 = vmin.f32 %v8116, 6.0
      %v8149 = vmin.f32 %v8117, 6.0
      %v8150 = vmin.f32 %v8118, 6.0
      %v8151 = vmin.f32 %v8119, 6.0
      %v8152 = vmin.f32 %v8120, 6.0
      %v8153 = vmin.f32 %v8121, 6.0
      %v8154 = vmin.f32 %v8122, 6.0
      %v8155 = vmin.f32 %v8123, 6.0
      %v8156 = vmin.f32 %v8124, 6.0
      %v8157 = vmin.f32 %v8125, 6.0
      %v8158 = vmul.f32 %v7983, %v8126
      %v8159 = vmul.f32 %v7985, %v8127
      %v8160 = vmul.f32 %v7988, %v8128
      %v8161 = vmul.f32 %v7990, %v8129
      %v8162 = vmul.f32 %v7993, %v8130
      %v8163 = vmul.f32 %v7995, %v8131
      %v8164 = vmul.f32 %v7998, %v8132
      %v8165 = vmul.f32 %v8000, %v8133
      %v8166 = vmul.f32 %v8003, %v8134
      %v8167 = vmul.f32 %v8005, %v8135
      %v8168 = vmul.f32 %v8008, %v8136
      %v8169 = vmul.f32 %v8010, %v8137
      %v8170 = vmul.f32 %v8013, %v8138
      %v8171 = vmul.f32 %v8015, %v8139
      %v8172 = vmul.f32 %v8018, %v8140
      %v8173 = vmul.f32 %v8020, %v8141
      %v8174 = vmul.f32 %v8023, %v8142
      %v8175 = vmul.f32 %v8025, %v8143
      %v8176 = vmul.f32 %v8028, %v8144
      %v8177 = vmul.f32 %v8030, %v8145
      %v8178 = vmul.f32 %v8033, %v8146
      %v8179 = vmul.f32 %v8035, %v8147
      %v8180 = vmul.f32 %v8038, %v8148
      %v8181 = vmul.f32 %v8040, %v8149
      %v8182 = vmul.f32 %v8043, %v8150
      %v8183 = vmul.f32 %v8045, %v8151
      %v8184 = vmul.f32 %v8048, %v8152
      %v8185 = vmul.f32 %v8050, %v8153
      %v8186 = vmul.f32 %v8053, %v8154
      %v8187 = vmul.f32 %v8055, %v8155
      %v8188 = vmul.f32 %v8058, %v8156
      %v8189 = vmul.f32 %v8060, %v8157
      %v8190 = vmul.f32 %v8158, 0.16666667
      %v8191 = vmul.f32 %v8159, 0.16666667
      %v8192 = vmul.f32 %v8160, 0.16666667
      %v8193 = vmul.f32 %v8161, 0.16666667
      %v8194 = vmul.f32 %v8162, 0.16666667
      %v8195 = vmul.f32 %v8163, 0.16666667
      %v8196 = vmul.f32 %v8164, 0.16666667
      %v8197 = vmul.f32 %v8165, 0.16666667
      %v8198 = vmul.f32 %v8166, 0.16666667
      %v8199 = vmul.f32 %v8167, 0.16666667
      %v8200 = vmul.f32 %v8168, 0.16666667
      %v8201 = vmul.f32 %v8169, 0.16666667
      %v8202 = vmul.f32 %v8170, 0.16666667
      %v8203 = vmul.f32 %v8171, 0.16666667
      %v8204 = vmul.f32 %v8172, 0.16666667
      %v8205 = vmul.f32 %v8173, 0.16666667
      %v8206 = vmul.f32 %v8174, 0.16666667
      %v8207 = vmul.f32 %v8175, 0.16666667
      %v8208 = vmul.f32 %v8176, 0.16666667
      %v8209 = vmul.f32 %v8177, 0.16666667
      %v8210 = vmul.f32 %v8178, 0.16666667
      %v8211 = vmul.f32 %v8179, 0.16666667
      %v8212 = vmul.f32 %v8180, 0.16666667
      %v8213 = vmul.f32 %v8181, 0.16666667
      %v8214 = vmul.f32 %v8182, 0.16666667
      %v8215 = vmul.f32 %v8183, 0.16666667
      %v8216 = vmul.f32 %v8184, 0.16666667
      %v8217 = vmul.f32 %v8185, 0.16666667
      %v8218 = vmul.f32 %v8186, 0.16666667
      %v8219 = vmul.f32 %v8187, 0.16666667
      %v8220 = vmul.f32 %v8188, 0.16666667
      %v8221 = vmul.f32 %v8189, 0.16666667
      %v8222 = vld [vmem:[%s15] sm:$0xf]
      %v8223 = vpack.c.bf16 %v8191, %v8190
      %v8224 = vpack.c.bf16 %v8193, %v8192
      %v8225 = vpack.c.bf16 %v8195, %v8194
      %v8226 = vpack.c.bf16 %v8197, %v8196
      %v8227 = vpack.c.bf16 %v8199, %v8198
      %v8228 = vpack.c.bf16 %v8201, %v8200
      %v8229 = vpack.c.bf16 %v8203, %v8202
      %v8230 = vpack.c.bf16 %v8205, %v8204
      %v8231 = vpack.c.bf16 %v8207, %v8206
      %v8232 = vpack.c.bf16 %v8209, %v8208
      %v8233 = vpack.c.bf16 %v8211, %v8210
      %v8234 = vpack.c.bf16 %v8213, %v8212
      %v8235 = vpack.c.bf16 %v8215, %v8214
      %v8236 = vpack.c.bf16 %v8217, %v8216
      %v8237 = vpack.c.bf16 %v8219, %v8218
      %v8238 = vpack.c.bf16 %v8221, %v8220
      %v8239 = vld [vmem:[%s16] sm:$0xff]
      %8241 = vset.pattern.permute.xlu0 0
      %8242 = vperm.xlu0 %8241, %v8239
      %v8243 = vpop.permute.xlu0 %8242
      %v8246 = vsel %vm7924, %v8222, 0
      %v8249 = vsel %vm7924, %v8223, 0
      %v8252 = vsel %vm7924, %v8224, 0
      %v8255 = vsel %vm7924, %v8225, 0
      %v8258 = vsel %vm7924, %v8226, 0
      %v8261 = vsel %vm7924, %v8227, 0
      %v8264 = vsel %vm7924, %v8228, 0
      %v8267 = vsel %vm7924, %v8229, 0
      %v8270 = vsel %vm7924, %v8230, 0
      %v8273 = vsel %vm7924, %v8231, 0
      %v8276 = vsel %vm7924, %v8232, 0
      %v8279 = vsel %vm7924, %v8233, 0
      %v8282 = vsel %vm7924, %v8234, 0
      %v8285 = vsel %vm7924, %v8235, 0
      %v8288 = vsel %vm7924, %v8236, 0
      %v8291 = vsel %vm7924, %v8237, 0
      %v8294 = vsel %vm7924, %v8238, 0
      %8296 = vmatpush.bf16.xpose.msra.mxu0 %v8270
      %8297 = vmatpush.bf16.xpose.msra.mxu0 %v8267
      %8298 = vmatpush.bf16.xpose.msra.mxu0 %v8264
      %8299 = vmatpush.bf16.xpose.msra.mxu0 %v8261
      %8300 = vmatpush.bf16.xpose.msra.mxu0 %v8258
      %8301 = vmatpush.bf16.xpose.msra.mxu0 %v8255
      %8302 = vmatpush.bf16.xpose.msra.mxu0 %v8252
      %8303 = vmatpush.bf16.xpose.msra.mxu0 %v8249
      %8304 = vmatmul.bf16.gmra.mxu0 %v8246
      %v8305 = vpop.f32.mrf.mxu0
      %v8306 = vadd.f32 %v8243, %v8305
      %v8307 = vpop.f32.mrf.mxu0
      %8308 = vdwg.mxu0
      %8309 = vmatpush.bf16.xpose.msra.mxu0 %v8294
      %8310 = vmatpush.bf16.xpose.msra.mxu0 %v8291
      %8311 = vmatpush.bf16.xpose.msra.mxu0 %v8288
      %8312 = vmatpush.bf16.xpose.msra.mxu0 %v8285
      %8313 = vmatpush.bf16.xpose.msra.mxu0 %v8282
      %8314 = vmatpush.bf16.xpose.msra.mxu0 %v8279
      %8315 = vmatpush.bf16.xpose.msra.mxu0 %v8276
      %8316 = vmatpush.bf16.xpose.msra.mxu0 %v8273
      %8317 = vmatmul.bf16.gmra.mxu0 %v8246
      %v8318 = vpop.f32.mrf.mxu0
      %v8319 = vadd.f32 %v8243, %v8318
      %v8320 = vpop.f32.mrf.mxu0
      %8321 = vdwg.mxu0
      %8322 = vst [vmem:[%s548] sm:$0xff] %v8306
      %8323 = vst [vmem:[%s548 + $0x8] sm:$0xff] %v8319
      %p8324 = scmp.lt.s32.totalorder %s28, 1
      %s8325 = scalar_select %p8324, %s28, 1
      %s8326 = smul.addr %s8325, 2
      %s8327 = smul.addr %s8326, 8
      %s8328 = scalar_lea.vmem %s17, %s8327
      // Predicated region
      $region89: #{msnet_forward.1} parent=87 // pred_check
        %p8329 = pneg %p408
      $region90: #{msnet_forward.1} parent=87 // pred_check_branch
        %8331 = sbr.rel (%p8329) target = $region92
      $region91: #{msnet_forward.1} parent=87 // pred_region
        _
      $region92: #{msnet_forward.1} parent=87 // pred_fallthru
        _
    $region88: #{msnet_forward.1} parent=5 // pred_fallthru
      _
    %p8332 = scmp.le.s32.totalorder 2, %s23
    // Predicated region
    $region93: #{msnet_forward.1} parent=5 // pred_check
      %p8333 = pneg %p8332
    $region94: #{msnet_forward.1} parent=5 // pred_check_branch
      %8335 = sbr.rel (%p8333) target = $region96
    $region95: #{msnet_forward.1} parent=5 // pred_region
      %s8336 = ssub.s32 %s23, 2
      // Predicated region
      $region97: #{msnet_forward.1} parent=95 // pred_check
        %p8337 = pneg %p414
      $region98: #{msnet_forward.1} parent=95 // pred_check_branch
        %8339 = sbr.rel (%p8337) target = $region100
      $region99: #{msnet_forward.1} parent=95 // pred_region
        %p8340 = scmp.lt.s32.totalorder %s29, 1
        %s8341 = scalar_select %p8340, %s29, 1
        %s8342 = smul.addr %s8341, 2
        %s8343 = smul.addr %s8342, 8
        %s8344 = scalar_lea.vmem %s17, %s8343
      $region100: #{msnet_forward.1} parent=95 // pred_fallthru
        _
    $region96: #{msnet_forward.1} parent=5 // pred_fallthru
      _
  $region6: #{msnet_forward.1} parent=0 // loop_footer
    %s27 = sadd.s32 1, %s23
  $region7: #{msnet_forward.1} parent=0 // loop_footer_branch
    %22 = sbr.rel target = $region3
  $region8: #{msnet_forward.1} parent=0 // loop_exit
    _

</llo_original>
